<compile_context>
chip_gen: v5e
topology: v5e:2x2
jax: 0.10.0
libtpu: 0.0.40
codegen_flags: <defaults>
</compile_context>

<pallas_src>
import functools
import math

import jax
import jax.numpy as jnp
from jax import lax
from jax.experimental import pallas as pl
from jax.experimental.pallas import tpu as pltpu


# ----------------------------- config -----------------------------

CFG = dict(
    image_size=32,
    in_chans=3,
    patch=16,
    hidden=128,
    heads=4,
    mlp=256,
    layers=2,
    n_classes=15,
)


def _round_up(n, m):
    return ((n + m - 1) // m) * m


def _pick_tb(batch):
    """Images per grid step.  TB must be a multiple of 8 so the (TB, NC_pad)
    output block stays sublane-aligned; keep >=2 grid steps when the batch
    allows so both v7x TensorCores get work."""
    if batch >= 64:
        return 32            # M = 256 rows -> full-height v6e MXU tiles
    if batch >= 32:
        return 16            # M = 128 rows (v5e MXU height), >=2 grid steps
    return 8                 # small batches: one aligned block (batch padded)


# ----------------------------- fused ViT kernel -----------------------------

def _vit_kernel(patches_ref, add_ref, bias_ref, conv_w_ref,
                ln1_g_ref, ln1_b_ref, qkv_w_ref, qkv_b_ref,
                out_w_ref, out_b_ref, ln2_g_ref, ln2_b_ref,
                fc1_w_ref, fc1_b_ref, fc2_w_ref, fc2_b_ref,
                lnf_g_ref, lnf_b_ref, head_w_ref, head_b_ref,
                o_ref, hbuf_ref, *, n_layers, n_heads, s_pad, tb, eps):
    """One grid step == TB images: full ViT forward on a (TB*S_pad, D) slab."""
    M, D = add_ref.shape
    Dh = D // n_heads
    bf16 = jnp.bfloat16
    f32 = jnp.float32

    def layer_norm(x, g, b):
        mu = jnp.mean(x, axis=-1, keepdims=True)
        c = x - mu
        var = jnp.mean(c * c, axis=-1, keepdims=True)
        return c * lax.rsqrt(var + eps) * g + b

    def mm(x, w, bias=None):
        # bf16 MXU inputs, f32 accumulation.
        acc = jnp.dot(x.astype(bf16), w.astype(bf16),
                      preferred_element_type=f32)
        return acc if bias is None else acc + bias

    def gelu_tanh(x):
        # tanh-approx GELU -> jnp.tanh runs on the EUP slot.
        # TODO(synk): torch nn.GELU() default is exact erf; deviation ~1e-3.
        c = math.sqrt(2.0 / math.pi)
        return 0.5 * x * (1.0 + jnp.tanh(c * (x + 0.044715 * x * x * x)))

    # --- patch embedding: one (M, CPP) x (CPP, D) matmul; CLS token, positional
    # embedding and conv bias come from the precomputed additive slab (padded
    # rows stay exactly zero because their patch rows are zero and add is 0). ---
    h = mm(patches_ref[...], conv_w_ref[...]) + add_ref[...]          # (M, D) f32

    attn_bias = bias_ref[...]                                         # (M, M) f32

    for l in range(n_layers):          # static unroll over encoder layers
        # ----- multi-head self-attention (pre-LN), block-diagonal over images -----
        y = layer_norm(h, ln1_g_ref[l], ln1_b_ref[l])
        qkv = mm(y, qkv_w_ref[l], qkv_b_ref[l])                       # (M, 3D)
        attn = None
        for hd in range(n_heads):      # static unroll over heads
            q = qkv[:, hd * Dh:(hd + 1) * Dh]
            k = qkv[:, D + hd * Dh:D + (hd + 1) * Dh]
            v = qkv[:, 2 * D + hd * Dh:2 * D + (hd + 1) * Dh]
            # 1/sqrt(Dh) is folded into the Q weights at pack time.
            s = lax.dot_general(q.astype(bf16), k.astype(bf16),
                                (((1,), (1,)), ((), ())),
                                preferred_element_type=f32) + attn_bias
            s = s - jnp.max(s, axis=-1, keepdims=True)                # f32 stats
            p = jnp.exp(s)
            p = p * pl.reciprocal(jnp.sum(p, axis=-1, keepdims=True), approx=True)
            o_h = mm(p, v)                                            # (M, Dh)
            # head merge via per-head out-projection slab (no lane concat)
            part = mm(o_h, out_w_ref[l, hd * Dh:(hd + 1) * Dh, :])    # (M, D)
            attn = part if attn is None else attn + part
        h = h + attn + out_b_ref[l]

        # ----- MLP (pre-LN), GELU fused in-kernel -----
        y = layer_norm(h, ln2_g_ref[l], ln2_b_ref[l])
        m_act = gelu_tanh(mm(y, fc1_w_ref[l], fc1_b_ref[l]))
        h = h + mm(m_act, fc2_w_ref[l], fc2_b_ref[l])

    # ----- CLS rows only: strided sublane gather, final LN, lane-dense head -----
    hbuf_ref[...] = h
    h_cls = hbuf_ref[pl.ds(0, tb, stride=s_pad), :]                   # (TB, D)
    h_cls = layer_norm(h_cls, lnf_g_ref[...], lnf_b_ref[...])
    o_ref[...] = mm(h_cls, head_w_ref[...], head_b_ref[...]).astype(o_ref.dtype)


# ----------------------------- parameters -----------------------------

def init_params(key, cfg):
    D, C, P = cfg["hidden"], cfg["in_chans"], cfg["patch"]
    mlp, L, NC = cfg["mlp"], cfg["layers"], cfg["n_classes"]
    n_patches = (cfg["image_size"] // P) ** 2
    S = n_patches + 1

    def nrm(k, shape, s=0.02):
        return (s * jax.random.normal(k, shape)).astype(jnp.float32)

    keys = iter(jax.random.split(key, 8 + 8 * L))
    params = {
        # conv_proj (D, C, P, P) flattened in (C, P, P) order -> (C*P*P, D)
        "conv_w": nrm(next(keys), (C * P * P, D)),
        "conv_b": jnp.zeros((D,), jnp.float32),
        "cls": nrm(next(keys), (1, 1, D)),
        "pos": nrm(next(keys), (1, S, D)),
        "ln_g": jnp.ones((D,), jnp.float32),
        "ln_b": jnp.zeros((D,), jnp.float32),
        "head_w": nrm(next(keys), (D, NC)),
        "head_b": jnp.zeros((NC,), jnp.float32),
        "layers": [],
    }
    for _ in range(L):
        params["layers"].append({
            "ln1_g": jnp.ones((D,), jnp.float32),
            "ln1_b": jnp.zeros((D,), jnp.float32),
            "qkv_w": nrm(next(keys), (D, 3 * D)),
            "qkv_b": jnp.zeros((3 * D,), jnp.float32),
            "out_w": nrm(next(keys), (D, D)),
            "out_b": jnp.zeros((D,), jnp.float32),
            "ln2_g": jnp.ones((D,), jnp.float32),
            "ln2_b": jnp.zeros((D,), jnp.float32),
            "fc1_w": nrm(next(keys), (D, mlp)),
            "fc1_b": jnp.zeros((mlp,), jnp.float32),
            "fc2_w": nrm(next(keys), (mlp, D)),
            "fc2_b": jnp.zeros((D,), jnp.float32),
        })
    return params


def pack_params(params, cfg):
    """Stack per-layer weights, pad to lane/sublane-aligned shapes, fold the
    attention scale / CLS / pos / conv-bias constants, cast matmul weights to
    bf16 (f32 master params untouched)."""
    D, L, MLP = cfg["hidden"], cfg["layers"], cfg["mlp"]
    NC, NH = cfg["n_classes"], cfg["heads"]
    Dh = D // NH
    n_patches = (cfg["image_size"] // cfg["patch"]) ** 2
    S = n_patches + 1
    S_pad = _round_up(S, 8)
    NC_pad = _round_up(NC, 128)
    bf16 = jnp.bfloat16

    def stack(name):
        return jnp.stack([lyr[name] for lyr in params["layers"]], axis=0)

    # fold 1/sqrt(Dh) into the Q third of the QKV projection (free at runtime)
    scale = 1.0 / math.sqrt(Dh)
    qkv_w = stack("qkv_w").at[:, :, :D].multiply(scale)
    qkv_b = stack("qkv_b").at[:, :D].multiply(scale)

    # per-position additive term: CLS + pos on row 0, conv_b + pos on patch
    # rows, zero on padded rows.
    add = jnp.zeros((S_pad, D), jnp.float32)
    add = add.at[0, :].set(params["cls"][0, 0] + params["pos"][0, 0])
    add = add.at[1:S, :].set(params["conv_b"][None, :] + params["pos"][0, 1:S])

    head_w = jnp.zeros((D, NC_pad), jnp.float32).at[:, :NC].set(params["head_w"])
    head_b = jnp.zeros((NC_pad,), jnp.float32).at[:NC].set(params["head_b"])

    return dict(
        conv_w=params["conv_w"].astype(bf16),
        add=add,
        ln1_g=stack("ln1_g").reshape(L, 1, D),
        ln1_b=stack("ln1_b").reshape(L, 1, D),
        qkv_w=qkv_w.astype(bf16),
        qkv_b=qkv_b.reshape(L, 1, 3 * D),
        out_w=stack("out_w").astype(bf16),
        out_b=stack("out_b").reshape(L, 1, D),
        ln2_g=stack("ln2_g").reshape(L, 1, D),
        ln2_b=stack("ln2_b").reshape(L, 1, D),
        fc1_w=stack("fc1_w").astype(bf16),
        fc1_b=stack("fc1_b").reshape(L, 1, MLP),
        fc2_w=stack("fc2_w").astype(bf16),
        fc2_b=stack("fc2_b").reshape(L, 1, D),
        lnf_g=params["ln_g"].reshape(1, D),
        lnf_b=params["ln_b"].reshape(1, D),
        head_w=head_w.astype(bf16),
        head_b=head_b.reshape(1, NC_pad),
    )


# ----------------------------- forward -----------------------------

def vit_forward(x, packed, cfg):
    """x: (B, C, H, W) float32 (NCHW, like PyTorch). Returns logits (B, n_classes)."""
    B, C, H, W = x.shape
    P, D, NH, L, MLP = cfg["patch"], cfg["hidden"], cfg["heads"], cfg["layers"], cfg["mlp"]
    NC = cfg["n_classes"]
    nh, nw = H // P, W // P
    n_patches = nh * nw
    S = n_patches + 1
    S_pad = _round_up(S, 8)
    NC_pad = _round_up(NC, 128)
    CPP = C * P * P

    TB = _pick_tb(B)
    B_pad = _round_up(B, TB)
    M_blk = TB * S_pad
    n_steps = B_pad // TB

    # im2col for Conv2d(C, D, k=P, s=P) — one XLA transpose outside the kernel.
    # Each image gets S_pad rows: row 0 (CLS slot) and padded rows are zero.
    patches = (x.reshape(B, C, nh, P, nw, P)
                 .transpose(0, 2, 4, 1, 3, 5)
                 .reshape(B, n_patches, CPP)).astype(jnp.bfloat16)
    slab = jnp.zeros((B_pad, S_pad, CPP), jnp.bfloat16)
    slab = slab.at[:B, 1:1 + n_patches, :].set(patches)
    slab = slab.reshape(B_pad * S_pad, CPP)

    # additive slab (CLS + pos + conv_b) tiled over the TB images of a block.
    add_slab = jnp.tile(packed["add"], (TB, 1))                       # (M_blk, D)

    # block-diagonal additive attention mask over the TB images in a slab;
    # padded key positions get -1e30.
    ids = jnp.arange(M_blk)
    same_img = (ids[:, None] // S_pad) == (ids[None, :] // S_pad)
    key_valid = (ids[None, :] % S_pad) < S
    attn_bias = jnp.where(same_img & key_valid, 0.0, -1e30).astype(jnp.float32)

    kernel = functools.partial(_vit_kernel, n_layers=L, n_heads=NH,
                               s_pad=S_pad, tb=TB, eps=1e-6)

    full2 = lambda shape: pl.BlockSpec(shape, lambda b: (0, 0))
    full3 = lambda shape: pl.BlockSpec(shape, lambda b: (0, 0, 0))

    in_specs = [
        pl.BlockSpec((M_blk, CPP), lambda b: (b, 0)),                 # patch slab (per block)
        full2((M_blk, D)),                                            # additive slab
        full2((M_blk, M_blk)),                                        # attention mask bias
        full2((CPP, D)),                                              # conv_w
        full3((L, 1, D)), full3((L, 1, D)),                           # ln1 g/b
        full3((L, D, 3 * D)), full3((L, 1, 3 * D)),                   # qkv w/b
        full3((L, D, D)), full3((L, 1, D)),                           # out w/b
        full3((L, 1, D)), full3((L, 1, D)),                           # ln2 g/b
        full3((L, D, MLP)), full3((L, 1, MLP)),                       # fc1 w/b
        full3((L, MLP, D)), full3((L, 1, D)),                         # fc2 w/b
        full2((1, D)), full2((1, D)),                                 # final ln g/b
        full2((D, NC_pad)), full2((1, NC_pad)),                       # head w/b (padded)
    ]

    # advisory cost estimate for XLA's scheduler around the fused call
    flops = int(2 * B_pad * S_pad * (CPP * D
                                     + L * (4 * D * D + 2 * D * MLP + 2 * M_blk * D))
                + 2 * B_pad * D * NC_pad)
    transc = int(B_pad * S_pad * L * (NH * M_blk + MLP))
    weight_bytes = sum(int(v.size) * (2 if v.dtype == jnp.bfloat16 else 4)
                       for k, v in packed.items() if k != "add")
    bytes_acc = int(slab.size * 2 + add_slab.size * 4 + attn_bias.size * 4
                    + weight_bytes + B_pad * NC_pad * 4)

    out = pl.pallas_call(
        kernel,
        out_shape=jax.ShapeDtypeStruct((B_pad, NC_pad), jnp.float32),
        grid=(n_steps,),
        in_specs=in_specs,
        out_specs=pl.BlockSpec((TB, NC_pad), lambda b: (b, 0)),
        scratch_shapes=[pltpu.VMEM((M_blk, D), jnp.float32)],         # CLS-row gather buffer
        compiler_params=pltpu.CompilerParams(
            dimension_semantics=("parallel",)),   # batch-block axis -> both TCs on v7x
        cost_estimate=pl.CostEstimate(flops=flops, transcendentals=transc,
                                      bytes_accessed=bytes_acc),
    )(slab, add_slab, attn_bias, packed["conv_w"],
      packed["ln1_g"], packed["ln1_b"], packed["qkv_w"], packed["qkv_b"],
      packed["out_w"], packed["out_b"], packed["ln2_g"], packed["ln2_b"],
      packed["fc1_w"], packed["fc1_b"], packed["fc2_w"], packed["fc2_b"],
      packed["lnf_g"], packed["lnf_b"], packed["head_w"], packed["head_b"])

    # real batch rows / real classes only (padding sliced off here).
    return out[:B, :NC]


def predict_proba(x, packed, cfg):
    return jax.nn.softmax(vit_forward(x, packed, cfg), axis=1)


# ----------------------------- main -----------------------------

if __name__ == "__main__":
    key = jax.random.PRNGKey(0)
    k_param, k_x = jax.random.split(key)

    params = init_params(k_param, CFG)
    packed = pack_params(params, CFG)

    B = 32   # -> TB=16 images per grid step (M=128 rows), 2 grid steps
    x = jax.random.normal(
        k_x, (B, CFG["in_chans"], CFG["image_size"], CFG["image_size"]),
        dtype=jnp.float32,
    )

    fwd = jax.jit(functools.partial(vit_forward, cfg=CFG))
    prob_fn = jax.jit(functools.partial(predict_proba, cfg=CFG))

    logits = jax.block_until_ready(fwd(x, packed))
    probs = jax.block_until_ready(prob_fn(x, packed))

    assert logits.shape == (B, CFG["n_classes"])
    assert probs.shape == (B, CFG["n_classes"])
    assert bool(jnp.all(jnp.isfinite(logits)))
    assert bool(jnp.all(jnp.isfinite(probs)))
    print("KERNEL_OK")
</pallas_src>

<mosaic_0001>
module attributes {stable_mosaic.version = 11 : i64} {
  func.func @_vit_kernel(%arg0: i32, %arg1: memref<128x768xbf16, #tpu.memory_space<vmem>>, %arg2: memref<128x128xf32, #tpu.memory_space<vmem>>, %arg3: memref<128x128xf32, #tpu.memory_space<vmem>>, %arg4: memref<768x128xbf16, #tpu.memory_space<vmem>>, %arg5: memref<2x1x128xf32, #tpu.memory_space<vmem>>, %arg6: memref<2x1x128xf32, #tpu.memory_space<vmem>>, %arg7: memref<2x128x384xbf16, #tpu.memory_space<vmem>>, %arg8: memref<2x1x384xf32, #tpu.memory_space<vmem>>, %arg9: memref<2x128x128xbf16, #tpu.memory_space<vmem>>, %arg10: memref<2x1x128xf32, #tpu.memory_space<vmem>>, %arg11: memref<2x1x128xf32, #tpu.memory_space<vmem>>, %arg12: memref<2x1x128xf32, #tpu.memory_space<vmem>>, %arg13: memref<2x128x256xbf16, #tpu.memory_space<vmem>>, %arg14: memref<2x1x256xf32, #tpu.memory_space<vmem>>, %arg15: memref<2x256x128xbf16, #tpu.memory_space<vmem>>, %arg16: memref<2x1x128xf32, #tpu.memory_space<vmem>>, %arg17: memref<1x128xf32, #tpu.memory_space<vmem>>, %arg18: memref<1x128xf32, #tpu.memory_space<vmem>>, %arg19: memref<128x128xbf16, #tpu.memory_space<vmem>>, %arg20: memref<1x128xf32, #tpu.memory_space<vmem>>, %arg21: memref<16x128xf32, #tpu.memory_space<vmem>>, %arg22: memref<128x128xf32, #tpu.memory_space<vmem>>) attributes {dimension_semantics = [#tpu.dimension_semantics<parallel>], iteration_bounds = array<i64: 2>, scalar_prefetch = 0 : i64, scratch_operands = 1 : i64, tpu.core_type = #tpu.core_type<tc>, window_params = [{transform_indices = @transform_0, window_bounds = array<i64: 128, 768>}, {pipeline_mode = #tpu.pipeline_mode<synchronous>, transform_indices = @transform_1, window_bounds = array<i64: 128, 128>}, {pipeline_mode = #tpu.pipeline_mode<synchronous>, transform_indices = @transform_2, window_bounds = array<i64: 128, 128>}, {pipeline_mode = #tpu.pipeline_mode<synchronous>, transform_indices = @transform_3, window_bounds = array<i64: 768, 128>}, {pipeline_mode = #tpu.pipeline_mode<synchronous>, transform_indices = @transform_4, window_bounds = array<i64: 2, 1, 128>}, {pipeline_mode = #tpu.pipeline_mode<synchronous>, transform_indices = @transform_5, window_bounds = array<i64: 2, 1, 128>}, {pipeline_mode = #tpu.pipeline_mode<synchronous>, transform_indices = @transform_6, window_bounds = array<i64: 2, 128, 384>}, {pipeline_mode = #tpu.pipeline_mode<synchronous>, transform_indices = @transform_7, window_bounds = array<i64: 2, 1, 384>}, {pipeline_mode = #tpu.pipeline_mode<synchronous>, transform_indices = @transform_8, window_bounds = array<i64: 2, 128, 128>}, {pipeline_mode = #tpu.pipeline_mode<synchronous>, transform_indices = @transform_9, window_bounds = array<i64: 2, 1, 128>}, {pipeline_mode = #tpu.pipeline_mode<synchronous>, transform_indices = @transform_10, window_bounds = array<i64: 2, 1, 128>}, {pipeline_mode = #tpu.pipeline_mode<synchronous>, transform_indices = @transform_11, window_bounds = array<i64: 2, 1, 128>}, {pipeline_mode = #tpu.pipeline_mode<synchronous>, transform_indices = @transform_12, window_bounds = array<i64: 2, 128, 256>}, {pipeline_mode = #tpu.pipeline_mode<synchronous>, transform_indices = @transform_13, window_bounds = array<i64: 2, 1, 256>}, {pipeline_mode = #tpu.pipeline_mode<synchronous>, transform_indices = @transform_14, window_bounds = array<i64: 2, 256, 128>}, {pipeline_mode = #tpu.pipeline_mode<synchronous>, transform_indices = @transform_15, window_bounds = array<i64: 2, 1, 128>}, {pipeline_mode = #tpu.pipeline_mode<synchronous>, transform_indices = @transform_16, window_bounds = array<i64: 1, 128>}, {pipeline_mode = #tpu.pipeline_mode<synchronous>, transform_indices = @transform_17, window_bounds = array<i64: 1, 128>}, {pipeline_mode = #tpu.pipeline_mode<synchronous>, transform_indices = @transform_18, window_bounds = array<i64: 128, 128>}, {pipeline_mode = #tpu.pipeline_mode<synchronous>, transform_indices = @transform_19, window_bounds = array<i64: 1, 128>}, {transform_indices = @transform_20, window_bounds = array<i64: 16, 128>}]} {
    %c0 = arith.constant 0 : index
    %c0_0 = arith.constant 0 : index
    %0 = vector.load %arg1[%c0, %c0_0] : memref<128x768xbf16, #tpu.memory_space<vmem>>, vector<128x768xbf16>
    %c0_1 = arith.constant 0 : index
    %c0_2 = arith.constant 0 : index
    %1 = vector.load %arg4[%c0_1, %c0_2] : memref<768x128xbf16, #tpu.memory_space<vmem>>, vector<768x128xbf16>
    %cst = arith.constant dense<0.000000e+00> : vector<128x128xf32>
    %2 = tpu.matmul %0, %1, %cst {dimension_numbers = #tpu.dot_dimension_numbers<[1], [0], [0], [1], [0, 0, 1, 1], [], []>} : vector<128x768xbf16>, vector<768x128xbf16>, vector<128x128xf32> -> vector<128x128xf32>
    %c0_3 = arith.constant 0 : index
    %c0_4 = arith.constant 0 : index
    %3 = vector.load %arg2[%c0_3, %c0_4] : memref<128x128xf32, #tpu.memory_space<vmem>>, vector<128x128xf32>
    %4 = arith.addf %2, %3 : vector<128x128xf32>
    %c0_5 = arith.constant 0 : index
    %c0_6 = arith.constant 0 : index
    %5 = vector.load %arg3[%c0_5, %c0_6] : memref<128x128xf32, #tpu.memory_space<vmem>>, vector<128x128xf32>
    %c0_7 = arith.constant 0 : index
    %c0_8 = arith.constant 0 : index
    %c0_9 = arith.constant 0 : index
    %6 = vector.load %arg5[%c0_7, %c0_8, %c0_9] : memref<2x1x128xf32, #tpu.memory_space<vmem>>, vector<1x1x128xf32>
    %7 = vector.shape_cast %6 : vector<1x1x128xf32> to vector<1x128xf32>
    %c0_10 = arith.constant 0 : index
    %c0_11 = arith.constant 0 : index
    %c0_12 = arith.constant 0 : index
    %8 = vector.load %arg6[%c0_10, %c0_11, %c0_12] : memref<2x1x128xf32, #tpu.memory_space<vmem>>, vector<1x1x128xf32>
    %9 = vector.shape_cast %8 : vector<1x1x128xf32> to vector<1x128xf32>
    %cst_13 = arith.constant dense<0.000000e+00> : vector<128xf32>
    %10 = vector.multi_reduction <add>, %4, %cst_13 [1] : vector<128x128xf32> to vector<128xf32>
    %11 = vector.shape_cast %10 : vector<128xf32> to vector<128x1xf32>
    %cst_14 = arith.constant 1.280000e+02 : f32
    %12 = vector.broadcast %cst_14 : f32 to vector<128x1xf32>
    %13 = arith.divf %11, %12 : vector<128x1xf32>
    %14 = vector.broadcast %13 : vector<128x1xf32> to vector<128x128xf32>
    %15 = arith.subf %4, %14 : vector<128x128xf32>
    %16 = arith.mulf %15, %15 : vector<128x128xf32>
    %cst_15 = arith.constant dense<0.000000e+00> : vector<128xf32>
    %17 = vector.multi_reduction <add>, %16, %cst_15 [1] : vector<128x128xf32> to vector<128xf32>
    %18 = vector.shape_cast %17 : vector<128xf32> to vector<128x1xf32>
    %cst_16 = arith.constant 1.280000e+02 : f32
    %19 = vector.broadcast %cst_16 : f32 to vector<128x1xf32>
    %20 = arith.divf %18, %19 : vector<128x1xf32>
    %cst_17 = arith.constant 9.99999997E-7 : f32
    %21 = vector.broadcast %cst_17 : f32 to vector<128x1xf32>
    %22 = arith.addf %20, %21 : vector<128x1xf32>
    %23 = math.rsqrt %22 : vector<128x1xf32>
    %24 = vector.broadcast %23 : vector<128x1xf32> to vector<128x128xf32>
    %25 = arith.mulf %15, %24 : vector<128x128xf32>
    %26 = vector.broadcast %7 : vector<1x128xf32> to vector<128x128xf32>
    %27 = arith.mulf %25, %26 : vector<128x128xf32>
    %28 = vector.broadcast %9 : vector<1x128xf32> to vector<128x128xf32>
    %29 = arith.addf %27, %28 : vector<128x128xf32>
    %c0_18 = arith.constant 0 : index
    %c0_19 = arith.constant 0 : index
    %c0_20 = arith.constant 0 : index
    %30 = vector.load %arg7[%c0_18, %c0_19, %c0_20] : memref<2x128x384xbf16, #tpu.memory_space<vmem>>, vector<1x128x384xbf16>
    %31 = vector.shape_cast %30 : vector<1x128x384xbf16> to vector<128x384xbf16>
    %c0_21 = arith.constant 0 : index
    %c0_22 = arith.constant 0 : index
    %c0_23 = arith.constant 0 : index
    %32 = vector.load %arg8[%c0_21, %c0_22, %c0_23] : memref<2x1x384xf32, #tpu.memory_space<vmem>>, vector<1x1x384xf32>
    %33 = vector.shape_cast %32 : vector<1x1x384xf32> to vector<1x384xf32>
    %34 = arith.truncf %29 : vector<128x128xf32> to vector<128x128xbf16>
    %cst_24 = arith.constant dense<0.000000e+00> : vector<128x384xf32>
    %35 = tpu.matmul %34, %31, %cst_24 {dimension_numbers = #tpu.dot_dimension_numbers<[1], [0], [0], [1], [0, 0, 1, 1], [], []>} : vector<128x128xbf16>, vector<128x384xbf16>, vector<128x384xf32> -> vector<128x384xf32>
    %36 = vector.broadcast %33 : vector<1x384xf32> to vector<128x384xf32>
    %37 = arith.addf %35, %36 : vector<128x384xf32>
    %38 = vector.extract_strided_slice %37 {offsets = [0, 0], sizes = [128, 32], strides = [1, 1]} : vector<128x384xf32> to vector<128x32xf32>
    %39 = vector.extract_strided_slice %37 {offsets = [0, 128], sizes = [128, 32], strides = [1, 1]} : vector<128x384xf32> to vector<128x32xf32>
    %40 = vector.extract_strided_slice %37 {offsets = [0, 256], sizes = [128, 32], strides = [1, 1]} : vector<128x384xf32> to vector<128x32xf32>
    %41 = arith.truncf %38 : vector<128x32xf32> to vector<128x32xbf16>
    %42 = arith.truncf %39 : vector<128x32xf32> to vector<128x32xbf16>
    %cst_25 = arith.constant dense<0.000000e+00> : vector<128x128xf32>
    %43 = tpu.matmul %41, %42, %cst_25 {dimension_numbers = #tpu.dot_dimension_numbers<[1], [1], [0], [0], [0, 0, 1, 0], [], []>} : vector<128x32xbf16>, vector<128x32xbf16>, vector<128x128xf32> -> vector<128x128xf32>
    %44 = arith.addf %43, %5 : vector<128x128xf32>
    %cst_26 = arith.constant dense<0xFF800000> : vector<128xf32>
    %45 = vector.multi_reduction <maximumf>, %44, %cst_26 [1] : vector<128x128xf32> to vector<128xf32>
    %46 = vector.shape_cast %45 : vector<128xf32> to vector<128x1xf32>
    %47 = vector.broadcast %46 : vector<128x1xf32> to vector<128x128xf32>
    %48 = arith.subf %44, %47 : vector<128x128xf32>
    %49 = math.exp %48 : vector<128x128xf32>
    %cst_27 = arith.constant dense<0.000000e+00> : vector<128xf32>
    %50 = vector.multi_reduction <add>, %49, %cst_27 [1] : vector<128x128xf32> to vector<128xf32>
    %51 = vector.shape_cast %50 : vector<128xf32> to vector<128x1xf32>
    %52 = tpu.reciprocal %51 {approx = true} : vector<128x1xf32> -> vector<128x1xf32>
    %53 = vector.broadcast %52 : vector<128x1xf32> to vector<128x128xf32>
    %54 = arith.mulf %49, %53 : vector<128x128xf32>
    %55 = arith.truncf %54 : vector<128x128xf32> to vector<128x128xbf16>
    %56 = arith.truncf %40 : vector<128x32xf32> to vector<128x32xbf16>
    %cst_28 = arith.constant dense<0.000000e+00> : vector<128x32xf32>
    %57 = tpu.matmul %55, %56, %cst_28 {dimension_numbers = #tpu.dot_dimension_numbers<[1], [0], [0], [1], [0, 0, 1, 1], [], []>} : vector<128x128xbf16>, vector<128x32xbf16>, vector<128x32xf32> -> vector<128x32xf32>
    %c0_29 = arith.constant 0 : index
    %c0_30 = arith.constant 0 : index
    %c0_31 = arith.constant 0 : index
    %58 = vector.load %arg9[%c0_29, %c0_30, %c0_31] : memref<2x128x128xbf16, #tpu.memory_space<vmem>>, vector<1x32x128xbf16>
    %59 = vector.shape_cast %58 : vector<1x32x128xbf16> to vector<32x128xbf16>
    %60 = arith.truncf %57 : vector<128x32xf32> to vector<128x32xbf16>
    %cst_32 = arith.constant dense<0.000000e+00> : vector<128x128xf32>
    %61 = tpu.matmul %60, %59, %cst_32 {dimension_numbers = #tpu.dot_dimension_numbers<[1], [0], [0], [1], [0, 0, 1, 1], [], []>} : vector<128x32xbf16>, vector<32x128xbf16>, vector<128x128xf32> -> vector<128x128xf32>
    %62 = vector.extract_strided_slice %37 {offsets = [0, 32], sizes = [128, 32], strides = [1, 1]} : vector<128x384xf32> to vector<128x32xf32>
    %63 = vector.extract_strided_slice %37 {offsets = [0, 160], sizes = [128, 32], strides = [1, 1]} : vector<128x384xf32> to vector<128x32xf32>
    %64 = vector.extract_strided_slice %37 {offsets = [0, 288], sizes = [128, 32], strides = [1, 1]} : vector<128x384xf32> to vector<128x32xf32>
    %65 = arith.truncf %62 : vector<128x32xf32> to vector<128x32xbf16>
    %66 = arith.truncf %63 : vector<128x32xf32> to vector<128x32xbf16>
    %cst_33 = arith.constant dense<0.000000e+00> : vector<128x128xf32>
    %67 = tpu.matmul %65, %66, %cst_33 {dimension_numbers = #tpu.dot_dimension_numbers<[1], [1], [0], [0], [0, 0, 1, 0], [], []>} : vector<128x32xbf16>, vector<128x32xbf16>, vector<128x128xf32> -> vector<128x128xf32>
    %68 = arith.addf %67, %5 : vector<128x128xf32>
    %cst_34 = arith.constant dense<0xFF800000> : vector<128xf32>
    %69 = vector.multi_reduction <maximumf>, %68, %cst_34 [1] : vector<128x128xf32> to vector<128xf32>
    %70 = vector.shape_cast %69 : vector<128xf32> to vector<128x1xf32>
    %71 = vector.broadcast %70 : vector<128x1xf32> to vector<128x128xf32>
    %72 = arith.subf %68, %71 : vector<128x128xf32>
    %73 = math.exp %72 : vector<128x128xf32>
    %cst_35 = arith.constant dense<0.000000e+00> : vector<128xf32>
    %74 = vector.multi_reduction <add>, %73, %cst_35 [1] : vector<128x128xf32> to vector<128xf32>
    %75 = vector.shape_cast %74 : vector<128xf32> to vector<128x1xf32>
    %76 = tpu.reciprocal %75 {approx = true} : vector<128x1xf32> -> vector<128x1xf32>
    %77 = vector.broadcast %76 : vector<128x1xf32> to vector<128x128xf32>
    %78 = arith.mulf %73, %77 : vector<128x128xf32>
    %79 = arith.truncf %78 : vector<128x128xf32> to vector<128x128xbf16>
    %80 = arith.truncf %64 : vector<128x32xf32> to vector<128x32xbf16>
    %cst_36 = arith.constant dense<0.000000e+00> : vector<128x32xf32>
    %81 = tpu.matmul %79, %80, %cst_36 {dimension_numbers = #tpu.dot_dimension_numbers<[1], [0], [0], [1], [0, 0, 1, 1], [], []>} : vector<128x128xbf16>, vector<128x32xbf16>, vector<128x32xf32> -> vector<128x32xf32>
    %c0_37 = arith.constant 0 : index
    %c32 = arith.constant 32 : index
    %c0_38 = arith.constant 0 : index
    %82 = vector.load %arg9[%c0_37, %c32, %c0_38] : memref<2x128x128xbf16, #tpu.memory_space<vmem>>, vector<1x32x128xbf16>
    %83 = vector.shape_cast %82 : vector<1x32x128xbf16> to vector<32x128xbf16>
    %84 = arith.truncf %81 : vector<128x32xf32> to vector<128x32xbf16>
    %cst_39 = arith.constant dense<0.000000e+00> : vector<128x128xf32>
    %85 = tpu.matmul %84, %83, %cst_39 {dimension_numbers = #tpu.dot_dimension_numbers<[1], [0], [0], [1], [0, 0, 1, 1], [], []>} : vector<128x32xbf16>, vector<32x128xbf16>, vector<128x128xf32> -> vector<128x128xf32>
    %86 = arith.addf %61, %85 : vector<128x128xf32>
    %87 = vector.extract_strided_slice %37 {offsets = [0, 64], sizes = [128, 32], strides = [1, 1]} : vector<128x384xf32> to vector<128x32xf32>
    %88 = vector.extract_strided_slice %37 {offsets = [0, 192], sizes = [128, 32], strides = [1, 1]} : vector<128x384xf32> to vector<128x32xf32>
    %89 = vector.extract_strided_slice %37 {offsets = [0, 320], sizes = [128, 32], strides = [1, 1]} : vector<128x384xf32> to vector<128x32xf32>
    %90 = arith.truncf %87 : vector<128x32xf32> to vector<128x32xbf16>
    %91 = arith.truncf %88 : vector<128x32xf32> to vector<128x32xbf16>
    %cst_40 = arith.constant dense<0.000000e+00> : vector<128x128xf32>
    %92 = tpu.matmul %90, %91, %cst_40 {dimension_numbers = #tpu.dot_dimension_numbers<[1], [1], [0], [0], [0, 0, 1, 0], [], []>} : vector<128x32xbf16>, vector<128x32xbf16>, vector<128x128xf32> -> vector<128x128xf32>
    %93 = arith.addf %92, %5 : vector<128x128xf32>
    %cst_41 = arith.constant dense<0xFF800000> : vector<128xf32>
    %94 = vector.multi_reduction <maximumf>, %93, %cst_41 [1] : vector<128x128xf32> to vector<128xf32>
    %95 = vector.shape_cast %94 : vector<128xf32> to vector<128x1xf32>
    %96 = vector.broadcast %95 : vector<128x1xf32> to vector<128x128xf32>
    %97 = arith.subf %93, %96 : vector<128x128xf32>
    %98 = math.exp %97 : vector<128x128xf32>
    %cst_42 = arith.constant dense<0.000000e+00> : vector<128xf32>
    %99 = vector.multi_reduction <add>, %98, %cst_42 [1] : vector<128x128xf32> to vector<128xf32>
    %100 = vector.shape_cast %99 : vector<128xf32> to vector<128x1xf32>
    %101 = tpu.reciprocal %100 {approx = true} : vector<128x1xf32> -> vector<128x1xf32>
    %102 = vector.broadcast %101 : vector<128x1xf32> to vector<128x128xf32>
    %103 = arith.mulf %98, %102 : vector<128x128xf32>
    %104 = arith.truncf %103 : vector<128x128xf32> to vector<128x128xbf16>
    %105 = arith.truncf %89 : vector<128x32xf32> to vector<128x32xbf16>
    %cst_43 = arith.constant dense<0.000000e+00> : vector<128x32xf32>
    %106 = tpu.matmul %104, %105, %cst_43 {dimension_numbers = #tpu.dot_dimension_numbers<[1], [0], [0], [1], [0, 0, 1, 1], [], []>} : vector<128x128xbf16>, vector<128x32xbf16>, vector<128x32xf32> -> vector<128x32xf32>
    %c0_44 = arith.constant 0 : index
    %c64 = arith.constant 64 : index
    %c0_45 = arith.constant 0 : index
    %107 = vector.load %arg9[%c0_44, %c64, %c0_45] : memref<2x128x128xbf16, #tpu.memory_space<vmem>>, vector<1x32x128xbf16>
    %108 = vector.shape_cast %107 : vector<1x32x128xbf16> to vector<32x128xbf16>
    %109 = arith.truncf %106 : vector<128x32xf32> to vector<128x32xbf16>
    %cst_46 = arith.constant dense<0.000000e+00> : vector<128x128xf32>
    %110 = tpu.matmul %109, %108, %cst_46 {dimension_numbers = #tpu.dot_dimension_numbers<[1], [0], [0], [1], [0, 0, 1, 1], [], []>} : vector<128x32xbf16>, vector<32x128xbf16>, vector<128x128xf32> -> vector<128x128xf32>
    %111 = arith.addf %86, %110 : vector<128x128xf32>
    %112 = vector.extract_strided_slice %37 {offsets = [0, 96], sizes = [128, 32], strides = [1, 1]} : vector<128x384xf32> to vector<128x32xf32>
    %113 = vector.extract_strided_slice %37 {offsets = [0, 224], sizes = [128, 32], strides = [1, 1]} : vector<128x384xf32> to vector<128x32xf32>
    %114 = vector.extract_strided_slice %37 {offsets = [0, 352], sizes = [128, 32], strides = [1, 1]} : vector<128x384xf32> to vector<128x32xf32>
    %115 = arith.truncf %112 : vector<128x32xf32> to vector<128x32xbf16>
    %116 = arith.truncf %113 : vector<128x32xf32> to vector<128x32xbf16>
    %cst_47 = arith.constant dense<0.000000e+00> : vector<128x128xf32>
    %117 = tpu.matmul %115, %116, %cst_47 {dimension_numbers = #tpu.dot_dimension_numbers<[1], [1], [0], [0], [0, 0, 1, 0], [], []>} : vector<128x32xbf16>, vector<128x32xbf16>, vector<128x128xf32> -> vector<128x128xf32>
    %118 = arith.addf %117, %5 : vector<128x128xf32>
    %cst_48 = arith.constant dense<0xFF800000> : vector<128xf32>
    %119 = vector.multi_reduction <maximumf>, %118, %cst_48 [1] : vector<128x128xf32> to vector<128xf32>
    %120 = vector.shape_cast %119 : vector<128xf32> to vector<128x1xf32>
    %121 = vector.broadcast %120 : vector<128x1xf32> to vector<128x128xf32>
    %122 = arith.subf %118, %121 : vector<128x128xf32>
    %123 = math.exp %122 : vector<128x128xf32>
    %cst_49 = arith.constant dense<0.000000e+00> : vector<128xf32>
    %124 = vector.multi_reduction <add>, %123, %cst_49 [1] : vector<128x128xf32> to vector<128xf32>
    %125 = vector.shape_cast %124 : vector<128xf32> to vector<128x1xf32>
    %126 = tpu.reciprocal %125 {approx = true} : vector<128x1xf32> -> vector<128x1xf32>
    %127 = vector.broadcast %126 : vector<128x1xf32> to vector<128x128xf32>
    %128 = arith.mulf %123, %127 : vector<128x128xf32>
    %129 = arith.truncf %128 : vector<128x128xf32> to vector<128x128xbf16>
    %130 = arith.truncf %114 : vector<128x32xf32> to vector<128x32xbf16>
    %cst_50 = arith.constant dense<0.000000e+00> : vector<128x32xf32>
    %131 = tpu.matmul %129, %130, %cst_50 {dimension_numbers = #tpu.dot_dimension_numbers<[1], [0], [0], [1], [0, 0, 1, 1], [], []>} : vector<128x128xbf16>, vector<128x32xbf16>, vector<128x32xf32> -> vector<128x32xf32>
    %c0_51 = arith.constant 0 : index
    %c96 = arith.constant 96 : index
    %c0_52 = arith.constant 0 : index
    %132 = vector.load %arg9[%c0_51, %c96, %c0_52] : memref<2x128x128xbf16, #tpu.memory_space<vmem>>, vector<1x32x128xbf16>
    %133 = vector.shape_cast %132 : vector<1x32x128xbf16> to vector<32x128xbf16>
    %134 = arith.truncf %131 : vector<128x32xf32> to vector<128x32xbf16>
    %cst_53 = arith.constant dense<0.000000e+00> : vector<128x128xf32>
    %135 = tpu.matmul %134, %133, %cst_53 {dimension_numbers = #tpu.dot_dimension_numbers<[1], [0], [0], [1], [0, 0, 1, 1], [], []>} : vector<128x32xbf16>, vector<32x128xbf16>, vector<128x128xf32> -> vector<128x128xf32>
    %136 = arith.addf %111, %135 : vector<128x128xf32>
    %137 = arith.addf %4, %136 : vector<128x128xf32>
    %c0_54 = arith.constant 0 : index
    %c0_55 = arith.constant 0 : index
    %c0_56 = arith.constant 0 : index
    %138 = vector.load %arg10[%c0_54, %c0_55, %c0_56] : memref<2x1x128xf32, #tpu.memory_space<vmem>>, vector<1x1x128xf32>
    %139 = vector.shape_cast %138 : vector<1x1x128xf32> to vector<1x128xf32>
    %140 = vector.broadcast %139 : vector<1x128xf32> to vector<128x128xf32>
    %141 = arith.addf %137, %140 : vector<128x128xf32>
    %c0_57 = arith.constant 0 : index
    %c0_58 = arith.constant 0 : index
    %c0_59 = arith.constant 0 : index
    %142 = vector.load %arg11[%c0_57, %c0_58, %c0_59] : memref<2x1x128xf32, #tpu.memory_space<vmem>>, vector<1x1x128xf32>
    %143 = vector.shape_cast %142 : vector<1x1x128xf32> to vector<1x128xf32>
    %c0_60 = arith.constant 0 : index
    %c0_61 = arith.constant 0 : index
    %c0_62 = arith.constant 0 : index
    %144 = vector.load %arg12[%c0_60, %c0_61, %c0_62] : memref<2x1x128xf32, #tpu.memory_space<vmem>>, vector<1x1x128xf32>
    %145 = vector.shape_cast %144 : vector<1x1x128xf32> to vector<1x128xf32>
    %cst_63 = arith.constant dense<0.000000e+00> : vector<128xf32>
    %146 = vector.multi_reduction <add>, %141, %cst_63 [1] : vector<128x128xf32> to vector<128xf32>
    %147 = vector.shape_cast %146 : vector<128xf32> to vector<128x1xf32>
    %cst_64 = arith.constant 1.280000e+02 : f32
    %148 = vector.broadcast %cst_64 : f32 to vector<128x1xf32>
    %149 = arith.divf %147, %148 : vector<128x1xf32>
    %150 = vector.broadcast %149 : vector<128x1xf32> to vector<128x128xf32>
    %151 = arith.subf %141, %150 : vector<128x128xf32>
    %152 = arith.mulf %151, %151 : vector<128x128xf32>
    %cst_65 = arith.constant dense<0.000000e+00> : vector<128xf32>
    %153 = vector.multi_reduction <add>, %152, %cst_65 [1] : vector<128x128xf32> to vector<128xf32>
    %154 = vector.shape_cast %153 : vector<128xf32> to vector<128x1xf32>
    %cst_66 = arith.constant 1.280000e+02 : f32
    %155 = vector.broadcast %cst_66 : f32 to vector<128x1xf32>
    %156 = arith.divf %154, %155 : vector<128x1xf32>
    %cst_67 = arith.constant 9.99999997E-7 : f32
    %157 = vector.broadcast %cst_67 : f32 to vector<128x1xf32>
    %158 = arith.addf %156, %157 : vector<128x1xf32>
    %159 = math.rsqrt %158 : vector<128x1xf32>
    %160 = vector.broadcast %159 : vector<128x1xf32> to vector<128x128xf32>
    %161 = arith.mulf %151, %160 : vector<128x128xf32>
    %162 = vector.broadcast %143 : vector<1x128xf32> to vector<128x128xf32>
    %163 = arith.mulf %161, %162 : vector<128x128xf32>
    %164 = vector.broadcast %145 : vector<1x128xf32> to vector<128x128xf32>
    %165 = arith.addf %163, %164 : vector<128x128xf32>
    %c0_68 = arith.constant 0 : index
    %c0_69 = arith.constant 0 : index
    %c0_70 = arith.constant 0 : index
    %166 = vector.load %arg13[%c0_68, %c0_69, %c0_70] : memref<2x128x256xbf16, #tpu.memory_space<vmem>>, vector<1x128x256xbf16>
    %167 = vector.shape_cast %166 : vector<1x128x256xbf16> to vector<128x256xbf16>
    %c0_71 = arith.constant 0 : index
    %c0_72 = arith.constant 0 : index
    %c0_73 = arith.constant 0 : index
    %168 = vector.load %arg14[%c0_71, %c0_72, %c0_73] : memref<2x1x256xf32, #tpu.memory_space<vmem>>, vector<1x1x256xf32>
    %169 = vector.shape_cast %168 : vector<1x1x256xf32> to vector<1x256xf32>
    %170 = arith.truncf %165 : vector<128x128xf32> to vector<128x128xbf16>
    %cst_74 = arith.constant dense<0.000000e+00> : vector<128x256xf32>
    %171 = tpu.matmul %170, %167, %cst_74 {dimension_numbers = #tpu.dot_dimension_numbers<[1], [0], [0], [1], [0, 0, 1, 1], [], []>} : vector<128x128xbf16>, vector<128x256xbf16>, vector<128x256xf32> -> vector<128x256xf32>
    %172 = vector.broadcast %169 : vector<1x256xf32> to vector<128x256xf32>
    %173 = arith.addf %171, %172 : vector<128x256xf32>
    %cst_75 = arith.constant 5.000000e-01 : f32
    %174 = vector.broadcast %cst_75 : f32 to vector<128x256xf32>
    %175 = arith.mulf %174, %173 : vector<128x256xf32>
    %cst_76 = arith.constant 4.471500e-02 : f32
    %176 = vector.broadcast %cst_76 : f32 to vector<128x256xf32>
    %177 = arith.mulf %176, %173 : vector<128x256xf32>
    %178 = arith.mulf %177, %173 : vector<128x256xf32>
    %179 = arith.mulf %178, %173 : vector<128x256xf32>
    %180 = arith.addf %173, %179 : vector<128x256xf32>
    %cst_77 = arith.constant 0.797884583 : f32
    %181 = vector.broadcast %cst_77 : f32 to vector<128x256xf32>
    %182 = arith.mulf %181, %180 : vector<128x256xf32>
    %183 = math.tanh %182 : vector<128x256xf32>
    %cst_78 = arith.constant 1.000000e+00 : f32
    %184 = vector.broadcast %cst_78 : f32 to vector<128x256xf32>
    %185 = arith.addf %184, %183 : vector<128x256xf32>
    %186 = arith.mulf %175, %185 : vector<128x256xf32>
    %c0_79 = arith.constant 0 : index
    %c0_80 = arith.constant 0 : index
    %c0_81 = arith.constant 0 : index
    %187 = vector.load %arg15[%c0_79, %c0_80, %c0_81] : memref<2x256x128xbf16, #tpu.memory_space<vmem>>, vector<1x256x128xbf16>
    %188 = vector.shape_cast %187 : vector<1x256x128xbf16> to vector<256x128xbf16>
    %c0_82 = arith.constant 0 : index
    %c0_83 = arith.constant 0 : index
    %c0_84 = arith.constant 0 : index
    %189 = vector.load %arg16[%c0_82, %c0_83, %c0_84] : memref<2x1x128xf32, #tpu.memory_space<vmem>>, vector<1x1x128xf32>
    %190 = vector.shape_cast %189 : vector<1x1x128xf32> to vector<1x128xf32>
    %191 = arith.truncf %186 : vector<128x256xf32> to vector<128x256xbf16>
    %cst_85 = arith.constant dense<0.000000e+00> : vector<128x128xf32>
    %192 = tpu.matmul %191, %188, %cst_85 {dimension_numbers = #tpu.dot_dimension_numbers<[1], [0], [0], [1], [0, 0, 1, 1], [], []>} : vector<128x256xbf16>, vector<256x128xbf16>, vector<128x128xf32> -> vector<128x128xf32>
    %193 = vector.broadcast %190 : vector<1x128xf32> to vector<128x128xf32>
    %194 = arith.addf %192, %193 : vector<128x128xf32>
    %195 = arith.addf %141, %194 : vector<128x128xf32>
    %c1 = arith.constant 1 : index
    %c0_86 = arith.constant 0 : index
    %c0_87 = arith.constant 0 : index
    %196 = vector.load %arg5[%c1, %c0_86, %c0_87] : memref<2x1x128xf32, #tpu.memory_space<vmem>>, vector<1x1x128xf32>
    %197 = vector.shape_cast %196 : vector<1x1x128xf32> to vector<1x128xf32>
    %c1_88 = arith.constant 1 : index
    %c0_89 = arith.constant 0 : index
    %c0_90 = arith.constant 0 : index
    %198 = vector.load %arg6[%c1_88, %c0_89, %c0_90] : memref<2x1x128xf32, #tpu.memory_space<vmem>>, vector<1x1x128xf32>
    %199 = vector.shape_cast %198 : vector<1x1x128xf32> to vector<1x128xf32>
    %cst_91 = arith.constant dense<0.000000e+00> : vector<128xf32>
    %200 = vector.multi_reduction <add>, %195, %cst_91 [1] : vector<128x128xf32> to vector<128xf32>
    %201 = vector.shape_cast %200 : vector<128xf32> to vector<128x1xf32>
    %cst_92 = arith.constant 1.280000e+02 : f32
    %202 = vector.broadcast %cst_92 : f32 to vector<128x1xf32>
    %203 = arith.divf %201, %202 : vector<128x1xf32>
    %204 = vector.broadcast %203 : vector<128x1xf32> to vector<128x128xf32>
    %205 = arith.subf %195, %204 : vector<128x128xf32>
    %206 = arith.mulf %205, %205 : vector<128x128xf32>
    %cst_93 = arith.constant dense<0.000000e+00> : vector<128xf32>
    %207 = vector.multi_reduction <add>, %206, %cst_93 [1] : vector<128x128xf32> to vector<128xf32>
    %208 = vector.shape_cast %207 : vector<128xf32> to vector<128x1xf32>
    %cst_94 = arith.constant 1.280000e+02 : f32
    %209 = vector.broadcast %cst_94 : f32 to vector<128x1xf32>
    %210 = arith.divf %208, %209 : vector<128x1xf32>
    %cst_95 = arith.constant 9.99999997E-7 : f32
    %211 = vector.broadcast %cst_95 : f32 to vector<128x1xf32>
    %212 = arith.addf %210, %211 : vector<128x1xf32>
    %213 = math.rsqrt %212 : vector<128x1xf32>
    %214 = vector.broadcast %213 : vector<128x1xf32> to vector<128x128xf32>
    %215 = arith.mulf %205, %214 : vector<128x128xf32>
    %216 = vector.broadcast %197 : vector<1x128xf32> to vector<128x128xf32>
    %217 = arith.mulf %215, %216 : vector<128x128xf32>
    %218 = vector.broadcast %199 : vector<1x128xf32> to vector<128x128xf32>
    %219 = arith.addf %217, %218 : vector<128x128xf32>
    %c1_96 = arith.constant 1 : index
    %c0_97 = arith.constant 0 : index
    %c0_98 = arith.constant 0 : index
    %220 = vector.load %arg7[%c1_96, %c0_97, %c0_98] : memref<2x128x384xbf16, #tpu.memory_space<vmem>>, vector<1x128x384xbf16>
    %221 = vector.shape_cast %220 : vector<1x128x384xbf16> to vector<128x384xbf16>
    %c1_99 = arith.constant 1 : index
    %c0_100 = arith.constant 0 : index
    %c0_101 = arith.constant 0 : index
    %222 = vector.load %arg8[%c1_99, %c0_100, %c0_101] : memref<2x1x384xf32, #tpu.memory_space<vmem>>, vector<1x1x384xf32>
    %223 = vector.shape_cast %222 : vector<1x1x384xf32> to vector<1x384xf32>
    %224 = arith.truncf %219 : vector<128x128xf32> to vector<128x128xbf16>
    %cst_102 = arith.constant dense<0.000000e+00> : vector<128x384xf32>
    %225 = tpu.matmul %224, %221, %cst_102 {dimension_numbers = #tpu.dot_dimension_numbers<[1], [0], [0], [1], [0, 0, 1, 1], [], []>} : vector<128x128xbf16>, vector<128x384xbf16>, vector<128x384xf32> -> vector<128x384xf32>
    %226 = vector.broadcast %223 : vector<1x384xf32> to vector<128x384xf32>
    %227 = arith.addf %225, %226 : vector<128x384xf32>
    %228 = vector.extract_strided_slice %227 {offsets = [0, 0], sizes = [128, 32], strides = [1, 1]} : vector<128x384xf32> to vector<128x32xf32>
    %229 = vector.extract_strided_slice %227 {offsets = [0, 128], sizes = [128, 32], strides = [1, 1]} : vector<128x384xf32> to vector<128x32xf32>
    %230 = vector.extract_strided_slice %227 {offsets = [0, 256], sizes = [128, 32], strides = [1, 1]} : vector<128x384xf32> to vector<128x32xf32>
    %231 = arith.truncf %228 : vector<128x32xf32> to vector<128x32xbf16>
    %232 = arith.truncf %229 : vector<128x32xf32> to vector<128x32xbf16>
    %cst_103 = arith.constant dense<0.000000e+00> : vector<128x128xf32>
    %233 = tpu.matmul %231, %232, %cst_103 {dimension_numbers = #tpu.dot_dimension_numbers<[1], [1], [0], [0], [0, 0, 1, 0], [], []>} : vector<128x32xbf16>, vector<128x32xbf16>, vector<128x128xf32> -> vector<128x128xf32>
    %234 = arith.addf %233, %5 : vector<128x128xf32>
    %cst_104 = arith.constant dense<0xFF800000> : vector<128xf32>
    %235 = vector.multi_reduction <maximumf>, %234, %cst_104 [1] : vector<128x128xf32> to vector<128xf32>
    %236 = vector.shape_cast %235 : vector<128xf32> to vector<128x1xf32>
    %237 = vector.broadcast %236 : vector<128x1xf32> to vector<128x128xf32>
    %238 = arith.subf %234, %237 : vector<128x128xf32>
    %239 = math.exp %238 : vector<128x128xf32>
    %cst_105 = arith.constant dense<0.000000e+00> : vector<128xf32>
    %240 = vector.multi_reduction <add>, %239, %cst_105 [1] : vector<128x128xf32> to vector<128xf32>
    %241 = vector.shape_cast %240 : vector<128xf32> to vector<128x1xf32>
    %242 = tpu.reciprocal %241 {approx = true} : vector<128x1xf32> -> vector<128x1xf32>
    %243 = vector.broadcast %242 : vector<128x1xf32> to vector<128x128xf32>
    %244 = arith.mulf %239, %243 : vector<128x128xf32>
    %245 = arith.truncf %244 : vector<128x128xf32> to vector<128x128xbf16>
    %246 = arith.truncf %230 : vector<128x32xf32> to vector<128x32xbf16>
    %cst_106 = arith.constant dense<0.000000e+00> : vector<128x32xf32>
    %247 = tpu.matmul %245, %246, %cst_106 {dimension_numbers = #tpu.dot_dimension_numbers<[1], [0], [0], [1], [0, 0, 1, 1], [], []>} : vector<128x128xbf16>, vector<128x32xbf16>, vector<128x32xf32> -> vector<128x32xf32>
    %c1_107 = arith.constant 1 : index
    %c0_108 = arith.constant 0 : index
    %c0_109 = arith.constant 0 : index
    %248 = vector.load %arg9[%c1_107, %c0_108, %c0_109] : memref<2x128x128xbf16, #tpu.memory_space<vmem>>, vector<1x32x128xbf16>
    %249 = vector.shape_cast %248 : vector<1x32x128xbf16> to vector<32x128xbf16>
    %250 = arith.truncf %247 : vector<128x32xf32> to vector<128x32xbf16>
    %cst_110 = arith.constant dense<0.000000e+00> : vector<128x128xf32>
    %251 = tpu.matmul %250, %249, %cst_110 {dimension_numbers = #tpu.dot_dimension_numbers<[1], [0], [0], [1], [0, 0, 1, 1], [], []>} : vector<128x32xbf16>, vector<32x128xbf16>, vector<128x128xf32> -> vector<128x128xf32>
    %252 = vector.extract_strided_slice %227 {offsets = [0, 32], sizes = [128, 32], strides = [1, 1]} : vector<128x384xf32> to vector<128x32xf32>
    %253 = vector.extract_strided_slice %227 {offsets = [0, 160], sizes = [128, 32], strides = [1, 1]} : vector<128x384xf32> to vector<128x32xf32>
    %254 = vector.extract_strided_slice %227 {offsets = [0, 288], sizes = [128, 32], strides = [1, 1]} : vector<128x384xf32> to vector<128x32xf32>
    %255 = arith.truncf %252 : vector<128x32xf32> to vector<128x32xbf16>
    %256 = arith.truncf %253 : vector<128x32xf32> to vector<128x32xbf16>
    %cst_111 = arith.constant dense<0.000000e+00> : vector<128x128xf32>
    %257 = tpu.matmul %255, %256, %cst_111 {dimension_numbers = #tpu.dot_dimension_numbers<[1], [1], [0], [0], [0, 0, 1, 0], [], []>} : vector<128x32xbf16>, vector<128x32xbf16>, vector<128x128xf32> -> vector<128x128xf32>
    %258 = arith.addf %257, %5 : vector<128x128xf32>
    %cst_112 = arith.constant dense<0xFF800000> : vector<128xf32>
    %259 = vector.multi_reduction <maximumf>, %258, %cst_112 [1] : vector<128x128xf32> to vector<128xf32>
    %260 = vector.shape_cast %259 : vector<128xf32> to vector<128x1xf32>
    %261 = vector.broadcast %260 : vector<128x1xf32> to vector<128x128xf32>
    %262 = arith.subf %258, %261 : vector<128x128xf32>
    %263 = math.exp %262 : vector<128x128xf32>
    %cst_113 = arith.constant dense<0.000000e+00> : vector<128xf32>
    %264 = vector.multi_reduction <add>, %263, %cst_113 [1] : vector<128x128xf32> to vector<128xf32>
    %265 = vector.shape_cast %264 : vector<128xf32> to vector<128x1xf32>
    %266 = tpu.reciprocal %265 {approx = true} : vector<128x1xf32> -> vector<128x1xf32>
    %267 = vector.broadcast %266 : vector<128x1xf32> to vector<128x128xf32>
    %268 = arith.mulf %263, %267 : vector<128x128xf32>
    %269 = arith.truncf %268 : vector<128x128xf32> to vector<128x128xbf16>
    %270 = arith.truncf %254 : vector<128x32xf32> to vector<128x32xbf16>
    %cst_114 = arith.constant dense<0.000000e+00> : vector<128x32xf32>
    %271 = tpu.matmul %269, %270, %cst_114 {dimension_numbers = #tpu.dot_dimension_numbers<[1], [0], [0], [1], [0, 0, 1, 1], [], []>} : vector<128x128xbf16>, vector<128x32xbf16>, vector<128x32xf32> -> vector<128x32xf32>
    %c1_115 = arith.constant 1 : index
    %c32_116 = arith.constant 32 : index
    %c0_117 = arith.constant 0 : index
    %272 = vector.load %arg9[%c1_115, %c32_116, %c0_117] : memref<2x128x128xbf16, #tpu.memory_space<vmem>>, vector<1x32x128xbf16>
    %273 = vector.shape_cast %272 : vector<1x32x128xbf16> to vector<32x128xbf16>
    %274 = arith.truncf %271 : vector<128x32xf32> to vector<128x32xbf16>
    %cst_118 = arith.constant dense<0.000000e+00> : vector<128x128xf32>
    %275 = tpu.matmul %274, %273, %cst_118 {dimension_numbers = #tpu.dot_dimension_numbers<[1], [0], [0], [1], [0, 0, 1, 1], [], []>} : vector<128x32xbf16>, vector<32x128xbf16>, vector<128x128xf32> -> vector<128x128xf32>
    %276 = arith.addf %251, %275 : vector<128x128xf32>
    %277 = vector.extract_strided_slice %227 {offsets = [0, 64], sizes = [128, 32], strides = [1, 1]} : vector<128x384xf32> to vector<128x32xf32>
    %278 = vector.extract_strided_slice %227 {offsets = [0, 192], sizes = [128, 32], strides = [1, 1]} : vector<128x384xf32> to vector<128x32xf32>
    %279 = vector.extract_strided_slice %227 {offsets = [0, 320], sizes = [128, 32], strides = [1, 1]} : vector<128x384xf32> to vector<128x32xf32>
    %280 = arith.truncf %277 : vector<128x32xf32> to vector<128x32xbf16>
    %281 = arith.truncf %278 : vector<128x32xf32> to vector<128x32xbf16>
    %cst_119 = arith.constant dense<0.000000e+00> : vector<128x128xf32>
    %282 = tpu.matmul %280, %281, %cst_119 {dimension_numbers = #tpu.dot_dimension_numbers<[1], [1], [0], [0], [0, 0, 1, 0], [], []>} : vector<128x32xbf16>, vector<128x32xbf16>, vector<128x128xf32> -> vector<128x128xf32>
    %283 = arith.addf %282, %5 : vector<128x128xf32>
    %cst_120 = arith.constant dense<0xFF800000> : vector<128xf32>
    %284 = vector.multi_reduction <maximumf>, %283, %cst_120 [1] : vector<128x128xf32> to vector<128xf32>
    %285 = vector.shape_cast %284 : vector<128xf32> to vector<128x1xf32>
    %286 = vector.broadcast %285 : vector<128x1xf32> to vector<128x128xf32>
    %287 = arith.subf %283, %286 : vector<128x128xf32>
    %288 = math.exp %287 : vector<128x128xf32>
    %cst_121 = arith.constant dense<0.000000e+00> : vector<128xf32>
    %289 = vector.multi_reduction <add>, %288, %cst_121 [1] : vector<128x128xf32> to vector<128xf32>
    %290 = vector.shape_cast %289 : vector<128xf32> to vector<128x1xf32>
    %291 = tpu.reciprocal %290 {approx = true} : vector<128x1xf32> -> vector<128x1xf32>
    %292 = vector.broadcast %291 : vector<128x1xf32> to vector<128x128xf32>
    %293 = arith.mulf %288, %292 : vector<128x128xf32>
    %294 = arith.truncf %293 : vector<128x128xf32> to vector<128x128xbf16>
    %295 = arith.truncf %279 : vector<128x32xf32> to vector<128x32xbf16>
    %cst_122 = arith.constant dense<0.000000e+00> : vector<128x32xf32>
    %296 = tpu.matmul %294, %295, %cst_122 {dimension_numbers = #tpu.dot_dimension_numbers<[1], [0], [0], [1], [0, 0, 1, 1], [], []>} : vector<128x128xbf16>, vector<128x32xbf16>, vector<128x32xf32> -> vector<128x32xf32>
    %c1_123 = arith.constant 1 : index
    %c64_124 = arith.constant 64 : index
    %c0_125 = arith.constant 0 : index
    %297 = vector.load %arg9[%c1_123, %c64_124, %c0_125] : memref<2x128x128xbf16, #tpu.memory_space<vmem>>, vector<1x32x128xbf16>
    %298 = vector.shape_cast %297 : vector<1x32x128xbf16> to vector<32x128xbf16>
    %299 = arith.truncf %296 : vector<128x32xf32> to vector<128x32xbf16>
    %cst_126 = arith.constant dense<0.000000e+00> : vector<128x128xf32>
    %300 = tpu.matmul %299, %298, %cst_126 {dimension_numbers = #tpu.dot_dimension_numbers<[1], [0], [0], [1], [0, 0, 1, 1], [], []>} : vector<128x32xbf16>, vector<32x128xbf16>, vector<128x128xf32> -> vector<128x128xf32>
    %301 = arith.addf %276, %300 : vector<128x128xf32>
    %302 = vector.extract_strided_slice %227 {offsets = [0, 96], sizes = [128, 32], strides = [1, 1]} : vector<128x384xf32> to vector<128x32xf32>
    %303 = vector.extract_strided_slice %227 {offsets = [0, 224], sizes = [128, 32], strides = [1, 1]} : vector<128x384xf32> to vector<128x32xf32>
    %304 = vector.extract_strided_slice %227 {offsets = [0, 352], sizes = [128, 32], strides = [1, 1]} : vector<128x384xf32> to vector<128x32xf32>
    %305 = arith.truncf %302 : vector<128x32xf32> to vector<128x32xbf16>
    %306 = arith.truncf %303 : vector<128x32xf32> to vector<128x32xbf16>
    %cst_127 = arith.constant dense<0.000000e+00> : vector<128x128xf32>
    %307 = tpu.matmul %305, %306, %cst_127 {dimension_numbers = #tpu.dot_dimension_numbers<[1], [1], [0], [0], [0, 0, 1, 0], [], []>} : vector<128x32xbf16>, vector<128x32xbf16>, vector<128x128xf32> -> vector<128x128xf32>
    %308 = arith.addf %307, %5 : vector<128x128xf32>
    %cst_128 = arith.constant dense<0xFF800000> : vector<128xf32>
    %309 = vector.multi_reduction <maximumf>, %308, %cst_128 [1] : vector<128x128xf32> to vector<128xf32>
    %310 = vector.shape_cast %309 : vector<128xf32> to vector<128x1xf32>
    %311 = vector.broadcast %310 : vector<128x1xf32> to vector<128x128xf32>
    %312 = arith.subf %308, %311 : vector<128x128xf32>
    %313 = math.exp %312 : vector<128x128xf32>
    %cst_129 = arith.constant dense<0.000000e+00> : vector<128xf32>
    %314 = vector.multi_reduction <add>, %313, %cst_129 [1] : vector<128x128xf32> to vector<128xf32>
    %315 = vector.shape_cast %314 : vector<128xf32> to vector<128x1xf32>
    %316 = tpu.reciprocal %315 {approx = true} : vector<128x1xf32> -> vector<128x1xf32>
    %317 = vector.broadcast %316 : vector<128x1xf32> to vector<128x128xf32>
    %318 = arith.mulf %313, %317 : vector<128x128xf32>
    %319 = arith.truncf %318 : vector<128x128xf32> to vector<128x128xbf16>
    %320 = arith.truncf %304 : vector<128x32xf32> to vector<128x32xbf16>
    %cst_130 = arith.constant dense<0.000000e+00> : vector<128x32xf32>
    %321 = tpu.matmul %319, %320, %cst_130 {dimension_numbers = #tpu.dot_dimension_numbers<[1], [0], [0], [1], [0, 0, 1, 1], [], []>} : vector<128x128xbf16>, vector<128x32xbf16>, vector<128x32xf32> -> vector<128x32xf32>
    %c1_131 = arith.constant 1 : index
    %c96_132 = arith.constant 96 : index
    %c0_133 = arith.constant 0 : index
    %322 = vector.load %arg9[%c1_131, %c96_132, %c0_133] : memref<2x128x128xbf16, #tpu.memory_space<vmem>>, vector<1x32x128xbf16>
    %323 = vector.shape_cast %322 : vector<1x32x128xbf16> to vector<32x128xbf16>
    %324 = arith.truncf %321 : vector<128x32xf32> to vector<128x32xbf16>
    %cst_134 = arith.constant dense<0.000000e+00> : vector<128x128xf32>
    %325 = tpu.matmul %324, %323, %cst_134 {dimension_numbers = #tpu.dot_dimension_numbers<[1], [0], [0], [1], [0, 0, 1, 1], [], []>} : vector<128x32xbf16>, vector<32x128xbf16>, vector<128x128xf32> -> vector<128x128xf32>
    %326 = arith.addf %301, %325 : vector<128x128xf32>
    %327 = arith.addf %195, %326 : vector<128x128xf32>
    %c1_135 = arith.constant 1 : index
    %c0_136 = arith.constant 0 : index
    %c0_137 = arith.constant 0 : index
    %328 = vector.load %arg10[%c1_135, %c0_136, %c0_137] : memref<2x1x128xf32, #tpu.memory_space<vmem>>, vector<1x1x128xf32>
    %329 = vector.shape_cast %328 : vector<1x1x128xf32> to vector<1x128xf32>
    %330 = vector.broadcast %329 : vector<1x128xf32> to vector<128x128xf32>
    %331 = arith.addf %327, %330 : vector<128x128xf32>
    %c1_138 = arith.constant 1 : index
    %c0_139 = arith.constant 0 : index
    %c0_140 = arith.constant 0 : index
    %332 = vector.load %arg11[%c1_138, %c0_139, %c0_140] : memref<2x1x128xf32, #tpu.memory_space<vmem>>, vector<1x1x128xf32>
    %333 = vector.shape_cast %332 : vector<1x1x128xf32> to vector<1x128xf32>
    %c1_141 = arith.constant 1 : index
    %c0_142 = arith.constant 0 : index
    %c0_143 = arith.constant 0 : index
    %334 = vector.load %arg12[%c1_141, %c0_142, %c0_143] : memref<2x1x128xf32, #tpu.memory_space<vmem>>, vector<1x1x128xf32>
    %335 = vector.shape_cast %334 : vector<1x1x128xf32> to vector<1x128xf32>
    %cst_144 = arith.constant dense<0.000000e+00> : vector<128xf32>
    %336 = vector.multi_reduction <add>, %331, %cst_144 [1] : vector<128x128xf32> to vector<128xf32>
    %337 = vector.shape_cast %336 : vector<128xf32> to vector<128x1xf32>
    %cst_145 = arith.constant 1.280000e+02 : f32
    %338 = vector.broadcast %cst_145 : f32 to vector<128x1xf32>
    %339 = arith.divf %337, %338 : vector<128x1xf32>
    %340 = vector.broadcast %339 : vector<128x1xf32> to vector<128x128xf32>
    %341 = arith.subf %331, %340 : vector<128x128xf32>
    %342 = arith.mulf %341, %341 : vector<128x128xf32>
    %cst_146 = arith.constant dense<0.000000e+00> : vector<128xf32>
    %343 = vector.multi_reduction <add>, %342, %cst_146 [1] : vector<128x128xf32> to vector<128xf32>
    %344 = vector.shape_cast %343 : vector<128xf32> to vector<128x1xf32>
    %cst_147 = arith.constant 1.280000e+02 : f32
    %345 = vector.broadcast %cst_147 : f32 to vector<128x1xf32>
    %346 = arith.divf %344, %345 : vector<128x1xf32>
    %cst_148 = arith.constant 9.99999997E-7 : f32
    %347 = vector.broadcast %cst_148 : f32 to vector<128x1xf32>
    %348 = arith.addf %346, %347 : vector<128x1xf32>
    %349 = math.rsqrt %348 : vector<128x1xf32>
    %350 = vector.broadcast %349 : vector<128x1xf32> to vector<128x128xf32>
    %351 = arith.mulf %341, %350 : vector<128x128xf32>
    %352 = vector.broadcast %333 : vector<1x128xf32> to vector<128x128xf32>
    %353 = arith.mulf %351, %352 : vector<128x128xf32>
    %354 = vector.broadcast %335 : vector<1x128xf32> to vector<128x128xf32>
    %355 = arith.addf %353, %354 : vector<128x128xf32>
    %c1_149 = arith.constant 1 : index
    %c0_150 = arith.constant 0 : index
    %c0_151 = arith.constant 0 : index
    %356 = vector.load %arg13[%c1_149, %c0_150, %c0_151] : memref<2x128x256xbf16, #tpu.memory_space<vmem>>, vector<1x128x256xbf16>
    %357 = vector.shape_cast %356 : vector<1x128x256xbf16> to vector<128x256xbf16>
    %c1_152 = arith.constant 1 : index
    %c0_153 = arith.constant 0 : index
    %c0_154 = arith.constant 0 : index
    %358 = vector.load %arg14[%c1_152, %c0_153, %c0_154] : memref<2x1x256xf32, #tpu.memory_space<vmem>>, vector<1x1x256xf32>
    %359 = vector.shape_cast %358 : vector<1x1x256xf32> to vector<1x256xf32>
    %360 = arith.truncf %355 : vector<128x128xf32> to vector<128x128xbf16>
    %cst_155 = arith.constant dense<0.000000e+00> : vector<128x256xf32>
    %361 = tpu.matmul %360, %357, %cst_155 {dimension_numbers = #tpu.dot_dimension_numbers<[1], [0], [0], [1], [0, 0, 1, 1], [], []>} : vector<128x128xbf16>, vector<128x256xbf16>, vector<128x256xf32> -> vector<128x256xf32>
    %362 = vector.broadcast %359 : vector<1x256xf32> to vector<128x256xf32>
    %363 = arith.addf %361, %362 : vector<128x256xf32>
    %cst_156 = arith.constant 5.000000e-01 : f32
    %364 = vector.broadcast %cst_156 : f32 to vector<128x256xf32>
    %365 = arith.mulf %364, %363 : vector<128x256xf32>
    %cst_157 = arith.constant 4.471500e-02 : f32
    %366 = vector.broadcast %cst_157 : f32 to vector<128x256xf32>
    %367 = arith.mulf %366, %363 : vector<128x256xf32>
    %368 = arith.mulf %367, %363 : vector<128x256xf32>
    %369 = arith.mulf %368, %363 : vector<128x256xf32>
    %370 = arith.addf %363, %369 : vector<128x256xf32>
    %cst_158 = arith.constant 0.797884583 : f32
    %371 = vector.broadcast %cst_158 : f32 to vector<128x256xf32>
    %372 = arith.mulf %371, %370 : vector<128x256xf32>
    %373 = math.tanh %372 : vector<128x256xf32>
    %cst_159 = arith.constant 1.000000e+00 : f32
    %374 = vector.broadcast %cst_159 : f32 to vector<128x256xf32>
    %375 = arith.addf %374, %373 : vector<128x256xf32>
    %376 = arith.mulf %365, %375 : vector<128x256xf32>
    %c1_160 = arith.constant 1 : index
    %c0_161 = arith.constant 0 : index
    %c0_162 = arith.constant 0 : index
    %377 = vector.load %arg15[%c1_160, %c0_161, %c0_162] : memref<2x256x128xbf16, #tpu.memory_space<vmem>>, vector<1x256x128xbf16>
    %378 = vector.shape_cast %377 : vector<1x256x128xbf16> to vector<256x128xbf16>
    %c1_163 = arith.constant 1 : index
    %c0_164 = arith.constant 0 : index
    %c0_165 = arith.constant 0 : index
    %379 = vector.load %arg16[%c1_163, %c0_164, %c0_165] : memref<2x1x128xf32, #tpu.memory_space<vmem>>, vector<1x1x128xf32>
    %380 = vector.shape_cast %379 : vector<1x1x128xf32> to vector<1x128xf32>
    %381 = arith.truncf %376 : vector<128x256xf32> to vector<128x256xbf16>
    %cst_166 = arith.constant dense<0.000000e+00> : vector<128x128xf32>
    %382 = tpu.matmul %381, %378, %cst_166 {dimension_numbers = #tpu.dot_dimension_numbers<[1], [0], [0], [1], [0, 0, 1, 1], [], []>} : vector<128x256xbf16>, vector<256x128xbf16>, vector<128x128xf32> -> vector<128x128xf32>
    %383 = vector.broadcast %380 : vector<1x128xf32> to vector<128x128xf32>
    %384 = arith.addf %382, %383 : vector<128x128xf32>
    %385 = arith.addf %331, %384 : vector<128x128xf32>
    %c0_167 = arith.constant 0 : index
    %c0_168 = arith.constant 0 : index
    %386 = vector.load %arg22[%c0_167, %c0_168] : memref<128x128xf32, #tpu.memory_space<vmem>>, vector<128x128xf32>
    tpu.vector_store %arg22[%c0_167, %c0_168], %385 {strides = array<i32>} : memref<128x128xf32, #tpu.memory_space<vmem>>, vector<128x128xf32>,
    %c0_169 = arith.constant 0 : index
    %c0_170 = arith.constant 0 : index
    %387 = tpu.strided_load %arg22[%c0_169, %c0_170] {strides = array<i32: 8, 1>} : memref<128x128xf32, #tpu.memory_space<vmem>>, vector<16x128xf32>
    %c0_171 = arith.constant 0 : index
    %c0_172 = arith.constant 0 : index
    %388 = vector.load %arg17[%c0_171, %c0_172] : memref<1x128xf32, #tpu.memory_space<vmem>>, vector<1x128xf32>
    %c0_173 = arith.constant 0 : index
    %c0_174 = arith.constant 0 : index
    %389 = vector.load %arg18[%c0_173, %c0_174] : memref<1x128xf32, #tpu.memory_space<vmem>>, vector<1x128xf32>
    %cst_175 = arith.constant dense<0.000000e+00> : vector<16xf32>
    %390 = vector.multi_reduction <add>, %387, %cst_175 [1] : vector<16x128xf32> to vector<16xf32>
    %391 = vector.shape_cast %390 : vector<16xf32> to vector<16x1xf32>
    %cst_176 = arith.constant 1.280000e+02 : f32
    %392 = vector.broadcast %cst_176 : f32 to vector<16x1xf32>
    %393 = arith.divf %391, %392 : vector<16x1xf32>
    %394 = vector.broadcast %393 : vector<16x1xf32> to vector<16x128xf32>
    %395 = arith.subf %387, %394 : vector<16x128xf32>
    %396 = arith.mulf %395, %395 : vector<16x128xf32>
    %cst_177 = arith.constant dense<0.000000e+00> : vector<16xf32>
    %397 = vector.multi_reduction <add>, %396, %cst_177 [1] : vector<16x128xf32> to vector<16xf32>
    %398 = vector.shape_cast %397 : vector<16xf32> to vector<16x1xf32>
    %cst_178 = arith.constant 1.280000e+02 : f32
    %399 = vector.broadcast %cst_178 : f32 to vector<16x1xf32>
    %400 = arith.divf %398, %399 : vector<16x1xf32>
    %cst_179 = arith.constant 9.99999997E-7 : f32
    %401 = vector.broadcast %cst_179 : f32 to vector<16x1xf32>
    %402 = arith.addf %400, %401 : vector<16x1xf32>
    %403 = math.rsqrt %402 : vector<16x1xf32>
    %404 = vector.broadcast %403 : vector<16x1xf32> to vector<16x128xf32>
    %405 = arith.mulf %395, %404 : vector<16x128xf32>
    %406 = vector.broadcast %388 : vector<1x128xf32> to vector<16x128xf32>
    %407 = arith.mulf %405, %406 : vector<16x128xf32>
    %408 = vector.broadcast %389 : vector<1x128xf32> to vector<16x128xf32>
    %409 = arith.addf %407, %408 : vector<16x128xf32>
    %c0_180 = arith.constant 0 : index
    %c0_181 = arith.constant 0 : index
    %410 = vector.load %arg19[%c0_180, %c0_181] : memref<128x128xbf16, #tpu.memory_space<vmem>>, vector<128x128xbf16>
    %c0_182 = arith.constant 0 : index
    %c0_183 = arith.constant 0 : index
    %411 = vector.load %arg20[%c0_182, %c0_183] : memref<1x128xf32, #tpu.memory_space<vmem>>, vector<1x128xf32>
    %412 = arith.truncf %409 : vector<16x128xf32> to vector<16x128xbf16>
    %cst_184 = arith.constant dense<0.000000e+00> : vector<16x128xf32>
    %413 = tpu.matmul %412, %410, %cst_184 {dimension_numbers = #tpu.dot_dimension_numbers<[1], [0], [0], [1], [0, 0, 1, 1], [], []>} : vector<16x128xbf16>, vector<128x128xbf16>, vector<16x128xf32> -> vector<16x128xf32>
    %414 = vector.broadcast %411 : vector<1x128xf32> to vector<16x128xf32>
    %415 = arith.addf %413, %414 : vector<16x128xf32>
    %c0_185 = arith.constant 0 : index
    %c0_186 = arith.constant 0 : index
    %416 = vector.load %arg21[%c0_185, %c0_186] : memref<16x128xf32, #tpu.memory_space<vmem>>, vector<16x128xf32>
    tpu.vector_store %arg21[%c0_185, %c0_186], %415 {strides = array<i32>} : memref<16x128xf32, #tpu.memory_space<vmem>>, vector<16x128xf32>,
    return
  }
  func.func @transform_0(%arg0: i32) -> (i32, i32) {
    %c0_i32 = arith.constant 0 : i32
    %c0_i32_0 = arith.constant 0 : i32
    return %arg0, %c0_i32 : i32, i32
  }
  func.func @transform_1(%arg0: i32) -> (i32, i32) {
    %c0_i32 = arith.constant 0 : i32
    %c0_i32_0 = arith.constant 0 : i32
    %c0_i32_1 = arith.constant 0 : i32
    return %c0_i32, %c0_i32_0 : i32, i32
  }
  func.func @transform_2(%arg0: i32) -> (i32, i32) {
    %c0_i32 = arith.constant 0 : i32
    %c0_i32_0 = arith.constant 0 : i32
    %c0_i32_1 = arith.constant 0 : i32
    return %c0_i32, %c0_i32_0 : i32, i32
  }
  func.func @transform_3(%arg0: i32) -> (i32, i32) {
    %c0_i32 = arith.constant 0 : i32
    %c0_i32_0 = arith.constant 0 : i32
    %c0_i32_1 = arith.constant 0 : i32
    return %c0_i32, %c0_i32_0 : i32, i32
  }
  func.func @transform_4(%arg0: i32) -> (i32, i32, i32) {
    %c0_i32 = arith.constant 0 : i32
    %c0_i32_0 = arith.constant 0 : i32
    %c0_i32_1 = arith.constant 0 : i32
    %c0_i32_2 = arith.constant 0 : i32
    return %c0_i32, %c0_i32_0, %c0_i32_1 : i32, i32, i32
  }
  func.func @transform_5(%arg0: i32) -> (i32, i32, i32) {
    %c0_i32 = arith.constant 0 : i32
    %c0_i32_0 = arith.constant 0 : i32
    %c0_i32_1 = arith.constant 0 : i32
    %c0_i32_2 = arith.constant 0 : i32
    return %c0_i32, %c0_i32_0, %c0_i32_1 : i32, i32, i32
  }
  func.func @transform_6(%arg0: i32) -> (i32, i32, i32) {
    %c0_i32 = arith.constant 0 : i32
    %c0_i32_0 = arith.constant 0 : i32
    %c0_i32_1 = arith.constant 0 : i32
    %c0_i32_2 = arith.constant 0 : i32
    return %c0_i32, %c0_i32_0, %c0_i32_1 : i32, i32, i32
  }
  func.func @transform_7(%arg0: i32) -> (i32, i32, i32) {
    %c0_i32 = arith.constant 0 : i32
    %c0_i32_0 = arith.constant 0 : i32
    %c0_i32_1 = arith.constant 0 : i32
    %c0_i32_2 = arith.constant 0 : i32
    return %c0_i32, %c0_i32_0, %c0_i32_1 : i32, i32, i32
  }
  func.func @transform_8(%arg0: i32) -> (i32, i32, i32) {
    %c0_i32 = arith.constant 0 : i32
    %c0_i32_0 = arith.constant 0 : i32
    %c0_i32_1 = arith.constant 0 : i32
    %c0_i32_2 = arith.constant 0 : i32
    return %c0_i32, %c0_i32_0, %c0_i32_1 : i32, i32, i32
  }
  func.func @transform_9(%arg0: i32) -> (i32, i32, i32) {
    %c0_i32 = arith.constant 0 : i32
    %c0_i32_0 = arith.constant 0 : i32
    %c0_i32_1 = arith.constant 0 : i32
    %c0_i32_2 = arith.constant 0 : i32
    return %c0_i32, %c0_i32_0, %c0_i32_1 : i32, i32, i32
  }
  func.func @transform_10(%arg0: i32) -> (i32, i32, i32) {
    %c0_i32 = arith.constant 0 : i32
    %c0_i32_0 = arith.constant 0 : i32
    %c0_i32_1 = arith.constant 0 : i32
    %c0_i32_2 = arith.constant 0 : i32
    return %c0_i32, %c0_i32_0, %c0_i32_1 : i32, i32, i32
  }
  func.func @transform_11(%arg0: i32) -> (i32, i32, i32) {
    %c0_i32 = arith.constant 0 : i32
    %c0_i32_0 = arith.constant 0 : i32
    %c0_i32_1 = arith.constant 0 : i32
    %c0_i32_2 = arith.constant 0 : i32
    return %c0_i32, %c0_i32_0, %c0_i32_1 : i32, i32, i32
  }
  func.func @transform_12(%arg0: i32) -> (i32, i32, i32) {
    %c0_i32 = arith.constant 0 : i32
    %c0_i32_0 = arith.constant 0 : i32
    %c0_i32_1 = arith.constant 0 : i32
    %c0_i32_2 = arith.constant 0 : i32
    return %c0_i32, %c0_i32_0, %c0_i32_1 : i32, i32, i32
  }
  func.func @transform_13(%arg0: i32) -> (i32, i32, i32) {
    %c0_i32 = arith.constant 0 : i32
    %c0_i32_0 = arith.constant 0 : i32
    %c0_i32_1 = arith.constant 0 : i32
    %c0_i32_2 = arith.constant 0 : i32
    return %c0_i32, %c0_i32_0, %c0_i32_1 : i32, i32, i32
  }
  func.func @transform_14(%arg0: i32) -> (i32, i32, i32) {
    %c0_i32 = arith.constant 0 : i32
    %c0_i32_0 = arith.constant 0 : i32
    %c0_i32_1 = arith.constant 0 : i32
    %c0_i32_2 = arith.constant 0 : i32
    return %c0_i32, %c0_i32_0, %c0_i32_1 : i32, i32, i32
  }
  func.func @transform_15(%arg0: i32) -> (i32, i32, i32) {
    %c0_i32 = arith.constant 0 : i32
    %c0_i32_0 = arith.constant 0 : i32
    %c0_i32_1 = arith.constant 0 : i32
    %c0_i32_2 = arith.constant 0 : i32
    return %c0_i32, %c0_i32_0, %c0_i32_1 : i32, i32, i32
  }
  func.func @transform_16(%arg0: i32) -> (i32, i32) {
    %c0_i32 = arith.constant 0 : i32
    %c0_i32_0 = arith.constant 0 : i32
    %c0_i32_1 = arith.constant 0 : i32
    return %c0_i32, %c0_i32_0 : i32, i32
  }
  func.func @transform_17(%arg0: i32) -> (i32, i32) {
    %c0_i32 = arith.constant 0 : i32
    %c0_i32_0 = arith.constant 0 : i32
    %c0_i32_1 = arith.constant 0 : i32
    return %c0_i32, %c0_i32_0 : i32, i32
  }
  func.func @transform_18(%arg0: i32) -> (i32, i32) {
    %c0_i32 = arith.constant 0 : i32
    %c0_i32_0 = arith.constant 0 : i32
    %c0_i32_1 = arith.constant 0 : i32
    return %c0_i32, %c0_i32_0 : i32, i32
  }
  func.func @transform_19(%arg0: i32) -> (i32, i32) {
    %c0_i32 = arith.constant 0 : i32
    %c0_i32_0 = arith.constant 0 : i32
    %c0_i32_1 = arith.constant 0 : i32
    return %c0_i32, %c0_i32_0 : i32, i32
  }
  func.func @transform_20(%arg0: i32) -> (i32, i32) {
    %c0_i32 = arith.constant 0 : i32
    %c0_i32_0 = arith.constant 0 : i32
    return %arg0, %c0_i32 : i32, i32
  }
}

</mosaic_0001>

<llo_original>
// kernel: vit_forward.1
$region0: #{vit_forward.1}
  #allocation0 [shape = 'u32[]', space=smem, size = 0x4, offset = 0x4, fixed_abs, tag = 'smem constant byte address 0x4 - core index']
  #allocation1 [shape = 'u32[72,128]{1,0:T(1,128)}', space=vmem, size = 0x9000, scoped, tag = 'internal scratch']
  #allocation2 [shape = 'f32[128,128]{1,0:T(8,128)}', space=vmem, size = 0x10000, scoped, tag = 'scratch operand']
  %s0 = inlined_call_operand.vmem [shape: bf16[256,768], index: 0, kind: input, shape index: {}]
  %s1 = inlined_call_operand.vmem [shape: f32[128,128], index: 1, kind: input, shape index: {}]
  %s2 = inlined_call_operand.vmem [shape: f32[128,128], index: 2, kind: input, shape index: {}]
  %s3 = inlined_call_operand.vmem [shape: bf16[768,128], index: 3, kind: input, shape index: {}]
  %s4 = inlined_call_operand.vmem [shape: f32[2,1,128], index: 4, kind: input, shape index: {}]
  %s5 = inlined_call_operand.vmem [shape: f32[2,1,128], index: 5, kind: input, shape index: {}]
  %s6 = inlined_call_operand.vmem [shape: bf16[2,128,384], index: 6, kind: input, shape index: {}]
  %s7 = inlined_call_operand.vmem [shape: f32[2,1,384], index: 7, kind: input, shape index: {}]
  %s8 = inlined_call_operand.vmem [shape: bf16[2,128,128], index: 8, kind: input, shape index: {}]
  %s9 = inlined_call_operand.vmem [shape: f32[2,1,128], index: 9, kind: input, shape index: {}]
  %s10 = inlined_call_operand.vmem [shape: f32[2,1,128], index: 10, kind: input, shape index: {}]
  %s11 = inlined_call_operand.vmem [shape: f32[2,1,128], index: 11, kind: input, shape index: {}]
  %s12 = inlined_call_operand.vmem [shape: bf16[2,128,256], index: 12, kind: input, shape index: {}]
  %s13 = inlined_call_operand.vmem [shape: f32[2,1,256], index: 13, kind: input, shape index: {}]
  %s14 = inlined_call_operand.vmem [shape: bf16[2,256,128], index: 14, kind: input, shape index: {}]
  %s15 = inlined_call_operand.vmem [shape: f32[2,1,128], index: 15, kind: input, shape index: {}]
  %s16 = inlined_call_operand.vmem [shape: f32[1,128], index: 16, kind: input, shape index: {}]
  %s17 = inlined_call_operand.vmem [shape: f32[1,128], index: 17, kind: input, shape index: {}]
  %s18 = inlined_call_operand.vmem [shape: bf16[128,128], index: 18, kind: input, shape index: {}]
  %s19 = inlined_call_operand.vmem [shape: f32[1,128], index: 19, kind: input, shape index: {}]
  %s20 = inlined_call_operand.vmem [shape: f32[32,128], index: 20, kind: output, shape index: {}]
  %s21 = sld [smem:[#allocation0]]
  $region113: #{vit_forward.1} parent=0
    _
  %s23 = ssub.s32 1, %s21
  %s24 = scalar_select 0, %s23, %s21
  loop: start=0, step=1, limit=4
  $region2: #{vit_forward.1} parent=0 // loop_pre_header
    _
  $region3: #{vit_forward.1} parent=0 // loop_header
    %s26 = sphi 0, %s30
    %p27 = scmp.ge.s32.totalorder %s26, 4
    %s36 = sphi 0, %s38
    %s39 = sphi 0, %s36
    %s40 = sphi 0, %s39
    %s56 = sphi 0, %s40
    %s60 = sphi 0, %s60
    %s62 = sphi 0, %s60
    %s63 = sphi 0, %s62
    %s77 = sphi 0, %s63
    %s81 = sphi 0, %s81
    %s83 = sphi 0, %s81
    %s84 = sphi 0, %s83
    %s98 = sphi 0, %s84
    %s102 = sphi 0, %s102
    %s104 = sphi 0, %s102
    %s105 = sphi 0, %s104
    %s119 = sphi 0, %s105
    %s123 = sphi 0, %s123
    %s125 = sphi 0, %s123
    %s126 = sphi 0, %s125
    %s140 = sphi 0, %s126
    %s144 = sphi 0, %s144
    %s146 = sphi 0, %s144
    %s147 = sphi 0, %s146
    %s161 = sphi 0, %s147
    %s165 = sphi 0, %s165
    %s167 = sphi 0, %s165
    %s168 = sphi 0, %s167
    %s182 = sphi 0, %s168
    %s186 = sphi 0, %s186
    %s188 = sphi 0, %s186
    %s189 = sphi 0, %s188
    %s203 = sphi 0, %s189
    %s207 = sphi 0, %s207
    %s209 = sphi 0, %s207
    %s210 = sphi 0, %s209
    %s224 = sphi 0, %s210
    %s228 = sphi 0, %s228
    %s230 = sphi 0, %s228
    %s231 = sphi 0, %s230
    %s245 = sphi 0, %s231
    %s249 = sphi 0, %s249
    %s251 = sphi 0, %s249
    %s252 = sphi 0, %s251
    %s266 = sphi 0, %s252
    %s270 = sphi 0, %s270
    %s272 = sphi 0, %s270
    %s273 = sphi 0, %s272
    %s287 = sphi 0, %s273
    %s291 = sphi 0, %s291
    %s293 = sphi 0, %s291
    %s294 = sphi 0, %s293
    %s308 = sphi 0, %s294
    %s312 = sphi 0, %s312
    %s314 = sphi 0, %s312
    %s315 = sphi 0, %s314
    %s329 = sphi 0, %s315
    %s333 = sphi 0, %s333
    %s335 = sphi 0, %s333
    %s336 = sphi 0, %s335
    %s350 = sphi 0, %s336
    %s354 = sphi 0, %s354
    %s356 = sphi 0, %s354
    %s357 = sphi 0, %s356
    %s371 = sphi 0, %s357
    %s375 = sphi 0, %s375
    %s377 = sphi 0, %s375
    %s378 = sphi 0, %s377
    %s392 = sphi 0, %s378
    %s396 = sphi 0, %s396
    %s398 = sphi 0, %s396
    %s399 = sphi 0, %s398
    %s413 = sphi 0, %s399
    %s417 = sphi 0, %s417
    %s419 = sphi 0, %s417
    %s420 = sphi 0, %s419
    %s434 = sphi 0, %s420
    %s438 = sphi 0, %s438
    %s440 = sphi 0, %s438
    %s441 = sphi 0, %s440
    %s455 = sphi 0, %s441
    %s461 = sphi 0, %s463
    %s464 = sphi 0, %s461
    %s465 = sphi 0, %s464
    %s481 = sphi 0, %s465
  $region4: #{vit_forward.1} parent=0 // loop_header_branch
    %29 = sbr.rel (%p27) target = $region8
  $region5: #{vit_forward.1} parent=0 // loop_body
    %s31 = ssub.s32 %s26, 1
    %s32 = ssub.s32 %s26, 2
    %s33 = sadd.s32 %s26, 1
    %s34 = ssub.s32 %s26, %s33
    %p35 = scmp.eq.s32.totalorder %s34, 0
    %s37 = sadd.s32 %s36, 1
    %s38 = scalar_select %p35, %s36, %s37
    %p41 = pneg %p35
    %p42 = scmp.eq.s32.totalorder %s26, 1
    %p43 = por %p41, %p42
    %p44 = scmp.ne.s32.totalorder %s36, %s39
    %p45 = scmp.eq.s32.totalorder %s26, 0
    %p46 = por %p44, %p45
    %p47 = scmp.ne.s32.totalorder %s36, %s39
    %p48 = scmp.eq.s32.totalorder %s31, 1
    %p49 = por %p47, %p48
    %p50 = scmp.ne.s32.totalorder %s39, %s40
    %p51 = scmp.eq.s32.totalorder %s31, 0
    %p52 = por %p50, %p51
    %p53 = scmp.ne.s32.totalorder %s39, %s40
    %p54 = scmp.eq.s32.totalorder %s32, 1
    %p55 = por %p53, %p54
    %p57 = scmp.ne.s32.totalorder %s40, %s56
    %p58 = scmp.eq.s32.totalorder %s32, 0
    %p59 = por %p57, %p58
    %s61 = sadd.s32 %s60, 1
    %p64 = scmp.eq.s32.totalorder %s26, 1
    %p65 = scmp.ne.s32.totalorder %s60, %s62
    %p66 = scmp.eq.s32.totalorder %s26, 0
    %p67 = por %p65, %p66
    %p68 = scmp.ne.s32.totalorder %s60, %s62
    %p69 = scmp.eq.s32.totalorder %s31, 1
    %p70 = por %p68, %p69
    %p71 = scmp.ne.s32.totalorder %s62, %s63
    %p72 = scmp.eq.s32.totalorder %s31, 0
    %p73 = por %p71, %p72
    %p74 = scmp.ne.s32.totalorder %s62, %s63
    %p75 = scmp.eq.s32.totalorder %s32, 1
    %p76 = por %p74, %p75
    %p78 = scmp.ne.s32.totalorder %s63, %s77
    %p79 = scmp.eq.s32.totalorder %s32, 0
    %p80 = por %p78, %p79
    %s82 = sadd.s32 %s81, 1
    %p85 = scmp.eq.s32.totalorder %s26, 1
    %p86 = scmp.ne.s32.totalorder %s81, %s83
    %p87 = scmp.eq.s32.totalorder %s26, 0
    %p88 = por %p86, %p87
    %p89 = scmp.ne.s32.totalorder %s81, %s83
    %p90 = scmp.eq.s32.totalorder %s31, 1
    %p91 = por %p89, %p90
    %p92 = scmp.ne.s32.totalorder %s83, %s84
    %p93 = scmp.eq.s32.totalorder %s31, 0
    %p94 = por %p92, %p93
    %p95 = scmp.ne.s32.totalorder %s83, %s84
    %p96 = scmp.eq.s32.totalorder %s32, 1
    %p97 = por %p95, %p96
    %p99 = scmp.ne.s32.totalorder %s84, %s98
    %p100 = scmp.eq.s32.totalorder %s32, 0
    %p101 = por %p99, %p100
    %s103 = sadd.s32 %s102, 1
    %p106 = scmp.eq.s32.totalorder %s26, 1
    %p107 = scmp.ne.s32.totalorder %s102, %s104
    %p108 = scmp.eq.s32.totalorder %s26, 0
    %p109 = por %p107, %p108
    %p110 = scmp.ne.s32.totalorder %s102, %s104
    %p111 = scmp.eq.s32.totalorder %s31, 1
    %p112 = por %p110, %p111
    %p113 = scmp.ne.s32.totalorder %s104, %s105
    %p114 = scmp.eq.s32.totalorder %s31, 0
    %p115 = por %p113, %p114
    %p116 = scmp.ne.s32.totalorder %s104, %s105
    %p117 = scmp.eq.s32.totalorder %s32, 1
    %p118 = por %p116, %p117
    %p120 = scmp.ne.s32.totalorder %s105, %s119
    %p121 = scmp.eq.s32.totalorder %s32, 0
    %p122 = por %p120, %p121
    %s124 = sadd.s32 %s123, 1
    %p127 = scmp.eq.s32.totalorder %s26, 1
    %p128 = scmp.ne.s32.totalorder %s123, %s125
    %p129 = scmp.eq.s32.totalorder %s26, 0
    %p130 = por %p128, %p129
    %p131 = scmp.ne.s32.totalorder %s123, %s125
    %p132 = scmp.eq.s32.totalorder %s31, 1
    %p133 = por %p131, %p132
    %p134 = scmp.ne.s32.totalorder %s125, %s126
    %p135 = scmp.eq.s32.totalorder %s31, 0
    %p136 = por %p134, %p135
    %p137 = scmp.ne.s32.totalorder %s125, %s126
    %p138 = scmp.eq.s32.totalorder %s32, 1
    %p139 = por %p137, %p138
    %p141 = scmp.ne.s32.totalorder %s126, %s140
    %p142 = scmp.eq.s32.totalorder %s32, 0
    %p143 = por %p141, %p142
    %s145 = sadd.s32 %s144, 1
    %p148 = scmp.eq.s32.totalorder %s26, 1
    %p149 = scmp.ne.s32.totalorder %s144, %s146
    %p150 = scmp.eq.s32.totalorder %s26, 0
    %p151 = por %p149, %p150
    %p152 = scmp.ne.s32.totalorder %s144, %s146
    %p153 = scmp.eq.s32.totalorder %s31, 1
    %p154 = por %p152, %p153
    %p155 = scmp.ne.s32.totalorder %s146, %s147
    %p156 = scmp.eq.s32.totalorder %s31, 0
    %p157 = por %p155, %p156
    %p158 = scmp.ne.s32.totalorder %s146, %s147
    %p159 = scmp.eq.s32.totalorder %s32, 1
    %p160 = por %p158, %p159
    %p162 = scmp.ne.s32.totalorder %s147, %s161
    %p163 = scmp.eq.s32.totalorder %s32, 0
    %p164 = por %p162, %p163
    %s166 = sadd.s32 %s165, 1
    %p169 = scmp.eq.s32.totalorder %s26, 1
    %p170 = scmp.ne.s32.totalorder %s165, %s167
    %p171 = scmp.eq.s32.totalorder %s26, 0
    %p172 = por %p170, %p171
    %p173 = scmp.ne.s32.totalorder %s165, %s167
    %p174 = scmp.eq.s32.totalorder %s31, 1
    %p175 = por %p173, %p174
    %p176 = scmp.ne.s32.totalorder %s167, %s168
    %p177 = scmp.eq.s32.totalorder %s31, 0
    %p178 = por %p176, %p177
    %p179 = scmp.ne.s32.totalorder %s167, %s168
    %p180 = scmp.eq.s32.totalorder %s32, 1
    %p181 = por %p179, %p180
    %p183 = scmp.ne.s32.totalorder %s168, %s182
    %p184 = scmp.eq.s32.totalorder %s32, 0
    %p185 = por %p183, %p184
    %s187 = sadd.s32 %s186, 1
    %p190 = scmp.eq.s32.totalorder %s26, 1
    %p191 = scmp.ne.s32.totalorder %s186, %s188
    %p192 = scmp.eq.s32.totalorder %s26, 0
    %p193 = por %p191, %p192
    %p194 = scmp.ne.s32.totalorder %s186, %s188
    %p195 = scmp.eq.s32.totalorder %s31, 1
    %p196 = por %p194, %p195
    %p197 = scmp.ne.s32.totalorder %s188, %s189
    %p198 = scmp.eq.s32.totalorder %s31, 0
    %p199 = por %p197, %p198
    %p200 = scmp.ne.s32.totalorder %s188, %s189
    %p201 = scmp.eq.s32.totalorder %s32, 1
    %p202 = por %p200, %p201
    %p204 = scmp.ne.s32.totalorder %s189, %s203
    %p205 = scmp.eq.s32.totalorder %s32, 0
    %p206 = por %p204, %p205
    %s208 = sadd.s32 %s207, 1
    %p211 = scmp.eq.s32.totalorder %s26, 1
    %p212 = scmp.ne.s32.totalorder %s207, %s209
    %p213 = scmp.eq.s32.totalorder %s26, 0
    %p214 = por %p212, %p213
    %p215 = scmp.ne.s32.totalorder %s207, %s209
    %p216 = scmp.eq.s32.totalorder %s31, 1
    %p217 = por %p215, %p216
    %p218 = scmp.ne.s32.totalorder %s209, %s210
    %p219 = scmp.eq.s32.totalorder %s31, 0
    %p220 = por %p218, %p219
    %p221 = scmp.ne.s32.totalorder %s209, %s210
    %p222 = scmp.eq.s32.totalorder %s32, 1
    %p223 = por %p221, %p222
    %p225 = scmp.ne.s32.totalorder %s210, %s224
    %p226 = scmp.eq.s32.totalorder %s32, 0
    %p227 = por %p225, %p226
    %s229 = sadd.s32 %s228, 1
    %p232 = scmp.eq.s32.totalorder %s26, 1
    %p233 = scmp.ne.s32.totalorder %s228, %s230
    %p234 = scmp.eq.s32.totalorder %s26, 0
    %p235 = por %p233, %p234
    %p236 = scmp.ne.s32.totalorder %s228, %s230
    %p237 = scmp.eq.s32.totalorder %s31, 1
    %p238 = por %p236, %p237
    %p239 = scmp.ne.s32.totalorder %s230, %s231
    %p240 = scmp.eq.s32.totalorder %s31, 0
    %p241 = por %p239, %p240
    %p242 = scmp.ne.s32.totalorder %s230, %s231
    %p243 = scmp.eq.s32.totalorder %s32, 1
    %p244 = por %p242, %p243
    %p246 = scmp.ne.s32.totalorder %s231, %s245
    %p247 = scmp.eq.s32.totalorder %s32, 0
    %p248 = por %p246, %p247
    %s250 = sadd.s32 %s249, 1
    %p253 = scmp.eq.s32.totalorder %s26, 1
    %p254 = scmp.ne.s32.totalorder %s249, %s251
    %p255 = scmp.eq.s32.totalorder %s26, 0
    %p256 = por %p254, %p255
    %p257 = scmp.ne.s32.totalorder %s249, %s251
    %p258 = scmp.eq.s32.totalorder %s31, 1
    %p259 = por %p257, %p258
    %p260 = scmp.ne.s32.totalorder %s251, %s252
    %p261 = scmp.eq.s32.totalorder %s31, 0
    %p262 = por %p260, %p261
    %p263 = scmp.ne.s32.totalorder %s251, %s252
    %p264 = scmp.eq.s32.totalorder %s32, 1
    %p265 = por %p263, %p264
    %p267 = scmp.ne.s32.totalorder %s252, %s266
    %p268 = scmp.eq.s32.totalorder %s32, 0
    %p269 = por %p267, %p268
    %s271 = sadd.s32 %s270, 1
    %p274 = scmp.eq.s32.totalorder %s26, 1
    %p275 = scmp.ne.s32.totalorder %s270, %s272
    %p276 = scmp.eq.s32.totalorder %s26, 0
    %p277 = por %p275, %p276
    %p278 = scmp.ne.s32.totalorder %s270, %s272
    %p279 = scmp.eq.s32.totalorder %s31, 1
    %p280 = por %p278, %p279
    %p281 = scmp.ne.s32.totalorder %s272, %s273
    %p282 = scmp.eq.s32.totalorder %s31, 0
    %p283 = por %p281, %p282
    %p284 = scmp.ne.s32.totalorder %s272, %s273
    %p285 = scmp.eq.s32.totalorder %s32, 1
    %p286 = por %p284, %p285
    %p288 = scmp.ne.s32.totalorder %s273, %s287
    %p289 = scmp.eq.s32.totalorder %s32, 0
    %p290 = por %p288, %p289
    %s292 = sadd.s32 %s291, 1
    %p295 = scmp.eq.s32.totalorder %s26, 1
    %p296 = scmp.ne.s32.totalorder %s291, %s293
    %p297 = scmp.eq.s32.totalorder %s26, 0
    %p298 = por %p296, %p297
    %p299 = scmp.ne.s32.totalorder %s291, %s293
    %p300 = scmp.eq.s32.totalorder %s31, 1
    %p301 = por %p299, %p300
    %p302 = scmp.ne.s32.totalorder %s293, %s294
    %p303 = scmp.eq.s32.totalorder %s31, 0
    %p304 = por %p302, %p303
    %p305 = scmp.ne.s32.totalorder %s293, %s294
    %p306 = scmp.eq.s32.totalorder %s32, 1
    %p307 = por %p305, %p306
    %p309 = scmp.ne.s32.totalorder %s294, %s308
    %p310 = scmp.eq.s32.totalorder %s32, 0
    %p311 = por %p309, %p310
    %s313 = sadd.s32 %s312, 1
    %p316 = scmp.eq.s32.totalorder %s26, 1
    %p317 = scmp.ne.s32.totalorder %s312, %s314
    %p318 = scmp.eq.s32.totalorder %s26, 0
    %p319 = por %p317, %p318
    %p320 = scmp.ne.s32.totalorder %s312, %s314
    %p321 = scmp.eq.s32.totalorder %s31, 1
    %p322 = por %p320, %p321
    %p323 = scmp.ne.s32.totalorder %s314, %s315
    %p324 = scmp.eq.s32.totalorder %s31, 0
    %p325 = por %p323, %p324
    %p326 = scmp.ne.s32.totalorder %s314, %s315
    %p327 = scmp.eq.s32.totalorder %s32, 1
    %p328 = por %p326, %p327
    %p330 = scmp.ne.s32.totalorder %s315, %s329
    %p331 = scmp.eq.s32.totalorder %s32, 0
    %p332 = por %p330, %p331
    %s334 = sadd.s32 %s333, 1
    %p337 = scmp.eq.s32.totalorder %s26, 1
    %p338 = scmp.ne.s32.totalorder %s333, %s335
    %p339 = scmp.eq.s32.totalorder %s26, 0
    %p340 = por %p338, %p339
    %p341 = scmp.ne.s32.totalorder %s333, %s335
    %p342 = scmp.eq.s32.totalorder %s31, 1
    %p343 = por %p341, %p342
    %p344 = scmp.ne.s32.totalorder %s335, %s336
    %p345 = scmp.eq.s32.totalorder %s31, 0
    %p346 = por %p344, %p345
    %p347 = scmp.ne.s32.totalorder %s335, %s336
    %p348 = scmp.eq.s32.totalorder %s32, 1
    %p349 = por %p347, %p348
    %p351 = scmp.ne.s32.totalorder %s336, %s350
    %p352 = scmp.eq.s32.totalorder %s32, 0
    %p353 = por %p351, %p352
    %s355 = sadd.s32 %s354, 1
    %p358 = scmp.eq.s32.totalorder %s26, 1
    %p359 = scmp.ne.s32.totalorder %s354, %s356
    %p360 = scmp.eq.s32.totalorder %s26, 0
    %p361 = por %p359, %p360
    %p362 = scmp.ne.s32.totalorder %s354, %s356
    %p363 = scmp.eq.s32.totalorder %s31, 1
    %p364 = por %p362, %p363
    %p365 = scmp.ne.s32.totalorder %s356, %s357
    %p366 = scmp.eq.s32.totalorder %s31, 0
    %p367 = por %p365, %p366
    %p368 = scmp.ne.s32.totalorder %s356, %s357
    %p369 = scmp.eq.s32.totalorder %s32, 1
    %p370 = por %p368, %p369
    %p372 = scmp.ne.s32.totalorder %s357, %s371
    %p373 = scmp.eq.s32.totalorder %s32, 0
    %p374 = por %p372, %p373
    %s376 = sadd.s32 %s375, 1
    %p379 = scmp.eq.s32.totalorder %s26, 1
    %p380 = scmp.ne.s32.totalorder %s375, %s377
    %p381 = scmp.eq.s32.totalorder %s26, 0
    %p382 = por %p380, %p381
    %p383 = scmp.ne.s32.totalorder %s375, %s377
    %p384 = scmp.eq.s32.totalorder %s31, 1
    %p385 = por %p383, %p384
    %p386 = scmp.ne.s32.totalorder %s377, %s378
    %p387 = scmp.eq.s32.totalorder %s31, 0
    %p388 = por %p386, %p387
    %p389 = scmp.ne.s32.totalorder %s377, %s378
    %p390 = scmp.eq.s32.totalorder %s32, 1
    %p391 = por %p389, %p390
    %p393 = scmp.ne.s32.totalorder %s378, %s392
    %p394 = scmp.eq.s32.totalorder %s32, 0
    %p395 = por %p393, %p394
    %s397 = sadd.s32 %s396, 1
    %p400 = scmp.eq.s32.totalorder %s26, 1
    %p401 = scmp.ne.s32.totalorder %s396, %s398
    %p402 = scmp.eq.s32.totalorder %s26, 0
    %p403 = por %p401, %p402
    %p404 = scmp.ne.s32.totalorder %s396, %s398
    %p405 = scmp.eq.s32.totalorder %s31, 1
    %p406 = por %p404, %p405
    %p407 = scmp.ne.s32.totalorder %s398, %s399
    %p408 = scmp.eq.s32.totalorder %s31, 0
    %p409 = por %p407, %p408
    %p410 = scmp.ne.s32.totalorder %s398, %s399
    %p411 = scmp.eq.s32.totalorder %s32, 1
    %p412 = por %p410, %p411
    %p414 = scmp.ne.s32.totalorder %s399, %s413
    %p415 = scmp.eq.s32.totalorder %s32, 0
    %p416 = por %p414, %p415
    %s418 = sadd.s32 %s417, 1
    %p421 = scmp.eq.s32.totalorder %s26, 1
    %p422 = scmp.ne.s32.totalorder %s417, %s419
    %p423 = scmp.eq.s32.totalorder %s26, 0
    %p424 = por %p422, %p423
    %p425 = scmp.ne.s32.totalorder %s417, %s419
    %p426 = scmp.eq.s32.totalorder %s31, 1
    %p427 = por %p425, %p426
    %p428 = scmp.ne.s32.totalorder %s419, %s420
    %p429 = scmp.eq.s32.totalorder %s31, 0
    %p430 = por %p428, %p429
    %p431 = scmp.ne.s32.totalorder %s419, %s420
    %p432 = scmp.eq.s32.totalorder %s32, 1
    %p433 = por %p431, %p432
    %p435 = scmp.ne.s32.totalorder %s420, %s434
    %p436 = scmp.eq.s32.totalorder %s32, 0
    %p437 = por %p435, %p436
    %s439 = sadd.s32 %s438, 1
    %p442 = scmp.eq.s32.totalorder %s26, 1
    %p443 = scmp.ne.s32.totalorder %s438, %s440
    %p444 = scmp.eq.s32.totalorder %s26, 0
    %p445 = por %p443, %p444
    %p446 = scmp.ne.s32.totalorder %s438, %s440
    %p447 = scmp.eq.s32.totalorder %s31, 1
    %p448 = por %p446, %p447
    %p449 = scmp.ne.s32.totalorder %s440, %s441
    %p450 = scmp.eq.s32.totalorder %s31, 0
    %p451 = por %p449, %p450
    %p452 = scmp.ne.s32.totalorder %s440, %s441
    %p453 = scmp.eq.s32.totalorder %s32, 1
    %p454 = por %p452, %p453
    %p456 = scmp.ne.s32.totalorder %s441, %s455
    %p457 = scmp.eq.s32.totalorder %s32, 0
    %p458 = por %p456, %p457
    %s459 = ssub.s32 %s26, %s33
    %p460 = scmp.eq.s32.totalorder %s459, 0
    %s462 = sadd.s32 %s461, 1
    %s463 = scalar_select %p460, %s461, %s462
    %p466 = pneg %p460
    %p467 = scmp.eq.s32.totalorder %s26, 1
    %p468 = por %p466, %p467
    %p469 = scmp.ne.s32.totalorder %s461, %s464
    %p470 = scmp.eq.s32.totalorder %s26, 0
    %p471 = por %p469, %p470
    %p472 = scmp.ne.s32.totalorder %s461, %s464
    %p473 = scmp.eq.s32.totalorder %s31, 1
    %p474 = por %p472, %p473
    %p475 = scmp.ne.s32.totalorder %s464, %s465
    %p476 = scmp.eq.s32.totalorder %s31, 0
    %p477 = por %p475, %p476
    %p478 = scmp.ne.s32.totalorder %s464, %s465
    %p479 = scmp.eq.s32.totalorder %s32, 1
    %p480 = por %p478, %p479
    %p482 = scmp.ne.s32.totalorder %s465, %s481
    %p483 = scmp.eq.s32.totalorder %s32, 0
    %p484 = por %p482, %p483
    %p485 = scmp.le.s32.totalorder 1, %s26
    %p486 = scmp.lt.s32.totalorder %s26, 3
    %p487 = pnand %p485, %p486
    %p488 = pneg %p487
    // Predicated region
    $region9: #{vit_forward.1} parent=5 // pred_check
      _
    $region10: #{vit_forward.1} parent=5 // pred_check_branch
      %490 = sbr.rel (%p487) target = $region12
    $region11: #{vit_forward.1} parent=5 // pred_region
      %s491 = ssub.s32 %s26, 1
      // Predicated region
      $region13: #{vit_forward.1} parent=11 // pred_check
        %p492 = pneg %p73
      $region14: #{vit_forward.1} parent=11 // pred_check_branch
        %494 = sbr.rel (%p492) target = $region16
      $region15: #{vit_forward.1} parent=11 // pred_region
        _
      $region16: #{vit_forward.1} parent=11 // pred_fallthru
        _
      // Predicated region
      $region17: #{vit_forward.1} parent=11 // pred_check
        %p495 = pneg %p94
      $region18: #{vit_forward.1} parent=11 // pred_check_branch
        %497 = sbr.rel (%p495) target = $region20
      $region19: #{vit_forward.1} parent=11 // pred_region
        _
      $region20: #{vit_forward.1} parent=11 // pred_fallthru
        _
      // Predicated region
      $region21: #{vit_forward.1} parent=11 // pred_check
        %p498 = pneg %p115
      $region22: #{vit_forward.1} parent=11 // pred_check_branch
        %500 = sbr.rel (%p498) target = $region24
      $region23: #{vit_forward.1} parent=11 // pred_region
        _
      $region24: #{vit_forward.1} parent=11 // pred_fallthru
        _
      // Predicated region
      $region25: #{vit_forward.1} parent=11 // pred_check
        %p501 = pneg %p136
      $region26: #{vit_forward.1} parent=11 // pred_check_branch
        %503 = sbr.rel (%p501) target = $region28
      $region27: #{vit_forward.1} parent=11 // pred_region
        _
      $region28: #{vit_forward.1} parent=11 // pred_fallthru
        _
      // Predicated region
      $region29: #{vit_forward.1} parent=11 // pred_check
        %p504 = pneg %p157
      $region30: #{vit_forward.1} parent=11 // pred_check_branch
        %506 = sbr.rel (%p504) target = $region32
      $region31: #{vit_forward.1} parent=11 // pred_region
        _
      $region32: #{vit_forward.1} parent=11 // pred_fallthru
        _
      // Predicated region
      $region33: #{vit_forward.1} parent=11 // pred_check
        %p507 = pneg %p178
      $region34: #{vit_forward.1} parent=11 // pred_check_branch
        %509 = sbr.rel (%p507) target = $region36
      $region35: #{vit_forward.1} parent=11 // pred_region
        _
      $region36: #{vit_forward.1} parent=11 // pred_fallthru
        _
      // Predicated region
      $region37: #{vit_forward.1} parent=11 // pred_check
        %p510 = pneg %p199
      $region38: #{vit_forward.1} parent=11 // pred_check_branch
        %512 = sbr.rel (%p510) target = $region40
      $region39: #{vit_forward.1} parent=11 // pred_region
        _
      $region40: #{vit_forward.1} parent=11 // pred_fallthru
        _
      // Predicated region
      $region41: #{vit_forward.1} parent=11 // pred_check
        %p513 = pneg %p220
      $region42: #{vit_forward.1} parent=11 // pred_check_branch
        %515 = sbr.rel (%p513) target = $region44
      $region43: #{vit_forward.1} parent=11 // pred_region
        _
      $region44: #{vit_forward.1} parent=11 // pred_fallthru
        _
      // Predicated region
      $region45: #{vit_forward.1} parent=11 // pred_check
        %p516 = pneg %p241
      $region46: #{vit_forward.1} parent=11 // pred_check_branch
        %518 = sbr.rel (%p516) target = $region48
      $region47: #{vit_forward.1} parent=11 // pred_region
        _
      $region48: #{vit_forward.1} parent=11 // pred_fallthru
        _
      // Predicated region
      $region49: #{vit_forward.1} parent=11 // pred_check
        %p519 = pneg %p262
      $region50: #{vit_forward.1} parent=11 // pred_check_branch
        %521 = sbr.rel (%p519) target = $region52
      $region51: #{vit_forward.1} parent=11 // pred_region
        _
      $region52: #{vit_forward.1} parent=11 // pred_fallthru
        _
      // Predicated region
      $region53: #{vit_forward.1} parent=11 // pred_check
        %p522 = pneg %p283
      $region54: #{vit_forward.1} parent=11 // pred_check_branch
        %524 = sbr.rel (%p522) target = $region56
      $region55: #{vit_forward.1} parent=11 // pred_region
        _
      $region56: #{vit_forward.1} parent=11 // pred_fallthru
        _
      // Predicated region
      $region57: #{vit_forward.1} parent=11 // pred_check
        %p525 = pneg %p304
      $region58: #{vit_forward.1} parent=11 // pred_check_branch
        %527 = sbr.rel (%p525) target = $region60
      $region59: #{vit_forward.1} parent=11 // pred_region
        _
      $region60: #{vit_forward.1} parent=11 // pred_fallthru
        _
      // Predicated region
      $region61: #{vit_forward.1} parent=11 // pred_check
        %p528 = pneg %p325
      $region62: #{vit_forward.1} parent=11 // pred_check_branch
        %530 = sbr.rel (%p528) target = $region64
      $region63: #{vit_forward.1} parent=11 // pred_region
        _
      $region64: #{vit_forward.1} parent=11 // pred_fallthru
        _
      // Predicated region
      $region65: #{vit_forward.1} parent=11 // pred_check
        %p531 = pneg %p346
      $region66: #{vit_forward.1} parent=11 // pred_check_branch
        %533 = sbr.rel (%p531) target = $region68
      $region67: #{vit_forward.1} parent=11 // pred_region
        _
      $region68: #{vit_forward.1} parent=11 // pred_fallthru
        _
      // Predicated region
      $region69: #{vit_forward.1} parent=11 // pred_check
        %p534 = pneg %p367
      $region70: #{vit_forward.1} parent=11 // pred_check_branch
        %536 = sbr.rel (%p534) target = $region72
      $region71: #{vit_forward.1} parent=11 // pred_region
        _
      $region72: #{vit_forward.1} parent=11 // pred_fallthru
        _
      // Predicated region
      $region73: #{vit_forward.1} parent=11 // pred_check
        %p537 = pneg %p388
      $region74: #{vit_forward.1} parent=11 // pred_check_branch
        %539 = sbr.rel (%p537) target = $region76
      $region75: #{vit_forward.1} parent=11 // pred_region
        _
      $region76: #{vit_forward.1} parent=11 // pred_fallthru
        _
      // Predicated region
      $region77: #{vit_forward.1} parent=11 // pred_check
        %p540 = pneg %p409
      $region78: #{vit_forward.1} parent=11 // pred_check_branch
        %542 = sbr.rel (%p540) target = $region80
      $region79: #{vit_forward.1} parent=11 // pred_region
        _
      $region80: #{vit_forward.1} parent=11 // pred_fallthru
        _
      // Predicated region
      $region81: #{vit_forward.1} parent=11 // pred_check
        %p543 = pneg %p430
      $region82: #{vit_forward.1} parent=11 // pred_check_branch
        %545 = sbr.rel (%p543) target = $region84
      $region83: #{vit_forward.1} parent=11 // pred_region
        _
      $region84: #{vit_forward.1} parent=11 // pred_fallthru
        _
      // Predicated region
      $region85: #{vit_forward.1} parent=11 // pred_check
        %p546 = pneg %p451
      $region86: #{vit_forward.1} parent=11 // pred_check_branch
        %548 = sbr.rel (%p546) target = $region88
      $region87: #{vit_forward.1} parent=11 // pred_region
        _
      $region88: #{vit_forward.1} parent=11 // pred_fallthru
        _
    $region12: #{vit_forward.1} parent=5 // pred_fallthru
      _
    %p549 = scmp.lt.s32.totalorder %s26, 2
    // Predicated region
    $region89: #{vit_forward.1} parent=5 // pred_check
      %p550 = pneg %p549
    $region90: #{vit_forward.1} parent=5 // pred_check_branch
      %552 = sbr.rel (%p550) target = $region92
    $region91: #{vit_forward.1} parent=5 // pred_region
      // Predicated region
      $region93: #{vit_forward.1} parent=91 // pred_check
        %p553 = pneg %p46
      $region94: #{vit_forward.1} parent=91 // pred_check_branch
        %555 = sbr.rel (%p553) target = $region96
      $region95: #{vit_forward.1} parent=91 // pred_region
        %s556 = smul.u32 16, %s26
        %p557 = scmp.lt.s32.totalorder %s556, 31
        %s558 = scalar_select %p557, %s556, 31
        %s559 = smul.addr %s558, 6
        %s560 = smul.addr %s559, 4
        %s561 = scalar_lea.vmem %s0, %s560
        %s562 = smul.u32 16, %s26
      $region96: #{vit_forward.1} parent=91 // pred_fallthru
        _
    $region92: #{vit_forward.1} parent=5 // pred_fallthru
      _
    %p563 = scmp.le.s32.totalorder 1, %s26
    %p564 = scmp.lt.s32.totalorder %s26, 3
    %p565 = pnand %p563, %p564
    %p566 = pneg %p565
    // Predicated region
    $region97: #{vit_forward.1} parent=5 // pred_check
      _
    $region98: #{vit_forward.1} parent=5 // pred_check_branch
      %568 = sbr.rel (%p565) target = $region100
    $region99: #{vit_forward.1} parent=5 // pred_region
      %s569 = ssub.s32 %s26, 1
      %s570 = smul.u32 16, %s31
      %p571 = scmp.lt.s32.totalorder %s570, 31
      %s572 = scalar_select %p571, %s570, 31
      %s573 = smul.addr %s572, 6
      %s574 = smul.addr %s573, 4
      %s575 = scalar_lea.vmem %s0, %s574
      %p576 = pneg %p52
      %p577 = pneg %p49
      %p578 = pneg %p73
      %p579 = pneg %p70
      %p580 = pneg %p94
      %p581 = pneg %p91
      %p582 = pneg %p115
      %p583 = pneg %p112
      %p584 = pneg %p136
      %p585 = pneg %p133
      %p586 = pneg %p157
      %p587 = pneg %p154
      %p588 = pneg %p178
      %p589 = pneg %p175
      %p590 = pneg %p199
      %p591 = pneg %p196
      %p592 = pneg %p220
      %p593 = pneg %p217
      %p594 = pneg %p241
      %p595 = pneg %p238
      %p596 = pneg %p262
      %p597 = pneg %p259
      %p598 = pneg %p283
      %p599 = pneg %p280
      %p600 = pneg %p304
      %p601 = pneg %p301
      %p602 = pneg %p325
      %p603 = pneg %p322
      %p604 = pneg %p346
      %p605 = pneg %p343
      %p606 = pneg %p367
      %p607 = pneg %p364
      %p608 = pneg %p388
      %p609 = pneg %p385
      %p610 = pneg %p409
      %p611 = pneg %p406
      %p612 = pneg %p430
      %p613 = pneg %p427
      %p614 = pneg %p451
      %p615 = pneg %p448
      %p616 = pneg %p477
      %p617 = pneg %p474
      %s618 = smul.u32 2, %s31
      %p619 = scmp.lt.s32.totalorder %s618, 3
      %s620 = scalar_select %p619, %s618, 3
      %s621 = smul.addr %s620, 8
      %s622 = scalar_lea.vmem %s20, %s621
      %s623 = smul.u32 16, %s31
      %p624 = scmp.lt.s32.totalorder %s623, 31
      %s625 = scalar_select %p624, %s623, 31
      %s626 = smul.addr %s625, 6
      %s627 = smul.addr %s626, 4
      %s628 = scalar_lea.vmem %s0, %s627
      %s629 = smul.u32 16, %s31
      %s630 = smul.u32 2, %s31
      %p631 = scmp.lt.s32.totalorder %s630, 3
      %s632 = scalar_select %p631, %s630, 3
      %s633 = smul.addr %s632, 8
      %s634 = scalar_lea.vmem %s20, %s633
      %s635 = smul.u32 2, %s31
      %v637 = vld [vmem:[%s628] sm:$0xff]
      %v638 = vld [vmem:[%s628 + $0x8] sm:$0xff]
      %v639 = vld [vmem:[%s628 + $0x10] sm:$0xff]
      %v640 = vld [vmem:[%s628 + $0x18] sm:$0xff]
      %v641 = vld [vmem:[%s628 + $0x20] sm:$0xff]
      %v642 = vld [vmem:[%s628 + $0x28] sm:$0xff]
      %v643 = vld [vmem:[%s628 + $0x30] sm:$0xff]
      %v644 = vld [vmem:[%s628 + $0x38] sm:$0xff]
      %v645 = vld [vmem:[%s628 + $0x40] sm:$0xff]
      %v646 = vld [vmem:[%s628 + $0x48] sm:$0xff]
      %v647 = vld [vmem:[%s628 + $0x50] sm:$0xff]
      %v648 = vld [vmem:[%s628 + $0x58] sm:$0xff]
      %v649 = vld [vmem:[%s628 + $0x60] sm:$0xff]
      %v650 = vld [vmem:[%s628 + $0x68] sm:$0xff]
      %v651 = vld [vmem:[%s628 + $0x70] sm:$0xff]
      %v652 = vld [vmem:[%s628 + $0x78] sm:$0xff]
      %v653 = vld [vmem:[%s628 + $0x80] sm:$0xff]
      %v654 = vld [vmem:[%s628 + $0x88] sm:$0xff]
      %v655 = vld [vmem:[%s628 + $0x90] sm:$0xff]
      %v656 = vld [vmem:[%s628 + $0x98] sm:$0xff]
      %v657 = vld [vmem:[%s628 + $0xa0] sm:$0xff]
      %v658 = vld [vmem:[%s628 + $0xa8] sm:$0xff]
      %v659 = vld [vmem:[%s628 + $0xb0] sm:$0xff]
      %v660 = vld [vmem:[%s628 + $0xb8] sm:$0xff]
      %v661 = vld [vmem:[%s628 + $0xc0] sm:$0xff]
      %v662 = vld [vmem:[%s628 + $0xc8] sm:$0xff]
      %v663 = vld [vmem:[%s628 + $0xd0] sm:$0xff]
      %v664 = vld [vmem:[%s628 + $0xd8] sm:$0xff]
      %v665 = vld [vmem:[%s628 + $0xe0] sm:$0xff]
      %v666 = vld [vmem:[%s628 + $0xe8] sm:$0xff]
      %v667 = vld [vmem:[%s628 + $0xf0] sm:$0xff]
      %v668 = vld [vmem:[%s628 + $0xf8] sm:$0xff]
      %v669 = vld [vmem:[%s628 + $0x100] sm:$0xff]
      %v670 = vld [vmem:[%s628 + $0x108] sm:$0xff]
      %v671 = vld [vmem:[%s628 + $0x110] sm:$0xff]
      %v672 = vld [vmem:[%s628 + $0x118] sm:$0xff]
      %v673 = vld [vmem:[%s628 + $0x120] sm:$0xff]
      %v674 = vld [vmem:[%s628 + $0x128] sm:$0xff]
      %v675 = vld [vmem:[%s628 + $0x130] sm:$0xff]
      %v676 = vld [vmem:[%s628 + $0x138] sm:$0xff]
      %v677 = vld [vmem:[%s628 + $0x140] sm:$0xff]
      %v678 = vld [vmem:[%s628 + $0x148] sm:$0xff]
      %v679 = vld [vmem:[%s628 + $0x150] sm:$0xff]
      %v680 = vld [vmem:[%s628 + $0x158] sm:$0xff]
      %v681 = vld [vmem:[%s628 + $0x160] sm:$0xff]
      %v682 = vld [vmem:[%s628 + $0x168] sm:$0xff]
      %v683 = vld [vmem:[%s628 + $0x170] sm:$0xff]
      %v684 = vld [vmem:[%s628 + $0x178] sm:$0xff]
      %v685 = vld [vmem:[%s3] sm:$0xf]
      %v686 = vld [vmem:[%s3 + $0x4] sm:$0xf]
      %v687 = vld [vmem:[%s3 + $0x8] sm:$0xf]
      %v688 = vld [vmem:[%s3 + $0xc] sm:$0xf]
      %v689 = vld [vmem:[%s3 + $0x10] sm:$0xf]
      %v690 = vld [vmem:[%s3 + $0x14] sm:$0xf]
      %v691 = vld [vmem:[%s3 + $0x18] sm:$0xf]
      %v692 = vld [vmem:[%s3 + $0x1c] sm:$0xf]
      %v693 = vld [vmem:[%s3 + $0x20] sm:$0xf]
      %v694 = vld [vmem:[%s3 + $0x24] sm:$0xf]
      %v695 = vld [vmem:[%s3 + $0x28] sm:$0xf]
      %v696 = vld [vmem:[%s3 + $0x2c] sm:$0xf]
      %v697 = vld [vmem:[%s3 + $0x30] sm:$0xf]
      %v698 = vld [vmem:[%s3 + $0x34] sm:$0xf]
      %v699 = vld [vmem:[%s3 + $0x38] sm:$0xf]
      %v700 = vld [vmem:[%s3 + $0x3c] sm:$0xf]
      %v701 = vld [vmem:[%s3 + $0x40] sm:$0xf]
      %v702 = vld [vmem:[%s3 + $0x44] sm:$0xf]
      %v703 = vld [vmem:[%s3 + $0x48] sm:$0xf]
      %v704 = vld [vmem:[%s3 + $0x4c] sm:$0xf]
      %v705 = vld [vmem:[%s3 + $0x50] sm:$0xf]
      %v706 = vld [vmem:[%s3 + $0x54] sm:$0xf]
      %v707 = vld [vmem:[%s3 + $0x58] sm:$0xf]
      %v708 = vld [vmem:[%s3 + $0x5c] sm:$0xf]
      %v709 = vld [vmem:[%s3 + $0x60] sm:$0xf]
      %v710 = vld [vmem:[%s3 + $0x64] sm:$0xf]
      %v711 = vld [vmem:[%s3 + $0x68] sm:$0xf]
      %v712 = vld [vmem:[%s3 + $0x6c] sm:$0xf]
      %v713 = vld [vmem:[%s3 + $0x70] sm:$0xf]
      %v714 = vld [vmem:[%s3 + $0x74] sm:$0xf]
      %v715 = vld [vmem:[%s3 + $0x78] sm:$0xf]
      %v716 = vld [vmem:[%s3 + $0x7c] sm:$0xf]
      %v717 = vld [vmem:[%s3 + $0x80] sm:$0xf]
      %v718 = vld [vmem:[%s3 + $0x84] sm:$0xf]
      %v719 = vld [vmem:[%s3 + $0x88] sm:$0xf]
      %v720 = vld [vmem:[%s3 + $0x8c] sm:$0xf]
      %v721 = vld [vmem:[%s3 + $0x90] sm:$0xf]
      %v722 = vld [vmem:[%s3 + $0x94] sm:$0xf]
      %v723 = vld [vmem:[%s3 + $0x98] sm:$0xf]
      %v724 = vld [vmem:[%s3 + $0x9c] sm:$0xf]
      %v725 = vld [vmem:[%s3 + $0xa0] sm:$0xf]
      %v726 = vld [vmem:[%s3 + $0xa4] sm:$0xf]
      %v727 = vld [vmem:[%s3 + $0xa8] sm:$0xf]
      %v728 = vld [vmem:[%s3 + $0xac] sm:$0xf]
      %v729 = vld [vmem:[%s3 + $0xb0] sm:$0xf]
      %v730 = vld [vmem:[%s3 + $0xb4] sm:$0xf]
      %v731 = vld [vmem:[%s3 + $0xb8] sm:$0xf]
      %v732 = vld [vmem:[%s3 + $0xbc] sm:$0xf]
      %v733 = vld [vmem:[%s3 + $0xc0] sm:$0xf]
      %v734 = vld [vmem:[%s3 + $0xc4] sm:$0xf]
      %v735 = vld [vmem:[%s3 + $0xc8] sm:$0xf]
      %v736 = vld [vmem:[%s3 + $0xcc] sm:$0xf]
      %v737 = vld [vmem:[%s3 + $0xd0] sm:$0xf]
      %v738 = vld [vmem:[%s3 + $0xd4] sm:$0xf]
      %v739 = vld [vmem:[%s3 + $0xd8] sm:$0xf]
      %v740 = vld [vmem:[%s3 + $0xdc] sm:$0xf]
      %v741 = vld [vmem:[%s3 + $0xe0] sm:$0xf]
      %v742 = vld [vmem:[%s3 + $0xe4] sm:$0xf]
      %v743 = vld [vmem:[%s3 + $0xe8] sm:$0xf]
      %v744 = vld [vmem:[%s3 + $0xec] sm:$0xf]
      %v745 = vld [vmem:[%s3 + $0xf0] sm:$0xf]
      %v746 = vld [vmem:[%s3 + $0xf4] sm:$0xf]
      %v747 = vld [vmem:[%s3 + $0xf8] sm:$0xf]
      %v748 = vld [vmem:[%s3 + $0xfc] sm:$0xf]
      %v749 = vld [vmem:[%s3 + $0x100] sm:$0xf]
      %v750 = vld [vmem:[%s3 + $0x104] sm:$0xf]
      %v751 = vld [vmem:[%s3 + $0x108] sm:$0xf]
      %v752 = vld [vmem:[%s3 + $0x10c] sm:$0xf]
      %v753 = vld [vmem:[%s3 + $0x110] sm:$0xf]
      %v754 = vld [vmem:[%s3 + $0x114] sm:$0xf]
      %v755 = vld [vmem:[%s3 + $0x118] sm:$0xf]
      %v756 = vld [vmem:[%s3 + $0x11c] sm:$0xf]
      %v757 = vld [vmem:[%s3 + $0x120] sm:$0xf]
      %v758 = vld [vmem:[%s3 + $0x124] sm:$0xf]
      %v759 = vld [vmem:[%s3 + $0x128] sm:$0xf]
      %v760 = vld [vmem:[%s3 + $0x12c] sm:$0xf]
      %v761 = vld [vmem:[%s3 + $0x130] sm:$0xf]
      %v762 = vld [vmem:[%s3 + $0x134] sm:$0xf]
      %v763 = vld [vmem:[%s3 + $0x138] sm:$0xf]
      %v764 = vld [vmem:[%s3 + $0x13c] sm:$0xf]
      %v765 = vld [vmem:[%s3 + $0x140] sm:$0xf]
      %v766 = vld [vmem:[%s3 + $0x144] sm:$0xf]
      %v767 = vld [vmem:[%s3 + $0x148] sm:$0xf]
      %v768 = vld [vmem:[%s3 + $0x14c] sm:$0xf]
      %v769 = vld [vmem:[%s3 + $0x150] sm:$0xf]
      %v770 = vld [vmem:[%s3 + $0x154] sm:$0xf]
      %v771 = vld [vmem:[%s3 + $0x158] sm:$0xf]
      %v772 = vld [vmem:[%s3 + $0x15c] sm:$0xf]
      %v773 = vld [vmem:[%s3 + $0x160] sm:$0xf]
      %v774 = vld [vmem:[%s3 + $0x164] sm:$0xf]
      %v775 = vld [vmem:[%s3 + $0x168] sm:$0xf]
      %v776 = vld [vmem:[%s3 + $0x16c] sm:$0xf]
      %v777 = vld [vmem:[%s3 + $0x170] sm:$0xf]
      %v778 = vld [vmem:[%s3 + $0x174] sm:$0xf]
      %v779 = vld [vmem:[%s3 + $0x178] sm:$0xf]
      %v780 = vld [vmem:[%s3 + $0x17c] sm:$0xf]
      %v781 = vld [vmem:[%s1] sm:$0xff]
      %v782 = vld [vmem:[%s1 + $0x8] sm:$0xff]
      %v783 = vld [vmem:[%s1 + $0x10] sm:$0xff]
      %v784 = vld [vmem:[%s1 + $0x18] sm:$0xff]
      %v785 = vld [vmem:[%s1 + $0x20] sm:$0xff]
      %v786 = vld [vmem:[%s1 + $0x28] sm:$0xff]
      %v787 = vld [vmem:[%s1 + $0x30] sm:$0xff]
      %v788 = vld [vmem:[%s1 + $0x38] sm:$0xff]
      %v789 = vld [vmem:[%s1 + $0x40] sm:$0xff]
      %v790 = vld [vmem:[%s1 + $0x48] sm:$0xff]
      %v791 = vld [vmem:[%s1 + $0x50] sm:$0xff]
      %v792 = vld [vmem:[%s1 + $0x58] sm:$0xff]
      %v793 = vld [vmem:[%s1 + $0x60] sm:$0xff]
      %v794 = vld [vmem:[%s1 + $0x68] sm:$0xff]
      %v795 = vld [vmem:[%s1 + $0x70] sm:$0xff]
      %v796 = vld [vmem:[%s1 + $0x78] sm:$0xff]
      %v845 = vunpack.c.l.b16 %v637
      %v846 = vunpack.c.h.b16 %v637
      %v847 = vunpack.c.l.b16 %v638
      %v848 = vunpack.c.h.b16 %v638
      %v849 = vunpack.c.l.b16 %v639
      %v850 = vunpack.c.h.b16 %v639
      %v851 = vunpack.c.l.b16 %v640
      %v852 = vunpack.c.h.b16 %v640
      %v853 = vunpack.c.l.b16 %v641
      %v854 = vunpack.c.h.b16 %v641
      %v855 = vunpack.c.l.b16 %v642
      %v856 = vunpack.c.h.b16 %v642
      %v857 = vunpack.c.l.b16 %v643
      %v858 = vunpack.c.h.b16 %v643
      %v859 = vunpack.c.l.b16 %v644
      %v860 = vunpack.c.h.b16 %v644
      %v861 = vunpack.c.l.b16 %v645
      %v862 = vunpack.c.h.b16 %v645
      %v863 = vunpack.c.l.b16 %v646
      %v864 = vunpack.c.h.b16 %v646
      %v865 = vunpack.c.l.b16 %v647
      %v866 = vunpack.c.h.b16 %v647
      %v867 = vunpack.c.l.b16 %v648
      %v868 = vunpack.c.h.b16 %v648
      %v869 = vunpack.c.l.b16 %v649
      %v870 = vunpack.c.h.b16 %v649
      %v871 = vunpack.c.l.b16 %v650
      %v872 = vunpack.c.h.b16 %v650
      %v873 = vunpack.c.l.b16 %v651
      %v874 = vunpack.c.h.b16 %v651
      %v875 = vunpack.c.l.b16 %v652
      %v876 = vunpack.c.h.b16 %v652
      %v877 = vunpack.c.l.b16 %v653
      %v878 = vunpack.c.h.b16 %v653
      %v879 = vunpack.c.l.b16 %v654
      %v880 = vunpack.c.h.b16 %v654
      %v881 = vunpack.c.l.b16 %v655
      %v882 = vunpack.c.h.b16 %v655
      %v883 = vunpack.c.l.b16 %v656
      %v884 = vunpack.c.h.b16 %v656
      %v885 = vunpack.c.l.b16 %v657
      %v886 = vunpack.c.h.b16 %v657
      %v887 = vunpack.c.l.b16 %v658
      %v888 = vunpack.c.h.b16 %v658
      %v889 = vunpack.c.l.b16 %v659
      %v890 = vunpack.c.h.b16 %v659
      %v891 = vunpack.c.l.b16 %v660
      %v892 = vunpack.c.h.b16 %v660
      %v893 = vunpack.c.l.b16 %v661
      %v894 = vunpack.c.h.b16 %v661
      %v895 = vunpack.c.l.b16 %v662
      %v896 = vunpack.c.h.b16 %v662
      %v897 = vunpack.c.l.b16 %v663
      %v898 = vunpack.c.h.b16 %v663
      %v899 = vunpack.c.l.b16 %v664
      %v900 = vunpack.c.h.b16 %v664
      %v901 = vunpack.c.l.b16 %v665
      %v902 = vunpack.c.h.b16 %v665
      %v903 = vunpack.c.l.b16 %v666
      %v904 = vunpack.c.h.b16 %v666
      %v905 = vunpack.c.l.b16 %v667
      %v906 = vunpack.c.h.b16 %v667
      %v907 = vunpack.c.l.b16 %v668
      %v908 = vunpack.c.h.b16 %v668
      %v909 = vunpack.c.l.b16 %v669
      %v910 = vunpack.c.h.b16 %v669
      %v911 = vunpack.c.l.b16 %v670
      %v912 = vunpack.c.h.b16 %v670
      %v913 = vunpack.c.l.b16 %v671
      %v914 = vunpack.c.h.b16 %v671
      %v915 = vunpack.c.l.b16 %v672
      %v916 = vunpack.c.h.b16 %v672
      %v917 = vunpack.c.l.b16 %v673
      %v918 = vunpack.c.h.b16 %v673
      %v919 = vunpack.c.l.b16 %v674
      %v920 = vunpack.c.h.b16 %v674
      %v921 = vunpack.c.l.b16 %v675
      %v922 = vunpack.c.h.b16 %v675
      %v923 = vunpack.c.l.b16 %v676
      %v924 = vunpack.c.h.b16 %v676
      %v925 = vunpack.c.l.b16 %v677
      %v926 = vunpack.c.h.b16 %v677
      %v927 = vunpack.c.l.b16 %v678
      %v928 = vunpack.c.h.b16 %v678
      %v929 = vunpack.c.l.b16 %v679
      %v930 = vunpack.c.h.b16 %v679
      %v931 = vunpack.c.l.b16 %v680
      %v932 = vunpack.c.h.b16 %v680
      %v933 = vunpack.c.l.b16 %v681
      %v934 = vunpack.c.h.b16 %v681
      %v935 = vunpack.c.l.b16 %v682
      %v936 = vunpack.c.h.b16 %v682
      %v937 = vunpack.c.l.b16 %v683
      %v938 = vunpack.c.h.b16 %v683
      %v939 = vunpack.c.l.b16 %v684
      %v940 = vunpack.c.h.b16 %v684
      %v941 = vpack.c.b16 %v851, %v845
      %v942 = vpack.c.b16 %v852, %v846
      %v943 = vpack.c.b16 %v853, %v847
      %v944 = vpack.c.b16 %v854, %v848
      %v945 = vpack.c.b16 %v855, %v849
      %v946 = vpack.c.b16 %v856, %v850
      %v947 = vpack.c.b16 %v863, %v857
      %v948 = vpack.c.b16 %v864, %v858
      %v949 = vpack.c.b16 %v865, %v859
      %v950 = vpack.c.b16 %v866, %v860
      %v951 = vpack.c.b16 %v867, %v861
      %v952 = vpack.c.b16 %v868, %v862
      %v953 = vpack.c.b16 %v875, %v869
      %v954 = vpack.c.b16 %v876, %v870
      %v955 = vpack.c.b16 %v877, %v871
      %v956 = vpack.c.b16 %v878, %v872
      %v957 = vpack.c.b16 %v879, %v873
      %v958 = vpack.c.b16 %v880, %v874
      %v959 = vpack.c.b16 %v887, %v881
      %v960 = vpack.c.b16 %v888, %v882
      %v961 = vpack.c.b16 %v889, %v883
      %v962 = vpack.c.b16 %v890, %v884
      %v963 = vpack.c.b16 %v891, %v885
      %v964 = vpack.c.b16 %v892, %v886
      %v965 = vpack.c.b16 %v899, %v893
      %v966 = vpack.c.b16 %v900, %v894
      %v967 = vpack.c.b16 %v901, %v895
      %v968 = vpack.c.b16 %v902, %v896
      %v969 = vpack.c.b16 %v903, %v897
      %v970 = vpack.c.b16 %v904, %v898
      %v971 = vpack.c.b16 %v911, %v905
      %v972 = vpack.c.b16 %v912, %v906
      %v973 = vpack.c.b16 %v913, %v907
      %v974 = vpack.c.b16 %v914, %v908
      %v975 = vpack.c.b16 %v915, %v909
      %v976 = vpack.c.b16 %v916, %v910
      %v977 = vpack.c.b16 %v923, %v917
      %v978 = vpack.c.b16 %v924, %v918
      %v979 = vpack.c.b16 %v925, %v919
      %v980 = vpack.c.b16 %v926, %v920
      %v981 = vpack.c.b16 %v927, %v921
      %v982 = vpack.c.b16 %v928, %v922
      %v983 = vpack.c.b16 %v935, %v929
      %v984 = vpack.c.b16 %v936, %v930
      %v985 = vpack.c.b16 %v937, %v931
      %v986 = vpack.c.b16 %v938, %v932
      %v987 = vpack.c.b16 %v939, %v933
      %v988 = vpack.c.b16 %v940, %v934
      %v1133 = vunpack.c.l.b16 %v685
      %v1134 = vunpack.c.l.b16 %v686
      %v1135 = vunpack.c.l.b16 %v687
      %v1136 = vunpack.c.l.b16 %v688
      %v1137 = vunpack.c.l.b16 %v689
      %v1138 = vunpack.c.l.b16 %v690
      %v1139 = vunpack.c.l.b16 %v691
      %v1140 = vunpack.c.l.b16 %v692
      %v1141 = vunpack.c.l.b16 %v693
      %v1142 = vunpack.c.l.b16 %v694
      %v1143 = vunpack.c.l.b16 %v695
      %v1144 = vunpack.c.l.b16 %v696
      %v1145 = vunpack.c.l.b16 %v697
      %v1146 = vunpack.c.l.b16 %v698
      %v1147 = vunpack.c.l.b16 %v699
      %v1148 = vunpack.c.l.b16 %v700
      %v1149 = vunpack.c.l.b16 %v701
      %v1150 = vunpack.c.l.b16 %v702
      %v1151 = vunpack.c.l.b16 %v703
      %v1152 = vunpack.c.l.b16 %v704
      %v1153 = vunpack.c.l.b16 %v705
      %v1154 = vunpack.c.l.b16 %v706
      %v1155 = vunpack.c.l.b16 %v707
      %v1156 = vunpack.c.l.b16 %v708
      %v1157 = vunpack.c.l.b16 %v709
      %v1158 = vunpack.c.l.b16 %v710
      %v1159 = vunpack.c.l.b16 %v711
      %v1160 = vunpack.c.l.b16 %v712
      %v1161 = vunpack.c.l.b16 %v713
      %v1162 = vunpack.c.l.b16 %v714
      %v1163 = vunpack.c.l.b16 %v715
      %v1164 = vunpack.c.l.b16 %v716
      %v1165 = vunpack.c.l.b16 %v717
      %v1166 = vunpack.c.l.b16 %v718
      %v1167 = vunpack.c.l.b16 %v719
      %v1168 = vunpack.c.l.b16 %v720
      %v1169 = vunpack.c.l.b16 %v721
      %v1170 = vunpack.c.l.b16 %v722
      %v1171 = vunpack.c.l.b16 %v723
      %v1172 = vunpack.c.l.b16 %v724
      %v1173 = vunpack.c.l.b16 %v725
      %v1174 = vunpack.c.l.b16 %v726
      %v1175 = vunpack.c.l.b16 %v727
      %v1176 = vunpack.c.l.b16 %v728
      %v1177 = vunpack.c.l.b16 %v729
      %v1178 = vunpack.c.l.b16 %v730
      %v1179 = vunpack.c.l.b16 %v731
      %v1180 = vunpack.c.l.b16 %v732
      %v1181 = vunpack.c.l.b16 %v733
      %v1182 = vunpack.c.l.b16 %v734
      %v1183 = vunpack.c.l.b16 %v735
      %v1184 = vunpack.c.l.b16 %v736
      %v1185 = vunpack.c.l.b16 %v737
      %v1186 = vunpack.c.l.b16 %v738
      %v1187 = vunpack.c.l.b16 %v739
      %v1188 = vunpack.c.l.b16 %v740
      %v1189 = vunpack.c.l.b16 %v741
      %v1190 = vunpack.c.l.b16 %v742
      %v1191 = vunpack.c.l.b16 %v743
      %v1192 = vunpack.c.l.b16 %v744
      %v1193 = vunpack.c.l.b16 %v745
      %v1194 = vunpack.c.l.b16 %v746
      %v1195 = vunpack.c.l.b16 %v747
      %v1196 = vunpack.c.l.b16 %v748
      %v1197 = vunpack.c.l.b16 %v749
      %v1198 = vunpack.c.l.b16 %v750
      %v1199 = vunpack.c.l.b16 %v751
      %v1200 = vunpack.c.l.b16 %v752
      %v1201 = vunpack.c.l.b16 %v753
      %v1202 = vunpack.c.l.b16 %v754
      %v1203 = vunpack.c.l.b16 %v755
      %v1204 = vunpack.c.l.b16 %v756
      %v1205 = vunpack.c.l.b16 %v757
      %v1206 = vunpack.c.l.b16 %v758
      %v1207 = vunpack.c.l.b16 %v759
      %v1208 = vunpack.c.l.b16 %v760
      %v1209 = vunpack.c.l.b16 %v761
      %v1210 = vunpack.c.l.b16 %v762
      %v1211 = vunpack.c.l.b16 %v763
      %v1212 = vunpack.c.l.b16 %v764
      %v1213 = vunpack.c.l.b16 %v765
      %v1214 = vunpack.c.l.b16 %v766
      %v1215 = vunpack.c.l.b16 %v767
      %v1216 = vunpack.c.l.b16 %v768
      %v1217 = vunpack.c.l.b16 %v769
      %v1218 = vunpack.c.l.b16 %v770
      %v1219 = vunpack.c.l.b16 %v771
      %v1220 = vunpack.c.l.b16 %v772
      %v1221 = vunpack.c.l.b16 %v773
      %v1222 = vunpack.c.l.b16 %v774
      %v1223 = vunpack.c.l.b16 %v775
      %v1224 = vunpack.c.l.b16 %v776
      %v1225 = vunpack.c.l.b16 %v777
      %v1226 = vunpack.c.l.b16 %v778
      %v1227 = vunpack.c.l.b16 %v779
      %v1228 = vunpack.c.l.b16 %v780
      %v1229 = vpack.c.b16 %v1134, %v1133
      %v1230 = vpack.c.b16 %v1136, %v1135
      %v1231 = vpack.c.b16 %v1138, %v1137
      %v1232 = vpack.c.b16 %v1140, %v1139
      %v1233 = vpack.c.b16 %v1142, %v1141
      %v1234 = vpack.c.b16 %v1144, %v1143
      %v1235 = vpack.c.b16 %v1146, %v1145
      %v1236 = vpack.c.b16 %v1148, %v1147
      %v1237 = vpack.c.b16 %v1150, %v1149
      %v1238 = vpack.c.b16 %v1152, %v1151
      %v1239 = vpack.c.b16 %v1154, %v1153
      %v1240 = vpack.c.b16 %v1156, %v1155
      %v1241 = vpack.c.b16 %v1158, %v1157
      %v1242 = vpack.c.b16 %v1160, %v1159
      %v1243 = vpack.c.b16 %v1162, %v1161
      %v1244 = vpack.c.b16 %v1164, %v1163
      %v1245 = vpack.c.b16 %v1166, %v1165
      %v1246 = vpack.c.b16 %v1168, %v1167
      %v1247 = vpack.c.b16 %v1170, %v1169
      %v1248 = vpack.c.b16 %v1172, %v1171
      %v1249 = vpack.c.b16 %v1174, %v1173
      %v1250 = vpack.c.b16 %v1176, %v1175
      %v1251 = vpack.c.b16 %v1178, %v1177
      %v1252 = vpack.c.b16 %v1180, %v1179
      %v1253 = vpack.c.b16 %v1182, %v1181
      %v1254 = vpack.c.b16 %v1184, %v1183
      %v1255 = vpack.c.b16 %v1186, %v1185
      %v1256 = vpack.c.b16 %v1188, %v1187
      %v1257 = vpack.c.b16 %v1190, %v1189
      %v1258 = vpack.c.b16 %v1192, %v1191
      %v1259 = vpack.c.b16 %v1194, %v1193
      %v1260 = vpack.c.b16 %v1196, %v1195
      %v1261 = vpack.c.b16 %v1198, %v1197
      %v1262 = vpack.c.b16 %v1200, %v1199
      %v1263 = vpack.c.b16 %v1202, %v1201
      %v1264 = vpack.c.b16 %v1204, %v1203
      %v1265 = vpack.c.b16 %v1206, %v1205
      %v1266 = vpack.c.b16 %v1208, %v1207
      %v1267 = vpack.c.b16 %v1210, %v1209
      %v1268 = vpack.c.b16 %v1212, %v1211
      %v1269 = vpack.c.b16 %v1214, %v1213
      %v1270 = vpack.c.b16 %v1216, %v1215
      %v1271 = vpack.c.b16 %v1218, %v1217
      %v1272 = vpack.c.b16 %v1220, %v1219
      %v1273 = vpack.c.b16 %v1222, %v1221
      %v1274 = vpack.c.b16 %v1224, %v1223
      %v1275 = vpack.c.b16 %v1226, %v1225
      %v1276 = vpack.c.b16 %v1228, %v1227
      %1325 = vmatpush.bf16.msra.mxu0 %v1236
      %1326 = vmatpush.bf16.msra.mxu0 %v1235
      %1327 = vmatpush.bf16.msra.mxu0 %v1234
      %1328 = vmatpush.bf16.msra.mxu0 %v1233
      %1329 = vmatpush.bf16.msra.mxu0 %v1232
      %1330 = vmatpush.bf16.msra.mxu0 %v1231
      %1331 = vmatpush.bf16.msra.mxu0 %v1230
      %1332 = vmatpush.bf16.msra.mxu0 %v1229
      %1333 = vmatmul.bf16.gmra.mxu0 %v941
      %v1334 = vpop.f32.mrf.mxu0
      %v1335 = vadd.f32 %v781, %v1334
      %v1336 = vpop.f32.mrf.mxu0
      %v1337 = vadd.f32 %v782, %v1336
      %1338 = vmatmul.bf16.gmra.mxu0 %v947
      %v1339 = vpop.f32.mrf.mxu0
      %v1340 = vadd.f32 %v783, %v1339
      %v1341 = vpop.f32.mrf.mxu0
      %v1342 = vadd.f32 %v784, %v1341
      %1343 = vmatmul.bf16.gmra.mxu0 %v953
      %v1344 = vpop.f32.mrf.mxu0
      %v1345 = vadd.f32 %v785, %v1344
      %v1346 = vpop.f32.mrf.mxu0
      %v1347 = vadd.f32 %v786, %v1346
      %1348 = vmatmul.bf16.gmra.mxu0 %v959
      %v1349 = vpop.f32.mrf.mxu0
      %v1350 = vadd.f32 %v787, %v1349
      %v1351 = vpop.f32.mrf.mxu0
      %v1352 = vadd.f32 %v788, %v1351
      %1353 = vmatmul.bf16.gmra.mxu0 %v965
      %v1354 = vpop.f32.mrf.mxu0
      %v1355 = vadd.f32 %v789, %v1354
      %v1356 = vpop.f32.mrf.mxu0
      %v1357 = vadd.f32 %v790, %v1356
      %1358 = vmatmul.bf16.gmra.mxu0 %v971
      %v1359 = vpop.f32.mrf.mxu0
      %v1360 = vadd.f32 %v791, %v1359
      %v1361 = vpop.f32.mrf.mxu0
      %v1362 = vadd.f32 %v792, %v1361
      %1363 = vmatmul.bf16.gmra.mxu0 %v977
      %v1364 = vpop.f32.mrf.mxu0
      %v1365 = vadd.f32 %v793, %v1364
      %v1366 = vpop.f32.mrf.mxu0
      %v1367 = vadd.f32 %v794, %v1366
      %1368 = vmatmul.bf16.gmra.mxu0 %v983
      %v1369 = vpop.f32.mrf.mxu0
      %v1370 = vadd.f32 %v795, %v1369
      %v1371 = vpop.f32.mrf.mxu0
      %v1372 = vadd.f32 %v796, %v1371
      %1373 = vdwg.mxu0
      %1374 = vmatpush.bf16.msra.mxu0 %v1244
      %1375 = vmatpush.bf16.msra.mxu0 %v1243
      %1376 = vmatpush.bf16.msra.mxu0 %v1242
      %1377 = vmatpush.bf16.msra.mxu0 %v1241
      %1378 = vmatpush.bf16.msra.mxu0 %v1240
      %1379 = vmatpush.bf16.msra.mxu0 %v1239
      %1380 = vmatpush.bf16.msra.mxu0 %v1238
      %1381 = vmatpush.bf16.msra.mxu0 %v1237
      %1382 = vmatmul.bf16.gmra.mxu0 %v942
      %v1383 = vpop.f32.mrf.mxu0
      %v1384 = vadd.f32 %v1335, %v1383
      %v1385 = vpop.f32.mrf.mxu0
      %v1386 = vadd.f32 %v1337, %v1385
      %1387 = vmatmul.bf16.gmra.mxu0 %v948
      %v1388 = vpop.f32.mrf.mxu0
      %v1389 = vadd.f32 %v1340, %v1388
      %v1390 = vpop.f32.mrf.mxu0
      %v1391 = vadd.f32 %v1342, %v1390
      %1392 = vmatmul.bf16.gmra.mxu0 %v954
      %v1393 = vpop.f32.mrf.mxu0
      %v1394 = vadd.f32 %v1345, %v1393
      %v1395 = vpop.f32.mrf.mxu0
      %v1396 = vadd.f32 %v1347, %v1395
      %1397 = vmatmul.bf16.gmra.mxu0 %v960
      %v1398 = vpop.f32.mrf.mxu0
      %v1399 = vadd.f32 %v1350, %v1398
      %v1400 = vpop.f32.mrf.mxu0
      %v1401 = vadd.f32 %v1352, %v1400
      %1402 = vmatmul.bf16.gmra.mxu0 %v966
      %v1403 = vpop.f32.mrf.mxu0
      %v1404 = vadd.f32 %v1355, %v1403
      %v1405 = vpop.f32.mrf.mxu0
      %v1406 = vadd.f32 %v1357, %v1405
      %1407 = vmatmul.bf16.gmra.mxu0 %v972
      %v1408 = vpop.f32.mrf.mxu0
      %v1409 = vadd.f32 %v1360, %v1408
      %v1410 = vpop.f32.mrf.mxu0
      %v1411 = vadd.f32 %v1362, %v1410
      %1412 = vmatmul.bf16.gmra.mxu0 %v978
      %v1413 = vpop.f32.mrf.mxu0
      %v1414 = vadd.f32 %v1365, %v1413
      %v1415 = vpop.f32.mrf.mxu0
      %v1416 = vadd.f32 %v1367, %v1415
      %1417 = vmatmul.bf16.gmra.mxu0 %v984
      %v1418 = vpop.f32.mrf.mxu0
      %v1419 = vadd.f32 %v1370, %v1418
      %v1420 = vpop.f32.mrf.mxu0
      %v1421 = vadd.f32 %v1372, %v1420
      %1422 = vdwg.mxu0
      %1423 = vmatpush.bf16.msra.mxu0 %v1252
      %1424 = vmatpush.bf16.msra.mxu0 %v1251
      %1425 = vmatpush.bf16.msra.mxu0 %v1250
      %1426 = vmatpush.bf16.msra.mxu0 %v1249
      %1427 = vmatpush.bf16.msra.mxu0 %v1248
      %1428 = vmatpush.bf16.msra.mxu0 %v1247
      %1429 = vmatpush.bf16.msra.mxu0 %v1246
      %1430 = vmatpush.bf16.msra.mxu0 %v1245
      %1431 = vmatmul.bf16.gmra.mxu0 %v943
      %v1432 = vpop.f32.mrf.mxu0
      %v1433 = vadd.f32 %v1384, %v1432
      %v1434 = vpop.f32.mrf.mxu0
      %v1435 = vadd.f32 %v1386, %v1434
      %1436 = vmatmul.bf16.gmra.mxu0 %v949
      %v1437 = vpop.f32.mrf.mxu0
      %v1438 = vadd.f32 %v1389, %v1437
      %v1439 = vpop.f32.mrf.mxu0
      %v1440 = vadd.f32 %v1391, %v1439
      %1441 = vmatmul.bf16.gmra.mxu0 %v955
      %v1442 = vpop.f32.mrf.mxu0
      %v1443 = vadd.f32 %v1394, %v1442
      %v1444 = vpop.f32.mrf.mxu0
      %v1445 = vadd.f32 %v1396, %v1444
      %1446 = vmatmul.bf16.gmra.mxu0 %v961
      %v1447 = vpop.f32.mrf.mxu0
      %v1448 = vadd.f32 %v1399, %v1447
      %v1449 = vpop.f32.mrf.mxu0
      %v1450 = vadd.f32 %v1401, %v1449
      %1451 = vmatmul.bf16.gmra.mxu0 %v967
      %v1452 = vpop.f32.mrf.mxu0
      %v1453 = vadd.f32 %v1404, %v1452
      %v1454 = vpop.f32.mrf.mxu0
      %v1455 = vadd.f32 %v1406, %v1454
      %1456 = vmatmul.bf16.gmra.mxu0 %v973
      %v1457 = vpop.f32.mrf.mxu0
      %v1458 = vadd.f32 %v1409, %v1457
      %v1459 = vpop.f32.mrf.mxu0
      %v1460 = vadd.f32 %v1411, %v1459
      %1461 = vmatmul.bf16.gmra.mxu0 %v979
      %v1462 = vpop.f32.mrf.mxu0
      %v1463 = vadd.f32 %v1414, %v1462
      %v1464 = vpop.f32.mrf.mxu0
      %v1465 = vadd.f32 %v1416, %v1464
      %1466 = vmatmul.bf16.gmra.mxu0 %v985
      %v1467 = vpop.f32.mrf.mxu0
      %v1468 = vadd.f32 %v1419, %v1467
      %v1469 = vpop.f32.mrf.mxu0
      %v1470 = vadd.f32 %v1421, %v1469
      %1471 = vdwg.mxu0
      %1472 = vmatpush.bf16.msra.mxu0 %v1260
      %1473 = vmatpush.bf16.msra.mxu0 %v1259
      %1474 = vmatpush.bf16.msra.mxu0 %v1258
      %1475 = vmatpush.bf16.msra.mxu0 %v1257
      %1476 = vmatpush.bf16.msra.mxu0 %v1256
      %1477 = vmatpush.bf16.msra.mxu0 %v1255
      %1478 = vmatpush.bf16.msra.mxu0 %v1254
      %1479 = vmatpush.bf16.msra.mxu0 %v1253
      %1480 = vmatmul.bf16.gmra.mxu0 %v944
      %v1481 = vpop.f32.mrf.mxu0
      %v1482 = vadd.f32 %v1433, %v1481
      %v1483 = vpop.f32.mrf.mxu0
      %v1484 = vadd.f32 %v1435, %v1483
      %1485 = vmatmul.bf16.gmra.mxu0 %v950
      %v1486 = vpop.f32.mrf.mxu0
      %v1487 = vadd.f32 %v1438, %v1486
      %v1488 = vpop.f32.mrf.mxu0
      %v1489 = vadd.f32 %v1440, %v1488
      %1490 = vmatmul.bf16.gmra.mxu0 %v956
      %v1491 = vpop.f32.mrf.mxu0
      %v1492 = vadd.f32 %v1443, %v1491
      %v1493 = vpop.f32.mrf.mxu0
      %v1494 = vadd.f32 %v1445, %v1493
      %1495 = vmatmul.bf16.gmra.mxu0 %v962
      %v1496 = vpop.f32.mrf.mxu0
      %v1497 = vadd.f32 %v1448, %v1496
      %v1498 = vpop.f32.mrf.mxu0
      %v1499 = vadd.f32 %v1450, %v1498
      %1500 = vmatmul.bf16.gmra.mxu0 %v968
      %v1501 = vpop.f32.mrf.mxu0
      %v1502 = vadd.f32 %v1453, %v1501
      %v1503 = vpop.f32.mrf.mxu0
      %v1504 = vadd.f32 %v1455, %v1503
      %1505 = vmatmul.bf16.gmra.mxu0 %v974
      %v1506 = vpop.f32.mrf.mxu0
      %v1507 = vadd.f32 %v1458, %v1506
      %v1508 = vpop.f32.mrf.mxu0
      %v1509 = vadd.f32 %v1460, %v1508
      %1510 = vmatmul.bf16.gmra.mxu0 %v980
      %v1511 = vpop.f32.mrf.mxu0
      %v1512 = vadd.f32 %v1463, %v1511
      %v1513 = vpop.f32.mrf.mxu0
      %v1514 = vadd.f32 %v1465, %v1513
      %1515 = vmatmul.bf16.gmra.mxu0 %v986
      %v1516 = vpop.f32.mrf.mxu0
      %v1517 = vadd.f32 %v1468, %v1516
      %v1518 = vpop.f32.mrf.mxu0
      %v1519 = vadd.f32 %v1470, %v1518
      %1520 = vdwg.mxu0
      %1521 = vmatpush.bf16.msra.mxu0 %v1268
      %1522 = vmatpush.bf16.msra.mxu0 %v1267
      %1523 = vmatpush.bf16.msra.mxu0 %v1266
      %1524 = vmatpush.bf16.msra.mxu0 %v1265
      %1525 = vmatpush.bf16.msra.mxu0 %v1264
      %1526 = vmatpush.bf16.msra.mxu0 %v1263
      %1527 = vmatpush.bf16.msra.mxu0 %v1262
      %1528 = vmatpush.bf16.msra.mxu0 %v1261
      %1529 = vmatmul.bf16.gmra.mxu0 %v945
      %v1530 = vpop.f32.mrf.mxu0
      %v1531 = vadd.f32 %v1482, %v1530
      %v1532 = vpop.f32.mrf.mxu0
      %v1533 = vadd.f32 %v1484, %v1532
      %1534 = vmatmul.bf16.gmra.mxu0 %v951
      %v1535 = vpop.f32.mrf.mxu0
      %v1536 = vadd.f32 %v1487, %v1535
      %v1537 = vpop.f32.mrf.mxu0
      %v1538 = vadd.f32 %v1489, %v1537
      %1539 = vmatmul.bf16.gmra.mxu0 %v957
      %v1540 = vpop.f32.mrf.mxu0
      %v1541 = vadd.f32 %v1492, %v1540
      %v1542 = vpop.f32.mrf.mxu0
      %v1543 = vadd.f32 %v1494, %v1542
      %1544 = vmatmul.bf16.gmra.mxu0 %v963
      %v1545 = vpop.f32.mrf.mxu0
      %v1546 = vadd.f32 %v1497, %v1545
      %v1547 = vpop.f32.mrf.mxu0
      %v1548 = vadd.f32 %v1499, %v1547
      %1549 = vmatmul.bf16.gmra.mxu0 %v969
      %v1550 = vpop.f32.mrf.mxu0
      %v1551 = vadd.f32 %v1502, %v1550
      %v1552 = vpop.f32.mrf.mxu0
      %v1553 = vadd.f32 %v1504, %v1552
      %1554 = vmatmul.bf16.gmra.mxu0 %v975
      %v1555 = vpop.f32.mrf.mxu0
      %v1556 = vadd.f32 %v1507, %v1555
      %v1557 = vpop.f32.mrf.mxu0
      %v1558 = vadd.f32 %v1509, %v1557
      %1559 = vmatmul.bf16.gmra.mxu0 %v981
      %v1560 = vpop.f32.mrf.mxu0
      %v1561 = vadd.f32 %v1512, %v1560
      %v1562 = vpop.f32.mrf.mxu0
      %v1563 = vadd.f32 %v1514, %v1562
      %1564 = vmatmul.bf16.gmra.mxu0 %v987
      %v1565 = vpop.f32.mrf.mxu0
      %v1566 = vadd.f32 %v1517, %v1565
      %v1567 = vpop.f32.mrf.mxu0
      %v1568 = vadd.f32 %v1519, %v1567
      %1569 = vdwg.mxu0
      %1570 = vmatpush.bf16.msra.mxu0 %v1276
      %1571 = vmatpush.bf16.msra.mxu0 %v1275
      %1572 = vmatpush.bf16.msra.mxu0 %v1274
      %1573 = vmatpush.bf16.msra.mxu0 %v1273
      %1574 = vmatpush.bf16.msra.mxu0 %v1272
      %1575 = vmatpush.bf16.msra.mxu0 %v1271
      %1576 = vmatpush.bf16.msra.mxu0 %v1270
      %1577 = vmatpush.bf16.msra.mxu0 %v1269
      %1578 = vmatmul.bf16.gmra.mxu0 %v946
      %v1579 = vpop.f32.mrf.mxu0
      %v1580 = vadd.f32 %v1531, %v1579
      %v1581 = vpop.f32.mrf.mxu0
      %v1582 = vadd.f32 %v1533, %v1581
      %1583 = vmatmul.bf16.gmra.mxu0 %v952
      %v1584 = vpop.f32.mrf.mxu0
      %v1585 = vadd.f32 %v1536, %v1584
      %v1586 = vpop.f32.mrf.mxu0
      %v1587 = vadd.f32 %v1538, %v1586
      %1588 = vmatmul.bf16.gmra.mxu0 %v958
      %v1589 = vpop.f32.mrf.mxu0
      %v1590 = vadd.f32 %v1541, %v1589
      %v1591 = vpop.f32.mrf.mxu0
      %v1592 = vadd.f32 %v1543, %v1591
      %1593 = vmatmul.bf16.gmra.mxu0 %v964
      %v1594 = vpop.f32.mrf.mxu0
      %v1595 = vadd.f32 %v1546, %v1594
      %v1596 = vpop.f32.mrf.mxu0
      %v1597 = vadd.f32 %v1548, %v1596
      %1598 = vmatmul.bf16.gmra.mxu0 %v970
      %v1599 = vpop.f32.mrf.mxu0
      %v1600 = vadd.f32 %v1551, %v1599
      %v1601 = vpop.f32.mrf.mxu0
      %v1602 = vadd.f32 %v1553, %v1601
      %1603 = vmatmul.bf16.gmra.mxu0 %v976
      %v1604 = vpop.f32.mrf.mxu0
      %v1605 = vadd.f32 %v1556, %v1604
      %v1606 = vpop.f32.mrf.mxu0
      %v1607 = vadd.f32 %v1558, %v1606
      %1608 = vmatmul.bf16.gmra.mxu0 %v982
      %v1609 = vpop.f32.mrf.mxu0
      %v1610 = vadd.f32 %v1561, %v1609
      %v1611 = vpop.f32.mrf.mxu0
      %v1612 = vadd.f32 %v1563, %v1611
      %1613 = vmatmul.bf16.gmra.mxu0 %v988
      %v1614 = vpop.f32.mrf.mxu0
      %v1615 = vadd.f32 %v1566, %v1614
      %v1616 = vpop.f32.mrf.mxu0
      %v1617 = vadd.f32 %v1568, %v1616
      %1618 = vdwg.mxu0
      %v1619 = vld [vmem:[%s2] sm:$0xff]
      %v1620 = vld [vmem:[%s2 + $0x8] sm:$0xff]
      %v1621 = vld [vmem:[%s2 + $0x10] sm:$0xff]
      %v1622 = vld [vmem:[%s2 + $0x18] sm:$0xff]
      %v1623 = vld [vmem:[%s2 + $0x20] sm:$0xff]
      %v1624 = vld [vmem:[%s2 + $0x28] sm:$0xff]
      %v1625 = vld [vmem:[%s2 + $0x30] sm:$0xff]
      %v1626 = vld [vmem:[%s2 + $0x38] sm:$0xff]
      %v1627 = vld [vmem:[%s2 + $0x40] sm:$0xff]
      %v1628 = vld [vmem:[%s2 + $0x48] sm:$0xff]
      %v1629 = vld [vmem:[%s2 + $0x50] sm:$0xff]
      %v1630 = vld [vmem:[%s2 + $0x58] sm:$0xff]
      %v1631 = vld [vmem:[%s2 + $0x60] sm:$0xff]
      %v1632 = vld [vmem:[%s2 + $0x68] sm:$0xff]
      %v1633 = vld [vmem:[%s2 + $0x70] sm:$0xff]
      %v1634 = vld [vmem:[%s2 + $0x78] sm:$0xff]
      %v1635 = vld [vmem:[%s4] sm:$0x1]
      %v1636 = vld [vmem:[%s5] sm:$0x1]
      %1637 = vadd.xlane.f32.xlu0 %v1580
      %v1638 = vpop.xlane.xlu0 %1637
      %1639 = vadd.xlane.f32.xlu0 %v1582
      %v1640 = vpop.xlane.xlu0 %1639
      %1641 = vadd.xlane.f32.xlu0 %v1585
      %v1642 = vpop.xlane.xlu0 %1641
      %1643 = vadd.xlane.f32.xlu0 %v1587
      %v1644 = vpop.xlane.xlu0 %1643
      %1645 = vadd.xlane.f32.xlu0 %v1590
      %v1646 = vpop.xlane.xlu0 %1645
      %1647 = vadd.xlane.f32.xlu0 %v1592
      %v1648 = vpop.xlane.xlu0 %1647
      %1649 = vadd.xlane.f32.xlu0 %v1595
      %v1650 = vpop.xlane.xlu0 %1649
      %1651 = vadd.xlane.f32.xlu0 %v1597
      %v1652 = vpop.xlane.xlu0 %1651
      %1653 = vadd.xlane.f32.xlu0 %v1600
      %v1654 = vpop.xlane.xlu0 %1653
      %1655 = vadd.xlane.f32.xlu0 %v1602
      %v1656 = vpop.xlane.xlu0 %1655
      %1657 = vadd.xlane.f32.xlu0 %v1605
      %v1658 = vpop.xlane.xlu0 %1657
      %1659 = vadd.xlane.f32.xlu0 %v1607
      %v1660 = vpop.xlane.xlu0 %1659
      %1661 = vadd.xlane.f32.xlu0 %v1610
      %v1662 = vpop.xlane.xlu0 %1661
      %1663 = vadd.xlane.f32.xlu0 %v1612
      %v1664 = vpop.xlane.xlu0 %1663
      %1665 = vadd.xlane.f32.xlu0 %v1615
      %v1666 = vpop.xlane.xlu0 %1665
      %1667 = vadd.xlane.f32.xlu0 %v1617
      %v1668 = vpop.xlane.xlu0 %1667
      %v1669 = vrcp.pop 128.0
      %v1670 = vmul.f32 128.0, %v1669
      %v1671 = vsub.f32 1.0, %v1670
      %v1672 = vmul.f32 %v1669, %v1671
      %v1673 = vadd.f32 %v1669, %v1672
      %vm1674 = vweird.f32 %v1669
      %v1675 = vsel %vm1674, %v1669, %v1673
      %v1676 = vmul.f32 %v1638, %v1675
      %v1677 = vmul.f32 %v1640, %v1675
      %v1678 = vmul.f32 %v1642, %v1675
      %v1679 = vmul.f32 %v1644, %v1675
      %v1680 = vmul.f32 %v1646, %v1675
      %v1681 = vmul.f32 %v1648, %v1675
      %v1682 = vmul.f32 %v1650, %v1675
      %v1683 = vmul.f32 %v1652, %v1675
      %v1684 = vmul.f32 %v1654, %v1675
      %v1685 = vmul.f32 %v1656, %v1675
      %v1686 = vmul.f32 %v1658, %v1675
      %v1687 = vmul.f32 %v1660, %v1675
      %v1688 = vmul.f32 %v1662, %v1675
      %v1689 = vmul.f32 %v1664, %v1675
      %v1690 = vmul.f32 %v1666, %v1675
      %v1691 = vmul.f32 %v1668, %v1675
      %v1692 = vsub.f32 %v1580, %v1676
      %v1693 = vsub.f32 %v1582, %v1677
      %v1694 = vsub.f32 %v1585, %v1678
      %v1695 = vsub.f32 %v1587, %v1679
      %v1696 = vsub.f32 %v1590, %v1680
      %v1697 = vsub.f32 %v1592, %v1681
      %v1698 = vsub.f32 %v1595, %v1682
      %v1699 = vsub.f32 %v1597, %v1683
      %v1700 = vsub.f32 %v1600, %v1684
      %v1701 = vsub.f32 %v1602, %v1685
      %v1702 = vsub.f32 %v1605, %v1686
      %v1703 = vsub.f32 %v1607, %v1687
      %v1704 = vsub.f32 %v1610, %v1688
      %v1705 = vsub.f32 %v1612, %v1689
      %v1706 = vsub.f32 %v1615, %v1690
      %v1707 = vsub.f32 %v1617, %v1691
      %v1708 = vmul.f32 %v1692, %v1692
      %v1709 = vmul.f32 %v1693, %v1693
      %v1710 = vmul.f32 %v1694, %v1694
      %v1711 = vmul.f32 %v1695, %v1695
      %v1712 = vmul.f32 %v1696, %v1696
      %v1713 = vmul.f32 %v1697, %v1697
      %v1714 = vmul.f32 %v1698, %v1698
      %v1715 = vmul.f32 %v1699, %v1699
      %v1716 = vmul.f32 %v1700, %v1700
      %v1717 = vmul.f32 %v1701, %v1701
      %v1718 = vmul.f32 %v1702, %v1702
      %v1719 = vmul.f32 %v1703, %v1703
      %v1720 = vmul.f32 %v1704, %v1704
      %v1721 = vmul.f32 %v1705, %v1705
      %v1722 = vmul.f32 %v1706, %v1706
      %v1723 = vmul.f32 %v1707, %v1707
      %1724 = vadd.xlane.f32.xlu0 %v1708
      %v1725 = vpop.xlane.xlu0 %1724
      %1726 = vadd.xlane.f32.xlu0 %v1709
      %v1727 = vpop.xlane.xlu0 %1726
      %1728 = vadd.xlane.f32.xlu0 %v1710
      %v1729 = vpop.xlane.xlu0 %1728
      %1730 = vadd.xlane.f32.xlu0 %v1711
      %v1731 = vpop.xlane.xlu0 %1730
      %1732 = vadd.xlane.f32.xlu0 %v1712
      %v1733 = vpop.xlane.xlu0 %1732
      %1734 = vadd.xlane.f32.xlu0 %v1713
      %v1735 = vpop.xlane.xlu0 %1734
      %1736 = vadd.xlane.f32.xlu0 %v1714
      %v1737 = vpop.xlane.xlu0 %1736
      %1738 = vadd.xlane.f32.xlu0 %v1715
      %v1739 = vpop.xlane.xlu0 %1738
      %1740 = vadd.xlane.f32.xlu0 %v1716
      %v1741 = vpop.xlane.xlu0 %1740
      %1742 = vadd.xlane.f32.xlu0 %v1717
      %v1743 = vpop.xlane.xlu0 %1742
      %1744 = vadd.xlane.f32.xlu0 %v1718
      %v1745 = vpop.xlane.xlu0 %1744
      %1746 = vadd.xlane.f32.xlu0 %v1719
      %v1747 = vpop.xlane.xlu0 %1746
      %1748 = vadd.xlane.f32.xlu0 %v1720
      %v1749 = vpop.xlane.xlu0 %1748
      %1750 = vadd.xlane.f32.xlu0 %v1721
      %v1751 = vpop.xlane.xlu0 %1750
      %1752 = vadd.xlane.f32.xlu0 %v1722
      %v1753 = vpop.xlane.xlu0 %1752
      %1754 = vadd.xlane.f32.xlu0 %v1723
      %v1755 = vpop.xlane.xlu0 %1754
      %v1756 = vmul.f32 %v1725, %v1675
      %v1757 = vmul.f32 %v1727, %v1675
      %v1758 = vmul.f32 %v1729, %v1675
      %v1759 = vmul.f32 %v1731, %v1675
      %v1760 = vmul.f32 %v1733, %v1675
      %v1761 = vmul.f32 %v1735, %v1675
      %v1762 = vmul.f32 %v1737, %v1675
      %v1763 = vmul.f32 %v1739, %v1675
      %v1764 = vmul.f32 %v1741, %v1675
      %v1765 = vmul.f32 %v1743, %v1675
      %v1766 = vmul.f32 %v1745, %v1675
      %v1767 = vmul.f32 %v1747, %v1675
      %v1768 = vmul.f32 %v1749, %v1675
      %v1769 = vmul.f32 %v1751, %v1675
      %v1770 = vmul.f32 %v1753, %v1675
      %v1771 = vmul.f32 %v1755, %v1675
      %v1772 = vadd.f32 %v1756, 1e-06
      %v1773 = vadd.f32 %v1757, 1e-06
      %v1774 = vadd.f32 %v1758, 1e-06
      %v1775 = vadd.f32 %v1759, 1e-06
      %v1776 = vadd.f32 %v1760, 1e-06
      %v1777 = vadd.f32 %v1761, 1e-06
      %v1778 = vadd.f32 %v1762, 1e-06
      %v1779 = vadd.f32 %v1763, 1e-06
      %v1780 = vadd.f32 %v1764, 1e-06
      %v1781 = vadd.f32 %v1765, 1e-06
      %v1782 = vadd.f32 %v1766, 1e-06
      %v1783 = vadd.f32 %v1767, 1e-06
      %v1784 = vadd.f32 %v1768, 1e-06
      %v1785 = vadd.f32 %v1769, 1e-06
      %v1786 = vadd.f32 %v1770, 1e-06
      %v1787 = vadd.f32 %v1771, 1e-06
      %v1788 = vrsqrt.pop %v1772
      %v1789 = vmul.f32 %v1788, %v1772
      %v1790 = vmul.f32 %v1789, %v1788
      %v1791 = vmul.f32 0.5, %v1790
      %v1792 = vsub.f32 1.5, %v1791
      %v1793 = vmul.f32 %v1788, %v1792
      %vm1794 = vweird.f32 %v1772
      %vm1795 = vweird.f32 %v1788
      %vm1796 = vmor %vm1794, %vm1795
      %v1797 = vsel %vm1796, %v1788, %v1793
      %v1798 = vrsqrt.pop %v1773
      %v1799 = vmul.f32 %v1798, %v1773
      %v1800 = vmul.f32 %v1799, %v1798
      %v1801 = vmul.f32 0.5, %v1800
      %v1802 = vsub.f32 1.5, %v1801
      %v1803 = vmul.f32 %v1798, %v1802
      %vm1804 = vweird.f32 %v1773
      %vm1805 = vweird.f32 %v1798
      %vm1806 = vmor %vm1804, %vm1805
      %v1807 = vsel %vm1806, %v1798, %v1803
      %v1808 = vrsqrt.pop %v1774
      %v1809 = vmul.f32 %v1808, %v1774
      %v1810 = vmul.f32 %v1809, %v1808
      %v1811 = vmul.f32 0.5, %v1810
      %v1812 = vsub.f32 1.5, %v1811
      %v1813 = vmul.f32 %v1808, %v1812
      %vm1814 = vweird.f32 %v1774
      %vm1815 = vweird.f32 %v1808
      %vm1816 = vmor %vm1814, %vm1815
      %v1817 = vsel %vm1816, %v1808, %v1813
      %v1818 = vrsqrt.pop %v1775
      %v1819 = vmul.f32 %v1818, %v1775
      %v1820 = vmul.f32 %v1819, %v1818
      %v1821 = vmul.f32 0.5, %v1820
      %v1822 = vsub.f32 1.5, %v1821
      %v1823 = vmul.f32 %v1818, %v1822
      %vm1824 = vweird.f32 %v1775
      %vm1825 = vweird.f32 %v1818
      %vm1826 = vmor %vm1824, %vm1825
      %v1827 = vsel %vm1826, %v1818, %v1823
      %v1828 = vrsqrt.pop %v1776
      %v1829 = vmul.f32 %v1828, %v1776
      %v1830 = vmul.f32 %v1829, %v1828
      %v1831 = vmul.f32 0.5, %v1830
      %v1832 = vsub.f32 1.5, %v1831
      %v1833 = vmul.f32 %v1828, %v1832
      %vm1834 = vweird.f32 %v1776
      %vm1835 = vweird.f32 %v1828
      %vm1836 = vmor %vm1834, %vm1835
      %v1837 = vsel %vm1836, %v1828, %v1833
      %v1838 = vrsqrt.pop %v1777
      %v1839 = vmul.f32 %v1838, %v1777
      %v1840 = vmul.f32 %v1839, %v1838
      %v1841 = vmul.f32 0.5, %v1840
      %v1842 = vsub.f32 1.5, %v1841
      %v1843 = vmul.f32 %v1838, %v1842
      %vm1844 = vweird.f32 %v1777
      %vm1845 = vweird.f32 %v1838
      %vm1846 = vmor %vm1844, %vm1845
      %v1847 = vsel %vm1846, %v1838, %v1843
      %v1848 = vrsqrt.pop %v1778
      %v1849 = vmul.f32 %v1848, %v1778
      %v1850 = vmul.f32 %v1849, %v1848
      %v1851 = vmul.f32 0.5, %v1850
      %v1852 = vsub.f32 1.5, %v1851
      %v1853 = vmul.f32 %v1848, %v1852
      %vm1854 = vweird.f32 %v1778
      %vm1855 = vweird.f32 %v1848
      %vm1856 = vmor %vm1854, %vm1855
      %v1857 = vsel %vm1856, %v1848, %v1853
      %v1858 = vrsqrt.pop %v1779
      %v1859 = vmul.f32 %v1858, %v1779
      %v1860 = vmul.f32 %v1859, %v1858
      %v1861 = vmul.f32 0.5, %v1860
      %v1862 = vsub.f32 1.5, %v1861
      %v1863 = vmul.f32 %v1858, %v1862
      %vm1864 = vweird.f32 %v1779
      %vm1865 = vweird.f32 %v1858
      %vm1866 = vmor %vm1864, %vm1865
      %v1867 = vsel %vm1866, %v1858, %v1863
      %v1868 = vrsqrt.pop %v1780
      %v1869 = vmul.f32 %v1868, %v1780
      %v1870 = vmul.f32 %v1869, %v1868
      %v1871 = vmul.f32 0.5, %v1870
      %v1872 = vsub.f32 1.5, %v1871
      %v1873 = vmul.f32 %v1868, %v1872
      %vm1874 = vweird.f32 %v1780
      %vm1875 = vweird.f32 %v1868
      %vm1876 = vmor %vm1874, %vm1875
      %v1877 = vsel %vm1876, %v1868, %v1873
      %v1878 = vrsqrt.pop %v1781
      %v1879 = vmul.f32 %v1878, %v1781
      %v1880 = vmul.f32 %v1879, %v1878
      %v1881 = vmul.f32 0.5, %v1880
      %v1882 = vsub.f32 1.5, %v1881
      %v1883 = vmul.f32 %v1878, %v1882
      %vm1884 = vweird.f32 %v1781
      %vm1885 = vweird.f32 %v1878
      %vm1886 = vmor %vm1884, %vm1885
      %v1887 = vsel %vm1886, %v1878, %v1883
      %v1888 = vrsqrt.pop %v1782
      %v1889 = vmul.f32 %v1888, %v1782
      %v1890 = vmul.f32 %v1889, %v1888
      %v1891 = vmul.f32 0.5, %v1890
      %v1892 = vsub.f32 1.5, %v1891
      %v1893 = vmul.f32 %v1888, %v1892
      %vm1894 = vweird.f32 %v1782
      %vm1895 = vweird.f32 %v1888
      %vm1896 = vmor %vm1894, %vm1895
      %v1897 = vsel %vm1896, %v1888, %v1893
      %v1898 = vrsqrt.pop %v1783
      %v1899 = vmul.f32 %v1898, %v1783
      %v1900 = vmul.f32 %v1899, %v1898
      %v1901 = vmul.f32 0.5, %v1900
      %v1902 = vsub.f32 1.5, %v1901
      %v1903 = vmul.f32 %v1898, %v1902
      %vm1904 = vweird.f32 %v1783
      %vm1905 = vweird.f32 %v1898
      %vm1906 = vmor %vm1904, %vm1905
      %v1907 = vsel %vm1906, %v1898, %v1903
      %v1908 = vrsqrt.pop %v1784
      %v1909 = vmul.f32 %v1908, %v1784
      %v1910 = vmul.f32 %v1909, %v1908
      %v1911 = vmul.f32 0.5, %v1910
      %v1912 = vsub.f32 1.5, %v1911
      %v1913 = vmul.f32 %v1908, %v1912
      %vm1914 = vweird.f32 %v1784
      %vm1915 = vweird.f32 %v1908
      %vm1916 = vmor %vm1914, %vm1915
      %v1917 = vsel %vm1916, %v1908, %v1913
      %v1918 = vrsqrt.pop %v1785
      %v1919 = vmul.f32 %v1918, %v1785
      %v1920 = vmul.f32 %v1919, %v1918
      %v1921 = vmul.f32 0.5, %v1920
      %v1922 = vsub.f32 1.5, %v1921
      %v1923 = vmul.f32 %v1918, %v1922
      %vm1924 = vweird.f32 %v1785
      %vm1925 = vweird.f32 %v1918
      %vm1926 = vmor %vm1924, %vm1925
      %v1927 = vsel %vm1926, %v1918, %v1923
      %v1928 = vrsqrt.pop %v1786
      %v1929 = vmul.f32 %v1928, %v1786
      %v1930 = vmul.f32 %v1929, %v1928
      %v1931 = vmul.f32 0.5, %v1930
      %v1932 = vsub.f32 1.5, %v1931
      %v1933 = vmul.f32 %v1928, %v1932
      %vm1934 = vweird.f32 %v1786
      %vm1935 = vweird.f32 %v1928
      %vm1936 = vmor %vm1934, %vm1935
      %v1937 = vsel %vm1936, %v1928, %v1933
      %v1938 = vrsqrt.pop %v1787
      %v1939 = vmul.f32 %v1938, %v1787
      %v1940 = vmul.f32 %v1939, %v1938
      %v1941 = vmul.f32 0.5, %v1940
      %v1942 = vsub.f32 1.5, %v1941
      %v1943 = vmul.f32 %v1938, %v1942
      %vm1944 = vweird.f32 %v1787
      %vm1945 = vweird.f32 %v1938
      %vm1946 = vmor %vm1944, %vm1945
      %v1947 = vsel %vm1946, %v1938, %v1943
      %v1948 = vmul.f32 %v1692, %v1797
      %v1949 = vmul.f32 %v1693, %v1807
      %v1950 = vmul.f32 %v1694, %v1817
      %v1951 = vmul.f32 %v1695, %v1827
      %v1952 = vmul.f32 %v1696, %v1837
      %v1953 = vmul.f32 %v1697, %v1847
      %v1954 = vmul.f32 %v1698, %v1857
      %v1955 = vmul.f32 %v1699, %v1867
      %v1956 = vmul.f32 %v1700, %v1877
      %v1957 = vmul.f32 %v1701, %v1887
      %v1958 = vmul.f32 %v1702, %v1897
      %v1959 = vmul.f32 %v1703, %v1907
      %v1960 = vmul.f32 %v1704, %v1917
      %v1961 = vmul.f32 %v1705, %v1927
      %v1962 = vmul.f32 %v1706, %v1937
      %v1963 = vmul.f32 %v1707, %v1947
      %v1965 = vperm.slane %v1635, 0
      %v1967 = vmul.f32 %v1948, %v1965
      %v1968 = vmul.f32 %v1949, %v1965
      %v1969 = vmul.f32 %v1950, %v1965
      %v1970 = vmul.f32 %v1951, %v1965
      %v1971 = vmul.f32 %v1952, %v1965
      %v1972 = vmul.f32 %v1953, %v1965
      %v1973 = vmul.f32 %v1954, %v1965
      %v1974 = vmul.f32 %v1955, %v1965
      %v1975 = vmul.f32 %v1956, %v1965
      %v1976 = vmul.f32 %v1957, %v1965
      %v1977 = vmul.f32 %v1958, %v1965
      %v1978 = vmul.f32 %v1959, %v1965
      %v1979 = vmul.f32 %v1960, %v1965
      %v1980 = vmul.f32 %v1961, %v1965
      %v1981 = vmul.f32 %v1962, %v1965
      %v1982 = vmul.f32 %v1963, %v1965
      %v1984 = vperm.slane %v1636, 0
      %v1986 = vadd.f32 %v1967, %v1984
      %v1987 = vadd.f32 %v1968, %v1984
      %v1988 = vadd.f32 %v1969, %v1984
      %v1989 = vadd.f32 %v1970, %v1984
      %v1990 = vadd.f32 %v1971, %v1984
      %v1991 = vadd.f32 %v1972, %v1984
      %v1992 = vadd.f32 %v1973, %v1984
      %v1993 = vadd.f32 %v1974, %v1984
      %v1994 = vadd.f32 %v1975, %v1984
      %v1995 = vadd.f32 %v1976, %v1984
      %v1996 = vadd.f32 %v1977, %v1984
      %v1997 = vadd.f32 %v1978, %v1984
      %v1998 = vadd.f32 %v1979, %v1984
      %v1999 = vadd.f32 %v1980, %v1984
      %v2000 = vadd.f32 %v1981, %v1984
      %v2001 = vadd.f32 %v1982, %v1984
      %v2002 = vld [vmem:[%s6] sm:$0xff]
      %v2003 = vld [vmem:[%s6 + $0x8] sm:$0xf]
      %v2004 = vld [vmem:[%s6 + $0xc] sm:$0xff]
      %v2005 = vld [vmem:[%s6 + $0x14] sm:$0xf]
      %v2006 = vld [vmem:[%s6 + $0x18] sm:$0xff]
      %v2007 = vld [vmem:[%s6 + $0x20] sm:$0xf]
      %v2008 = vld [vmem:[%s6 + $0x24] sm:$0xff]
      %v2009 = vld [vmem:[%s6 + $0x2c] sm:$0xf]
      %v2010 = vld [vmem:[%s6 + $0x30] sm:$0xff]
      %v2011 = vld [vmem:[%s6 + $0x38] sm:$0xf]
      %v2012 = vld [vmem:[%s6 + $0x3c] sm:$0xff]
      %v2013 = vld [vmem:[%s6 + $0x44] sm:$0xf]
      %v2014 = vld [vmem:[%s6 + $0x48] sm:$0xff]
      %v2015 = vld [vmem:[%s6 + $0x50] sm:$0xf]
      %v2016 = vld [vmem:[%s6 + $0x54] sm:$0xff]
      %v2017 = vld [vmem:[%s6 + $0x5c] sm:$0xf]
      %v2018 = vld [vmem:[%s6 + $0x60] sm:$0xff]
      %v2019 = vld [vmem:[%s6 + $0x68] sm:$0xf]
      %v2020 = vld [vmem:[%s6 + $0x6c] sm:$0xff]
      %v2021 = vld [vmem:[%s6 + $0x74] sm:$0xf]
      %v2022 = vld [vmem:[%s6 + $0x78] sm:$0xff]
      %v2023 = vld [vmem:[%s6 + $0x80] sm:$0xf]
      %v2024 = vld [vmem:[%s6 + $0x84] sm:$0xff]
      %v2025 = vld [vmem:[%s6 + $0x8c] sm:$0xf]
      %v2026 = vld [vmem:[%s6 + $0x90] sm:$0xff]
      %v2027 = vld [vmem:[%s6 + $0x98] sm:$0xf]
      %v2028 = vld [vmem:[%s6 + $0x9c] sm:$0xff]
      %v2029 = vld [vmem:[%s6 + $0xa4] sm:$0xf]
      %v2030 = vld [vmem:[%s6 + $0xa8] sm:$0xff]
      %v2031 = vld [vmem:[%s6 + $0xb0] sm:$0xf]
      %v2032 = vld [vmem:[%s6 + $0xb4] sm:$0xff]
      %v2033 = vld [vmem:[%s6 + $0xbc] sm:$0xf]
      %v2034 = vld [vmem:[%s7] sm:$0x7]
      %v2035 = vpack.c.bf16 %v1987, %v1986
      %v2036 = vpack.c.bf16 %v1989, %v1988
      %v2037 = vpack.c.bf16 %v1991, %v1990
      %v2038 = vpack.c.bf16 %v1993, %v1992
      %v2039 = vpack.c.bf16 %v1995, %v1994
      %v2040 = vpack.c.bf16 %v1997, %v1996
      %v2041 = vpack.c.bf16 %v1999, %v1998
      %v2042 = vpack.c.bf16 %v2001, %v2000
      %v2044 = vperm.slane %v2034, 0
      %v2045 = vperm.slane %v2034, 1
      %v2046 = vperm.slane %v2034, 2
      %v2082 = vunpack.c.l.b16 %v2002
      %v2083 = vunpack.c.h.b16 %v2002
      %v2084 = vunpack.c.l.b16 %v2003
      %v2085 = vunpack.c.l.b16 %v2004
      %v2086 = vunpack.c.h.b16 %v2004
      %v2087 = vunpack.c.l.b16 %v2005
      %v2088 = vunpack.c.l.b16 %v2006
      %v2089 = vunpack.c.h.b16 %v2006
      %v2090 = vunpack.c.l.b16 %v2007
      %v2091 = vunpack.c.l.b16 %v2008
      %v2092 = vunpack.c.h.b16 %v2008
      %v2093 = vunpack.c.l.b16 %v2009
      %v2094 = vunpack.c.l.b16 %v2010
      %v2095 = vunpack.c.h.b16 %v2010
      %v2096 = vunpack.c.l.b16 %v2011
      %v2097 = vunpack.c.l.b16 %v2012
      %v2098 = vunpack.c.h.b16 %v2012
      %v2099 = vunpack.c.l.b16 %v2013
      %v2100 = vunpack.c.l.b16 %v2014
      %v2101 = vunpack.c.h.b16 %v2014
      %v2102 = vunpack.c.l.b16 %v2015
      %v2103 = vunpack.c.l.b16 %v2016
      %v2104 = vunpack.c.h.b16 %v2016
      %v2105 = vunpack.c.l.b16 %v2017
      %v2106 = vunpack.c.l.b16 %v2018
      %v2107 = vunpack.c.h.b16 %v2018
      %v2108 = vunpack.c.l.b16 %v2019
      %v2109 = vunpack.c.l.b16 %v2020
      %v2110 = vunpack.c.h.b16 %v2020
      %v2111 = vunpack.c.l.b16 %v2021
      %v2112 = vunpack.c.l.b16 %v2022
      %v2113 = vunpack.c.h.b16 %v2022
      %v2114 = vunpack.c.l.b16 %v2023
      %v2115 = vunpack.c.l.b16 %v2024
      %v2116 = vunpack.c.h.b16 %v2024
      %v2117 = vunpack.c.l.b16 %v2025
      %v2118 = vunpack.c.l.b16 %v2026
      %v2119 = vunpack.c.h.b16 %v2026
      %v2120 = vunpack.c.l.b16 %v2027
      %v2121 = vunpack.c.l.b16 %v2028
      %v2122 = vunpack.c.h.b16 %v2028
      %v2123 = vunpack.c.l.b16 %v2029
      %v2124 = vunpack.c.l.b16 %v2030
      %v2125 = vunpack.c.h.b16 %v2030
      %v2126 = vunpack.c.l.b16 %v2031
      %v2127 = vunpack.c.l.b16 %v2032
      %v2128 = vunpack.c.h.b16 %v2032
      %v2129 = vunpack.c.l.b16 %v2033
      %v2130 = vpack.c.b16 %v2085, %v2082
      %v2131 = vpack.c.b16 %v2086, %v2083
      %v2132 = vpack.c.b16 %v2087, %v2084
      %v2133 = vpack.c.b16 %v2091, %v2088
      %v2134 = vpack.c.b16 %v2092, %v2089
      %v2135 = vpack.c.b16 %v2093, %v2090
      %v2136 = vpack.c.b16 %v2097, %v2094
      %v2137 = vpack.c.b16 %v2098, %v2095
      %v2138 = vpack.c.b16 %v2099, %v2096
      %v2139 = vpack.c.b16 %v2103, %v2100
      %v2140 = vpack.c.b16 %v2104, %v2101
      %v2141 = vpack.c.b16 %v2105, %v2102
      %v2142 = vpack.c.b16 %v2109, %v2106
      %v2143 = vpack.c.b16 %v2110, %v2107
      %v2144 = vpack.c.b16 %v2111, %v2108
      %v2145 = vpack.c.b16 %v2115, %v2112
      %v2146 = vpack.c.b16 %v2116, %v2113
      %v2147 = vpack.c.b16 %v2117, %v2114
      %v2148 = vpack.c.b16 %v2121, %v2118
      %v2149 = vpack.c.b16 %v2122, %v2119
      %v2150 = vpack.c.b16 %v2123, %v2120
      %v2151 = vpack.c.b16 %v2127, %v2124
      %v2152 = vpack.c.b16 %v2128, %v2125
      %v2153 = vpack.c.b16 %v2129, %v2126
      %2178 = vmatpush.bf16.msra.mxu0 %v2151
      %2179 = vmatpush.bf16.msra.mxu0 %v2148
      %2180 = vmatpush.bf16.msra.mxu0 %v2145
      %2181 = vmatpush.bf16.msra.mxu0 %v2142
      %2182 = vmatpush.bf16.msra.mxu0 %v2139
      %2183 = vmatpush.bf16.msra.mxu0 %v2136
      %2184 = vmatpush.bf16.msra.mxu0 %v2133
      %2185 = vmatpush.bf16.msra.mxu0 %v2130
      %2186 = vmatmul.bf16.gmra.mxu0 %v2035
      %v2187 = vpop.f32.mrf.mxu0
      %v2188 = vadd.f32 %v2044, %v2187
      %v2189 = vpop.f32.mrf.mxu0
      %v2190 = vadd.f32 %v2044, %v2189
      %2191 = vmatmul.bf16.gmra.mxu0 %v2036
      %v2192 = vpop.f32.mrf.mxu0
      %v2193 = vadd.f32 %v2044, %v2192
      %v2194 = vpop.f32.mrf.mxu0
      %v2195 = vadd.f32 %v2044, %v2194
      %2196 = vmatmul.bf16.gmra.mxu0 %v2037
      %v2197 = vpop.f32.mrf.mxu0
      %v2198 = vadd.f32 %v2044, %v2197
      %v2199 = vpop.f32.mrf.mxu0
      %v2200 = vadd.f32 %v2044, %v2199
      %2201 = vmatmul.bf16.gmra.mxu0 %v2038
      %v2202 = vpop.f32.mrf.mxu0
      %v2203 = vadd.f32 %v2044, %v2202
      %v2204 = vpop.f32.mrf.mxu0
      %v2205 = vadd.f32 %v2044, %v2204
      %2206 = vmatmul.bf16.gmra.mxu0 %v2039
      %v2207 = vpop.f32.mrf.mxu0
      %v2208 = vadd.f32 %v2044, %v2207
      %v2209 = vpop.f32.mrf.mxu0
      %v2210 = vadd.f32 %v2044, %v2209
      %2211 = vmatmul.bf16.gmra.mxu0 %v2040
      %v2212 = vpop.f32.mrf.mxu0
      %v2213 = vadd.f32 %v2044, %v2212
      %v2214 = vpop.f32.mrf.mxu0
      %v2215 = vadd.f32 %v2044, %v2214
      %2216 = vmatmul.bf16.gmra.mxu0 %v2041
      %v2217 = vpop.f32.mrf.mxu0
      %v2218 = vadd.f32 %v2044, %v2217
      %v2219 = vpop.f32.mrf.mxu0
      %v2220 = vadd.f32 %v2044, %v2219
      %2221 = vmatmul.bf16.gmra.mxu0 %v2042
      %v2222 = vpop.f32.mrf.mxu0
      %v2223 = vadd.f32 %v2044, %v2222
      %v2224 = vpop.f32.mrf.mxu0
      %v2225 = vadd.f32 %v2044, %v2224
      %2226 = vdwg.mxu0
      %2227 = vmatpush.bf16.msra.mxu0 %v2152
      %2228 = vmatpush.bf16.msra.mxu0 %v2149
      %2229 = vmatpush.bf16.msra.mxu0 %v2146
      %2230 = vmatpush.bf16.msra.mxu0 %v2143
      %2231 = vmatpush.bf16.msra.mxu0 %v2140
      %2232 = vmatpush.bf16.msra.mxu0 %v2137
      %2233 = vmatpush.bf16.msra.mxu0 %v2134
      %2234 = vmatpush.bf16.msra.mxu0 %v2131
      %2235 = vmatmul.bf16.gmra.mxu0 %v2035
      %v2236 = vpop.f32.mrf.mxu0
      %v2237 = vadd.f32 %v2045, %v2236
      %v2238 = vpop.f32.mrf.mxu0
      %v2239 = vadd.f32 %v2045, %v2238
      %2240 = vmatmul.bf16.gmra.mxu0 %v2036
      %v2241 = vpop.f32.mrf.mxu0
      %v2242 = vadd.f32 %v2045, %v2241
      %v2243 = vpop.f32.mrf.mxu0
      %v2244 = vadd.f32 %v2045, %v2243
      %2245 = vmatmul.bf16.gmra.mxu0 %v2037
      %v2246 = vpop.f32.mrf.mxu0
      %v2247 = vadd.f32 %v2045, %v2246
      %v2248 = vpop.f32.mrf.mxu0
      %v2249 = vadd.f32 %v2045, %v2248
      %2250 = vmatmul.bf16.gmra.mxu0 %v2038
      %v2251 = vpop.f32.mrf.mxu0
      %v2252 = vadd.f32 %v2045, %v2251
      %v2253 = vpop.f32.mrf.mxu0
      %v2254 = vadd.f32 %v2045, %v2253
      %2255 = vmatmul.bf16.gmra.mxu0 %v2039
      %v2256 = vpop.f32.mrf.mxu0
      %v2257 = vadd.f32 %v2045, %v2256
      %v2258 = vpop.f32.mrf.mxu0
      %v2259 = vadd.f32 %v2045, %v2258
      %2260 = vmatmul.bf16.gmra.mxu0 %v2040
      %v2261 = vpop.f32.mrf.mxu0
      %v2262 = vadd.f32 %v2045, %v2261
      %v2263 = vpop.f32.mrf.mxu0
      %v2264 = vadd.f32 %v2045, %v2263
      %2265 = vmatmul.bf16.gmra.mxu0 %v2041
      %v2266 = vpop.f32.mrf.mxu0
      %v2267 = vadd.f32 %v2045, %v2266
      %v2268 = vpop.f32.mrf.mxu0
      %v2269 = vadd.f32 %v2045, %v2268
      %2270 = vmatmul.bf16.gmra.mxu0 %v2042
      %v2271 = vpop.f32.mrf.mxu0
      %v2272 = vadd.f32 %v2045, %v2271
      %v2273 = vpop.f32.mrf.mxu0
      %v2274 = vadd.f32 %v2045, %v2273
      %2275 = vdwg.mxu0
      %2276 = vmatpush.bf16.msra.mxu0 %v2153
      %2277 = vmatpush.bf16.msra.mxu0 %v2150
      %2278 = vmatpush.bf16.msra.mxu0 %v2147
      %2279 = vmatpush.bf16.msra.mxu0 %v2144
      %2280 = vmatpush.bf16.msra.mxu0 %v2141
      %2281 = vmatpush.bf16.msra.mxu0 %v2138
      %2282 = vmatpush.bf16.msra.mxu0 %v2135
      %2283 = vmatpush.bf16.msra.mxu0 %v2132
      %2284 = vmatmul.bf16.gmra.mxu0 %v2035
      %v2285 = vpop.f32.mrf.mxu0
      %v2286 = vadd.f32 %v2046, %v2285
      %v2287 = vpop.f32.mrf.mxu0
      %v2288 = vadd.f32 %v2046, %v2287
      %2289 = vmatmul.bf16.gmra.mxu0 %v2036
      %v2290 = vpop.f32.mrf.mxu0
      %v2291 = vadd.f32 %v2046, %v2290
      %v2292 = vpop.f32.mrf.mxu0
      %v2293 = vadd.f32 %v2046, %v2292
      %2294 = vmatmul.bf16.gmra.mxu0 %v2037
      %v2295 = vpop.f32.mrf.mxu0
      %v2296 = vadd.f32 %v2046, %v2295
      %v2297 = vpop.f32.mrf.mxu0
      %v2298 = vadd.f32 %v2046, %v2297
      %2299 = vmatmul.bf16.gmra.mxu0 %v2038
      %v2300 = vpop.f32.mrf.mxu0
      %v2301 = vadd.f32 %v2046, %v2300
      %v2302 = vpop.f32.mrf.mxu0
      %v2303 = vadd.f32 %v2046, %v2302
      %2304 = vmatmul.bf16.gmra.mxu0 %v2039
      %v2305 = vpop.f32.mrf.mxu0
      %v2306 = vadd.f32 %v2046, %v2305
      %v2307 = vpop.f32.mrf.mxu0
      %v2308 = vadd.f32 %v2046, %v2307
      %2309 = vmatmul.bf16.gmra.mxu0 %v2040
      %v2310 = vpop.f32.mrf.mxu0
      %v2311 = vadd.f32 %v2046, %v2310
      %v2312 = vpop.f32.mrf.mxu0
      %v2313 = vadd.f32 %v2046, %v2312
      %2314 = vmatmul.bf16.gmra.mxu0 %v2041
      %v2315 = vpop.f32.mrf.mxu0
      %v2316 = vadd.f32 %v2046, %v2315
      %v2317 = vpop.f32.mrf.mxu0
      %v2318 = vadd.f32 %v2046, %v2317
      %2319 = vmatmul.bf16.gmra.mxu0 %v2042
      %v2320 = vpop.f32.mrf.mxu0
      %v2321 = vadd.f32 %v2046, %v2320
      %v2322 = vpop.f32.mrf.mxu0
      %v2323 = vadd.f32 %v2046, %v2322
      %2324 = vdwg.mxu0
      %v2325 = vpack.c.bf16 %v2190, %v2188
      %v2326 = vpack.c.bf16 %v2195, %v2193
      %v2327 = vpack.c.bf16 %v2200, %v2198
      %v2328 = vpack.c.bf16 %v2205, %v2203
      %v2329 = vpack.c.bf16 %v2210, %v2208
      %v2330 = vpack.c.bf16 %v2215, %v2213
      %v2331 = vpack.c.bf16 %v2220, %v2218
      %v2332 = vpack.c.bf16 %v2225, %v2223
      %v2333 = vpack.c.bf16 %v2239, %v2237
      %v2334 = vpack.c.bf16 %v2244, %v2242
      %v2335 = vpack.c.bf16 %v2249, %v2247
      %v2336 = vpack.c.bf16 %v2254, %v2252
      %v2337 = vpack.c.bf16 %v2259, %v2257
      %v2338 = vpack.c.bf16 %v2264, %v2262
      %v2339 = vpack.c.bf16 %v2269, %v2267
      %v2340 = vpack.c.bf16 %v2274, %v2272
      %vm2341 = vcmask 261120
      %v2343 = vsel %vm2341, %v2325, 0
      %v2346 = vsel %vm2341, %v2326, 0
      %v2349 = vsel %vm2341, %v2327, 0
      %v2352 = vsel %vm2341, %v2328, 0
      %v2355 = vsel %vm2341, %v2329, 0
      %v2358 = vsel %vm2341, %v2330, 0
      %v2361 = vsel %vm2341, %v2331, 0
      %v2364 = vsel %vm2341, %v2332, 0
      %v2367 = vsel %vm2341, %v2333, 0
      %v2370 = vsel %vm2341, %v2334, 0
      %v2373 = vsel %vm2341, %v2335, 0
      %v2376 = vsel %vm2341, %v2336, 0
      %v2379 = vsel %vm2341, %v2337, 0
      %v2382 = vsel %vm2341, %v2338, 0
      %v2385 = vsel %vm2341, %v2339, 0
      %v2388 = vsel %vm2341, %v2340, 0
      %2390 = vmatpush.bf16.xpose.msra.mxu0 %v2388
      %2391 = vmatpush.bf16.xpose.msra.mxu0 %v2385
      %2392 = vmatpush.bf16.xpose.msra.mxu0 %v2382
      %2393 = vmatpush.bf16.xpose.msra.mxu0 %v2379
      %2394 = vmatpush.bf16.xpose.msra.mxu0 %v2376
      %2395 = vmatpush.bf16.xpose.msra.mxu0 %v2373
      %2396 = vmatpush.bf16.xpose.msra.mxu0 %v2370
      %2397 = vmatpush.bf16.xpose.msra.mxu0 %v2367
      %2398 = vmatmul.bf16.gmra.mxu0 %v2343
      %v2399 = vpop.f32.mrf.mxu0
      %v2400 = vadd.f32 %v1619, %v2399
      %v2401 = vpop.f32.mrf.mxu0
      %v2402 = vadd.f32 %v1620, %v2401
      %2403 = vmatmul.bf16.gmra.mxu0 %v2346
      %v2404 = vpop.f32.mrf.mxu0
      %v2405 = vadd.f32 %v1621, %v2404
      %v2406 = vpop.f32.mrf.mxu0
      %v2407 = vadd.f32 %v1622, %v2406
      %2408 = vmatmul.bf16.gmra.mxu0 %v2349
      %v2409 = vpop.f32.mrf.mxu0
      %v2410 = vadd.f32 %v1623, %v2409
      %v2411 = vpop.f32.mrf.mxu0
      %v2412 = vadd.f32 %v1624, %v2411
      %2413 = vmatmul.bf16.gmra.mxu0 %v2352
      %v2414 = vpop.f32.mrf.mxu0
      %v2415 = vadd.f32 %v1625, %v2414
      %v2416 = vpop.f32.mrf.mxu0
      %v2417 = vadd.f32 %v1626, %v2416
      %2418 = vmatmul.bf16.gmra.mxu0 %v2355
      %v2419 = vpop.f32.mrf.mxu0
      %v2420 = vadd.f32 %v1627, %v2419
      %v2421 = vpop.f32.mrf.mxu0
      %v2422 = vadd.f32 %v1628, %v2421
      %2423 = vmatmul.bf16.gmra.mxu0 %v2358
      %v2424 = vpop.f32.mrf.mxu0
      %v2425 = vadd.f32 %v1629, %v2424
      %v2426 = vpop.f32.mrf.mxu0
      %v2427 = vadd.f32 %v1630, %v2426
      %2428 = vmatmul.bf16.gmra.mxu0 %v2361
      %v2429 = vpop.f32.mrf.mxu0
      %v2430 = vadd.f32 %v1631, %v2429
      %v2431 = vpop.f32.mrf.mxu0
      %v2432 = vadd.f32 %v1632, %v2431
      %2433 = vmatmul.bf16.gmra.mxu0 %v2364
      %v2434 = vpop.f32.mrf.mxu0
      %v2435 = vadd.f32 %v1633, %v2434
      %v2436 = vpop.f32.mrf.mxu0
      %v2437 = vadd.f32 %v1634, %v2436
      %2438 = vdwg.mxu0
      %2439 = vmax.xlane.f32.xlu0 %v2400
      %v2440 = vpop.xlane.xlu0 %2439
      %2441 = vmax.xlane.f32.xlu0 %v2402
      %v2442 = vpop.xlane.xlu0 %2441
      %2443 = vmax.xlane.f32.xlu0 %v2405
      %v2444 = vpop.xlane.xlu0 %2443
      %2445 = vmax.xlane.f32.xlu0 %v2407
      %v2446 = vpop.xlane.xlu0 %2445
      %2447 = vmax.xlane.f32.xlu0 %v2410
      %v2448 = vpop.xlane.xlu0 %2447
      %2449 = vmax.xlane.f32.xlu0 %v2412
      %v2450 = vpop.xlane.xlu0 %2449
      %2451 = vmax.xlane.f32.xlu0 %v2415
      %v2452 = vpop.xlane.xlu0 %2451
      %2453 = vmax.xlane.f32.xlu0 %v2417
      %v2454 = vpop.xlane.xlu0 %2453
      %2455 = vmax.xlane.f32.xlu0 %v2420
      %v2456 = vpop.xlane.xlu0 %2455
      %2457 = vmax.xlane.f32.xlu0 %v2422
      %v2458 = vpop.xlane.xlu0 %2457
      %2459 = vmax.xlane.f32.xlu0 %v2425
      %v2460 = vpop.xlane.xlu0 %2459
      %2461 = vmax.xlane.f32.xlu0 %v2427
      %v2462 = vpop.xlane.xlu0 %2461
      %2463 = vmax.xlane.f32.xlu0 %v2430
      %v2464 = vpop.xlane.xlu0 %2463
      %2465 = vmax.xlane.f32.xlu0 %v2432
      %v2466 = vpop.xlane.xlu0 %2465
      %2467 = vmax.xlane.f32.xlu0 %v2435
      %v2468 = vpop.xlane.xlu0 %2467
      %2469 = vmax.xlane.f32.xlu0 %v2437
      %v2470 = vpop.xlane.xlu0 %2469
      %v2471 = vsub.f32 %v2400, %v2440
      %v2472 = vsub.f32 %v2402, %v2442
      %v2473 = vsub.f32 %v2405, %v2444
      %v2474 = vsub.f32 %v2407, %v2446
      %v2475 = vsub.f32 %v2410, %v2448
      %v2476 = vsub.f32 %v2412, %v2450
      %v2477 = vsub.f32 %v2415, %v2452
      %v2478 = vsub.f32 %v2417, %v2454
      %v2479 = vsub.f32 %v2420, %v2456
      %v2480 = vsub.f32 %v2422, %v2458
      %v2481 = vsub.f32 %v2425, %v2460
      %v2482 = vsub.f32 %v2427, %v2462
      %v2483 = vsub.f32 %v2430, %v2464
      %v2484 = vsub.f32 %v2432, %v2466
      %v2485 = vsub.f32 %v2435, %v2468
      %v2486 = vsub.f32 %v2437, %v2470
      %v2487 = vmul.f32 %v2471, 1.442695
      %v2488 = vpow.pop %v2487
      %v2489 = vmul.f32 %v2472, 1.442695
      %v2490 = vpow.pop %v2489
      %v2491 = vmul.f32 %v2473, 1.442695
      %v2492 = vpow.pop %v2491
      %v2493 = vmul.f32 %v2474, 1.442695
      %v2494 = vpow.pop %v2493
      %v2495 = vmul.f32 %v2475, 1.442695
      %v2496 = vpow.pop %v2495
      %v2497 = vmul.f32 %v2476, 1.442695
      %v2498 = vpow.pop %v2497
      %v2499 = vmul.f32 %v2477, 1.442695
      %v2500 = vpow.pop %v2499
      %v2501 = vmul.f32 %v2478, 1.442695
      %v2502 = vpow.pop %v2501
      %v2503 = vmul.f32 %v2479, 1.442695
      %v2504 = vpow.pop %v2503
      %v2505 = vmul.f32 %v2480, 1.442695
      %v2506 = vpow.pop %v2505
      %v2507 = vmul.f32 %v2481, 1.442695
      %v2508 = vpow.pop %v2507
      %v2509 = vmul.f32 %v2482, 1.442695
      %v2510 = vpow.pop %v2509
      %v2511 = vmul.f32 %v2483, 1.442695
      %v2512 = vpow.pop %v2511
      %v2513 = vmul.f32 %v2484, 1.442695
      %v2514 = vpow.pop %v2513
      %v2515 = vmul.f32 %v2485, 1.442695
      %v2516 = vpow.pop %v2515
      %v2517 = vmul.f32 %v2486, 1.442695
      %v2518 = vpow.pop %v2517
      %2519 = vadd.xlane.f32.xlu0 %v2488
      %v2520 = vpop.xlane.xlu0 %2519
      %2521 = vadd.xlane.f32.xlu0 %v2490
      %v2522 = vpop.xlane.xlu0 %2521
      %2523 = vadd.xlane.f32.xlu0 %v2492
      %v2524 = vpop.xlane.xlu0 %2523
      %2525 = vadd.xlane.f32.xlu0 %v2494
      %v2526 = vpop.xlane.xlu0 %2525
      %2527 = vadd.xlane.f32.xlu0 %v2496
      %v2528 = vpop.xlane.xlu0 %2527
      %2529 = vadd.xlane.f32.xlu0 %v2498
      %v2530 = vpop.xlane.xlu0 %2529
      %2531 = vadd.xlane.f32.xlu0 %v2500
      %v2532 = vpop.xlane.xlu0 %2531
      %2533 = vadd.xlane.f32.xlu0 %v2502
      %v2534 = vpop.xlane.xlu0 %2533
      %2535 = vadd.xlane.f32.xlu0 %v2504
      %v2536 = vpop.xlane.xlu0 %2535
      %2537 = vadd.xlane.f32.xlu0 %v2506
      %v2538 = vpop.xlane.xlu0 %2537
      %2539 = vadd.xlane.f32.xlu0 %v2508
      %v2540 = vpop.xlane.xlu0 %2539
      %2541 = vadd.xlane.f32.xlu0 %v2510
      %v2542 = vpop.xlane.xlu0 %2541
      %2543 = vadd.xlane.f32.xlu0 %v2512
      %v2544 = vpop.xlane.xlu0 %2543
      %2545 = vadd.xlane.f32.xlu0 %v2514
      %v2546 = vpop.xlane.xlu0 %2545
      %2547 = vadd.xlane.f32.xlu0 %v2516
      %v2548 = vpop.xlane.xlu0 %2547
      %2549 = vadd.xlane.f32.xlu0 %v2518
      %v2550 = vpop.xlane.xlu0 %2549
      %v2551 = vrcp.pop %v2520
      %v2552 = vrcp.pop %v2522
      %v2553 = vrcp.pop %v2524
      %v2554 = vrcp.pop %v2526
      %v2555 = vrcp.pop %v2528
      %v2556 = vrcp.pop %v2530
      %v2557 = vrcp.pop %v2532
      %v2558 = vrcp.pop %v2534
      %v2559 = vrcp.pop %v2536
      %v2560 = vrcp.pop %v2538
      %v2561 = vrcp.pop %v2540
      %v2562 = vrcp.pop %v2542
      %v2563 = vrcp.pop %v2544
      %v2564 = vrcp.pop %v2546
      %v2565 = vrcp.pop %v2548
      %v2566 = vrcp.pop %v2550
      %v2567 = vmul.f32 %v2488, %v2551
      %v2568 = vmul.f32 %v2490, %v2552
      %v2569 = vmul.f32 %v2492, %v2553
      %v2570 = vmul.f32 %v2494, %v2554
      %v2571 = vmul.f32 %v2496, %v2555
      %v2572 = vmul.f32 %v2498, %v2556
      %v2573 = vmul.f32 %v2500, %v2557
      %v2574 = vmul.f32 %v2502, %v2558
      %v2575 = vmul.f32 %v2504, %v2559
      %v2576 = vmul.f32 %v2506, %v2560
      %v2577 = vmul.f32 %v2508, %v2561
      %v2578 = vmul.f32 %v2510, %v2562
      %v2579 = vmul.f32 %v2512, %v2563
      %v2580 = vmul.f32 %v2514, %v2564
      %v2581 = vmul.f32 %v2516, %v2565
      %v2582 = vmul.f32 %v2518, %v2566
      %v2583 = vpack.c.bf16 %v2568, %v2567
      %v2584 = vpack.c.bf16 %v2570, %v2569
      %v2585 = vpack.c.bf16 %v2572, %v2571
      %v2586 = vpack.c.bf16 %v2574, %v2573
      %v2587 = vpack.c.bf16 %v2576, %v2575
      %v2588 = vpack.c.bf16 %v2578, %v2577
      %v2589 = vpack.c.bf16 %v2580, %v2579
      %v2590 = vpack.c.bf16 %v2582, %v2581
      %v2591 = vpack.c.bf16 %v2288, %v2286
      %v2592 = vpack.c.bf16 %v2293, %v2291
      %v2593 = vpack.c.bf16 %v2298, %v2296
      %v2594 = vpack.c.bf16 %v2303, %v2301
      %v2595 = vpack.c.bf16 %v2308, %v2306
      %v2596 = vpack.c.bf16 %v2313, %v2311
      %v2597 = vpack.c.bf16 %v2318, %v2316
      %v2598 = vpack.c.bf16 %v2323, %v2321
      %2599 = vmatpush.bf16.msra.mxu0 %v2598
      %2600 = vmatpush.bf16.msra.mxu0 %v2597
      %2601 = vmatpush.bf16.msra.mxu0 %v2596
      %2602 = vmatpush.bf16.msra.mxu0 %v2595
      %2603 = vmatpush.bf16.msra.mxu0 %v2594
      %2604 = vmatpush.bf16.msra.mxu0 %v2593
      %2605 = vmatpush.bf16.msra.mxu0 %v2592
      %2606 = vmatpush.bf16.msra.mxu0 %v2591
      %2607 = vmatmul.bf16.gmra.mxu0 %v2583
      %v2608 = vpop.f32.mrf.mxu0
      %v2609 = vadd.f32 0.0, %v2608
      %v2610 = vpop.f32.mrf.mxu0
      %v2611 = vadd.f32 0.0, %v2610
      %2612 = vmatmul.bf16.gmra.mxu0 %v2584
      %v2613 = vpop.f32.mrf.mxu0
      %v2614 = vadd.f32 0.0, %v2613
      %v2615 = vpop.f32.mrf.mxu0
      %v2616 = vadd.f32 0.0, %v2615
      %2617 = vmatmul.bf16.gmra.mxu0 %v2585
      %v2618 = vpop.f32.mrf.mxu0
      %v2619 = vadd.f32 0.0, %v2618
      %v2620 = vpop.f32.mrf.mxu0
      %v2621 = vadd.f32 0.0, %v2620
      %2622 = vmatmul.bf16.gmra.mxu0 %v2586
      %v2623 = vpop.f32.mrf.mxu0
      %v2624 = vadd.f32 0.0, %v2623
      %v2625 = vpop.f32.mrf.mxu0
      %v2626 = vadd.f32 0.0, %v2625
      %2627 = vmatmul.bf16.gmra.mxu0 %v2587
      %v2628 = vpop.f32.mrf.mxu0
      %v2629 = vadd.f32 0.0, %v2628
      %v2630 = vpop.f32.mrf.mxu0
      %v2631 = vadd.f32 0.0, %v2630
      %2632 = vmatmul.bf16.gmra.mxu0 %v2588
      %v2633 = vpop.f32.mrf.mxu0
      %v2634 = vadd.f32 0.0, %v2633
      %v2635 = vpop.f32.mrf.mxu0
      %v2636 = vadd.f32 0.0, %v2635
      %2637 = vmatmul.bf16.gmra.mxu0 %v2589
      %v2638 = vpop.f32.mrf.mxu0
      %v2639 = vadd.f32 0.0, %v2638
      %v2640 = vpop.f32.mrf.mxu0
      %v2641 = vadd.f32 0.0, %v2640
      %2642 = vmatmul.bf16.gmra.mxu0 %v2590
      %v2643 = vpop.f32.mrf.mxu0
      %v2644 = vadd.f32 0.0, %v2643
      %v2645 = vpop.f32.mrf.mxu0
      %v2646 = vadd.f32 0.0, %v2645
      %2647 = vdwg.mxu0
      %v2648 = vld [vmem:[%s8] sm:$0xf]
      %v2649 = vld [vmem:[%s8 + $0x4] sm:$0xf]
      %v2650 = vld [vmem:[%s8 + $0x8] sm:$0xf]
      %v2651 = vld [vmem:[%s8 + $0xc] sm:$0xf]
      %v2652 = vpack.c.bf16 %v2611, %v2609
      %v2653 = vpack.c.bf16 %v2616, %v2614
      %v2654 = vpack.c.bf16 %v2621, %v2619
      %v2655 = vpack.c.bf16 %v2626, %v2624
      %v2656 = vpack.c.bf16 %v2631, %v2629
      %v2657 = vpack.c.bf16 %v2636, %v2634
      %v2658 = vpack.c.bf16 %v2641, %v2639
      %v2659 = vpack.c.bf16 %v2646, %v2644
      %2668 = vrot.lane.b32.xlu0 %v2325, 96
      %v2669 = vpop.permute.xlu0 %2668
      %2670 = vrot.lane.b32.xlu0 %v2326, 96
      %v2671 = vpop.permute.xlu0 %2670
      %2672 = vrot.lane.b32.xlu0 %v2327, 96
      %v2673 = vpop.permute.xlu0 %2672
      %2674 = vrot.lane.b32.xlu0 %v2328, 96
      %v2675 = vpop.permute.xlu0 %2674
      %2676 = vrot.lane.b32.xlu0 %v2329, 96
      %v2677 = vpop.permute.xlu0 %2676
      %2678 = vrot.lane.b32.xlu0 %v2330, 96
      %v2679 = vpop.permute.xlu0 %2678
      %2680 = vrot.lane.b32.xlu0 %v2331, 96
      %v2681 = vpop.permute.xlu0 %2680
      %2682 = vrot.lane.b32.xlu0 %v2332, 96
      %v2683 = vpop.permute.xlu0 %2682
      %2692 = vrot.lane.b32.xlu0 %v2333, 96
      %v2693 = vpop.permute.xlu0 %2692
      %2694 = vrot.lane.b32.xlu0 %v2334, 96
      %v2695 = vpop.permute.xlu0 %2694
      %2696 = vrot.lane.b32.xlu0 %v2335, 96
      %v2697 = vpop.permute.xlu0 %2696
      %2698 = vrot.lane.b32.xlu0 %v2336, 96
      %v2699 = vpop.permute.xlu0 %2698
      %2700 = vrot.lane.b32.xlu0 %v2337, 96
      %v2701 = vpop.permute.xlu0 %2700
      %2702 = vrot.lane.b32.xlu0 %v2338, 96
      %v2703 = vpop.permute.xlu0 %2702
      %2704 = vrot.lane.b32.xlu0 %v2339, 96
      %v2705 = vpop.permute.xlu0 %2704
      %2706 = vrot.lane.b32.xlu0 %v2340, 96
      %v2707 = vpop.permute.xlu0 %2706
      %v2709 = vsel %vm2341, %v2669, 0
      %v2712 = vsel %vm2341, %v2671, 0
      %v2715 = vsel %vm2341, %v2673, 0
      %v2718 = vsel %vm2341, %v2675, 0
      %v2721 = vsel %vm2341, %v2677, 0
      %v2724 = vsel %vm2341, %v2679, 0
      %v2727 = vsel %vm2341, %v2681, 0
      %v2730 = vsel %vm2341, %v2683, 0
      %v2733 = vsel %vm2341, %v2693, 0
      %v2736 = vsel %vm2341, %v2695, 0
      %v2739 = vsel %vm2341, %v2697, 0
      %v2742 = vsel %vm2341, %v2699, 0
      %v2745 = vsel %vm2341, %v2701, 0
      %v2748 = vsel %vm2341, %v2703, 0
      %v2751 = vsel %vm2341, %v2705, 0
      %v2754 = vsel %vm2341, %v2707, 0
      %2756 = vmatpush.bf16.xpose.msra.mxu0 %v2754
      %2757 = vmatpush.bf16.xpose.msra.mxu0 %v2751
      %2758 = vmatpush.bf16.xpose.msra.mxu0 %v2748
      %2759 = vmatpush.bf16.xpose.msra.mxu0 %v2745
      %2760 = vmatpush.bf16.xpose.msra.mxu0 %v2742
      %2761 = vmatpush.bf16.xpose.msra.mxu0 %v2739
      %2762 = vmatpush.bf16.xpose.msra.mxu0 %v2736
      %2763 = vmatpush.bf16.xpose.msra.mxu0 %v2733
      %2764 = vmatmul.bf16.gmra.mxu0 %v2709
      %v2765 = vpop.f32.mrf.mxu0
      %v2766 = vadd.f32 %v1619, %v2765
      %v2767 = vpop.f32.mrf.mxu0
      %v2768 = vadd.f32 %v1620, %v2767
      %2769 = vmatmul.bf16.gmra.mxu0 %v2712
      %v2770 = vpop.f32.mrf.mxu0
      %v2771 = vadd.f32 %v1621, %v2770
      %v2772 = vpop.f32.mrf.mxu0
      %v2773 = vadd.f32 %v1622, %v2772
      %2774 = vmatmul.bf16.gmra.mxu0 %v2715
      %v2775 = vpop.f32.mrf.mxu0
      %v2776 = vadd.f32 %v1623, %v2775
      %v2777 = vpop.f32.mrf.mxu0
      %v2778 = vadd.f32 %v1624, %v2777
      %2779 = vmatmul.bf16.gmra.mxu0 %v2718
      %v2780 = vpop.f32.mrf.mxu0
      %v2781 = vadd.f32 %v1625, %v2780
      %v2782 = vpop.f32.mrf.mxu0
      %v2783 = vadd.f32 %v1626, %v2782
      %2784 = vmatmul.bf16.gmra.mxu0 %v2721
      %v2785 = vpop.f32.mrf.mxu0
      %v2786 = vadd.f32 %v1627, %v2785
      %v2787 = vpop.f32.mrf.mxu0
      %v2788 = vadd.f32 %v1628, %v2787
      %2789 = vmatmul.bf16.gmra.mxu0 %v2724
      %v2790 = vpop.f32.mrf.mxu0
      %v2791 = vadd.f32 %v1629, %v2790
      %v2792 = vpop.f32.mrf.mxu0
      %v2793 = vadd.f32 %v1630, %v2792
      %2794 = vmatmul.bf16.gmra.mxu0 %v2727
      %v2795 = vpop.f32.mrf.mxu0
      %v2796 = vadd.f32 %v1631, %v2795
      %v2797 = vpop.f32.mrf.mxu0
      %v2798 = vadd.f32 %v1632, %v2797
      %2799 = vmatmul.bf16.gmra.mxu0 %v2730
      %v2800 = vpop.f32.mrf.mxu0
      %v2801 = vadd.f32 %v1633, %v2800
      %v2802 = vpop.f32.mrf.mxu0
      %v2803 = vadd.f32 %v1634, %v2802
      %2804 = vdwg.mxu0
      %2805 = vmax.xlane.f32.xlu0 %v2766
      %v2806 = vpop.xlane.xlu0 %2805
      %2807 = vmax.xlane.f32.xlu0 %v2768
      %v2808 = vpop.xlane.xlu0 %2807
      %2809 = vmax.xlane.f32.xlu0 %v2771
      %v2810 = vpop.xlane.xlu0 %2809
      %2811 = vmax.xlane.f32.xlu0 %v2773
      %v2812 = vpop.xlane.xlu0 %2811
      %2813 = vmax.xlane.f32.xlu0 %v2776
      %v2814 = vpop.xlane.xlu0 %2813
      %2815 = vmax.xlane.f32.xlu0 %v2778
      %v2816 = vpop.xlane.xlu0 %2815
      %2817 = vmax.xlane.f32.xlu0 %v2781
      %v2818 = vpop.xlane.xlu0 %2817
      %2819 = vmax.xlane.f32.xlu0 %v2783
      %v2820 = vpop.xlane.xlu0 %2819
      %2821 = vmax.xlane.f32.xlu0 %v2786
      %v2822 = vpop.xlane.xlu0 %2821
      %2823 = vmax.xlane.f32.xlu0 %v2788
      %v2824 = vpop.xlane.xlu0 %2823
      %2825 = vmax.xlane.f32.xlu0 %v2791
      %v2826 = vpop.xlane.xlu0 %2825
      %2827 = vmax.xlane.f32.xlu0 %v2793
      %v2828 = vpop.xlane.xlu0 %2827
      %2829 = vmax.xlane.f32.xlu0 %v2796
      %v2830 = vpop.xlane.xlu0 %2829
      %2831 = vmax.xlane.f32.xlu0 %v2798
      %v2832 = vpop.xlane.xlu0 %2831
      %2833 = vmax.xlane.f32.xlu0 %v2801
      %v2834 = vpop.xlane.xlu0 %2833
      %2835 = vmax.xlane.f32.xlu0 %v2803
      %v2836 = vpop.xlane.xlu0 %2835
      %v2837 = vsub.f32 %v2766, %v2806
      %v2838 = vsub.f32 %v2768, %v2808
      %v2839 = vsub.f32 %v2771, %v2810
      %v2840 = vsub.f32 %v2773, %v2812
      %v2841 = vsub.f32 %v2776, %v2814
      %v2842 = vsub.f32 %v2778, %v2816
      %v2843 = vsub.f32 %v2781, %v2818
      %v2844 = vsub.f32 %v2783, %v2820
      %v2845 = vsub.f32 %v2786, %v2822
      %v2846 = vsub.f32 %v2788, %v2824
      %v2847 = vsub.f32 %v2791, %v2826
      %v2848 = vsub.f32 %v2793, %v2828
      %v2849 = vsub.f32 %v2796, %v2830
      %v2850 = vsub.f32 %v2798, %v2832
      %v2851 = vsub.f32 %v2801, %v2834
      %v2852 = vsub.f32 %v2803, %v2836
      %v2853 = vmul.f32 %v2837, 1.442695
      %v2854 = vpow.pop %v2853
      %v2855 = vmul.f32 %v2838, 1.442695
      %v2856 = vpow.pop %v2855
      %v2857 = vmul.f32 %v2839, 1.442695
      %v2858 = vpow.pop %v2857
      %v2859 = vmul.f32 %v2840, 1.442695
      %v2860 = vpow.pop %v2859
      %v2861 = vmul.f32 %v2841, 1.442695
      %v2862 = vpow.pop %v2861
      %v2863 = vmul.f32 %v2842, 1.442695
      %v2864 = vpow.pop %v2863
      %v2865 = vmul.f32 %v2843, 1.442695
      %v2866 = vpow.pop %v2865
      %v2867 = vmul.f32 %v2844, 1.442695
      %v2868 = vpow.pop %v2867
      %v2869 = vmul.f32 %v2845, 1.442695
      %v2870 = vpow.pop %v2869
      %v2871 = vmul.f32 %v2846, 1.442695
      %v2872 = vpow.pop %v2871
      %v2873 = vmul.f32 %v2847, 1.442695
      %v2874 = vpow.pop %v2873
      %v2875 = vmul.f32 %v2848, 1.442695
      %v2876 = vpow.pop %v2875
      %v2877 = vmul.f32 %v2849, 1.442695
      %v2878 = vpow.pop %v2877
      %v2879 = vmul.f32 %v2850, 1.442695
      %v2880 = vpow.pop %v2879
      %v2881 = vmul.f32 %v2851, 1.442695
      %v2882 = vpow.pop %v2881
      %v2883 = vmul.f32 %v2852, 1.442695
      %v2884 = vpow.pop %v2883
      %2885 = vadd.xlane.f32.xlu0 %v2854
      %v2886 = vpop.xlane.xlu0 %2885
      %2887 = vadd.xlane.f32.xlu0 %v2856
      %v2888 = vpop.xlane.xlu0 %2887
      %2889 = vadd.xlane.f32.xlu0 %v2858
      %v2890 = vpop.xlane.xlu0 %2889
      %2891 = vadd.xlane.f32.xlu0 %v2860
      %v2892 = vpop.xlane.xlu0 %2891
      %2893 = vadd.xlane.f32.xlu0 %v2862
      %v2894 = vpop.xlane.xlu0 %2893
      %2895 = vadd.xlane.f32.xlu0 %v2864
      %v2896 = vpop.xlane.xlu0 %2895
      %2897 = vadd.xlane.f32.xlu0 %v2866
      %v2898 = vpop.xlane.xlu0 %2897
      %2899 = vadd.xlane.f32.xlu0 %v2868
      %v2900 = vpop.xlane.xlu0 %2899
      %2901 = vadd.xlane.f32.xlu0 %v2870
      %v2902 = vpop.xlane.xlu0 %2901
      %2903 = vadd.xlane.f32.xlu0 %v2872
      %v2904 = vpop.xlane.xlu0 %2903
      %2905 = vadd.xlane.f32.xlu0 %v2874
      %v2906 = vpop.xlane.xlu0 %2905
      %2907 = vadd.xlane.f32.xlu0 %v2876
      %v2908 = vpop.xlane.xlu0 %2907
      %2909 = vadd.xlane.f32.xlu0 %v2878
      %v2910 = vpop.xlane.xlu0 %2909
      %2911 = vadd.xlane.f32.xlu0 %v2880
      %v2912 = vpop.xlane.xlu0 %2911
      %2913 = vadd.xlane.f32.xlu0 %v2882
      %v2914 = vpop.xlane.xlu0 %2913
      %2915 = vadd.xlane.f32.xlu0 %v2884
      %v2916 = vpop.xlane.xlu0 %2915
      %v2917 = vrcp.pop %v2886
      %v2918 = vrcp.pop %v2888
      %v2919 = vrcp.pop %v2890
      %v2920 = vrcp.pop %v2892
      %v2921 = vrcp.pop %v2894
      %v2922 = vrcp.pop %v2896
      %v2923 = vrcp.pop %v2898
      %v2924 = vrcp.pop %v2900
      %v2925 = vrcp.pop %v2902
      %v2926 = vrcp.pop %v2904
      %v2927 = vrcp.pop %v2906
      %v2928 = vrcp.pop %v2908
      %v2929 = vrcp.pop %v2910
      %v2930 = vrcp.pop %v2912
      %v2931 = vrcp.pop %v2914
      %v2932 = vrcp.pop %v2916
      %v2933 = vmul.f32 %v2854, %v2917
      %v2934 = vmul.f32 %v2856, %v2918
      %v2935 = vmul.f32 %v2858, %v2919
      %v2936 = vmul.f32 %v2860, %v2920
      %v2937 = vmul.f32 %v2862, %v2921
      %v2938 = vmul.f32 %v2864, %v2922
      %v2939 = vmul.f32 %v2866, %v2923
      %v2940 = vmul.f32 %v2868, %v2924
      %v2941 = vmul.f32 %v2870, %v2925
      %v2942 = vmul.f32 %v2872, %v2926
      %v2943 = vmul.f32 %v2874, %v2927
      %v2944 = vmul.f32 %v2876, %v2928
      %v2945 = vmul.f32 %v2878, %v2929
      %v2946 = vmul.f32 %v2880, %v2930
      %v2947 = vmul.f32 %v2882, %v2931
      %v2948 = vmul.f32 %v2884, %v2932
      %v2949 = vpack.c.bf16 %v2934, %v2933
      %v2950 = vpack.c.bf16 %v2936, %v2935
      %v2951 = vpack.c.bf16 %v2938, %v2937
      %v2952 = vpack.c.bf16 %v2940, %v2939
      %v2953 = vpack.c.bf16 %v2942, %v2941
      %v2954 = vpack.c.bf16 %v2944, %v2943
      %v2955 = vpack.c.bf16 %v2946, %v2945
      %v2956 = vpack.c.bf16 %v2948, %v2947
      %2965 = vrot.lane.b32.xlu0 %v2591, 96
      %v2966 = vpop.permute.xlu0 %2965
      %2967 = vrot.lane.b32.xlu0 %v2592, 96
      %v2968 = vpop.permute.xlu0 %2967
      %2969 = vrot.lane.b32.xlu0 %v2593, 96
      %v2970 = vpop.permute.xlu0 %2969
      %2971 = vrot.lane.b32.xlu0 %v2594, 96
      %v2972 = vpop.permute.xlu0 %2971
      %2973 = vrot.lane.b32.xlu0 %v2595, 96
      %v2974 = vpop.permute.xlu0 %2973
      %2975 = vrot.lane.b32.xlu0 %v2596, 96
      %v2976 = vpop.permute.xlu0 %2975
      %2977 = vrot.lane.b32.xlu0 %v2597, 96
      %v2978 = vpop.permute.xlu0 %2977
      %2979 = vrot.lane.b32.xlu0 %v2598, 96
      %v2980 = vpop.permute.xlu0 %2979
      %2989 = vmatpush.bf16.msra.mxu0 %v2980
      %2990 = vmatpush.bf16.msra.mxu0 %v2978
      %2991 = vmatpush.bf16.msra.mxu0 %v2976
      %2992 = vmatpush.bf16.msra.mxu0 %v2974
      %2993 = vmatpush.bf16.msra.mxu0 %v2972
      %2994 = vmatpush.bf16.msra.mxu0 %v2970
      %2995 = vmatpush.bf16.msra.mxu0 %v2968
      %2996 = vmatpush.bf16.msra.mxu0 %v2966
      %2997 = vmatmul.bf16.gmra.mxu0 %v2949
      %v2998 = vpop.f32.mrf.mxu0
      %v2999 = vadd.f32 0.0, %v2998
      %v3000 = vpop.f32.mrf.mxu0
      %v3001 = vadd.f32 0.0, %v3000
      %3002 = vmatmul.bf16.gmra.mxu0 %v2950
      %v3003 = vpop.f32.mrf.mxu0
      %v3004 = vadd.f32 0.0, %v3003
      %v3005 = vpop.f32.mrf.mxu0
      %v3006 = vadd.f32 0.0, %v3005
      %3007 = vmatmul.bf16.gmra.mxu0 %v2951
      %v3008 = vpop.f32.mrf.mxu0
      %v3009 = vadd.f32 0.0, %v3008
      %v3010 = vpop.f32.mrf.mxu0
      %v3011 = vadd.f32 0.0, %v3010
      %3012 = vmatmul.bf16.gmra.mxu0 %v2952
      %v3013 = vpop.f32.mrf.mxu0
      %v3014 = vadd.f32 0.0, %v3013
      %v3015 = vpop.f32.mrf.mxu0
      %v3016 = vadd.f32 0.0, %v3015
      %3017 = vmatmul.bf16.gmra.mxu0 %v2953
      %v3018 = vpop.f32.mrf.mxu0
      %v3019 = vadd.f32 0.0, %v3018
      %v3020 = vpop.f32.mrf.mxu0
      %v3021 = vadd.f32 0.0, %v3020
      %3022 = vmatmul.bf16.gmra.mxu0 %v2954
      %v3023 = vpop.f32.mrf.mxu0
      %v3024 = vadd.f32 0.0, %v3023
      %v3025 = vpop.f32.mrf.mxu0
      %v3026 = vadd.f32 0.0, %v3025
      %3027 = vmatmul.bf16.gmra.mxu0 %v2955
      %v3028 = vpop.f32.mrf.mxu0
      %v3029 = vadd.f32 0.0, %v3028
      %v3030 = vpop.f32.mrf.mxu0
      %v3031 = vadd.f32 0.0, %v3030
      %3032 = vmatmul.bf16.gmra.mxu0 %v2956
      %v3033 = vpop.f32.mrf.mxu0
      %v3034 = vadd.f32 0.0, %v3033
      %v3035 = vpop.f32.mrf.mxu0
      %v3036 = vadd.f32 0.0, %v3035
      %3037 = vdwg.mxu0
      %v3038 = vld [vmem:[%s8 + $0x10] sm:$0xf]
      %v3039 = vld [vmem:[%s8 + $0x14] sm:$0xf]
      %v3040 = vld [vmem:[%s8 + $0x18] sm:$0xf]
      %v3041 = vld [vmem:[%s8 + $0x1c] sm:$0xf]
      %v3042 = vpack.c.bf16 %v3001, %v2999
      %v3043 = vpack.c.bf16 %v3006, %v3004
      %v3044 = vpack.c.bf16 %v3011, %v3009
      %v3045 = vpack.c.bf16 %v3016, %v3014
      %v3046 = vpack.c.bf16 %v3021, %v3019
      %v3047 = vpack.c.bf16 %v3026, %v3024
      %v3048 = vpack.c.bf16 %v3031, %v3029
      %v3049 = vpack.c.bf16 %v3036, %v3034
      %v3054 = vunpack.c.l.b16 %v3038
      %v3055 = vunpack.c.l.b16 %v3039
      %v3056 = vunpack.c.l.b16 %v3040
      %v3057 = vunpack.c.l.b16 %v3041
      %v3058 = vpack.c.b16 %v3055, %v3054
      %v3059 = vpack.c.b16 %v3057, %v3056
      %v3063 = vsel %vm2341, %v3042, 0
      %v3066 = vsel %vm2341, %v3043, 0
      %v3069 = vsel %vm2341, %v3044, 0
      %v3072 = vsel %vm2341, %v3045, 0
      %v3075 = vsel %vm2341, %v3046, 0
      %v3078 = vsel %vm2341, %v3047, 0
      %v3081 = vsel %vm2341, %v3048, 0
      %v3084 = vsel %vm2341, %v3049, 0
      %3086 = vmatpush.bf16.msra.mxu0 0
      %3087 = vmatpush.bf16.msra.mxu0 0
      %3088 = vmatpush.bf16.msra.mxu0 0
      %3089 = vmatpush.bf16.msra.mxu0 0
      %3090 = vmatpush.bf16.msra.mxu0 0
      %3091 = vmatpush.bf16.msra.mxu0 0
      %3092 = vmatpush.bf16.msra.mxu0 %v3059
      %3093 = vmatpush.bf16.msra.mxu0 %v3058
      %3094 = vmatmul.bf16.gmra.mxu0 %v3063
      %v3095 = vpop.f32.mrf.mxu0
      %v3096 = vadd.f32 0.0, %v3095
      %v3097 = vpop.f32.mrf.mxu0
      %v3098 = vadd.f32 0.0, %v3097
      %3099 = vmatmul.bf16.gmra.mxu0 %v3066
      %v3100 = vpop.f32.mrf.mxu0
      %v3101 = vadd.f32 0.0, %v3100
      %v3102 = vpop.f32.mrf.mxu0
      %v3103 = vadd.f32 0.0, %v3102
      %3104 = vmatmul.bf16.gmra.mxu0 %v3069
      %v3105 = vpop.f32.mrf.mxu0
      %v3106 = vadd.f32 0.0, %v3105
      %v3107 = vpop.f32.mrf.mxu0
      %v3108 = vadd.f32 0.0, %v3107
      %3109 = vmatmul.bf16.gmra.mxu0 %v3072
      %v3110 = vpop.f32.mrf.mxu0
      %v3111 = vadd.f32 0.0, %v3110
      %v3112 = vpop.f32.mrf.mxu0
      %v3113 = vadd.f32 0.0, %v3112
      %3114 = vmatmul.bf16.gmra.mxu0 %v3075
      %v3115 = vpop.f32.mrf.mxu0
      %v3116 = vadd.f32 0.0, %v3115
      %v3117 = vpop.f32.mrf.mxu0
      %v3118 = vadd.f32 0.0, %v3117
      %3119 = vmatmul.bf16.gmra.mxu0 %v3078
      %v3120 = vpop.f32.mrf.mxu0
      %v3121 = vadd.f32 0.0, %v3120
      %v3122 = vpop.f32.mrf.mxu0
      %v3123 = vadd.f32 0.0, %v3122
      %3124 = vmatmul.bf16.gmra.mxu0 %v3081
      %v3125 = vpop.f32.mrf.mxu0
      %v3126 = vadd.f32 0.0, %v3125
      %v3127 = vpop.f32.mrf.mxu0
      %v3128 = vadd.f32 0.0, %v3127
      %3129 = vmatmul.bf16.gmra.mxu0 %v3084
      %v3130 = vpop.f32.mrf.mxu0
      %v3131 = vadd.f32 0.0, %v3130
      %v3132 = vpop.f32.mrf.mxu0
      %v3133 = vadd.f32 0.0, %v3132
      %3134 = vdwg.mxu0
      %v3139 = vunpack.c.l.b16 %v2648
      %v3140 = vunpack.c.l.b16 %v2649
      %v3141 = vunpack.c.l.b16 %v2650
      %v3142 = vunpack.c.l.b16 %v2651
      %v3143 = vpack.c.b16 %v3140, %v3139
      %v3144 = vpack.c.b16 %v3142, %v3141
      %v3148 = vsel %vm2341, %v2652, 0
      %v3151 = vsel %vm2341, %v2653, 0
      %v3154 = vsel %vm2341, %v2654, 0
      %v3157 = vsel %vm2341, %v2655, 0
      %v3160 = vsel %vm2341, %v2656, 0
      %v3163 = vsel %vm2341, %v2657, 0
      %v3166 = vsel %vm2341, %v2658, 0
      %v3169 = vsel %vm2341, %v2659, 0
      %3171 = vmatpush.bf16.msra.mxu0 0
      %3172 = vmatpush.bf16.msra.mxu0 0
      %3173 = vmatpush.bf16.msra.mxu0 0
      %3174 = vmatpush.bf16.msra.mxu0 0
      %3175 = vmatpush.bf16.msra.mxu0 0
      %3176 = vmatpush.bf16.msra.mxu0 0
      %3177 = vmatpush.bf16.msra.mxu0 %v3144
      %3178 = vmatpush.bf16.msra.mxu0 %v3143
      %3179 = vmatmul.bf16.gmra.mxu0 %v3148
      %v3180 = vpop.f32.mrf.mxu0
      %v3181 = vadd.f32 %v3096, %v3180
      %v3182 = vpop.f32.mrf.mxu0
      %v3183 = vadd.f32 %v3098, %v3182
      %3184 = vmatmul.bf16.gmra.mxu0 %v3151
      %v3185 = vpop.f32.mrf.mxu0
      %v3186 = vadd.f32 %v3101, %v3185
      %v3187 = vpop.f32.mrf.mxu0
      %v3188 = vadd.f32 %v3103, %v3187
      %3189 = vmatmul.bf16.gmra.mxu0 %v3154
      %v3190 = vpop.f32.mrf.mxu0
      %v3191 = vadd.f32 %v3106, %v3190
      %v3192 = vpop.f32.mrf.mxu0
      %v3193 = vadd.f32 %v3108, %v3192
      %3194 = vmatmul.bf16.gmra.mxu0 %v3157
      %v3195 = vpop.f32.mrf.mxu0
      %v3196 = vadd.f32 %v3111, %v3195
      %v3197 = vpop.f32.mrf.mxu0
      %v3198 = vadd.f32 %v3113, %v3197
      %3199 = vmatmul.bf16.gmra.mxu0 %v3160
      %v3200 = vpop.f32.mrf.mxu0
      %v3201 = vadd.f32 %v3116, %v3200
      %v3202 = vpop.f32.mrf.mxu0
      %v3203 = vadd.f32 %v3118, %v3202
      %3204 = vmatmul.bf16.gmra.mxu0 %v3163
      %v3205 = vpop.f32.mrf.mxu0
      %v3206 = vadd.f32 %v3121, %v3205
      %v3207 = vpop.f32.mrf.mxu0
      %v3208 = vadd.f32 %v3123, %v3207
      %3209 = vmatmul.bf16.gmra.mxu0 %v3166
      %v3210 = vpop.f32.mrf.mxu0
      %v3211 = vadd.f32 %v3126, %v3210
      %v3212 = vpop.f32.mrf.mxu0
      %v3213 = vadd.f32 %v3128, %v3212
      %3214 = vmatmul.bf16.gmra.mxu0 %v3169
      %v3215 = vpop.f32.mrf.mxu0
      %v3216 = vadd.f32 %v3131, %v3215
      %v3217 = vpop.f32.mrf.mxu0
      %v3218 = vadd.f32 %v3133, %v3217
      %3219 = vdwg.mxu0
      %3220 = vrot.lane.b32.xlu0 %v2325, 64
      %v3221 = vpop.permute.xlu0 %3220
      %3222 = vrot.lane.b32.xlu0 %v2326, 64
      %v3223 = vpop.permute.xlu0 %3222
      %3224 = vrot.lane.b32.xlu0 %v2327, 64
      %v3225 = vpop.permute.xlu0 %3224
      %3226 = vrot.lane.b32.xlu0 %v2328, 64
      %v3227 = vpop.permute.xlu0 %3226
      %3228 = vrot.lane.b32.xlu0 %v2329, 64
      %v3229 = vpop.permute.xlu0 %3228
      %3230 = vrot.lane.b32.xlu0 %v2330, 64
      %v3231 = vpop.permute.xlu0 %3230
      %3232 = vrot.lane.b32.xlu0 %v2331, 64
      %v3233 = vpop.permute.xlu0 %3232
      %3234 = vrot.lane.b32.xlu0 %v2332, 64
      %v3235 = vpop.permute.xlu0 %3234
      %3236 = vrot.lane.b32.xlu0 %v2333, 64
      %v3237 = vpop.permute.xlu0 %3236
      %3238 = vrot.lane.b32.xlu0 %v2334, 64
      %v3239 = vpop.permute.xlu0 %3238
      %3240 = vrot.lane.b32.xlu0 %v2335, 64
      %v3241 = vpop.permute.xlu0 %3240
      %3242 = vrot.lane.b32.xlu0 %v2336, 64
      %v3243 = vpop.permute.xlu0 %3242
      %3244 = vrot.lane.b32.xlu0 %v2337, 64
      %v3245 = vpop.permute.xlu0 %3244
      %3246 = vrot.lane.b32.xlu0 %v2338, 64
      %v3247 = vpop.permute.xlu0 %3246
      %3248 = vrot.lane.b32.xlu0 %v2339, 64
      %v3249 = vpop.permute.xlu0 %3248
      %3250 = vrot.lane.b32.xlu0 %v2340, 64
      %v3251 = vpop.permute.xlu0 %3250
      %v3253 = vsel %vm2341, %v3221, 0
      %v3256 = vsel %vm2341, %v3223, 0
      %v3259 = vsel %vm2341, %v3225, 0
      %v3262 = vsel %vm2341, %v3227, 0
      %v3265 = vsel %vm2341, %v3229, 0
      %v3268 = vsel %vm2341, %v3231, 0
      %v3271 = vsel %vm2341, %v3233, 0
      %v3274 = vsel %vm2341, %v3235, 0
      %v3277 = vsel %vm2341, %v3237, 0
      %v3280 = vsel %vm2341, %v3239, 0
      %v3283 = vsel %vm2341, %v3241, 0
      %v3286 = vsel %vm2341, %v3243, 0
      %v3289 = vsel %vm2341, %v3245, 0
      %v3292 = vsel %vm2341, %v3247, 0
      %v3295 = vsel %vm2341, %v3249, 0
      %v3298 = vsel %vm2341, %v3251, 0
      %3300 = vmatpush.bf16.xpose.msra.mxu0 %v3298
      %3301 = vmatpush.bf16.xpose.msra.mxu0 %v3295
      %3302 = vmatpush.bf16.xpose.msra.mxu0 %v3292
      %3303 = vmatpush.bf16.xpose.msra.mxu0 %v3289
      %3304 = vmatpush.bf16.xpose.msra.mxu0 %v3286
      %3305 = vmatpush.bf16.xpose.msra.mxu0 %v3283
      %3306 = vmatpush.bf16.xpose.msra.mxu0 %v3280
      %3307 = vmatpush.bf16.xpose.msra.mxu0 %v3277
      %3308 = vmatmul.bf16.gmra.mxu0 %v3253
      %v3309 = vpop.f32.mrf.mxu0
      %v3310 = vadd.f32 %v1619, %v3309
      %v3311 = vpop.f32.mrf.mxu0
      %v3312 = vadd.f32 %v1620, %v3311
      %3313 = vmatmul.bf16.gmra.mxu0 %v3256
      %v3314 = vpop.f32.mrf.mxu0
      %v3315 = vadd.f32 %v1621, %v3314
      %v3316 = vpop.f32.mrf.mxu0
      %v3317 = vadd.f32 %v1622, %v3316
      %3318 = vmatmul.bf16.gmra.mxu0 %v3259
      %v3319 = vpop.f32.mrf.mxu0
      %v3320 = vadd.f32 %v1623, %v3319
      %v3321 = vpop.f32.mrf.mxu0
      %v3322 = vadd.f32 %v1624, %v3321
      %3323 = vmatmul.bf16.gmra.mxu0 %v3262
      %v3324 = vpop.f32.mrf.mxu0
      %v3325 = vadd.f32 %v1625, %v3324
      %v3326 = vpop.f32.mrf.mxu0
      %v3327 = vadd.f32 %v1626, %v3326
      %3328 = vmatmul.bf16.gmra.mxu0 %v3265
      %v3329 = vpop.f32.mrf.mxu0
      %v3330 = vadd.f32 %v1627, %v3329
      %v3331 = vpop.f32.mrf.mxu0
      %v3332 = vadd.f32 %v1628, %v3331
      %3333 = vmatmul.bf16.gmra.mxu0 %v3268
      %v3334 = vpop.f32.mrf.mxu0
      %v3335 = vadd.f32 %v1629, %v3334
      %v3336 = vpop.f32.mrf.mxu0
      %v3337 = vadd.f32 %v1630, %v3336
      %3338 = vmatmul.bf16.gmra.mxu0 %v3271
      %v3339 = vpop.f32.mrf.mxu0
      %v3340 = vadd.f32 %v1631, %v3339
      %v3341 = vpop.f32.mrf.mxu0
      %v3342 = vadd.f32 %v1632, %v3341
      %3343 = vmatmul.bf16.gmra.mxu0 %v3274
      %v3344 = vpop.f32.mrf.mxu0
      %v3345 = vadd.f32 %v1633, %v3344
      %v3346 = vpop.f32.mrf.mxu0
      %v3347 = vadd.f32 %v1634, %v3346
      %3348 = vdwg.mxu0
      %3349 = vmax.xlane.f32.xlu0 %v3310
      %v3350 = vpop.xlane.xlu0 %3349
      %3351 = vmax.xlane.f32.xlu0 %v3312
      %v3352 = vpop.xlane.xlu0 %3351
      %3353 = vmax.xlane.f32.xlu0 %v3315
      %v3354 = vpop.xlane.xlu0 %3353
      %3355 = vmax.xlane.f32.xlu0 %v3317
      %v3356 = vpop.xlane.xlu0 %3355
      %3357 = vmax.xlane.f32.xlu0 %v3320
      %v3358 = vpop.xlane.xlu0 %3357
      %3359 = vmax.xlane.f32.xlu0 %v3322
      %v3360 = vpop.xlane.xlu0 %3359
      %3361 = vmax.xlane.f32.xlu0 %v3325
      %v3362 = vpop.xlane.xlu0 %3361
      %3363 = vmax.xlane.f32.xlu0 %v3327
      %v3364 = vpop.xlane.xlu0 %3363
      %3365 = vmax.xlane.f32.xlu0 %v3330
      %v3366 = vpop.xlane.xlu0 %3365
      %3367 = vmax.xlane.f32.xlu0 %v3332
      %v3368 = vpop.xlane.xlu0 %3367
      %3369 = vmax.xlane.f32.xlu0 %v3335
      %v3370 = vpop.xlane.xlu0 %3369
      %3371 = vmax.xlane.f32.xlu0 %v3337
      %v3372 = vpop.xlane.xlu0 %3371
      %3373 = vmax.xlane.f32.xlu0 %v3340
      %v3374 = vpop.xlane.xlu0 %3373
      %3375 = vmax.xlane.f32.xlu0 %v3342
      %v3376 = vpop.xlane.xlu0 %3375
      %3377 = vmax.xlane.f32.xlu0 %v3345
      %v3378 = vpop.xlane.xlu0 %3377
      %3379 = vmax.xlane.f32.xlu0 %v3347
      %v3380 = vpop.xlane.xlu0 %3379
      %v3381 = vsub.f32 %v3310, %v3350
      %v3382 = vsub.f32 %v3312, %v3352
      %v3383 = vsub.f32 %v3315, %v3354
      %v3384 = vsub.f32 %v3317, %v3356
      %v3385 = vsub.f32 %v3320, %v3358
      %v3386 = vsub.f32 %v3322, %v3360
      %v3387 = vsub.f32 %v3325, %v3362
      %v3388 = vsub.f32 %v3327, %v3364
      %v3389 = vsub.f32 %v3330, %v3366
      %v3390 = vsub.f32 %v3332, %v3368
      %v3391 = vsub.f32 %v3335, %v3370
      %v3392 = vsub.f32 %v3337, %v3372
      %v3393 = vsub.f32 %v3340, %v3374
      %v3394 = vsub.f32 %v3342, %v3376
      %v3395 = vsub.f32 %v3345, %v3378
      %v3396 = vsub.f32 %v3347, %v3380
      %v3397 = vmul.f32 %v3381, 1.442695
      %v3398 = vpow.pop %v3397
      %v3399 = vmul.f32 %v3382, 1.442695
      %v3400 = vpow.pop %v3399
      %v3401 = vmul.f32 %v3383, 1.442695
      %v3402 = vpow.pop %v3401
      %v3403 = vmul.f32 %v3384, 1.442695
      %v3404 = vpow.pop %v3403
      %v3405 = vmul.f32 %v3385, 1.442695
      %v3406 = vpow.pop %v3405
      %v3407 = vmul.f32 %v3386, 1.442695
      %v3408 = vpow.pop %v3407
      %v3409 = vmul.f32 %v3387, 1.442695
      %v3410 = vpow.pop %v3409
      %v3411 = vmul.f32 %v3388, 1.442695
      %v3412 = vpow.pop %v3411
      %v3413 = vmul.f32 %v3389, 1.442695
      %v3414 = vpow.pop %v3413
      %v3415 = vmul.f32 %v3390, 1.442695
      %v3416 = vpow.pop %v3415
      %v3417 = vmul.f32 %v3391, 1.442695
      %v3418 = vpow.pop %v3417
      %v3419 = vmul.f32 %v3392, 1.442695
      %v3420 = vpow.pop %v3419
      %v3421 = vmul.f32 %v3393, 1.442695
      %v3422 = vpow.pop %v3421
      %v3423 = vmul.f32 %v3394, 1.442695
      %v3424 = vpow.pop %v3423
      %v3425 = vmul.f32 %v3395, 1.442695
      %v3426 = vpow.pop %v3425
      %v3427 = vmul.f32 %v3396, 1.442695
      %v3428 = vpow.pop %v3427
      %3429 = vadd.xlane.f32.xlu0 %v3398
      %v3430 = vpop.xlane.xlu0 %3429
      %3431 = vadd.xlane.f32.xlu0 %v3400
      %v3432 = vpop.xlane.xlu0 %3431
      %3433 = vadd.xlane.f32.xlu0 %v3402
      %v3434 = vpop.xlane.xlu0 %3433
      %3435 = vadd.xlane.f32.xlu0 %v3404
      %v3436 = vpop.xlane.xlu0 %3435
      %3437 = vadd.xlane.f32.xlu0 %v3406
      %v3438 = vpop.xlane.xlu0 %3437
      %3439 = vadd.xlane.f32.xlu0 %v3408
      %v3440 = vpop.xlane.xlu0 %3439
      %3441 = vadd.xlane.f32.xlu0 %v3410
      %v3442 = vpop.xlane.xlu0 %3441
      %3443 = vadd.xlane.f32.xlu0 %v3412
      %v3444 = vpop.xlane.xlu0 %3443
      %3445 = vadd.xlane.f32.xlu0 %v3414
      %v3446 = vpop.xlane.xlu0 %3445
      %3447 = vadd.xlane.f32.xlu0 %v3416
      %v3448 = vpop.xlane.xlu0 %3447
      %3449 = vadd.xlane.f32.xlu0 %v3418
      %v3450 = vpop.xlane.xlu0 %3449
      %3451 = vadd.xlane.f32.xlu0 %v3420
      %v3452 = vpop.xlane.xlu0 %3451
      %3453 = vadd.xlane.f32.xlu0 %v3422
      %v3454 = vpop.xlane.xlu0 %3453
      %3455 = vadd.xlane.f32.xlu0 %v3424
      %v3456 = vpop.xlane.xlu0 %3455
      %3457 = vadd.xlane.f32.xlu0 %v3426
      %v3458 = vpop.xlane.xlu0 %3457
      %3459 = vadd.xlane.f32.xlu0 %v3428
      %v3460 = vpop.xlane.xlu0 %3459
      %v3461 = vrcp.pop %v3430
      %v3462 = vrcp.pop %v3432
      %v3463 = vrcp.pop %v3434
      %v3464 = vrcp.pop %v3436
      %v3465 = vrcp.pop %v3438
      %v3466 = vrcp.pop %v3440
      %v3467 = vrcp.pop %v3442
      %v3468 = vrcp.pop %v3444
      %v3469 = vrcp.pop %v3446
      %v3470 = vrcp.pop %v3448
      %v3471 = vrcp.pop %v3450
      %v3472 = vrcp.pop %v3452
      %v3473 = vrcp.pop %v3454
      %v3474 = vrcp.pop %v3456
      %v3475 = vrcp.pop %v3458
      %v3476 = vrcp.pop %v3460
      %v3477 = vmul.f32 %v3398, %v3461
      %v3478 = vmul.f32 %v3400, %v3462
      %v3479 = vmul.f32 %v3402, %v3463
      %v3480 = vmul.f32 %v3404, %v3464
      %v3481 = vmul.f32 %v3406, %v3465
      %v3482 = vmul.f32 %v3408, %v3466
      %v3483 = vmul.f32 %v3410, %v3467
      %v3484 = vmul.f32 %v3412, %v3468
      %v3485 = vmul.f32 %v3414, %v3469
      %v3486 = vmul.f32 %v3416, %v3470
      %v3487 = vmul.f32 %v3418, %v3471
      %v3488 = vmul.f32 %v3420, %v3472
      %v3489 = vmul.f32 %v3422, %v3473
      %v3490 = vmul.f32 %v3424, %v3474
      %v3491 = vmul.f32 %v3426, %v3475
      %v3492 = vmul.f32 %v3428, %v3476
      %v3493 = vpack.c.bf16 %v3478, %v3477
      %v3494 = vpack.c.bf16 %v3480, %v3479
      %v3495 = vpack.c.bf16 %v3482, %v3481
      %v3496 = vpack.c.bf16 %v3484, %v3483
      %v3497 = vpack.c.bf16 %v3486, %v3485
      %v3498 = vpack.c.bf16 %v3488, %v3487
      %v3499 = vpack.c.bf16 %v3490, %v3489
      %v3500 = vpack.c.bf16 %v3492, %v3491
      %3501 = vrot.lane.b32.xlu0 %v2591, 64
      %v3502 = vpop.permute.xlu0 %3501
      %3503 = vrot.lane.b32.xlu0 %v2592, 64
      %v3504 = vpop.permute.xlu0 %3503
      %3505 = vrot.lane.b32.xlu0 %v2593, 64
      %v3506 = vpop.permute.xlu0 %3505
      %3507 = vrot.lane.b32.xlu0 %v2594, 64
      %v3508 = vpop.permute.xlu0 %3507
      %3509 = vrot.lane.b32.xlu0 %v2595, 64
      %v3510 = vpop.permute.xlu0 %3509
      %3511 = vrot.lane.b32.xlu0 %v2596, 64
      %v3512 = vpop.permute.xlu0 %3511
      %3513 = vrot.lane.b32.xlu0 %v2597, 64
      %v3514 = vpop.permute.xlu0 %3513
      %3515 = vrot.lane.b32.xlu0 %v2598, 64
      %v3516 = vpop.permute.xlu0 %3515
      %3525 = vmatpush.bf16.msra.mxu0 %v3516
      %3526 = vmatpush.bf16.msra.mxu0 %v3514
      %3527 = vmatpush.bf16.msra.mxu0 %v3512
      %3528 = vmatpush.bf16.msra.mxu0 %v3510
      %3529 = vmatpush.bf16.msra.mxu0 %v3508
      %3530 = vmatpush.bf16.msra.mxu0 %v3506
      %3531 = vmatpush.bf16.msra.mxu0 %v3504
      %3532 = vmatpush.bf16.msra.mxu0 %v3502
      %3533 = vmatmul.bf16.gmra.mxu0 %v3493
      %v3534 = vpop.f32.mrf.mxu0
      %v3535 = vadd.f32 0.0, %v3534
      %v3536 = vpop.f32.mrf.mxu0
      %v3537 = vadd.f32 0.0, %v3536
      %3538 = vmatmul.bf16.gmra.mxu0 %v3494
      %v3539 = vpop.f32.mrf.mxu0
      %v3540 = vadd.f32 0.0, %v3539
      %v3541 = vpop.f32.mrf.mxu0
      %v3542 = vadd.f32 0.0, %v3541
      %3543 = vmatmul.bf16.gmra.mxu0 %v3495
      %v3544 = vpop.f32.mrf.mxu0
      %v3545 = vadd.f32 0.0, %v3544
      %v3546 = vpop.f32.mrf.mxu0
      %v3547 = vadd.f32 0.0, %v3546
      %3548 = vmatmul.bf16.gmra.mxu0 %v3496
      %v3549 = vpop.f32.mrf.mxu0
      %v3550 = vadd.f32 0.0, %v3549
      %v3551 = vpop.f32.mrf.mxu0
      %v3552 = vadd.f32 0.0, %v3551
      %3553 = vmatmul.bf16.gmra.mxu0 %v3497
      %v3554 = vpop.f32.mrf.mxu0
      %v3555 = vadd.f32 0.0, %v3554
      %v3556 = vpop.f32.mrf.mxu0
      %v3557 = vadd.f32 0.0, %v3556
      %3558 = vmatmul.bf16.gmra.mxu0 %v3498
      %v3559 = vpop.f32.mrf.mxu0
      %v3560 = vadd.f32 0.0, %v3559
      %v3561 = vpop.f32.mrf.mxu0
      %v3562 = vadd.f32 0.0, %v3561
      %3563 = vmatmul.bf16.gmra.mxu0 %v3499
      %v3564 = vpop.f32.mrf.mxu0
      %v3565 = vadd.f32 0.0, %v3564
      %v3566 = vpop.f32.mrf.mxu0
      %v3567 = vadd.f32 0.0, %v3566
      %3568 = vmatmul.bf16.gmra.mxu0 %v3500
      %v3569 = vpop.f32.mrf.mxu0
      %v3570 = vadd.f32 0.0, %v3569
      %v3571 = vpop.f32.mrf.mxu0
      %v3572 = vadd.f32 0.0, %v3571
      %3573 = vdwg.mxu0
      %v3574 = vld [vmem:[%s8 + $0x20] sm:$0xf]
      %v3575 = vld [vmem:[%s8 + $0x24] sm:$0xf]
      %v3576 = vld [vmem:[%s8 + $0x28] sm:$0xf]
      %v3577 = vld [vmem:[%s8 + $0x2c] sm:$0xf]
      %v3578 = vpack.c.bf16 %v3537, %v3535
      %v3579 = vpack.c.bf16 %v3542, %v3540
      %v3580 = vpack.c.bf16 %v3547, %v3545
      %v3581 = vpack.c.bf16 %v3552, %v3550
      %v3582 = vpack.c.bf16 %v3557, %v3555
      %v3583 = vpack.c.bf16 %v3562, %v3560
      %v3584 = vpack.c.bf16 %v3567, %v3565
      %v3585 = vpack.c.bf16 %v3572, %v3570
      %v3590 = vunpack.c.l.b16 %v3574
      %v3591 = vunpack.c.l.b16 %v3575
      %v3592 = vunpack.c.l.b16 %v3576
      %v3593 = vunpack.c.l.b16 %v3577
      %v3594 = vpack.c.b16 %v3591, %v3590
      %v3595 = vpack.c.b16 %v3593, %v3592
      %v3599 = vsel %vm2341, %v3578, 0
      %v3602 = vsel %vm2341, %v3579, 0
      %v3605 = vsel %vm2341, %v3580, 0
      %v3608 = vsel %vm2341, %v3581, 0
      %v3611 = vsel %vm2341, %v3582, 0
      %v3614 = vsel %vm2341, %v3583, 0
      %v3617 = vsel %vm2341, %v3584, 0
      %v3620 = vsel %vm2341, %v3585, 0
      %3622 = vmatpush.bf16.msra.mxu0 0
      %3623 = vmatpush.bf16.msra.mxu0 0
      %3624 = vmatpush.bf16.msra.mxu0 0
      %3625 = vmatpush.bf16.msra.mxu0 0
      %3626 = vmatpush.bf16.msra.mxu0 0
      %3627 = vmatpush.bf16.msra.mxu0 0
      %3628 = vmatpush.bf16.msra.mxu0 %v3595
      %3629 = vmatpush.bf16.msra.mxu0 %v3594
      %3630 = vmatmul.bf16.gmra.mxu0 %v3599
      %v3631 = vpop.f32.mrf.mxu0
      %v3632 = vadd.f32 0.0, %v3631
      %v3633 = vpop.f32.mrf.mxu0
      %v3634 = vadd.f32 0.0, %v3633
      %3635 = vmatmul.bf16.gmra.mxu0 %v3602
      %v3636 = vpop.f32.mrf.mxu0
      %v3637 = vadd.f32 0.0, %v3636
      %v3638 = vpop.f32.mrf.mxu0
      %v3639 = vadd.f32 0.0, %v3638
      %3640 = vmatmul.bf16.gmra.mxu0 %v3605
      %v3641 = vpop.f32.mrf.mxu0
      %v3642 = vadd.f32 0.0, %v3641
      %v3643 = vpop.f32.mrf.mxu0
      %v3644 = vadd.f32 0.0, %v3643
      %3645 = vmatmul.bf16.gmra.mxu0 %v3608
      %v3646 = vpop.f32.mrf.mxu0
      %v3647 = vadd.f32 0.0, %v3646
      %v3648 = vpop.f32.mrf.mxu0
      %v3649 = vadd.f32 0.0, %v3648
      %3650 = vmatmul.bf16.gmra.mxu0 %v3611
      %v3651 = vpop.f32.mrf.mxu0
      %v3652 = vadd.f32 0.0, %v3651
      %v3653 = vpop.f32.mrf.mxu0
      %v3654 = vadd.f32 0.0, %v3653
      %3655 = vmatmul.bf16.gmra.mxu0 %v3614
      %v3656 = vpop.f32.mrf.mxu0
      %v3657 = vadd.f32 0.0, %v3656
      %v3658 = vpop.f32.mrf.mxu0
      %v3659 = vadd.f32 0.0, %v3658
      %3660 = vmatmul.bf16.gmra.mxu0 %v3617
      %v3661 = vpop.f32.mrf.mxu0
      %v3662 = vadd.f32 0.0, %v3661
      %v3663 = vpop.f32.mrf.mxu0
      %v3664 = vadd.f32 0.0, %v3663
      %3665 = vmatmul.bf16.gmra.mxu0 %v3620
      %v3666 = vpop.f32.mrf.mxu0
      %v3667 = vadd.f32 0.0, %v3666
      %v3668 = vpop.f32.mrf.mxu0
      %v3669 = vadd.f32 0.0, %v3668
      %3670 = vdwg.mxu0
      %v3671 = vadd.f32 %v3181, %v3632
      %v3672 = vadd.f32 %v3183, %v3634
      %v3673 = vadd.f32 %v3186, %v3637
      %v3674 = vadd.f32 %v3188, %v3639
      %v3675 = vadd.f32 %v3191, %v3642
      %v3676 = vadd.f32 %v3193, %v3644
      %v3677 = vadd.f32 %v3196, %v3647
      %v3678 = vadd.f32 %v3198, %v3649
      %v3679 = vadd.f32 %v3201, %v3652
      %v3680 = vadd.f32 %v3203, %v3654
      %v3681 = vadd.f32 %v3206, %v3657
      %v3682 = vadd.f32 %v3208, %v3659
      %v3683 = vadd.f32 %v3211, %v3662
      %v3684 = vadd.f32 %v3213, %v3664
      %v3685 = vadd.f32 %v3216, %v3667
      %v3686 = vadd.f32 %v3218, %v3669
      %3687 = vrot.lane.b32.xlu0 %v2325, 32
      %v3688 = vpop.permute.xlu0 %3687
      %3689 = vrot.lane.b32.xlu0 %v2326, 32
      %v3690 = vpop.permute.xlu0 %3689
      %3691 = vrot.lane.b32.xlu0 %v2327, 32
      %v3692 = vpop.permute.xlu0 %3691
      %3693 = vrot.lane.b32.xlu0 %v2328, 32
      %v3694 = vpop.permute.xlu0 %3693
      %3695 = vrot.lane.b32.xlu0 %v2329, 32
      %v3696 = vpop.permute.xlu0 %3695
      %3697 = vrot.lane.b32.xlu0 %v2330, 32
      %v3698 = vpop.permute.xlu0 %3697
      %3699 = vrot.lane.b32.xlu0 %v2331, 32
      %v3700 = vpop.permute.xlu0 %3699
      %3701 = vrot.lane.b32.xlu0 %v2332, 32
      %v3702 = vpop.permute.xlu0 %3701
      %3703 = vrot.lane.b32.xlu0 %v2333, 32
      %v3704 = vpop.permute.xlu0 %3703
      %3705 = vrot.lane.b32.xlu0 %v2334, 32
      %v3706 = vpop.permute.xlu0 %3705
      %3707 = vrot.lane.b32.xlu0 %v2335, 32
      %v3708 = vpop.permute.xlu0 %3707
      %3709 = vrot.lane.b32.xlu0 %v2336, 32
      %v3710 = vpop.permute.xlu0 %3709
      %3711 = vrot.lane.b32.xlu0 %v2337, 32
      %v3712 = vpop.permute.xlu0 %3711
      %3713 = vrot.lane.b32.xlu0 %v2338, 32
      %v3714 = vpop.permute.xlu0 %3713
      %3715 = vrot.lane.b32.xlu0 %v2339, 32
      %v3716 = vpop.permute.xlu0 %3715
      %3717 = vrot.lane.b32.xlu0 %v2340, 32
      %v3718 = vpop.permute.xlu0 %3717
      %v3720 = vsel %vm2341, %v3688, 0
      %v3723 = vsel %vm2341, %v3690, 0
      %v3726 = vsel %vm2341, %v3692, 0
      %v3729 = vsel %vm2341, %v3694, 0
      %v3732 = vsel %vm2341, %v3696, 0
      %v3735 = vsel %vm2341, %v3698, 0
      %v3738 = vsel %vm2341, %v3700, 0
      %v3741 = vsel %vm2341, %v3702, 0
      %v3744 = vsel %vm2341, %v3704, 0
      %v3747 = vsel %vm2341, %v3706, 0
      %v3750 = vsel %vm2341, %v3708, 0
      %v3753 = vsel %vm2341, %v3710, 0
      %v3756 = vsel %vm2341, %v3712, 0
      %v3759 = vsel %vm2341, %v3714, 0
      %v3762 = vsel %vm2341, %v3716, 0
      %v3765 = vsel %vm2341, %v3718, 0
      %3767 = vmatpush.bf16.xpose.msra.mxu0 %v3765
      %3768 = vmatpush.bf16.xpose.msra.mxu0 %v3762
      %3769 = vmatpush.bf16.xpose.msra.mxu0 %v3759
      %3770 = vmatpush.bf16.xpose.msra.mxu0 %v3756
      %3771 = vmatpush.bf16.xpose.msra.mxu0 %v3753
      %3772 = vmatpush.bf16.xpose.msra.mxu0 %v3750
      %3773 = vmatpush.bf16.xpose.msra.mxu0 %v3747
      %3774 = vmatpush.bf16.xpose.msra.mxu0 %v3744
      %3775 = vmatmul.bf16.gmra.mxu0 %v3720
      %v3776 = vpop.f32.mrf.mxu0
      %v3777 = vadd.f32 %v1619, %v3776
      %v3778 = vpop.f32.mrf.mxu0
      %v3779 = vadd.f32 %v1620, %v3778
      %3780 = vmatmul.bf16.gmra.mxu0 %v3723
      %v3781 = vpop.f32.mrf.mxu0
      %v3782 = vadd.f32 %v1621, %v3781
      %v3783 = vpop.f32.mrf.mxu0
      %v3784 = vadd.f32 %v1622, %v3783
      %3785 = vmatmul.bf16.gmra.mxu0 %v3726
      %v3786 = vpop.f32.mrf.mxu0
      %v3787 = vadd.f32 %v1623, %v3786
      %v3788 = vpop.f32.mrf.mxu0
      %v3789 = vadd.f32 %v1624, %v3788
      %3790 = vmatmul.bf16.gmra.mxu0 %v3729
      %v3791 = vpop.f32.mrf.mxu0
      %v3792 = vadd.f32 %v1625, %v3791
      %v3793 = vpop.f32.mrf.mxu0
      %v3794 = vadd.f32 %v1626, %v3793
      %3795 = vmatmul.bf16.gmra.mxu0 %v3732
      %v3796 = vpop.f32.mrf.mxu0
      %v3797 = vadd.f32 %v1627, %v3796
      %v3798 = vpop.f32.mrf.mxu0
      %v3799 = vadd.f32 %v1628, %v3798
      %3800 = vmatmul.bf16.gmra.mxu0 %v3735
      %v3801 = vpop.f32.mrf.mxu0
      %v3802 = vadd.f32 %v1629, %v3801
      %v3803 = vpop.f32.mrf.mxu0
      %v3804 = vadd.f32 %v1630, %v3803
      %3805 = vmatmul.bf16.gmra.mxu0 %v3738
      %v3806 = vpop.f32.mrf.mxu0
      %v3807 = vadd.f32 %v1631, %v3806
      %v3808 = vpop.f32.mrf.mxu0
      %v3809 = vadd.f32 %v1632, %v3808
      %3810 = vmatmul.bf16.gmra.mxu0 %v3741
      %v3811 = vpop.f32.mrf.mxu0
      %v3812 = vadd.f32 %v1633, %v3811
      %v3813 = vpop.f32.mrf.mxu0
      %v3814 = vadd.f32 %v1634, %v3813
      %3815 = vdwg.mxu0
      %3816 = vmax.xlane.f32.xlu0 %v3777
      %v3817 = vpop.xlane.xlu0 %3816
      %3818 = vmax.xlane.f32.xlu0 %v3779
      %v3819 = vpop.xlane.xlu0 %3818
      %3820 = vmax.xlane.f32.xlu0 %v3782
      %v3821 = vpop.xlane.xlu0 %3820
      %3822 = vmax.xlane.f32.xlu0 %v3784
      %v3823 = vpop.xlane.xlu0 %3822
      %3824 = vmax.xlane.f32.xlu0 %v3787
      %v3825 = vpop.xlane.xlu0 %3824
      %3826 = vmax.xlane.f32.xlu0 %v3789
      %v3827 = vpop.xlane.xlu0 %3826
      %3828 = vmax.xlane.f32.xlu0 %v3792
      %v3829 = vpop.xlane.xlu0 %3828
      %3830 = vmax.xlane.f32.xlu0 %v3794
      %v3831 = vpop.xlane.xlu0 %3830
      %3832 = vmax.xlane.f32.xlu0 %v3797
      %v3833 = vpop.xlane.xlu0 %3832
      %3834 = vmax.xlane.f32.xlu0 %v3799
      %v3835 = vpop.xlane.xlu0 %3834
      %3836 = vmax.xlane.f32.xlu0 %v3802
      %v3837 = vpop.xlane.xlu0 %3836
      %3838 = vmax.xlane.f32.xlu0 %v3804
      %v3839 = vpop.xlane.xlu0 %3838
      %3840 = vmax.xlane.f32.xlu0 %v3807
      %v3841 = vpop.xlane.xlu0 %3840
      %3842 = vmax.xlane.f32.xlu0 %v3809
      %v3843 = vpop.xlane.xlu0 %3842
      %3844 = vmax.xlane.f32.xlu0 %v3812
      %v3845 = vpop.xlane.xlu0 %3844
      %3846 = vmax.xlane.f32.xlu0 %v3814
      %v3847 = vpop.xlane.xlu0 %3846
      %v3848 = vsub.f32 %v3777, %v3817
      %v3849 = vsub.f32 %v3779, %v3819
      %v3850 = vsub.f32 %v3782, %v3821
      %v3851 = vsub.f32 %v3784, %v3823
      %v3852 = vsub.f32 %v3787, %v3825
      %v3853 = vsub.f32 %v3789, %v3827
      %v3854 = vsub.f32 %v3792, %v3829
      %v3855 = vsub.f32 %v3794, %v3831
      %v3856 = vsub.f32 %v3797, %v3833
      %v3857 = vsub.f32 %v3799, %v3835
      %v3858 = vsub.f32 %v3802, %v3837
      %v3859 = vsub.f32 %v3804, %v3839
      %v3860 = vsub.f32 %v3807, %v3841
      %v3861 = vsub.f32 %v3809, %v3843
      %v3862 = vsub.f32 %v3812, %v3845
      %v3863 = vsub.f32 %v3814, %v3847
      %v3864 = vmul.f32 %v3848, 1.442695
      %v3865 = vpow.pop %v3864
      %v3866 = vmul.f32 %v3849, 1.442695
      %v3867 = vpow.pop %v3866
      %v3868 = vmul.f32 %v3850, 1.442695
      %v3869 = vpow.pop %v3868
      %v3870 = vmul.f32 %v3851, 1.442695
      %v3871 = vpow.pop %v3870
      %v3872 = vmul.f32 %v3852, 1.442695
      %v3873 = vpow.pop %v3872
      %v3874 = vmul.f32 %v3853, 1.442695
      %v3875 = vpow.pop %v3874
      %v3876 = vmul.f32 %v3854, 1.442695
      %v3877 = vpow.pop %v3876
      %v3878 = vmul.f32 %v3855, 1.442695
      %v3879 = vpow.pop %v3878
      %v3880 = vmul.f32 %v3856, 1.442695
      %v3881 = vpow.pop %v3880
      %v3882 = vmul.f32 %v3857, 1.442695
      %v3883 = vpow.pop %v3882
      %v3884 = vmul.f32 %v3858, 1.442695
      %v3885 = vpow.pop %v3884
      %v3886 = vmul.f32 %v3859, 1.442695
      %v3887 = vpow.pop %v3886
      %v3888 = vmul.f32 %v3860, 1.442695
      %v3889 = vpow.pop %v3888
      %v3890 = vmul.f32 %v3861, 1.442695
      %v3891 = vpow.pop %v3890
      %v3892 = vmul.f32 %v3862, 1.442695
      %v3893 = vpow.pop %v3892
      %v3894 = vmul.f32 %v3863, 1.442695
      %v3895 = vpow.pop %v3894
      %3896 = vadd.xlane.f32.xlu0 %v3865
      %v3897 = vpop.xlane.xlu0 %3896
      %3898 = vadd.xlane.f32.xlu0 %v3867
      %v3899 = vpop.xlane.xlu0 %3898
      %3900 = vadd.xlane.f32.xlu0 %v3869
      %v3901 = vpop.xlane.xlu0 %3900
      %3902 = vadd.xlane.f32.xlu0 %v3871
      %v3903 = vpop.xlane.xlu0 %3902
      %3904 = vadd.xlane.f32.xlu0 %v3873
      %v3905 = vpop.xlane.xlu0 %3904
      %3906 = vadd.xlane.f32.xlu0 %v3875
      %v3907 = vpop.xlane.xlu0 %3906
      %3908 = vadd.xlane.f32.xlu0 %v3877
      %v3909 = vpop.xlane.xlu0 %3908
      %3910 = vadd.xlane.f32.xlu0 %v3879
      %v3911 = vpop.xlane.xlu0 %3910
      %3912 = vadd.xlane.f32.xlu0 %v3881
      %v3913 = vpop.xlane.xlu0 %3912
      %3914 = vadd.xlane.f32.xlu0 %v3883
      %v3915 = vpop.xlane.xlu0 %3914
      %3916 = vadd.xlane.f32.xlu0 %v3885
      %v3917 = vpop.xlane.xlu0 %3916
      %3918 = vadd.xlane.f32.xlu0 %v3887
      %v3919 = vpop.xlane.xlu0 %3918
      %3920 = vadd.xlane.f32.xlu0 %v3889
      %v3921 = vpop.xlane.xlu0 %3920
      %3922 = vadd.xlane.f32.xlu0 %v3891
      %v3923 = vpop.xlane.xlu0 %3922
      %3924 = vadd.xlane.f32.xlu0 %v3893
      %v3925 = vpop.xlane.xlu0 %3924
      %3926 = vadd.xlane.f32.xlu0 %v3895
      %v3927 = vpop.xlane.xlu0 %3926
      %v3928 = vrcp.pop %v3897
      %v3929 = vrcp.pop %v3899
      %v3930 = vrcp.pop %v3901
      %v3931 = vrcp.pop %v3903
      %v3932 = vrcp.pop %v3905
      %v3933 = vrcp.pop %v3907
      %v3934 = vrcp.pop %v3909
      %v3935 = vrcp.pop %v3911
      %v3936 = vrcp.pop %v3913
      %v3937 = vrcp.pop %v3915
      %v3938 = vrcp.pop %v3917
      %v3939 = vrcp.pop %v3919
      %v3940 = vrcp.pop %v3921
      %v3941 = vrcp.pop %v3923
      %v3942 = vrcp.pop %v3925
      %v3943 = vrcp.pop %v3927
      %v3944 = vmul.f32 %v3865, %v3928
      %v3945 = vmul.f32 %v3867, %v3929
      %v3946 = vmul.f32 %v3869, %v3930
      %v3947 = vmul.f32 %v3871, %v3931
      %v3948 = vmul.f32 %v3873, %v3932
      %v3949 = vmul.f32 %v3875, %v3933
      %v3950 = vmul.f32 %v3877, %v3934
      %v3951 = vmul.f32 %v3879, %v3935
      %v3952 = vmul.f32 %v3881, %v3936
      %v3953 = vmul.f32 %v3883, %v3937
      %v3954 = vmul.f32 %v3885, %v3938
      %v3955 = vmul.f32 %v3887, %v3939
      %v3956 = vmul.f32 %v3889, %v3940
      %v3957 = vmul.f32 %v3891, %v3941
      %v3958 = vmul.f32 %v3893, %v3942
      %v3959 = vmul.f32 %v3895, %v3943
      %v3960 = vpack.c.bf16 %v3945, %v3944
      %v3961 = vpack.c.bf16 %v3947, %v3946
      %v3962 = vpack.c.bf16 %v3949, %v3948
      %v3963 = vpack.c.bf16 %v3951, %v3950
      %v3964 = vpack.c.bf16 %v3953, %v3952
      %v3965 = vpack.c.bf16 %v3955, %v3954
      %v3966 = vpack.c.bf16 %v3957, %v3956
      %v3967 = vpack.c.bf16 %v3959, %v3958
      %3968 = vrot.lane.b32.xlu0 %v2591, 32
      %v3969 = vpop.permute.xlu0 %3968
      %3970 = vrot.lane.b32.xlu0 %v2592, 32
      %v3971 = vpop.permute.xlu0 %3970
      %3972 = vrot.lane.b32.xlu0 %v2593, 32
      %v3973 = vpop.permute.xlu0 %3972
      %3974 = vrot.lane.b32.xlu0 %v2594, 32
      %v3975 = vpop.permute.xlu0 %3974
      %3976 = vrot.lane.b32.xlu0 %v2595, 32
      %v3977 = vpop.permute.xlu0 %3976
      %3978 = vrot.lane.b32.xlu0 %v2596, 32
      %v3979 = vpop.permute.xlu0 %3978
      %3980 = vrot.lane.b32.xlu0 %v2597, 32
      %v3981 = vpop.permute.xlu0 %3980
      %3982 = vrot.lane.b32.xlu0 %v2598, 32
      %v3983 = vpop.permute.xlu0 %3982
      %3992 = vmatpush.bf16.msra.mxu0 %v3983
      %3993 = vmatpush.bf16.msra.mxu0 %v3981
      %3994 = vmatpush.bf16.msra.mxu0 %v3979
      %3995 = vmatpush.bf16.msra.mxu0 %v3977
      %3996 = vmatpush.bf16.msra.mxu0 %v3975
      %3997 = vmatpush.bf16.msra.mxu0 %v3973
      %3998 = vmatpush.bf16.msra.mxu0 %v3971
      %3999 = vmatpush.bf16.msra.mxu0 %v3969
      %4000 = vmatmul.bf16.gmra.mxu0 %v3960
      %v4001 = vpop.f32.mrf.mxu0
      %v4002 = vadd.f32 0.0, %v4001
      %v4003 = vpop.f32.mrf.mxu0
      %v4004 = vadd.f32 0.0, %v4003
      %4005 = vmatmul.bf16.gmra.mxu0 %v3961
      %v4006 = vpop.f32.mrf.mxu0
      %v4007 = vadd.f32 0.0, %v4006
      %v4008 = vpop.f32.mrf.mxu0
      %v4009 = vadd.f32 0.0, %v4008
      %4010 = vmatmul.bf16.gmra.mxu0 %v3962
      %v4011 = vpop.f32.mrf.mxu0
      %v4012 = vadd.f32 0.0, %v4011
      %v4013 = vpop.f32.mrf.mxu0
      %v4014 = vadd.f32 0.0, %v4013
      %4015 = vmatmul.bf16.gmra.mxu0 %v3963
      %v4016 = vpop.f32.mrf.mxu0
      %v4017 = vadd.f32 0.0, %v4016
      %v4018 = vpop.f32.mrf.mxu0
      %v4019 = vadd.f32 0.0, %v4018
      %4020 = vmatmul.bf16.gmra.mxu0 %v3964
      %v4021 = vpop.f32.mrf.mxu0
      %v4022 = vadd.f32 0.0, %v4021
      %v4023 = vpop.f32.mrf.mxu0
      %v4024 = vadd.f32 0.0, %v4023
      %4025 = vmatmul.bf16.gmra.mxu0 %v3965
      %v4026 = vpop.f32.mrf.mxu0
      %v4027 = vadd.f32 0.0, %v4026
      %v4028 = vpop.f32.mrf.mxu0
      %v4029 = vadd.f32 0.0, %v4028
      %4030 = vmatmul.bf16.gmra.mxu0 %v3966
      %v4031 = vpop.f32.mrf.mxu0
      %v4032 = vadd.f32 0.0, %v4031
      %v4033 = vpop.f32.mrf.mxu0
      %v4034 = vadd.f32 0.0, %v4033
      %4035 = vmatmul.bf16.gmra.mxu0 %v3967
      %v4036 = vpop.f32.mrf.mxu0
      %v4037 = vadd.f32 0.0, %v4036
      %v4038 = vpop.f32.mrf.mxu0
      %v4039 = vadd.f32 0.0, %v4038
      %4040 = vdwg.mxu0
      %v4041 = vld [vmem:[%s8 + $0x30] sm:$0xf]
      %v4042 = vld [vmem:[%s8 + $0x34] sm:$0xf]
      %v4043 = vld [vmem:[%s8 + $0x38] sm:$0xf]
      %v4044 = vld [vmem:[%s8 + $0x3c] sm:$0xf]
      %v4045 = vpack.c.bf16 %v4004, %v4002
      %v4046 = vpack.c.bf16 %v4009, %v4007
      %v4047 = vpack.c.bf16 %v4014, %v4012
      %v4048 = vpack.c.bf16 %v4019, %v4017
      %v4049 = vpack.c.bf16 %v4024, %v4022
      %v4050 = vpack.c.bf16 %v4029, %v4027
      %v4051 = vpack.c.bf16 %v4034, %v4032
      %v4052 = vpack.c.bf16 %v4039, %v4037
      %v4057 = vunpack.c.l.b16 %v4041
      %v4058 = vunpack.c.l.b16 %v4042
      %v4059 = vunpack.c.l.b16 %v4043
      %v4060 = vunpack.c.l.b16 %v4044
      %v4061 = vpack.c.b16 %v4058, %v4057
      %v4062 = vpack.c.b16 %v4060, %v4059
      %v4066 = vsel %vm2341, %v4045, 0
      %v4069 = vsel %vm2341, %v4046, 0
      %v4072 = vsel %vm2341, %v4047, 0
      %v4075 = vsel %vm2341, %v4048, 0
      %v4078 = vsel %vm2341, %v4049, 0
      %v4081 = vsel %vm2341, %v4050, 0
      %v4084 = vsel %vm2341, %v4051, 0
      %v4087 = vsel %vm2341, %v4052, 0
      %4089 = vmatpush.bf16.msra.mxu0 0
      %4090 = vmatpush.bf16.msra.mxu0 0
      %4091 = vmatpush.bf16.msra.mxu0 0
      %4092 = vmatpush.bf16.msra.mxu0 0
      %4093 = vmatpush.bf16.msra.mxu0 0
      %4094 = vmatpush.bf16.msra.mxu0 0
      %4095 = vmatpush.bf16.msra.mxu0 %v4062
      %4096 = vmatpush.bf16.msra.mxu0 %v4061
      %4097 = vmatmul.bf16.gmra.mxu0 %v4066
      %v4098 = vpop.f32.mrf.mxu0
      %v4099 = vadd.f32 0.0, %v4098
      %v4100 = vpop.f32.mrf.mxu0
      %v4101 = vadd.f32 0.0, %v4100
      %4102 = vmatmul.bf16.gmra.mxu0 %v4069
      %v4103 = vpop.f32.mrf.mxu0
      %v4104 = vadd.f32 0.0, %v4103
      %v4105 = vpop.f32.mrf.mxu0
      %v4106 = vadd.f32 0.0, %v4105
      %4107 = vmatmul.bf16.gmra.mxu0 %v4072
      %v4108 = vpop.f32.mrf.mxu0
      %v4109 = vadd.f32 0.0, %v4108
      %v4110 = vpop.f32.mrf.mxu0
      %v4111 = vadd.f32 0.0, %v4110
      %4112 = vmatmul.bf16.gmra.mxu0 %v4075
      %v4113 = vpop.f32.mrf.mxu0
      %v4114 = vadd.f32 0.0, %v4113
      %v4115 = vpop.f32.mrf.mxu0
      %v4116 = vadd.f32 0.0, %v4115
      %4117 = vmatmul.bf16.gmra.mxu0 %v4078
      %v4118 = vpop.f32.mrf.mxu0
      %v4119 = vadd.f32 0.0, %v4118
      %v4120 = vpop.f32.mrf.mxu0
      %v4121 = vadd.f32 0.0, %v4120
      %4122 = vmatmul.bf16.gmra.mxu0 %v4081
      %v4123 = vpop.f32.mrf.mxu0
      %v4124 = vadd.f32 0.0, %v4123
      %v4125 = vpop.f32.mrf.mxu0
      %v4126 = vadd.f32 0.0, %v4125
      %4127 = vmatmul.bf16.gmra.mxu0 %v4084
      %v4128 = vpop.f32.mrf.mxu0
      %v4129 = vadd.f32 0.0, %v4128
      %v4130 = vpop.f32.mrf.mxu0
      %v4131 = vadd.f32 0.0, %v4130
      %4132 = vmatmul.bf16.gmra.mxu0 %v4087
      %v4133 = vpop.f32.mrf.mxu0
      %v4134 = vadd.f32 0.0, %v4133
      %v4135 = vpop.f32.mrf.mxu0
      %v4136 = vadd.f32 0.0, %v4135
      %4137 = vdwg.mxu0
      %v4138 = vadd.f32 %v3671, %v4099
      %v4139 = vadd.f32 %v3672, %v4101
      %v4140 = vadd.f32 %v3673, %v4104
      %v4141 = vadd.f32 %v3674, %v4106
      %v4142 = vadd.f32 %v3675, %v4109
      %v4143 = vadd.f32 %v3676, %v4111
      %v4144 = vadd.f32 %v3677, %v4114
      %v4145 = vadd.f32 %v3678, %v4116
      %v4146 = vadd.f32 %v3679, %v4119
      %v4147 = vadd.f32 %v3680, %v4121
      %v4148 = vadd.f32 %v3681, %v4124
      %v4149 = vadd.f32 %v3682, %v4126
      %v4150 = vadd.f32 %v3683, %v4129
      %v4151 = vadd.f32 %v3684, %v4131
      %v4152 = vadd.f32 %v3685, %v4134
      %v4153 = vadd.f32 %v3686, %v4136
      %v4154 = vadd.f32 %v1580, %v4138
      %v4155 = vadd.f32 %v1582, %v4139
      %v4156 = vadd.f32 %v1585, %v4140
      %v4157 = vadd.f32 %v1587, %v4141
      %v4158 = vadd.f32 %v1590, %v4142
      %v4159 = vadd.f32 %v1592, %v4143
      %v4160 = vadd.f32 %v1595, %v4144
      %v4161 = vadd.f32 %v1597, %v4145
      %v4162 = vadd.f32 %v1600, %v4146
      %v4163 = vadd.f32 %v1602, %v4147
      %v4164 = vadd.f32 %v1605, %v4148
      %v4165 = vadd.f32 %v1607, %v4149
      %v4166 = vadd.f32 %v1610, %v4150
      %v4167 = vadd.f32 %v1612, %v4151
      %v4168 = vadd.f32 %v1615, %v4152
      %v4169 = vadd.f32 %v1617, %v4153
      %v4170 = vld [vmem:[%s9] sm:$0x1]
      %v4172 = vperm.slane %v4170, 0
      %v4174 = vadd.f32 %v4154, %v4172
      %v4175 = vadd.f32 %v4155, %v4172
      %v4176 = vadd.f32 %v4156, %v4172
      %v4177 = vadd.f32 %v4157, %v4172
      %v4178 = vadd.f32 %v4158, %v4172
      %v4179 = vadd.f32 %v4159, %v4172
      %v4180 = vadd.f32 %v4160, %v4172
      %v4181 = vadd.f32 %v4161, %v4172
      %v4182 = vadd.f32 %v4162, %v4172
      %v4183 = vadd.f32 %v4163, %v4172
      %v4184 = vadd.f32 %v4164, %v4172
      %v4185 = vadd.f32 %v4165, %v4172
      %v4186 = vadd.f32 %v4166, %v4172
      %v4187 = vadd.f32 %v4167, %v4172
      %v4188 = vadd.f32 %v4168, %v4172
      %v4189 = vadd.f32 %v4169, %v4172
      %v4190 = vld [vmem:[%s10] sm:$0x1]
      %v4191 = vld [vmem:[%s11] sm:$0x1]
      %4192 = vadd.xlane.f32.xlu0 %v4174
      %v4193 = vpop.xlane.xlu0 %4192
      %4194 = vadd.xlane.f32.xlu0 %v4175
      %v4195 = vpop.xlane.xlu0 %4194
      %4196 = vadd.xlane.f32.xlu0 %v4176
      %v4197 = vpop.xlane.xlu0 %4196
      %4198 = vadd.xlane.f32.xlu0 %v4177
      %v4199 = vpop.xlane.xlu0 %4198
      %4200 = vadd.xlane.f32.xlu0 %v4178
      %v4201 = vpop.xlane.xlu0 %4200
      %4202 = vadd.xlane.f32.xlu0 %v4179
      %v4203 = vpop.xlane.xlu0 %4202
      %4204 = vadd.xlane.f32.xlu0 %v4180
      %v4205 = vpop.xlane.xlu0 %4204
      %4206 = vadd.xlane.f32.xlu0 %v4181
      %v4207 = vpop.xlane.xlu0 %4206
      %4208 = vadd.xlane.f32.xlu0 %v4182
      %v4209 = vpop.xlane.xlu0 %4208
      %4210 = vadd.xlane.f32.xlu0 %v4183
      %v4211 = vpop.xlane.xlu0 %4210
      %4212 = vadd.xlane.f32.xlu0 %v4184
      %v4213 = vpop.xlane.xlu0 %4212
      %4214 = vadd.xlane.f32.xlu0 %v4185
      %v4215 = vpop.xlane.xlu0 %4214
      %4216 = vadd.xlane.f32.xlu0 %v4186
      %v4217 = vpop.xlane.xlu0 %4216
      %4218 = vadd.xlane.f32.xlu0 %v4187
      %v4219 = vpop.xlane.xlu0 %4218
      %4220 = vadd.xlane.f32.xlu0 %v4188
      %v4221 = vpop.xlane.xlu0 %4220
      %4222 = vadd.xlane.f32.xlu0 %v4189
      %v4223 = vpop.xlane.xlu0 %4222
      %v4224 = vmul.f32 %v4193, %v1675
      %v4225 = vmul.f32 %v4195, %v1675
      %v4226 = vmul.f32 %v4197, %v1675
      %v4227 = vmul.f32 %v4199, %v1675
      %v4228 = vmul.f32 %v4201, %v1675
      %v4229 = vmul.f32 %v4203, %v1675
      %v4230 = vmul.f32 %v4205, %v1675
      %v4231 = vmul.f32 %v4207, %v1675
      %v4232 = vmul.f32 %v4209, %v1675
      %v4233 = vmul.f32 %v4211, %v1675
      %v4234 = vmul.f32 %v4213, %v1675
      %v4235 = vmul.f32 %v4215, %v1675
      %v4236 = vmul.f32 %v4217, %v1675
      %v4237 = vmul.f32 %v4219, %v1675
      %v4238 = vmul.f32 %v4221, %v1675
      %v4239 = vmul.f32 %v4223, %v1675
      %v4240 = vsub.f32 %v4174, %v4224
      %v4241 = vsub.f32 %v4175, %v4225
      %v4242 = vsub.f32 %v4176, %v4226
      %v4243 = vsub.f32 %v4177, %v4227
      %v4244 = vsub.f32 %v4178, %v4228
      %v4245 = vsub.f32 %v4179, %v4229
      %v4246 = vsub.f32 %v4180, %v4230
      %v4247 = vsub.f32 %v4181, %v4231
      %v4248 = vsub.f32 %v4182, %v4232
      %v4249 = vsub.f32 %v4183, %v4233
      %v4250 = vsub.f32 %v4184, %v4234
      %v4251 = vsub.f32 %v4185, %v4235
      %v4252 = vsub.f32 %v4186, %v4236
      %v4253 = vsub.f32 %v4187, %v4237
      %v4254 = vsub.f32 %v4188, %v4238
      %v4255 = vsub.f32 %v4189, %v4239
      %v4256 = vmul.f32 %v4240, %v4240
      %v4257 = vmul.f32 %v4241, %v4241
      %v4258 = vmul.f32 %v4242, %v4242
      %v4259 = vmul.f32 %v4243, %v4243
      %v4260 = vmul.f32 %v4244, %v4244
      %v4261 = vmul.f32 %v4245, %v4245
      %v4262 = vmul.f32 %v4246, %v4246
      %v4263 = vmul.f32 %v4247, %v4247
      %v4264 = vmul.f32 %v4248, %v4248
      %v4265 = vmul.f32 %v4249, %v4249
      %v4266 = vmul.f32 %v4250, %v4250
      %v4267 = vmul.f32 %v4251, %v4251
      %v4268 = vmul.f32 %v4252, %v4252
      %v4269 = vmul.f32 %v4253, %v4253
      %v4270 = vmul.f32 %v4254, %v4254
      %v4271 = vmul.f32 %v4255, %v4255
      %4272 = vadd.xlane.f32.xlu0 %v4256
      %v4273 = vpop.xlane.xlu0 %4272
      %4274 = vadd.xlane.f32.xlu0 %v4257
      %v4275 = vpop.xlane.xlu0 %4274
      %4276 = vadd.xlane.f32.xlu0 %v4258
      %v4277 = vpop.xlane.xlu0 %4276
      %4278 = vadd.xlane.f32.xlu0 %v4259
      %v4279 = vpop.xlane.xlu0 %4278
      %4280 = vadd.xlane.f32.xlu0 %v4260
      %v4281 = vpop.xlane.xlu0 %4280
      %4282 = vadd.xlane.f32.xlu0 %v4261
      %v4283 = vpop.xlane.xlu0 %4282
      %4284 = vadd.xlane.f32.xlu0 %v4262
      %v4285 = vpop.xlane.xlu0 %4284
      %4286 = vadd.xlane.f32.xlu0 %v4263
      %v4287 = vpop.xlane.xlu0 %4286
      %4288 = vadd.xlane.f32.xlu0 %v4264
      %v4289 = vpop.xlane.xlu0 %4288
      %4290 = vadd.xlane.f32.xlu0 %v4265
      %v4291 = vpop.xlane.xlu0 %4290
      %4292 = vadd.xlane.f32.xlu0 %v4266
      %v4293 = vpop.xlane.xlu0 %4292
      %4294 = vadd.xlane.f32.xlu0 %v4267
      %v4295 = vpop.xlane.xlu0 %4294
      %4296 = vadd.xlane.f32.xlu0 %v4268
      %v4297 = vpop.xlane.xlu0 %4296
      %4298 = vadd.xlane.f32.xlu0 %v4269
      %v4299 = vpop.xlane.xlu0 %4298
      %4300 = vadd.xlane.f32.xlu0 %v4270
      %v4301 = vpop.xlane.xlu0 %4300
      %4302 = vadd.xlane.f32.xlu0 %v4271
      %v4303 = vpop.xlane.xlu0 %4302
      %v4304 = vmul.f32 %v4273, %v1675
      %v4305 = vmul.f32 %v4275, %v1675
      %v4306 = vmul.f32 %v4277, %v1675
      %v4307 = vmul.f32 %v4279, %v1675
      %v4308 = vmul.f32 %v4281, %v1675
      %v4309 = vmul.f32 %v4283, %v1675
      %v4310 = vmul.f32 %v4285, %v1675
      %v4311 = vmul.f32 %v4287, %v1675
      %v4312 = vmul.f32 %v4289, %v1675
      %v4313 = vmul.f32 %v4291, %v1675
      %v4314 = vmul.f32 %v4293, %v1675
      %v4315 = vmul.f32 %v4295, %v1675
      %v4316 = vmul.f32 %v4297, %v1675
      %v4317 = vmul.f32 %v4299, %v1675
      %v4318 = vmul.f32 %v4301, %v1675
      %v4319 = vmul.f32 %v4303, %v1675
      %v4320 = vadd.f32 %v4304, 1e-06
      %v4321 = vadd.f32 %v4305, 1e-06
      %v4322 = vadd.f32 %v4306, 1e-06
      %v4323 = vadd.f32 %v4307, 1e-06
      %v4324 = vadd.f32 %v4308, 1e-06
      %v4325 = vadd.f32 %v4309, 1e-06
      %v4326 = vadd.f32 %v4310, 1e-06
      %v4327 = vadd.f32 %v4311, 1e-06
      %v4328 = vadd.f32 %v4312, 1e-06
      %v4329 = vadd.f32 %v4313, 1e-06
      %v4330 = vadd.f32 %v4314, 1e-06
      %v4331 = vadd.f32 %v4315, 1e-06
      %v4332 = vadd.f32 %v4316, 1e-06
      %v4333 = vadd.f32 %v4317, 1e-06
      %v4334 = vadd.f32 %v4318, 1e-06
      %v4335 = vadd.f32 %v4319, 1e-06
      %v4336 = vrsqrt.pop %v4320
      %v4337 = vmul.f32 %v4336, %v4320
      %v4338 = vmul.f32 %v4337, %v4336
      %v4339 = vmul.f32 0.5, %v4338
      %v4340 = vsub.f32 1.5, %v4339
      %v4341 = vmul.f32 %v4336, %v4340
      %vm4342 = vweird.f32 %v4320
      %vm4343 = vweird.f32 %v4336
      %vm4344 = vmor %vm4342, %vm4343
      %v4345 = vsel %vm4344, %v4336, %v4341
      %v4346 = vrsqrt.pop %v4321
      %v4347 = vmul.f32 %v4346, %v4321
      %v4348 = vmul.f32 %v4347, %v4346
      %v4349 = vmul.f32 0.5, %v4348
      %v4350 = vsub.f32 1.5, %v4349
      %v4351 = vmul.f32 %v4346, %v4350
      %vm4352 = vweird.f32 %v4321
      %vm4353 = vweird.f32 %v4346
      %vm4354 = vmor %vm4352, %vm4353
      %v4355 = vsel %vm4354, %v4346, %v4351
      %v4356 = vrsqrt.pop %v4322
      %v4357 = vmul.f32 %v4356, %v4322
      %v4358 = vmul.f32 %v4357, %v4356
      %v4359 = vmul.f32 0.5, %v4358
      %v4360 = vsub.f32 1.5, %v4359
      %v4361 = vmul.f32 %v4356, %v4360
      %vm4362 = vweird.f32 %v4322
      %vm4363 = vweird.f32 %v4356
      %vm4364 = vmor %vm4362, %vm4363
      %v4365 = vsel %vm4364, %v4356, %v4361
      %v4366 = vrsqrt.pop %v4323
      %v4367 = vmul.f32 %v4366, %v4323
      %v4368 = vmul.f32 %v4367, %v4366
      %v4369 = vmul.f32 0.5, %v4368
      %v4370 = vsub.f32 1.5, %v4369
      %v4371 = vmul.f32 %v4366, %v4370
      %vm4372 = vweird.f32 %v4323
      %vm4373 = vweird.f32 %v4366
      %vm4374 = vmor %vm4372, %vm4373
      %v4375 = vsel %vm4374, %v4366, %v4371
      %v4376 = vrsqrt.pop %v4324
      %v4377 = vmul.f32 %v4376, %v4324
      %v4378 = vmul.f32 %v4377, %v4376
      %v4379 = vmul.f32 0.5, %v4378
      %v4380 = vsub.f32 1.5, %v4379
      %v4381 = vmul.f32 %v4376, %v4380
      %vm4382 = vweird.f32 %v4324
      %vm4383 = vweird.f32 %v4376
      %vm4384 = vmor %vm4382, %vm4383
      %v4385 = vsel %vm4384, %v4376, %v4381
      %v4386 = vrsqrt.pop %v4325
      %v4387 = vmul.f32 %v4386, %v4325
      %v4388 = vmul.f32 %v4387, %v4386
      %v4389 = vmul.f32 0.5, %v4388
      %v4390 = vsub.f32 1.5, %v4389
      %v4391 = vmul.f32 %v4386, %v4390
      %vm4392 = vweird.f32 %v4325
      %vm4393 = vweird.f32 %v4386
      %vm4394 = vmor %vm4392, %vm4393
      %v4395 = vsel %vm4394, %v4386, %v4391
      %v4396 = vrsqrt.pop %v4326
      %v4397 = vmul.f32 %v4396, %v4326
      %v4398 = vmul.f32 %v4397, %v4396
      %v4399 = vmul.f32 0.5, %v4398
      %v4400 = vsub.f32 1.5, %v4399
      %v4401 = vmul.f32 %v4396, %v4400
      %vm4402 = vweird.f32 %v4326
      %vm4403 = vweird.f32 %v4396
      %vm4404 = vmor %vm4402, %vm4403
      %v4405 = vsel %vm4404, %v4396, %v4401
      %v4406 = vrsqrt.pop %v4327
      %v4407 = vmul.f32 %v4406, %v4327
      %v4408 = vmul.f32 %v4407, %v4406
      %v4409 = vmul.f32 0.5, %v4408
      %v4410 = vsub.f32 1.5, %v4409
      %v4411 = vmul.f32 %v4406, %v4410
      %vm4412 = vweird.f32 %v4327
      %vm4413 = vweird.f32 %v4406
      %vm4414 = vmor %vm4412, %vm4413
      %v4415 = vsel %vm4414, %v4406, %v4411
      %v4416 = vrsqrt.pop %v4328
      %v4417 = vmul.f32 %v4416, %v4328
      %v4418 = vmul.f32 %v4417, %v4416
      %v4419 = vmul.f32 0.5, %v4418
      %v4420 = vsub.f32 1.5, %v4419
      %v4421 = vmul.f32 %v4416, %v4420
      %vm4422 = vweird.f32 %v4328
      %vm4423 = vweird.f32 %v4416
      %vm4424 = vmor %vm4422, %vm4423
      %v4425 = vsel %vm4424, %v4416, %v4421
      %v4426 = vrsqrt.pop %v4329
      %v4427 = vmul.f32 %v4426, %v4329
      %v4428 = vmul.f32 %v4427, %v4426
      %v4429 = vmul.f32 0.5, %v4428
      %v4430 = vsub.f32 1.5, %v4429
      %v4431 = vmul.f32 %v4426, %v4430
      %vm4432 = vweird.f32 %v4329
      %vm4433 = vweird.f32 %v4426
      %vm4434 = vmor %vm4432, %vm4433
      %v4435 = vsel %vm4434, %v4426, %v4431
      %v4436 = vrsqrt.pop %v4330
      %v4437 = vmul.f32 %v4436, %v4330
      %v4438 = vmul.f32 %v4437, %v4436
      %v4439 = vmul.f32 0.5, %v4438
      %v4440 = vsub.f32 1.5, %v4439
      %v4441 = vmul.f32 %v4436, %v4440
      %vm4442 = vweird.f32 %v4330
      %vm4443 = vweird.f32 %v4436
      %vm4444 = vmor %vm4442, %vm4443
      %v4445 = vsel %vm4444, %v4436, %v4441
      %v4446 = vrsqrt.pop %v4331
      %v4447 = vmul.f32 %v4446, %v4331
      %v4448 = vmul.f32 %v4447, %v4446
      %v4449 = vmul.f32 0.5, %v4448
      %v4450 = vsub.f32 1.5, %v4449
      %v4451 = vmul.f32 %v4446, %v4450
      %vm4452 = vweird.f32 %v4331
      %vm4453 = vweird.f32 %v4446
      %vm4454 = vmor %vm4452, %vm4453
      %v4455 = vsel %vm4454, %v4446, %v4451
      %v4456 = vrsqrt.pop %v4332
      %v4457 = vmul.f32 %v4456, %v4332
      %v4458 = vmul.f32 %v4457, %v4456
      %v4459 = vmul.f32 0.5, %v4458
      %v4460 = vsub.f32 1.5, %v4459
      %v4461 = vmul.f32 %v4456, %v4460
      %vm4462 = vweird.f32 %v4332
      %vm4463 = vweird.f32 %v4456
      %vm4464 = vmor %vm4462, %vm4463
      %v4465 = vsel %vm4464, %v4456, %v4461
      %v4466 = vrsqrt.pop %v4333
      %v4467 = vmul.f32 %v4466, %v4333
      %v4468 = vmul.f32 %v4467, %v4466
      %v4469 = vmul.f32 0.5, %v4468
      %v4470 = vsub.f32 1.5, %v4469
      %v4471 = vmul.f32 %v4466, %v4470
      %vm4472 = vweird.f32 %v4333
      %vm4473 = vweird.f32 %v4466
      %vm4474 = vmor %vm4472, %vm4473
      %v4475 = vsel %vm4474, %v4466, %v4471
      %v4476 = vrsqrt.pop %v4334
      %v4477 = vmul.f32 %v4476, %v4334
      %v4478 = vmul.f32 %v4477, %v4476
      %v4479 = vmul.f32 0.5, %v4478
      %v4480 = vsub.f32 1.5, %v4479
      %v4481 = vmul.f32 %v4476, %v4480
      %vm4482 = vweird.f32 %v4334
      %vm4483 = vweird.f32 %v4476
      %vm4484 = vmor %vm4482, %vm4483
      %v4485 = vsel %vm4484, %v4476, %v4481
      %v4486 = vrsqrt.pop %v4335
      %v4487 = vmul.f32 %v4486, %v4335
      %v4488 = vmul.f32 %v4487, %v4486
      %v4489 = vmul.f32 0.5, %v4488
      %v4490 = vsub.f32 1.5, %v4489
      %v4491 = vmul.f32 %v4486, %v4490
      %vm4492 = vweird.f32 %v4335
      %vm4493 = vweird.f32 %v4486
      %vm4494 = vmor %vm4492, %vm4493
      %v4495 = vsel %vm4494, %v4486, %v4491
      %v4496 = vmul.f32 %v4240, %v4345
      %v4497 = vmul.f32 %v4241, %v4355
      %v4498 = vmul.f32 %v4242, %v4365
      %v4499 = vmul.f32 %v4243, %v4375
      %v4500 = vmul.f32 %v4244, %v4385
      %v4501 = vmul.f32 %v4245, %v4395
      %v4502 = vmul.f32 %v4246, %v4405
      %v4503 = vmul.f32 %v4247, %v4415
      %v4504 = vmul.f32 %v4248, %v4425
      %v4505 = vmul.f32 %v4249, %v4435
      %v4506 = vmul.f32 %v4250, %v4445
      %v4507 = vmul.f32 %v4251, %v4455
      %v4508 = vmul.f32 %v4252, %v4465
      %v4509 = vmul.f32 %v4253, %v4475
      %v4510 = vmul.f32 %v4254, %v4485
      %v4511 = vmul.f32 %v4255, %v4495
      %v4513 = vperm.slane %v4190, 0
      %v4515 = vmul.f32 %v4496, %v4513
      %v4516 = vmul.f32 %v4497, %v4513
      %v4517 = vmul.f32 %v4498, %v4513
      %v4518 = vmul.f32 %v4499, %v4513
      %v4519 = vmul.f32 %v4500, %v4513
      %v4520 = vmul.f32 %v4501, %v4513
      %v4521 = vmul.f32 %v4502, %v4513
      %v4522 = vmul.f32 %v4503, %v4513
      %v4523 = vmul.f32 %v4504, %v4513
      %v4524 = vmul.f32 %v4505, %v4513
      %v4525 = vmul.f32 %v4506, %v4513
      %v4526 = vmul.f32 %v4507, %v4513
      %v4527 = vmul.f32 %v4508, %v4513
      %v4528 = vmul.f32 %v4509, %v4513
      %v4529 = vmul.f32 %v4510, %v4513
      %v4530 = vmul.f32 %v4511, %v4513
      %v4532 = vperm.slane %v4191, 0
      %v4534 = vadd.f32 %v4515, %v4532
      %v4535 = vadd.f32 %v4516, %v4532
      %v4536 = vadd.f32 %v4517, %v4532
      %v4537 = vadd.f32 %v4518, %v4532
      %v4538 = vadd.f32 %v4519, %v4532
      %v4539 = vadd.f32 %v4520, %v4532
      %v4540 = vadd.f32 %v4521, %v4532
      %v4541 = vadd.f32 %v4522, %v4532
      %v4542 = vadd.f32 %v4523, %v4532
      %v4543 = vadd.f32 %v4524, %v4532
      %v4544 = vadd.f32 %v4525, %v4532
      %v4545 = vadd.f32 %v4526, %v4532
      %v4546 = vadd.f32 %v4527, %v4532
      %v4547 = vadd.f32 %v4528, %v4532
      %v4548 = vadd.f32 %v4529, %v4532
      %v4549 = vadd.f32 %v4530, %v4532
      %v4550 = vld [vmem:[%s12] sm:$0xff]
      %v4551 = vld [vmem:[%s12 + $0x8] sm:$0xff]
      %v4552 = vld [vmem:[%s12 + $0x10] sm:$0xff]
      %v4553 = vld [vmem:[%s12 + $0x18] sm:$0xff]
      %v4554 = vld [vmem:[%s12 + $0x20] sm:$0xff]
      %v4555 = vld [vmem:[%s12 + $0x28] sm:$0xff]
      %v4556 = vld [vmem:[%s12 + $0x30] sm:$0xff]
      %v4557 = vld [vmem:[%s12 + $0x38] sm:$0xff]
      %v4558 = vld [vmem:[%s12 + $0x40] sm:$0xff]
      %v4559 = vld [vmem:[%s12 + $0x48] sm:$0xff]
      %v4560 = vld [vmem:[%s12 + $0x50] sm:$0xff]
      %v4561 = vld [vmem:[%s12 + $0x58] sm:$0xff]
      %v4562 = vld [vmem:[%s12 + $0x60] sm:$0xff]
      %v4563 = vld [vmem:[%s12 + $0x68] sm:$0xff]
      %v4564 = vld [vmem:[%s12 + $0x70] sm:$0xff]
      %v4565 = vld [vmem:[%s12 + $0x78] sm:$0xff]
      %v4566 = vld [vmem:[%s13] sm:$0x3]
      %v4567 = vpack.c.bf16 %v4535, %v4534
      %v4568 = vpack.c.bf16 %v4537, %v4536
      %v4569 = vpack.c.bf16 %v4539, %v4538
      %v4570 = vpack.c.bf16 %v4541, %v4540
      %v4571 = vpack.c.bf16 %v4543, %v4542
      %v4572 = vpack.c.bf16 %v4545, %v4544
      %v4573 = vpack.c.bf16 %v4547, %v4546
      %v4574 = vpack.c.bf16 %v4549, %v4548
      %v4576 = vperm.slane %v4566, 0
      %v4577 = vperm.slane %v4566, 1
      %v4596 = vunpack.c.l.b16 %v4550
      %v4597 = vunpack.c.h.b16 %v4550
      %v4598 = vunpack.c.l.b16 %v4551
      %v4599 = vunpack.c.h.b16 %v4551
      %v4600 = vunpack.c.l.b16 %v4552
      %v4601 = vunpack.c.h.b16 %v4552
      %v4602 = vunpack.c.l.b16 %v4553
      %v4603 = vunpack.c.h.b16 %v4553
      %v4604 = vunpack.c.l.b16 %v4554
      %v4605 = vunpack.c.h.b16 %v4554
      %v4606 = vunpack.c.l.b16 %v4555
      %v4607 = vunpack.c.h.b16 %v4555
      %v4608 = vunpack.c.l.b16 %v4556
      %v4609 = vunpack.c.h.b16 %v4556
      %v4610 = vunpack.c.l.b16 %v4557
      %v4611 = vunpack.c.h.b16 %v4557
      %v4612 = vunpack.c.l.b16 %v4558
      %v4613 = vunpack.c.h.b16 %v4558
      %v4614 = vunpack.c.l.b16 %v4559
      %v4615 = vunpack.c.h.b16 %v4559
      %v4616 = vunpack.c.l.b16 %v4560
      %v4617 = vunpack.c.h.b16 %v4560
      %v4618 = vunpack.c.l.b16 %v4561
      %v4619 = vunpack.c.h.b16 %v4561
      %v4620 = vunpack.c.l.b16 %v4562
      %v4621 = vunpack.c.h.b16 %v4562
      %v4622 = vunpack.c.l.b16 %v4563
      %v4623 = vunpack.c.h.b16 %v4563
      %v4624 = vunpack.c.l.b16 %v4564
      %v4625 = vunpack.c.h.b16 %v4564
      %v4626 = vunpack.c.l.b16 %v4565
      %v4627 = vunpack.c.h.b16 %v4565
      %v4628 = vpack.c.b16 %v4598, %v4596
      %v4629 = vpack.c.b16 %v4599, %v4597
      %v4630 = vpack.c.b16 %v4602, %v4600
      %v4631 = vpack.c.b16 %v4603, %v4601
      %v4632 = vpack.c.b16 %v4606, %v4604
      %v4633 = vpack.c.b16 %v4607, %v4605
      %v4634 = vpack.c.b16 %v4610, %v4608
      %v4635 = vpack.c.b16 %v4611, %v4609
      %v4636 = vpack.c.b16 %v4614, %v4612
      %v4637 = vpack.c.b16 %v4615, %v4613
      %v4638 = vpack.c.b16 %v4618, %v4616
      %v4639 = vpack.c.b16 %v4619, %v4617
      %v4640 = vpack.c.b16 %v4622, %v4620
      %v4641 = vpack.c.b16 %v4623, %v4621
      %v4642 = vpack.c.b16 %v4626, %v4624
      %v4643 = vpack.c.b16 %v4627, %v4625
      %4660 = vmatpush.bf16.msra.mxu0 %v4642
      %4661 = vmatpush.bf16.msra.mxu0 %v4640
      %4662 = vmatpush.bf16.msra.mxu0 %v4638
      %4663 = vmatpush.bf16.msra.mxu0 %v4636
      %4664 = vmatpush.bf16.msra.mxu0 %v4634
      %4665 = vmatpush.bf16.msra.mxu0 %v4632
      %4666 = vmatpush.bf16.msra.mxu0 %v4630
      %4667 = vmatpush.bf16.msra.mxu0 %v4628
      %4668 = vmatmul.bf16.gmra.mxu0 %v4567
      %v4669 = vpop.f32.mrf.mxu0
      %v4670 = vadd.f32 %v4576, %v4669
      %v4671 = vpop.f32.mrf.mxu0
      %v4672 = vadd.f32 %v4576, %v4671
      %4673 = vmatmul.bf16.gmra.mxu0 %v4568
      %v4674 = vpop.f32.mrf.mxu0
      %v4675 = vadd.f32 %v4576, %v4674
      %v4676 = vpop.f32.mrf.mxu0
      %v4677 = vadd.f32 %v4576, %v4676
      %4678 = vmatmul.bf16.gmra.mxu0 %v4569
      %v4679 = vpop.f32.mrf.mxu0
      %v4680 = vadd.f32 %v4576, %v4679
      %v4681 = vpop.f32.mrf.mxu0
      %v4682 = vadd.f32 %v4576, %v4681
      %4683 = vmatmul.bf16.gmra.mxu0 %v4570
      %v4684 = vpop.f32.mrf.mxu0
      %v4685 = vadd.f32 %v4576, %v4684
      %v4686 = vpop.f32.mrf.mxu0
      %v4687 = vadd.f32 %v4576, %v4686
      %4688 = vmatmul.bf16.gmra.mxu0 %v4571
      %v4689 = vpop.f32.mrf.mxu0
      %v4690 = vadd.f32 %v4576, %v4689
      %v4691 = vpop.f32.mrf.mxu0
      %v4692 = vadd.f32 %v4576, %v4691
      %4693 = vmatmul.bf16.gmra.mxu0 %v4572
      %v4694 = vpop.f32.mrf.mxu0
      %v4695 = vadd.f32 %v4576, %v4694
      %v4696 = vpop.f32.mrf.mxu0
      %v4697 = vadd.f32 %v4576, %v4696
      %4698 = vmatmul.bf16.gmra.mxu0 %v4573
      %v4699 = vpop.f32.mrf.mxu0
      %v4700 = vadd.f32 %v4576, %v4699
      %v4701 = vpop.f32.mrf.mxu0
      %v4702 = vadd.f32 %v4576, %v4701
      %4703 = vmatmul.bf16.gmra.mxu0 %v4574
      %v4704 = vpop.f32.mrf.mxu0
      %v4705 = vadd.f32 %v4576, %v4704
      %v4706 = vpop.f32.mrf.mxu0
      %v4707 = vadd.f32 %v4576, %v4706
      %4708 = vdwg.mxu0
      %4709 = vmatpush.bf16.msra.mxu0 %v4643
      %4710 = vmatpush.bf16.msra.mxu0 %v4641
      %4711 = vmatpush.bf16.msra.mxu0 %v4639
      %4712 = vmatpush.bf16.msra.mxu0 %v4637
      %4713 = vmatpush.bf16.msra.mxu0 %v4635
      %4714 = vmatpush.bf16.msra.mxu0 %v4633
      %4715 = vmatpush.bf16.msra.mxu0 %v4631
      %4716 = vmatpush.bf16.msra.mxu0 %v4629
      %4717 = vmatmul.bf16.gmra.mxu0 %v4567
      %v4718 = vpop.f32.mrf.mxu0
      %v4719 = vadd.f32 %v4577, %v4718
      %v4720 = vpop.f32.mrf.mxu0
      %v4721 = vadd.f32 %v4577, %v4720
      %4722 = vmatmul.bf16.gmra.mxu0 %v4568
      %v4723 = vpop.f32.mrf.mxu0
      %v4724 = vadd.f32 %v4577, %v4723
      %v4725 = vpop.f32.mrf.mxu0
      %v4726 = vadd.f32 %v4577, %v4725
      %4727 = vmatmul.bf16.gmra.mxu0 %v4569
      %v4728 = vpop.f32.mrf.mxu0
      %v4729 = vadd.f32 %v4577, %v4728
      %v4730 = vpop.f32.mrf.mxu0
      %v4731 = vadd.f32 %v4577, %v4730
      %4732 = vmatmul.bf16.gmra.mxu0 %v4570
      %v4733 = vpop.f32.mrf.mxu0
      %v4734 = vadd.f32 %v4577, %v4733
      %v4735 = vpop.f32.mrf.mxu0
      %v4736 = vadd.f32 %v4577, %v4735
      %4737 = vmatmul.bf16.gmra.mxu0 %v4571
      %v4738 = vpop.f32.mrf.mxu0
      %v4739 = vadd.f32 %v4577, %v4738
      %v4740 = vpop.f32.mrf.mxu0
      %v4741 = vadd.f32 %v4577, %v4740
      %4742 = vmatmul.bf16.gmra.mxu0 %v4572
      %v4743 = vpop.f32.mrf.mxu0
      %v4744 = vadd.f32 %v4577, %v4743
      %v4745 = vpop.f32.mrf.mxu0
      %v4746 = vadd.f32 %v4577, %v4745
      %4747 = vmatmul.bf16.gmra.mxu0 %v4573
      %v4748 = vpop.f32.mrf.mxu0
      %v4749 = vadd.f32 %v4577, %v4748
      %v4750 = vpop.f32.mrf.mxu0
      %v4751 = vadd.f32 %v4577, %v4750
      %4752 = vmatmul.bf16.gmra.mxu0 %v4574
      %v4753 = vpop.f32.mrf.mxu0
      %v4754 = vadd.f32 %v4577, %v4753
      %v4755 = vpop.f32.mrf.mxu0
      %v4756 = vadd.f32 %v4577, %v4755
      %4757 = vdwg.mxu0
      %v4758 = vmul.f32 %v4670, 0.5
      %v4759 = vmul.f32 %v4719, 0.5
      %v4760 = vmul.f32 %v4672, 0.5
      %v4761 = vmul.f32 %v4721, 0.5
      %v4762 = vmul.f32 %v4675, 0.5
      %v4763 = vmul.f32 %v4724, 0.5
      %v4764 = vmul.f32 %v4677, 0.5
      %v4765 = vmul.f32 %v4726, 0.5
      %v4766 = vmul.f32 %v4680, 0.5
      %v4767 = vmul.f32 %v4729, 0.5
      %v4768 = vmul.f32 %v4682, 0.5
      %v4769 = vmul.f32 %v4731, 0.5
      %v4770 = vmul.f32 %v4685, 0.5
      %v4771 = vmul.f32 %v4734, 0.5
      %v4772 = vmul.f32 %v4687, 0.5
      %v4773 = vmul.f32 %v4736, 0.5
      %v4774 = vmul.f32 %v4690, 0.5
      %v4775 = vmul.f32 %v4739, 0.5
      %v4776 = vmul.f32 %v4692, 0.5
      %v4777 = vmul.f32 %v4741, 0.5
      %v4778 = vmul.f32 %v4695, 0.5
      %v4779 = vmul.f32 %v4744, 0.5
      %v4780 = vmul.f32 %v4697, 0.5
      %v4781 = vmul.f32 %v4746, 0.5
      %v4782 = vmul.f32 %v4700, 0.5
      %v4783 = vmul.f32 %v4749, 0.5
      %v4784 = vmul.f32 %v4702, 0.5
      %v4785 = vmul.f32 %v4751, 0.5
      %v4786 = vmul.f32 %v4705, 0.5
      %v4787 = vmul.f32 %v4754, 0.5
      %v4788 = vmul.f32 %v4707, 0.5
      %v4789 = vmul.f32 %v4756, 0.5
      %v4790 = vmul.f32 %v4670, 0.044715
      %v4791 = vmul.f32 %v4719, 0.044715
      %v4792 = vmul.f32 %v4672, 0.044715
      %v4793 = vmul.f32 %v4721, 0.044715
      %v4794 = vmul.f32 %v4675, 0.044715
      %v4795 = vmul.f32 %v4724, 0.044715
      %v4796 = vmul.f32 %v4677, 0.044715
      %v4797 = vmul.f32 %v4726, 0.044715
      %v4798 = vmul.f32 %v4680, 0.044715
      %v4799 = vmul.f32 %v4729, 0.044715
      %v4800 = vmul.f32 %v4682, 0.044715
      %v4801 = vmul.f32 %v4731, 0.044715
      %v4802 = vmul.f32 %v4685, 0.044715
      %v4803 = vmul.f32 %v4734, 0.044715
      %v4804 = vmul.f32 %v4687, 0.044715
      %v4805 = vmul.f32 %v4736, 0.044715
      %v4806 = vmul.f32 %v4690, 0.044715
      %v4807 = vmul.f32 %v4739, 0.044715
      %v4808 = vmul.f32 %v4692, 0.044715
      %v4809 = vmul.f32 %v4741, 0.044715
      %v4810 = vmul.f32 %v4695, 0.044715
      %v4811 = vmul.f32 %v4744, 0.044715
      %v4812 = vmul.f32 %v4697, 0.044715
      %v4813 = vmul.f32 %v4746, 0.044715
      %v4814 = vmul.f32 %v4700, 0.044715
      %v4815 = vmul.f32 %v4749, 0.044715
      %v4816 = vmul.f32 %v4702, 0.044715
      %v4817 = vmul.f32 %v4751, 0.044715
      %v4818 = vmul.f32 %v4705, 0.044715
      %v4819 = vmul.f32 %v4754, 0.044715
      %v4820 = vmul.f32 %v4707, 0.044715
      %v4821 = vmul.f32 %v4756, 0.044715
      %v4822 = vmul.f32 %v4790, %v4670
      %v4823 = vmul.f32 %v4791, %v4719
      %v4824 = vmul.f32 %v4792, %v4672
      %v4825 = vmul.f32 %v4793, %v4721
      %v4826 = vmul.f32 %v4794, %v4675
      %v4827 = vmul.f32 %v4795, %v4724
      %v4828 = vmul.f32 %v4796, %v4677
      %v4829 = vmul.f32 %v4797, %v4726
      %v4830 = vmul.f32 %v4798, %v4680
      %v4831 = vmul.f32 %v4799, %v4729
      %v4832 = vmul.f32 %v4800, %v4682
      %v4833 = vmul.f32 %v4801, %v4731
      %v4834 = vmul.f32 %v4802, %v4685
      %v4835 = vmul.f32 %v4803, %v4734
      %v4836 = vmul.f32 %v4804, %v4687
      %v4837 = vmul.f32 %v4805, %v4736
      %v4838 = vmul.f32 %v4806, %v4690
      %v4839 = vmul.f32 %v4807, %v4739
      %v4840 = vmul.f32 %v4808, %v4692
      %v4841 = vmul.f32 %v4809, %v4741
      %v4842 = vmul.f32 %v4810, %v4695
      %v4843 = vmul.f32 %v4811, %v4744
      %v4844 = vmul.f32 %v4812, %v4697
      %v4845 = vmul.f32 %v4813, %v4746
      %v4846 = vmul.f32 %v4814, %v4700
      %v4847 = vmul.f32 %v4815, %v4749
      %v4848 = vmul.f32 %v4816, %v4702
      %v4849 = vmul.f32 %v4817, %v4751
      %v4850 = vmul.f32 %v4818, %v4705
      %v4851 = vmul.f32 %v4819, %v4754
      %v4852 = vmul.f32 %v4820, %v4707
      %v4853 = vmul.f32 %v4821, %v4756
      %v4854 = vmul.f32 %v4822, %v4670
      %v4855 = vmul.f32 %v4823, %v4719
      %v4856 = vmul.f32 %v4824, %v4672
      %v4857 = vmul.f32 %v4825, %v4721
      %v4858 = vmul.f32 %v4826, %v4675
      %v4859 = vmul.f32 %v4827, %v4724
      %v4860 = vmul.f32 %v4828, %v4677
      %v4861 = vmul.f32 %v4829, %v4726
      %v4862 = vmul.f32 %v4830, %v4680
      %v4863 = vmul.f32 %v4831, %v4729
      %v4864 = vmul.f32 %v4832, %v4682
      %v4865 = vmul.f32 %v4833, %v4731
      %v4866 = vmul.f32 %v4834, %v4685
      %v4867 = vmul.f32 %v4835, %v4734
      %v4868 = vmul.f32 %v4836, %v4687
      %v4869 = vmul.f32 %v4837, %v4736
      %v4870 = vmul.f32 %v4838, %v4690
      %v4871 = vmul.f32 %v4839, %v4739
      %v4872 = vmul.f32 %v4840, %v4692
      %v4873 = vmul.f32 %v4841, %v4741
      %v4874 = vmul.f32 %v4842, %v4695
      %v4875 = vmul.f32 %v4843, %v4744
      %v4876 = vmul.f32 %v4844, %v4697
      %v4877 = vmul.f32 %v4845, %v4746
      %v4878 = vmul.f32 %v4846, %v4700
      %v4879 = vmul.f32 %v4847, %v4749
      %v4880 = vmul.f32 %v4848, %v4702
      %v4881 = vmul.f32 %v4849, %v4751
      %v4882 = vmul.f32 %v4850, %v4705
      %v4883 = vmul.f32 %v4851, %v4754
      %v4884 = vmul.f32 %v4852, %v4707
      %v4885 = vmul.f32 %v4853, %v4756
      %v4886 = vadd.f32 %v4670, %v4854
      %v4887 = vadd.f32 %v4719, %v4855
      %v4888 = vadd.f32 %v4672, %v4856
      %v4889 = vadd.f32 %v4721, %v4857
      %v4890 = vadd.f32 %v4675, %v4858
      %v4891 = vadd.f32 %v4724, %v4859
      %v4892 = vadd.f32 %v4677, %v4860
      %v4893 = vadd.f32 %v4726, %v4861
      %v4894 = vadd.f32 %v4680, %v4862
      %v4895 = vadd.f32 %v4729, %v4863
      %v4896 = vadd.f32 %v4682, %v4864
      %v4897 = vadd.f32 %v4731, %v4865
      %v4898 = vadd.f32 %v4685, %v4866
      %v4899 = vadd.f32 %v4734, %v4867
      %v4900 = vadd.f32 %v4687, %v4868
      %v4901 = vadd.f32 %v4736, %v4869
      %v4902 = vadd.f32 %v4690, %v4870
      %v4903 = vadd.f32 %v4739, %v4871
      %v4904 = vadd.f32 %v4692, %v4872
      %v4905 = vadd.f32 %v4741, %v4873
      %v4906 = vadd.f32 %v4695, %v4874
      %v4907 = vadd.f32 %v4744, %v4875
      %v4908 = vadd.f32 %v4697, %v4876
      %v4909 = vadd.f32 %v4746, %v4877
      %v4910 = vadd.f32 %v4700, %v4878
      %v4911 = vadd.f32 %v4749, %v4879
      %v4912 = vadd.f32 %v4702, %v4880
      %v4913 = vadd.f32 %v4751, %v4881
      %v4914 = vadd.f32 %v4705, %v4882
      %v4915 = vadd.f32 %v4754, %v4883
      %v4916 = vadd.f32 %v4707, %v4884
      %v4917 = vadd.f32 %v4756, %v4885
      %v4918 = vmul.f32 %v4886, 0.7978846
      %v4919 = vmul.f32 %v4887, 0.7978846
      %v4920 = vmul.f32 %v4888, 0.7978846
      %v4921 = vmul.f32 %v4889, 0.7978846
      %v4922 = vmul.f32 %v4890, 0.7978846
      %v4923 = vmul.f32 %v4891, 0.7978846
      %v4924 = vmul.f32 %v4892, 0.7978846
      %v4925 = vmul.f32 %v4893, 0.7978846
      %v4926 = vmul.f32 %v4894, 0.7978846
      %v4927 = vmul.f32 %v4895, 0.7978846
      %v4928 = vmul.f32 %v4896, 0.7978846
      %v4929 = vmul.f32 %v4897, 0.7978846
      %v4930 = vmul.f32 %v4898, 0.7978846
      %v4931 = vmul.f32 %v4899, 0.7978846
      %v4932 = vmul.f32 %v4900, 0.7978846
      %v4933 = vmul.f32 %v4901, 0.7978846
      %v4934 = vmul.f32 %v4902, 0.7978846
      %v4935 = vmul.f32 %v4903, 0.7978846
      %v4936 = vmul.f32 %v4904, 0.7978846
      %v4937 = vmul.f32 %v4905, 0.7978846
      %v4938 = vmul.f32 %v4906, 0.7978846
      %v4939 = vmul.f32 %v4907, 0.7978846
      %v4940 = vmul.f32 %v4908, 0.7978846
      %v4941 = vmul.f32 %v4909, 0.7978846
      %v4942 = vmul.f32 %v4910, 0.7978846
      %v4943 = vmul.f32 %v4911, 0.7978846
      %v4944 = vmul.f32 %v4912, 0.7978846
      %v4945 = vmul.f32 %v4913, 0.7978846
      %v4946 = vmul.f32 %v4914, 0.7978846
      %v4947 = vmul.f32 %v4915, 0.7978846
      %v4948 = vmul.f32 %v4916, 0.7978846
      %v4949 = vmul.f32 %v4917, 0.7978846
      %v4950 = vtanh.pop %v4918
      %v4951 = vtanh.pop %v4919
      %v4952 = vtanh.pop %v4920
      %v4953 = vtanh.pop %v4921
      %v4954 = vtanh.pop %v4922
      %v4955 = vtanh.pop %v4923
      %v4956 = vtanh.pop %v4924
      %v4957 = vtanh.pop %v4925
      %v4958 = vtanh.pop %v4926
      %v4959 = vtanh.pop %v4927
      %v4960 = vtanh.pop %v4928
      %v4961 = vtanh.pop %v4929
      %v4962 = vtanh.pop %v4930
      %v4963 = vtanh.pop %v4931
      %v4964 = vtanh.pop %v4932
      %v4965 = vtanh.pop %v4933
      %v4966 = vtanh.pop %v4934
      %v4967 = vtanh.pop %v4935
      %v4968 = vtanh.pop %v4936
      %v4969 = vtanh.pop %v4937
      %v4970 = vtanh.pop %v4938
      %v4971 = vtanh.pop %v4939
      %v4972 = vtanh.pop %v4940
      %v4973 = vtanh.pop %v4941
      %v4974 = vtanh.pop %v4942
      %v4975 = vtanh.pop %v4943
      %v4976 = vtanh.pop %v4944
      %v4977 = vtanh.pop %v4945
      %v4978 = vtanh.pop %v4946
      %v4979 = vtanh.pop %v4947
      %v4980 = vtanh.pop %v4948
      %v4981 = vtanh.pop %v4949
      %v4982 = vadd.f32 %v4950, 1.0
      %v4983 = vadd.f32 %v4951, 1.0
      %v4984 = vadd.f32 %v4952, 1.0
      %v4985 = vadd.f32 %v4953, 1.0
      %v4986 = vadd.f32 %v4954, 1.0
      %v4987 = vadd.f32 %v4955, 1.0
      %v4988 = vadd.f32 %v4956, 1.0
      %v4989 = vadd.f32 %v4957, 1.0
      %v4990 = vadd.f32 %v4958, 1.0
      %v4991 = vadd.f32 %v4959, 1.0
      %v4992 = vadd.f32 %v4960, 1.0
      %v4993 = vadd.f32 %v4961, 1.0
      %v4994 = vadd.f32 %v4962, 1.0
      %v4995 = vadd.f32 %v4963, 1.0
      %v4996 = vadd.f32 %v4964, 1.0
      %v4997 = vadd.f32 %v4965, 1.0
      %v4998 = vadd.f32 %v4966, 1.0
      %v4999 = vadd.f32 %v4967, 1.0
      %v5000 = vadd.f32 %v4968, 1.0
      %v5001 = vadd.f32 %v4969, 1.0
      %v5002 = vadd.f32 %v4970, 1.0
      %v5003 = vadd.f32 %v4971, 1.0
      %v5004 = vadd.f32 %v4972, 1.0
      %v5005 = vadd.f32 %v4973, 1.0
      %v5006 = vadd.f32 %v4974, 1.0
      %v5007 = vadd.f32 %v4975, 1.0
      %v5008 = vadd.f32 %v4976, 1.0
      %v5009 = vadd.f32 %v4977, 1.0
      %v5010 = vadd.f32 %v4978, 1.0
      %v5011 = vadd.f32 %v4979, 1.0
      %v5012 = vadd.f32 %v4980, 1.0
      %v5013 = vadd.f32 %v4981, 1.0
      %v5014 = vmul.f32 %v4758, %v4982
      %v5015 = vmul.f32 %v4759, %v4983
      %v5016 = vmul.f32 %v4760, %v4984
      %v5017 = vmul.f32 %v4761, %v4985
      %v5018 = vmul.f32 %v4762, %v4986
      %v5019 = vmul.f32 %v4763, %v4987
      %v5020 = vmul.f32 %v4764, %v4988
      %v5021 = vmul.f32 %v4765, %v4989
      %v5022 = vmul.f32 %v4766, %v4990
      %v5023 = vmul.f32 %v4767, %v4991
      %v5024 = vmul.f32 %v4768, %v4992
      %v5025 = vmul.f32 %v4769, %v4993
      %v5026 = vmul.f32 %v4770, %v4994
      %v5027 = vmul.f32 %v4771, %v4995
      %v5028 = vmul.f32 %v4772, %v4996
      %v5029 = vmul.f32 %v4773, %v4997
      %v5030 = vmul.f32 %v4774, %v4998
      %v5031 = vmul.f32 %v4775, %v4999
      %v5032 = vmul.f32 %v4776, %v5000
      %v5033 = vmul.f32 %v4777, %v5001
      %v5034 = vmul.f32 %v4778, %v5002
      %v5035 = vmul.f32 %v4779, %v5003
      %v5036 = vmul.f32 %v4780, %v5004
      %v5037 = vmul.f32 %v4781, %v5005
      %v5038 = vmul.f32 %v4782, %v5006
      %v5039 = vmul.f32 %v4783, %v5007
      %v5040 = vmul.f32 %v4784, %v5008
      %v5041 = vmul.f32 %v4785, %v5009
      %v5042 = vmul.f32 %v4786, %v5010
      %v5043 = vmul.f32 %v4787, %v5011
      %v5044 = vmul.f32 %v4788, %v5012
      %v5045 = vmul.f32 %v4789, %v5013
      %v5046 = vld [vmem:[%s14] sm:$0xf]
      %v5047 = vld [vmem:[%s14 + $0x4] sm:$0xf]
      %v5048 = vld [vmem:[%s14 + $0x8] sm:$0xf]
      %v5049 = vld [vmem:[%s14 + $0xc] sm:$0xf]
      %v5050 = vld [vmem:[%s14 + $0x10] sm:$0xf]
      %v5051 = vld [vmem:[%s14 + $0x14] sm:$0xf]
      %v5052 = vld [vmem:[%s14 + $0x18] sm:$0xf]
      %v5053 = vld [vmem:[%s14 + $0x1c] sm:$0xf]
      %v5054 = vld [vmem:[%s14 + $0x20] sm:$0xf]
      %v5055 = vld [vmem:[%s14 + $0x24] sm:$0xf]
      %v5056 = vld [vmem:[%s14 + $0x28] sm:$0xf]
      %v5057 = vld [vmem:[%s14 + $0x2c] sm:$0xf]
      %v5058 = vld [vmem:[%s14 + $0x30] sm:$0xf]
      %v5059 = vld [vmem:[%s14 + $0x34] sm:$0xf]
      %v5060 = vld [vmem:[%s14 + $0x38] sm:$0xf]
      %v5061 = vld [vmem:[%s14 + $0x3c] sm:$0xf]
      %v5062 = vld [vmem:[%s14 + $0x40] sm:$0xf]
      %v5063 = vld [vmem:[%s14 + $0x44] sm:$0xf]
      %v5064 = vld [vmem:[%s14 + $0x48] sm:$0xf]
      %v5065 = vld [vmem:[%s14 + $0x4c] sm:$0xf]
      %v5066 = vld [vmem:[%s14 + $0x50] sm:$0xf]
      %v5067 = vld [vmem:[%s14 + $0x54] sm:$0xf]
      %v5068 = vld [vmem:[%s14 + $0x58] sm:$0xf]
      %v5069 = vld [vmem:[%s14 + $0x5c] sm:$0xf]
      %v5070 = vld [vmem:[%s14 + $0x60] sm:$0xf]
      %v5071 = vld [vmem:[%s14 + $0x64] sm:$0xf]
      %v5072 = vld [vmem:[%s14 + $0x68] sm:$0xf]
      %v5073 = vld [vmem:[%s14 + $0x6c] sm:$0xf]
      %v5074 = vld [vmem:[%s14 + $0x70] sm:$0xf]
      %v5075 = vld [vmem:[%s14 + $0x74] sm:$0xf]
      %v5076 = vld [vmem:[%s14 + $0x78] sm:$0xf]
      %v5077 = vld [vmem:[%s14 + $0x7c] sm:$0xf]
      %v5078 = vld [vmem:[%s15] sm:$0x1]
      %v5079 = vpack.c.bf16 %v5016, %v5014
      %v5080 = vpack.c.bf16 %v5017, %v5015
      %v5081 = vpack.c.bf16 %v5020, %v5018
      %v5082 = vpack.c.bf16 %v5021, %v5019
      %v5083 = vpack.c.bf16 %v5024, %v5022
      %v5084 = vpack.c.bf16 %v5025, %v5023
      %v5085 = vpack.c.bf16 %v5028, %v5026
      %v5086 = vpack.c.bf16 %v5029, %v5027
      %v5087 = vpack.c.bf16 %v5032, %v5030
      %v5088 = vpack.c.bf16 %v5033, %v5031
      %v5089 = vpack.c.bf16 %v5036, %v5034
      %v5090 = vpack.c.bf16 %v5037, %v5035
      %v5091 = vpack.c.bf16 %v5040, %v5038
      %v5092 = vpack.c.bf16 %v5041, %v5039
      %v5093 = vpack.c.bf16 %v5044, %v5042
      %v5094 = vpack.c.bf16 %v5045, %v5043
      %v5096 = vperm.slane %v5078, 0
      %v5130 = vunpack.c.l.b16 %v5046
      %v5131 = vunpack.c.l.b16 %v5047
      %v5132 = vunpack.c.l.b16 %v5048
      %v5133 = vunpack.c.l.b16 %v5049
      %v5134 = vunpack.c.l.b16 %v5050
      %v5135 = vunpack.c.l.b16 %v5051
      %v5136 = vunpack.c.l.b16 %v5052
      %v5137 = vunpack.c.l.b16 %v5053
      %v5138 = vunpack.c.l.b16 %v5054
      %v5139 = vunpack.c.l.b16 %v5055
      %v5140 = vunpack.c.l.b16 %v5056
      %v5141 = vunpack.c.l.b16 %v5057
      %v5142 = vunpack.c.l.b16 %v5058
      %v5143 = vunpack.c.l.b16 %v5059
      %v5144 = vunpack.c.l.b16 %v5060
      %v5145 = vunpack.c.l.b16 %v5061
      %v5146 = vunpack.c.l.b16 %v5062
      %v5147 = vunpack.c.l.b16 %v5063
      %v5148 = vunpack.c.l.b16 %v5064
      %v5149 = vunpack.c.l.b16 %v5065
      %v5150 = vunpack.c.l.b16 %v5066
      %v5151 = vunpack.c.l.b16 %v5067
      %v5152 = vunpack.c.l.b16 %v5068
      %v5153 = vunpack.c.l.b16 %v5069
      %v5154 = vunpack.c.l.b16 %v5070
      %v5155 = vunpack.c.l.b16 %v5071
      %v5156 = vunpack.c.l.b16 %v5072
      %v5157 = vunpack.c.l.b16 %v5073
      %v5158 = vunpack.c.l.b16 %v5074
      %v5159 = vunpack.c.l.b16 %v5075
      %v5160 = vunpack.c.l.b16 %v5076
      %v5161 = vunpack.c.l.b16 %v5077
      %v5162 = vpack.c.b16 %v5131, %v5130
      %v5163 = vpack.c.b16 %v5133, %v5132
      %v5164 = vpack.c.b16 %v5135, %v5134
      %v5165 = vpack.c.b16 %v5137, %v5136
      %v5166 = vpack.c.b16 %v5139, %v5138
      %v5167 = vpack.c.b16 %v5141, %v5140
      %v5168 = vpack.c.b16 %v5143, %v5142
      %v5169 = vpack.c.b16 %v5145, %v5144
      %v5170 = vpack.c.b16 %v5147, %v5146
      %v5171 = vpack.c.b16 %v5149, %v5148
      %v5172 = vpack.c.b16 %v5151, %v5150
      %v5173 = vpack.c.b16 %v5153, %v5152
      %v5174 = vpack.c.b16 %v5155, %v5154
      %v5175 = vpack.c.b16 %v5157, %v5156
      %v5176 = vpack.c.b16 %v5159, %v5158
      %v5177 = vpack.c.b16 %v5161, %v5160
      %5194 = vmatpush.bf16.msra.mxu0 %v5169
      %5195 = vmatpush.bf16.msra.mxu0 %v5168
      %5196 = vmatpush.bf16.msra.mxu0 %v5167
      %5197 = vmatpush.bf16.msra.mxu0 %v5166
      %5198 = vmatpush.bf16.msra.mxu0 %v5165
      %5199 = vmatpush.bf16.msra.mxu0 %v5164
      %5200 = vmatpush.bf16.msra.mxu0 %v5163
      %5201 = vmatpush.bf16.msra.mxu0 %v5162
      %5202 = vmatmul.bf16.gmra.mxu0 %v5079
      %v5203 = vpop.f32.mrf.mxu0
      %v5204 = vadd.f32 %v5096, %v5203
      %v5205 = vpop.f32.mrf.mxu0
      %v5206 = vadd.f32 %v5096, %v5205
      %5207 = vmatmul.bf16.gmra.mxu0 %v5081
      %v5208 = vpop.f32.mrf.mxu0
      %v5209 = vadd.f32 %v5096, %v5208
      %v5210 = vpop.f32.mrf.mxu0
      %v5211 = vadd.f32 %v5096, %v5210
      %5212 = vmatmul.bf16.gmra.mxu0 %v5083
      %v5213 = vpop.f32.mrf.mxu0
      %v5214 = vadd.f32 %v5096, %v5213
      %v5215 = vpop.f32.mrf.mxu0
      %v5216 = vadd.f32 %v5096, %v5215
      %5217 = vmatmul.bf16.gmra.mxu0 %v5085
      %v5218 = vpop.f32.mrf.mxu0
      %v5219 = vadd.f32 %v5096, %v5218
      %v5220 = vpop.f32.mrf.mxu0
      %v5221 = vadd.f32 %v5096, %v5220
      %5222 = vmatmul.bf16.gmra.mxu0 %v5087
      %v5223 = vpop.f32.mrf.mxu0
      %v5224 = vadd.f32 %v5096, %v5223
      %v5225 = vpop.f32.mrf.mxu0
      %v5226 = vadd.f32 %v5096, %v5225
      %5227 = vmatmul.bf16.gmra.mxu0 %v5089
      %v5228 = vpop.f32.mrf.mxu0
      %v5229 = vadd.f32 %v5096, %v5228
      %v5230 = vpop.f32.mrf.mxu0
      %v5231 = vadd.f32 %v5096, %v5230
      %5232 = vmatmul.bf16.gmra.mxu0 %v5091
      %v5233 = vpop.f32.mrf.mxu0
      %v5234 = vadd.f32 %v5096, %v5233
      %v5235 = vpop.f32.mrf.mxu0
      %v5236 = vadd.f32 %v5096, %v5235
      %5237 = vmatmul.bf16.gmra.mxu0 %v5093
      %v5238 = vpop.f32.mrf.mxu0
      %v5239 = vadd.f32 %v5096, %v5238
      %v5240 = vpop.f32.mrf.mxu0
      %v5241 = vadd.f32 %v5096, %v5240
      %5242 = vdwg.mxu0
      %5243 = vmatpush.bf16.msra.mxu0 %v5177
      %5244 = vmatpush.bf16.msra.mxu0 %v5176
      %5245 = vmatpush.bf16.msra.mxu0 %v5175
      %5246 = vmatpush.bf16.msra.mxu0 %v5174
      %5247 = vmatpush.bf16.msra.mxu0 %v5173
      %5248 = vmatpush.bf16.msra.mxu0 %v5172
      %5249 = vmatpush.bf16.msra.mxu0 %v5171
      %5250 = vmatpush.bf16.msra.mxu0 %v5170
      %5251 = vmatmul.bf16.gmra.mxu0 %v5080
      %v5252 = vpop.f32.mrf.mxu0
      %v5253 = vadd.f32 %v5204, %v5252
      %v5254 = vpop.f32.mrf.mxu0
      %v5255 = vadd.f32 %v5206, %v5254
      %5256 = vmatmul.bf16.gmra.mxu0 %v5082
      %v5257 = vpop.f32.mrf.mxu0
      %v5258 = vadd.f32 %v5209, %v5257
      %v5259 = vpop.f32.mrf.mxu0
      %v5260 = vadd.f32 %v5211, %v5259
      %5261 = vmatmul.bf16.gmra.mxu0 %v5084
      %v5262 = vpop.f32.mrf.mxu0
      %v5263 = vadd.f32 %v5214, %v5262
      %v5264 = vpop.f32.mrf.mxu0
      %v5265 = vadd.f32 %v5216, %v5264
      %5266 = vmatmul.bf16.gmra.mxu0 %v5086
      %v5267 = vpop.f32.mrf.mxu0
      %v5268 = vadd.f32 %v5219, %v5267
      %v5269 = vpop.f32.mrf.mxu0
      %v5270 = vadd.f32 %v5221, %v5269
      %5271 = vmatmul.bf16.gmra.mxu0 %v5088
      %v5272 = vpop.f32.mrf.mxu0
      %v5273 = vadd.f32 %v5224, %v5272
      %v5274 = vpop.f32.mrf.mxu0
      %v5275 = vadd.f32 %v5226, %v5274
      %5276 = vmatmul.bf16.gmra.mxu0 %v5090
      %v5277 = vpop.f32.mrf.mxu0
      %v5278 = vadd.f32 %v5229, %v5277
      %v5279 = vpop.f32.mrf.mxu0
      %v5280 = vadd.f32 %v5231, %v5279
      %5281 = vmatmul.bf16.gmra.mxu0 %v5092
      %v5282 = vpop.f32.mrf.mxu0
      %v5283 = vadd.f32 %v5234, %v5282
      %v5284 = vpop.f32.mrf.mxu0
      %v5285 = vadd.f32 %v5236, %v5284
      %5286 = vmatmul.bf16.gmra.mxu0 %v5094
      %v5287 = vpop.f32.mrf.mxu0
      %v5288 = vadd.f32 %v5239, %v5287
      %v5289 = vpop.f32.mrf.mxu0
      %v5290 = vadd.f32 %v5241, %v5289
      %5291 = vdwg.mxu0
      %v5292 = vadd.f32 %v4174, %v5253
      %v5293 = vadd.f32 %v4175, %v5255
      %v5294 = vadd.f32 %v4176, %v5258
      %v5295 = vadd.f32 %v4177, %v5260
      %v5296 = vadd.f32 %v4178, %v5263
      %v5297 = vadd.f32 %v4179, %v5265
      %v5298 = vadd.f32 %v4180, %v5268
      %v5299 = vadd.f32 %v4181, %v5270
      %v5300 = vadd.f32 %v4182, %v5273
      %v5301 = vadd.f32 %v4183, %v5275
      %v5302 = vadd.f32 %v4184, %v5278
      %v5303 = vadd.f32 %v4185, %v5280
      %v5304 = vadd.f32 %v4186, %v5283
      %v5305 = vadd.f32 %v4187, %v5285
      %v5306 = vadd.f32 %v4188, %v5288
      %v5307 = vadd.f32 %v4189, %v5290
      %s5308 = scalar_lea.vmem %s4, 1
      %v5309 = vld [vmem:[%s5308] sm:$0x1]
      %s5310 = scalar_lea.vmem %s5, 1
      %v5311 = vld [vmem:[%s5310] sm:$0x1]
      %5312 = vadd.xlane.f32.xlu0 %v5292
      %v5313 = vpop.xlane.xlu0 %5312
      %5314 = vadd.xlane.f32.xlu0 %v5293
      %v5315 = vpop.xlane.xlu0 %5314
      %5316 = vadd.xlane.f32.xlu0 %v5294
      %v5317 = vpop.xlane.xlu0 %5316
      %5318 = vadd.xlane.f32.xlu0 %v5295
      %v5319 = vpop.xlane.xlu0 %5318
      %5320 = vadd.xlane.f32.xlu0 %v5296
      %v5321 = vpop.xlane.xlu0 %5320
      %5322 = vadd.xlane.f32.xlu0 %v5297
      %v5323 = vpop.xlane.xlu0 %5322
      %5324 = vadd.xlane.f32.xlu0 %v5298
      %v5325 = vpop.xlane.xlu0 %5324
      %5326 = vadd.xlane.f32.xlu0 %v5299
      %v5327 = vpop.xlane.xlu0 %5326
      %5328 = vadd.xlane.f32.xlu0 %v5300
      %v5329 = vpop.xlane.xlu0 %5328
      %5330 = vadd.xlane.f32.xlu0 %v5301
      %v5331 = vpop.xlane.xlu0 %5330
      %5332 = vadd.xlane.f32.xlu0 %v5302
      %v5333 = vpop.xlane.xlu0 %5332
      %5334 = vadd.xlane.f32.xlu0 %v5303
      %v5335 = vpop.xlane.xlu0 %5334
      %5336 = vadd.xlane.f32.xlu0 %v5304
      %v5337 = vpop.xlane.xlu0 %5336
      %5338 = vadd.xlane.f32.xlu0 %v5305
      %v5339 = vpop.xlane.xlu0 %5338
      %5340 = vadd.xlane.f32.xlu0 %v5306
      %v5341 = vpop.xlane.xlu0 %5340
      %5342 = vadd.xlane.f32.xlu0 %v5307
      %v5343 = vpop.xlane.xlu0 %5342
      %v5344 = vmul.f32 %v5313, %v1675
      %v5345 = vmul.f32 %v5315, %v1675
      %v5346 = vmul.f32 %v5317, %v1675
      %v5347 = vmul.f32 %v5319, %v1675
      %v5348 = vmul.f32 %v5321, %v1675
      %v5349 = vmul.f32 %v5323, %v1675
      %v5350 = vmul.f32 %v5325, %v1675
      %v5351 = vmul.f32 %v5327, %v1675
      %v5352 = vmul.f32 %v5329, %v1675
      %v5353 = vmul.f32 %v5331, %v1675
      %v5354 = vmul.f32 %v5333, %v1675
      %v5355 = vmul.f32 %v5335, %v1675
      %v5356 = vmul.f32 %v5337, %v1675
      %v5357 = vmul.f32 %v5339, %v1675
      %v5358 = vmul.f32 %v5341, %v1675
      %v5359 = vmul.f32 %v5343, %v1675
      %v5360 = vsub.f32 %v5292, %v5344
      %v5361 = vsub.f32 %v5293, %v5345
      %v5362 = vsub.f32 %v5294, %v5346
      %v5363 = vsub.f32 %v5295, %v5347
      %v5364 = vsub.f32 %v5296, %v5348
      %v5365 = vsub.f32 %v5297, %v5349
      %v5366 = vsub.f32 %v5298, %v5350
      %v5367 = vsub.f32 %v5299, %v5351
      %v5368 = vsub.f32 %v5300, %v5352
      %v5369 = vsub.f32 %v5301, %v5353
      %v5370 = vsub.f32 %v5302, %v5354
      %v5371 = vsub.f32 %v5303, %v5355
      %v5372 = vsub.f32 %v5304, %v5356
      %v5373 = vsub.f32 %v5305, %v5357
      %v5374 = vsub.f32 %v5306, %v5358
      %v5375 = vsub.f32 %v5307, %v5359
      %v5376 = vmul.f32 %v5360, %v5360
      %v5377 = vmul.f32 %v5361, %v5361
      %v5378 = vmul.f32 %v5362, %v5362
      %v5379 = vmul.f32 %v5363, %v5363
      %v5380 = vmul.f32 %v5364, %v5364
      %v5381 = vmul.f32 %v5365, %v5365
      %v5382 = vmul.f32 %v5366, %v5366
      %v5383 = vmul.f32 %v5367, %v5367
      %v5384 = vmul.f32 %v5368, %v5368
      %v5385 = vmul.f32 %v5369, %v5369
      %v5386 = vmul.f32 %v5370, %v5370
      %v5387 = vmul.f32 %v5371, %v5371
      %v5388 = vmul.f32 %v5372, %v5372
      %v5389 = vmul.f32 %v5373, %v5373
      %v5390 = vmul.f32 %v5374, %v5374
      %v5391 = vmul.f32 %v5375, %v5375
      %5392 = vadd.xlane.f32.xlu0 %v5376
      %v5393 = vpop.xlane.xlu0 %5392
      %5394 = vadd.xlane.f32.xlu0 %v5377
      %v5395 = vpop.xlane.xlu0 %5394
      %5396 = vadd.xlane.f32.xlu0 %v5378
      %v5397 = vpop.xlane.xlu0 %5396
      %5398 = vadd.xlane.f32.xlu0 %v5379
      %v5399 = vpop.xlane.xlu0 %5398
      %5400 = vadd.xlane.f32.xlu0 %v5380
      %v5401 = vpop.xlane.xlu0 %5400
      %5402 = vadd.xlane.f32.xlu0 %v5381
      %v5403 = vpop.xlane.xlu0 %5402
      %5404 = vadd.xlane.f32.xlu0 %v5382
      %v5405 = vpop.xlane.xlu0 %5404
      %5406 = vadd.xlane.f32.xlu0 %v5383
      %v5407 = vpop.xlane.xlu0 %5406
      %5408 = vadd.xlane.f32.xlu0 %v5384
      %v5409 = vpop.xlane.xlu0 %5408
      %5410 = vadd.xlane.f32.xlu0 %v5385
      %v5411 = vpop.xlane.xlu0 %5410
      %5412 = vadd.xlane.f32.xlu0 %v5386
      %v5413 = vpop.xlane.xlu0 %5412
      %5414 = vadd.xlane.f32.xlu0 %v5387
      %v5415 = vpop.xlane.xlu0 %5414
      %5416 = vadd.xlane.f32.xlu0 %v5388
      %v5417 = vpop.xlane.xlu0 %5416
      %5418 = vadd.xlane.f32.xlu0 %v5389
      %v5419 = vpop.xlane.xlu0 %5418
      %5420 = vadd.xlane.f32.xlu0 %v5390
      %v5421 = vpop.xlane.xlu0 %5420
      %5422 = vadd.xlane.f32.xlu0 %v5391
      %v5423 = vpop.xlane.xlu0 %5422
      %v5424 = vmul.f32 %v5393, %v1675
      %v5425 = vmul.f32 %v5395, %v1675
      %v5426 = vmul.f32 %v5397, %v1675
      %v5427 = vmul.f32 %v5399, %v1675
      %v5428 = vmul.f32 %v5401, %v1675
      %v5429 = vmul.f32 %v5403, %v1675
      %v5430 = vmul.f32 %v5405, %v1675
      %v5431 = vmul.f32 %v5407, %v1675
      %v5432 = vmul.f32 %v5409, %v1675
      %v5433 = vmul.f32 %v5411, %v1675
      %v5434 = vmul.f32 %v5413, %v1675
      %v5435 = vmul.f32 %v5415, %v1675
      %v5436 = vmul.f32 %v5417, %v1675
      %v5437 = vmul.f32 %v5419, %v1675
      %v5438 = vmul.f32 %v5421, %v1675
      %v5439 = vmul.f32 %v5423, %v1675
      %v5440 = vadd.f32 %v5424, 1e-06
      %v5441 = vadd.f32 %v5425, 1e-06
      %v5442 = vadd.f32 %v5426, 1e-06
      %v5443 = vadd.f32 %v5427, 1e-06
      %v5444 = vadd.f32 %v5428, 1e-06
      %v5445 = vadd.f32 %v5429, 1e-06
      %v5446 = vadd.f32 %v5430, 1e-06
      %v5447 = vadd.f32 %v5431, 1e-06
      %v5448 = vadd.f32 %v5432, 1e-06
      %v5449 = vadd.f32 %v5433, 1e-06
      %v5450 = vadd.f32 %v5434, 1e-06
      %v5451 = vadd.f32 %v5435, 1e-06
      %v5452 = vadd.f32 %v5436, 1e-06
      %v5453 = vadd.f32 %v5437, 1e-06
      %v5454 = vadd.f32 %v5438, 1e-06
      %v5455 = vadd.f32 %v5439, 1e-06
      %v5456 = vrsqrt.pop %v5440
      %v5457 = vmul.f32 %v5456, %v5440
      %v5458 = vmul.f32 %v5457, %v5456
      %v5459 = vmul.f32 0.5, %v5458
      %v5460 = vsub.f32 1.5, %v5459
      %v5461 = vmul.f32 %v5456, %v5460
      %vm5462 = vweird.f32 %v5440
      %vm5463 = vweird.f32 %v5456
      %vm5464 = vmor %vm5462, %vm5463
      %v5465 = vsel %vm5464, %v5456, %v5461
      %v5466 = vrsqrt.pop %v5441
      %v5467 = vmul.f32 %v5466, %v5441
      %v5468 = vmul.f32 %v5467, %v5466
      %v5469 = vmul.f32 0.5, %v5468
      %v5470 = vsub.f32 1.5, %v5469
      %v5471 = vmul.f32 %v5466, %v5470
      %vm5472 = vweird.f32 %v5441
      %vm5473 = vweird.f32 %v5466
      %vm5474 = vmor %vm5472, %vm5473
      %v5475 = vsel %vm5474, %v5466, %v5471
      %v5476 = vrsqrt.pop %v5442
      %v5477 = vmul.f32 %v5476, %v5442
      %v5478 = vmul.f32 %v5477, %v5476
      %v5479 = vmul.f32 0.5, %v5478
      %v5480 = vsub.f32 1.5, %v5479
      %v5481 = vmul.f32 %v5476, %v5480
      %vm5482 = vweird.f32 %v5442
      %vm5483 = vweird.f32 %v5476
      %vm5484 = vmor %vm5482, %vm5483
      %v5485 = vsel %vm5484, %v5476, %v5481
      %v5486 = vrsqrt.pop %v5443
      %v5487 = vmul.f32 %v5486, %v5443
      %v5488 = vmul.f32 %v5487, %v5486
      %v5489 = vmul.f32 0.5, %v5488
      %v5490 = vsub.f32 1.5, %v5489
      %v5491 = vmul.f32 %v5486, %v5490
      %vm5492 = vweird.f32 %v5443
      %vm5493 = vweird.f32 %v5486
      %vm5494 = vmor %vm5492, %vm5493
      %v5495 = vsel %vm5494, %v5486, %v5491
      %v5496 = vrsqrt.pop %v5444
      %v5497 = vmul.f32 %v5496, %v5444
      %v5498 = vmul.f32 %v5497, %v5496
      %v5499 = vmul.f32 0.5, %v5498
      %v5500 = vsub.f32 1.5, %v5499
      %v5501 = vmul.f32 %v5496, %v5500
      %vm5502 = vweird.f32 %v5444
      %vm5503 = vweird.f32 %v5496
      %vm5504 = vmor %vm5502, %vm5503
      %v5505 = vsel %vm5504, %v5496, %v5501
      %v5506 = vrsqrt.pop %v5445
      %v5507 = vmul.f32 %v5506, %v5445
      %v5508 = vmul.f32 %v5507, %v5506
      %v5509 = vmul.f32 0.5, %v5508
      %v5510 = vsub.f32 1.5, %v5509
      %v5511 = vmul.f32 %v5506, %v5510
      %vm5512 = vweird.f32 %v5445
      %vm5513 = vweird.f32 %v5506
      %vm5514 = vmor %vm5512, %vm5513
      %v5515 = vsel %vm5514, %v5506, %v5511
      %v5516 = vrsqrt.pop %v5446
      %v5517 = vmul.f32 %v5516, %v5446
      %v5518 = vmul.f32 %v5517, %v5516
      %v5519 = vmul.f32 0.5, %v5518
      %v5520 = vsub.f32 1.5, %v5519
      %v5521 = vmul.f32 %v5516, %v5520
      %vm5522 = vweird.f32 %v5446
      %vm5523 = vweird.f32 %v5516
      %vm5524 = vmor %vm5522, %vm5523
      %v5525 = vsel %vm5524, %v5516, %v5521
      %v5526 = vrsqrt.pop %v5447
      %v5527 = vmul.f32 %v5526, %v5447
      %v5528 = vmul.f32 %v5527, %v5526
      %v5529 = vmul.f32 0.5, %v5528
      %v5530 = vsub.f32 1.5, %v5529
      %v5531 = vmul.f32 %v5526, %v5530
      %vm5532 = vweird.f32 %v5447
      %vm5533 = vweird.f32 %v5526
      %vm5534 = vmor %vm5532, %vm5533
      %v5535 = vsel %vm5534, %v5526, %v5531
      %v5536 = vrsqrt.pop %v5448
      %v5537 = vmul.f32 %v5536, %v5448
      %v5538 = vmul.f32 %v5537, %v5536
      %v5539 = vmul.f32 0.5, %v5538
      %v5540 = vsub.f32 1.5, %v5539
      %v5541 = vmul.f32 %v5536, %v5540
      %vm5542 = vweird.f32 %v5448
      %vm5543 = vweird.f32 %v5536
      %vm5544 = vmor %vm5542, %vm5543
      %v5545 = vsel %vm5544, %v5536, %v5541
      %v5546 = vrsqrt.pop %v5449
      %v5547 = vmul.f32 %v5546, %v5449
      %v5548 = vmul.f32 %v5547, %v5546
      %v5549 = vmul.f32 0.5, %v5548
      %v5550 = vsub.f32 1.5, %v5549
      %v5551 = vmul.f32 %v5546, %v5550
      %vm5552 = vweird.f32 %v5449
      %vm5553 = vweird.f32 %v5546
      %vm5554 = vmor %vm5552, %vm5553
      %v5555 = vsel %vm5554, %v5546, %v5551
      %v5556 = vrsqrt.pop %v5450
      %v5557 = vmul.f32 %v5556, %v5450
      %v5558 = vmul.f32 %v5557, %v5556
      %v5559 = vmul.f32 0.5, %v5558
      %v5560 = vsub.f32 1.5, %v5559
      %v5561 = vmul.f32 %v5556, %v5560
      %vm5562 = vweird.f32 %v5450
      %vm5563 = vweird.f32 %v5556
      %vm5564 = vmor %vm5562, %vm5563
      %v5565 = vsel %vm5564, %v5556, %v5561
      %v5566 = vrsqrt.pop %v5451
      %v5567 = vmul.f32 %v5566, %v5451
      %v5568 = vmul.f32 %v5567, %v5566
      %v5569 = vmul.f32 0.5, %v5568
      %v5570 = vsub.f32 1.5, %v5569
      %v5571 = vmul.f32 %v5566, %v5570
      %vm5572 = vweird.f32 %v5451
      %vm5573 = vweird.f32 %v5566
      %vm5574 = vmor %vm5572, %vm5573
      %v5575 = vsel %vm5574, %v5566, %v5571
      %v5576 = vrsqrt.pop %v5452
      %v5577 = vmul.f32 %v5576, %v5452
      %v5578 = vmul.f32 %v5577, %v5576
      %v5579 = vmul.f32 0.5, %v5578
      %v5580 = vsub.f32 1.5, %v5579
      %v5581 = vmul.f32 %v5576, %v5580
      %vm5582 = vweird.f32 %v5452
      %vm5583 = vweird.f32 %v5576
      %vm5584 = vmor %vm5582, %vm5583
      %v5585 = vsel %vm5584, %v5576, %v5581
      %v5586 = vrsqrt.pop %v5453
      %v5587 = vmul.f32 %v5586, %v5453
      %v5588 = vmul.f32 %v5587, %v5586
      %v5589 = vmul.f32 0.5, %v5588
      %v5590 = vsub.f32 1.5, %v5589
      %v5591 = vmul.f32 %v5586, %v5590
      %vm5592 = vweird.f32 %v5453
      %vm5593 = vweird.f32 %v5586
      %vm5594 = vmor %vm5592, %vm5593
      %v5595 = vsel %vm5594, %v5586, %v5591
      %v5596 = vrsqrt.pop %v5454
      %v5597 = vmul.f32 %v5596, %v5454
      %v5598 = vmul.f32 %v5597, %v5596
      %v5599 = vmul.f32 0.5, %v5598
      %v5600 = vsub.f32 1.5, %v5599
      %v5601 = vmul.f32 %v5596, %v5600
      %vm5602 = vweird.f32 %v5454
      %vm5603 = vweird.f32 %v5596
      %vm5604 = vmor %vm5602, %vm5603
      %v5605 = vsel %vm5604, %v5596, %v5601
      %v5606 = vrsqrt.pop %v5455
      %v5607 = vmul.f32 %v5606, %v5455
      %v5608 = vmul.f32 %v5607, %v5606
      %v5609 = vmul.f32 0.5, %v5608
      %v5610 = vsub.f32 1.5, %v5609
      %v5611 = vmul.f32 %v5606, %v5610
      %vm5612 = vweird.f32 %v5455
      %vm5613 = vweird.f32 %v5606
      %vm5614 = vmor %vm5612, %vm5613
      %v5615 = vsel %vm5614, %v5606, %v5611
      %v5616 = vmul.f32 %v5360, %v5465
      %v5617 = vmul.f32 %v5361, %v5475
      %v5618 = vmul.f32 %v5362, %v5485
      %v5619 = vmul.f32 %v5363, %v5495
      %v5620 = vmul.f32 %v5364, %v5505
      %v5621 = vmul.f32 %v5365, %v5515
      %v5622 = vmul.f32 %v5366, %v5525
      %v5623 = vmul.f32 %v5367, %v5535
      %v5624 = vmul.f32 %v5368, %v5545
      %v5625 = vmul.f32 %v5369, %v5555
      %v5626 = vmul.f32 %v5370, %v5565
      %v5627 = vmul.f32 %v5371, %v5575
      %v5628 = vmul.f32 %v5372, %v5585
      %v5629 = vmul.f32 %v5373, %v5595
      %v5630 = vmul.f32 %v5374, %v5605
      %v5631 = vmul.f32 %v5375, %v5615
      %v5633 = vperm.slane %v5309, 0
      %v5635 = vmul.f32 %v5616, %v5633
      %v5636 = vmul.f32 %v5617, %v5633
      %v5637 = vmul.f32 %v5618, %v5633
      %v5638 = vmul.f32 %v5619, %v5633
      %v5639 = vmul.f32 %v5620, %v5633
      %v5640 = vmul.f32 %v5621, %v5633
      %v5641 = vmul.f32 %v5622, %v5633
      %v5642 = vmul.f32 %v5623, %v5633
      %v5643 = vmul.f32 %v5624, %v5633
      %v5644 = vmul.f32 %v5625, %v5633
      %v5645 = vmul.f32 %v5626, %v5633
      %v5646 = vmul.f32 %v5627, %v5633
      %v5647 = vmul.f32 %v5628, %v5633
      %v5648 = vmul.f32 %v5629, %v5633
      %v5649 = vmul.f32 %v5630, %v5633
      %v5650 = vmul.f32 %v5631, %v5633
      %v5652 = vperm.slane %v5311, 0
      %v5654 = vadd.f32 %v5635, %v5652
      %v5655 = vadd.f32 %v5636, %v5652
      %v5656 = vadd.f32 %v5637, %v5652
      %v5657 = vadd.f32 %v5638, %v5652
      %v5658 = vadd.f32 %v5639, %v5652
      %v5659 = vadd.f32 %v5640, %v5652
      %v5660 = vadd.f32 %v5641, %v5652
      %v5661 = vadd.f32 %v5642, %v5652
      %v5662 = vadd.f32 %v5643, %v5652
      %v5663 = vadd.f32 %v5644, %v5652
      %v5664 = vadd.f32 %v5645, %v5652
      %v5665 = vadd.f32 %v5646, %v5652
      %v5666 = vadd.f32 %v5647, %v5652
      %v5667 = vadd.f32 %v5648, %v5652
      %v5668 = vadd.f32 %v5649, %v5652
      %v5669 = vadd.f32 %v5650, %v5652
      %s5670 = scalar_lea.vmem %s6, 192
      %v5671 = vld [vmem:[%s5670] sm:$0xff]
      %v5672 = vld [vmem:[%s5670 + $0x8] sm:$0xf]
      %v5673 = vld [vmem:[%s5670 + $0xc] sm:$0xff]
      %v5674 = vld [vmem:[%s5670 + $0x14] sm:$0xf]
      %v5675 = vld [vmem:[%s5670 + $0x18] sm:$0xff]
      %v5676 = vld [vmem:[%s5670 + $0x20] sm:$0xf]
      %v5677 = vld [vmem:[%s5670 + $0x24] sm:$0xff]
      %v5678 = vld [vmem:[%s5670 + $0x2c] sm:$0xf]
      %v5679 = vld [vmem:[%s5670 + $0x30] sm:$0xff]
      %v5680 = vld [vmem:[%s5670 + $0x38] sm:$0xf]
      %v5681 = vld [vmem:[%s5670 + $0x3c] sm:$0xff]
      %v5682 = vld [vmem:[%s5670 + $0x44] sm:$0xf]
      %v5683 = vld [vmem:[%s5670 + $0x48] sm:$0xff]
      %v5684 = vld [vmem:[%s5670 + $0x50] sm:$0xf]
      %v5685 = vld [vmem:[%s5670 + $0x54] sm:$0xff]
      %v5686 = vld [vmem:[%s5670 + $0x5c] sm:$0xf]
      %v5687 = vld [vmem:[%s5670 + $0x60] sm:$0xff]
      %v5688 = vld [vmem:[%s5670 + $0x68] sm:$0xf]
      %v5689 = vld [vmem:[%s5670 + $0x6c] sm:$0xff]
      %v5690 = vld [vmem:[%s5670 + $0x74] sm:$0xf]
      %v5691 = vld [vmem:[%s5670 + $0x78] sm:$0xff]
      %v5692 = vld [vmem:[%s5670 + $0x80] sm:$0xf]
      %v5693 = vld [vmem:[%s5670 + $0x84] sm:$0xff]
      %v5694 = vld [vmem:[%s5670 + $0x8c] sm:$0xf]
      %v5695 = vld [vmem:[%s5670 + $0x90] sm:$0xff]
      %v5696 = vld [vmem:[%s5670 + $0x98] sm:$0xf]
      %v5697 = vld [vmem:[%s5670 + $0x9c] sm:$0xff]
      %v5698 = vld [vmem:[%s5670 + $0xa4] sm:$0xf]
      %v5699 = vld [vmem:[%s5670 + $0xa8] sm:$0xff]
      %v5700 = vld [vmem:[%s5670 + $0xb0] sm:$0xf]
      %v5701 = vld [vmem:[%s5670 + $0xb4] sm:$0xff]
      %v5702 = vld [vmem:[%s5670 + $0xbc] sm:$0xf]
      %s5703 = scalar_lea.vmem %s7, 3
      %v5704 = vld [vmem:[%s5703] sm:$0x7]
      %v5705 = vpack.c.bf16 %v5655, %v5654
      %v5706 = vpack.c.bf16 %v5657, %v5656
      %v5707 = vpack.c.bf16 %v5659, %v5658
      %v5708 = vpack.c.bf16 %v5661, %v5660
      %v5709 = vpack.c.bf16 %v5663, %v5662
      %v5710 = vpack.c.bf16 %v5665, %v5664
      %v5711 = vpack.c.bf16 %v5667, %v5666
      %v5712 = vpack.c.bf16 %v5669, %v5668
      %v5714 = vperm.slane %v5704, 0
      %v5715 = vperm.slane %v5704, 1
      %v5716 = vperm.slane %v5704, 2
      %v5752 = vunpack.c.l.b16 %v5671
      %v5753 = vunpack.c.h.b16 %v5671
      %v5754 = vunpack.c.l.b16 %v5672
      %v5755 = vunpack.c.l.b16 %v5673
      %v5756 = vunpack.c.h.b16 %v5673
      %v5757 = vunpack.c.l.b16 %v5674
      %v5758 = vunpack.c.l.b16 %v5675
      %v5759 = vunpack.c.h.b16 %v5675
      %v5760 = vunpack.c.l.b16 %v5676
      %v5761 = vunpack.c.l.b16 %v5677
      %v5762 = vunpack.c.h.b16 %v5677
      %v5763 = vunpack.c.l.b16 %v5678
      %v5764 = vunpack.c.l.b16 %v5679
      %v5765 = vunpack.c.h.b16 %v5679
      %v5766 = vunpack.c.l.b16 %v5680
      %v5767 = vunpack.c.l.b16 %v5681
      %v5768 = vunpack.c.h.b16 %v5681
      %v5769 = vunpack.c.l.b16 %v5682
      %v5770 = vunpack.c.l.b16 %v5683
      %v5771 = vunpack.c.h.b16 %v5683
      %v5772 = vunpack.c.l.b16 %v5684
      %v5773 = vunpack.c.l.b16 %v5685
      %v5774 = vunpack.c.h.b16 %v5685
      %v5775 = vunpack.c.l.b16 %v5686
      %v5776 = vunpack.c.l.b16 %v5687
      %v5777 = vunpack.c.h.b16 %v5687
      %v5778 = vunpack.c.l.b16 %v5688
      %v5779 = vunpack.c.l.b16 %v5689
      %v5780 = vunpack.c.h.b16 %v5689
      %v5781 = vunpack.c.l.b16 %v5690
      %v5782 = vunpack.c.l.b16 %v5691
      %v5783 = vunpack.c.h.b16 %v5691
      %v5784 = vunpack.c.l.b16 %v5692
      %v5785 = vunpack.c.l.b16 %v5693
      %v5786 = vunpack.c.h.b16 %v5693
      %v5787 = vunpack.c.l.b16 %v5694
      %v5788 = vunpack.c.l.b16 %v5695
      %v5789 = vunpack.c.h.b16 %v5695
      %v5790 = vunpack.c.l.b16 %v5696
      %v5791 = vunpack.c.l.b16 %v5697
      %v5792 = vunpack.c.h.b16 %v5697
      %v5793 = vunpack.c.l.b16 %v5698
      %v5794 = vunpack.c.l.b16 %v5699
      %v5795 = vunpack.c.h.b16 %v5699
      %v5796 = vunpack.c.l.b16 %v5700
      %v5797 = vunpack.c.l.b16 %v5701
      %v5798 = vunpack.c.h.b16 %v5701
      %v5799 = vunpack.c.l.b16 %v5702
      %v5800 = vpack.c.b16 %v5755, %v5752
      %v5801 = vpack.c.b16 %v5756, %v5753
      %v5802 = vpack.c.b16 %v5757, %v5754
      %v5803 = vpack.c.b16 %v5761, %v5758
      %v5804 = vpack.c.b16 %v5762, %v5759
      %v5805 = vpack.c.b16 %v5763, %v5760
      %v5806 = vpack.c.b16 %v5767, %v5764
      %v5807 = vpack.c.b16 %v5768, %v5765
      %v5808 = vpack.c.b16 %v5769, %v5766
      %v5809 = vpack.c.b16 %v5773, %v5770
      %v5810 = vpack.c.b16 %v5774, %v5771
      %v5811 = vpack.c.b16 %v5775, %v5772
      %v5812 = vpack.c.b16 %v5779, %v5776
      %v5813 = vpack.c.b16 %v5780, %v5777
      %v5814 = vpack.c.b16 %v5781, %v5778
      %v5815 = vpack.c.b16 %v5785, %v5782
      %v5816 = vpack.c.b16 %v5786, %v5783
      %v5817 = vpack.c.b16 %v5787, %v5784
      %v5818 = vpack.c.b16 %v5791, %v5788
      %v5819 = vpack.c.b16 %v5792, %v5789
      %v5820 = vpack.c.b16 %v5793, %v5790
      %v5821 = vpack.c.b16 %v5797, %v5794
      %v5822 = vpack.c.b16 %v5798, %v5795
      %v5823 = vpack.c.b16 %v5799, %v5796
      %5848 = vmatpush.bf16.msra.mxu0 %v5821
      %5849 = vmatpush.bf16.msra.mxu0 %v5818
      %5850 = vmatpush.bf16.msra.mxu0 %v5815
      %5851 = vmatpush.bf16.msra.mxu0 %v5812
      %5852 = vmatpush.bf16.msra.mxu0 %v5809
      %5853 = vmatpush.bf16.msra.mxu0 %v5806
      %5854 = vmatpush.bf16.msra.mxu0 %v5803
      %5855 = vmatpush.bf16.msra.mxu0 %v5800
      %5856 = vmatmul.bf16.gmra.mxu0 %v5705
      %v5857 = vpop.f32.mrf.mxu0
      %v5858 = vadd.f32 %v5714, %v5857
      %v5859 = vpop.f32.mrf.mxu0
      %v5860 = vadd.f32 %v5714, %v5859
      %5861 = vmatmul.bf16.gmra.mxu0 %v5706
      %v5862 = vpop.f32.mrf.mxu0
      %v5863 = vadd.f32 %v5714, %v5862
      %v5864 = vpop.f32.mrf.mxu0
      %v5865 = vadd.f32 %v5714, %v5864
      %5866 = vmatmul.bf16.gmra.mxu0 %v5707
      %v5867 = vpop.f32.mrf.mxu0
      %v5868 = vadd.f32 %v5714, %v5867
      %v5869 = vpop.f32.mrf.mxu0
      %v5870 = vadd.f32 %v5714, %v5869
      %5871 = vmatmul.bf16.gmra.mxu0 %v5708
      %v5872 = vpop.f32.mrf.mxu0
      %v5873 = vadd.f32 %v5714, %v5872
      %v5874 = vpop.f32.mrf.mxu0
      %v5875 = vadd.f32 %v5714, %v5874
      %5876 = vmatmul.bf16.gmra.mxu0 %v5709
      %v5877 = vpop.f32.mrf.mxu0
      %v5878 = vadd.f32 %v5714, %v5877
      %v5879 = vpop.f32.mrf.mxu0
      %v5880 = vadd.f32 %v5714, %v5879
      %5881 = vmatmul.bf16.gmra.mxu0 %v5710
      %v5882 = vpop.f32.mrf.mxu0
      %v5883 = vadd.f32 %v5714, %v5882
      %v5884 = vpop.f32.mrf.mxu0
      %v5885 = vadd.f32 %v5714, %v5884
      %5886 = vmatmul.bf16.gmra.mxu0 %v5711
      %v5887 = vpop.f32.mrf.mxu0
      %v5888 = vadd.f32 %v5714, %v5887
      %v5889 = vpop.f32.mrf.mxu0
      %v5890 = vadd.f32 %v5714, %v5889
      %5891 = vmatmul.bf16.gmra.mxu0 %v5712
      %v5892 = vpop.f32.mrf.mxu0
      %v5893 = vadd.f32 %v5714, %v5892
      %v5894 = vpop.f32.mrf.mxu0
      %v5895 = vadd.f32 %v5714, %v5894
      %5896 = vdwg.mxu0
      %5897 = vmatpush.bf16.msra.mxu0 %v5822
      %5898 = vmatpush.bf16.msra.mxu0 %v5819
      %5899 = vmatpush.bf16.msra.mxu0 %v5816
      %5900 = vmatpush.bf16.msra.mxu0 %v5813
      %5901 = vmatpush.bf16.msra.mxu0 %v5810
      %5902 = vmatpush.bf16.msra.mxu0 %v5807
      %5903 = vmatpush.bf16.msra.mxu0 %v5804
      %5904 = vmatpush.bf16.msra.mxu0 %v5801
      %5905 = vmatmul.bf16.gmra.mxu0 %v5705
      %v5906 = vpop.f32.mrf.mxu0
      %v5907 = vadd.f32 %v5715, %v5906
      %v5908 = vpop.f32.mrf.mxu0
      %v5909 = vadd.f32 %v5715, %v5908
      %5910 = vmatmul.bf16.gmra.mxu0 %v5706
      %v5911 = vpop.f32.mrf.mxu0
      %v5912 = vadd.f32 %v5715, %v5911
      %v5913 = vpop.f32.mrf.mxu0
      %v5914 = vadd.f32 %v5715, %v5913
      %5915 = vmatmul.bf16.gmra.mxu0 %v5707
      %v5916 = vpop.f32.mrf.mxu0
      %v5917 = vadd.f32 %v5715, %v5916
      %v5918 = vpop.f32.mrf.mxu0
      %v5919 = vadd.f32 %v5715, %v5918
      %5920 = vmatmul.bf16.gmra.mxu0 %v5708
      %v5921 = vpop.f32.mrf.mxu0
      %v5922 = vadd.f32 %v5715, %v5921
      %v5923 = vpop.f32.mrf.mxu0
      %v5924 = vadd.f32 %v5715, %v5923
      %5925 = vmatmul.bf16.gmra.mxu0 %v5709
      %v5926 = vpop.f32.mrf.mxu0
      %v5927 = vadd.f32 %v5715, %v5926
      %v5928 = vpop.f32.mrf.mxu0
      %v5929 = vadd.f32 %v5715, %v5928
      %5930 = vmatmul.bf16.gmra.mxu0 %v5710
      %v5931 = vpop.f32.mrf.mxu0
      %v5932 = vadd.f32 %v5715, %v5931
      %v5933 = vpop.f32.mrf.mxu0
      %v5934 = vadd.f32 %v5715, %v5933
      %5935 = vmatmul.bf16.gmra.mxu0 %v5711
      %v5936 = vpop.f32.mrf.mxu0
      %v5937 = vadd.f32 %v5715, %v5936
      %v5938 = vpop.f32.mrf.mxu0
      %v5939 = vadd.f32 %v5715, %v5938
      %5940 = vmatmul.bf16.gmra.mxu0 %v5712
      %v5941 = vpop.f32.mrf.mxu0
      %v5942 = vadd.f32 %v5715, %v5941
      %v5943 = vpop.f32.mrf.mxu0
      %v5944 = vadd.f32 %v5715, %v5943
      %5945 = vdwg.mxu0
      %5946 = vmatpush.bf16.msra.mxu0 %v5823
      %5947 = vmatpush.bf16.msra.mxu0 %v5820
      %5948 = vmatpush.bf16.msra.mxu0 %v5817
      %5949 = vmatpush.bf16.msra.mxu0 %v5814
      %5950 = vmatpush.bf16.msra.mxu0 %v5811
      %5951 = vmatpush.bf16.msra.mxu0 %v5808
      %5952 = vmatpush.bf16.msra.mxu0 %v5805
      %5953 = vmatpush.bf16.msra.mxu0 %v5802
      %5954 = vmatmul.bf16.gmra.mxu0 %v5705
      %v5955 = vpop.f32.mrf.mxu0
      %v5956 = vadd.f32 %v5716, %v5955
      %v5957 = vpop.f32.mrf.mxu0
      %v5958 = vadd.f32 %v5716, %v5957
      %5959 = vmatmul.bf16.gmra.mxu0 %v5706
      %v5960 = vpop.f32.mrf.mxu0
      %v5961 = vadd.f32 %v5716, %v5960
      %v5962 = vpop.f32.mrf.mxu0
      %v5963 = vadd.f32 %v5716, %v5962
      %5964 = vmatmul.bf16.gmra.mxu0 %v5707
      %v5965 = vpop.f32.mrf.mxu0
      %v5966 = vadd.f32 %v5716, %v5965
      %v5967 = vpop.f32.mrf.mxu0
      %v5968 = vadd.f32 %v5716, %v5967
      %5969 = vmatmul.bf16.gmra.mxu0 %v5708
      %v5970 = vpop.f32.mrf.mxu0
      %v5971 = vadd.f32 %v5716, %v5970
      %v5972 = vpop.f32.mrf.mxu0
      %v5973 = vadd.f32 %v5716, %v5972
      %5974 = vmatmul.bf16.gmra.mxu0 %v5709
      %v5975 = vpop.f32.mrf.mxu0
      %v5976 = vadd.f32 %v5716, %v5975
      %v5977 = vpop.f32.mrf.mxu0
      %v5978 = vadd.f32 %v5716, %v5977
      %5979 = vmatmul.bf16.gmra.mxu0 %v5710
      %v5980 = vpop.f32.mrf.mxu0
      %v5981 = vadd.f32 %v5716, %v5980
      %v5982 = vpop.f32.mrf.mxu0
      %v5983 = vadd.f32 %v5716, %v5982
      %5984 = vmatmul.bf16.gmra.mxu0 %v5711
      %v5985 = vpop.f32.mrf.mxu0
      %v5986 = vadd.f32 %v5716, %v5985
      %v5987 = vpop.f32.mrf.mxu0
      %v5988 = vadd.f32 %v5716, %v5987
      %5989 = vmatmul.bf16.gmra.mxu0 %v5712
      %v5990 = vpop.f32.mrf.mxu0
      %v5991 = vadd.f32 %v5716, %v5990
      %v5992 = vpop.f32.mrf.mxu0
      %v5993 = vadd.f32 %v5716, %v5992
      %5994 = vdwg.mxu0
      %v5995 = vpack.c.bf16 %v5860, %v5858
      %v5996 = vpack.c.bf16 %v5865, %v5863
      %v5997 = vpack.c.bf16 %v5870, %v5868
      %v5998 = vpack.c.bf16 %v5875, %v5873
      %v5999 = vpack.c.bf16 %v5880, %v5878
      %v6000 = vpack.c.bf16 %v5885, %v5883
      %v6001 = vpack.c.bf16 %v5890, %v5888
      %v6002 = vpack.c.bf16 %v5895, %v5893
      %v6003 = vpack.c.bf16 %v5909, %v5907
      %v6004 = vpack.c.bf16 %v5914, %v5912
      %v6005 = vpack.c.bf16 %v5919, %v5917
      %v6006 = vpack.c.bf16 %v5924, %v5922
      %v6007 = vpack.c.bf16 %v5929, %v5927
      %v6008 = vpack.c.bf16 %v5934, %v5932
      %v6009 = vpack.c.bf16 %v5939, %v5937
      %v6010 = vpack.c.bf16 %v5944, %v5942
      %v6012 = vsel %vm2341, %v5995, 0
      %v6015 = vsel %vm2341, %v5996, 0
      %v6018 = vsel %vm2341, %v5997, 0
      %v6021 = vsel %vm2341, %v5998, 0
      %v6024 = vsel %vm2341, %v5999, 0
      %v6027 = vsel %vm2341, %v6000, 0
      %v6030 = vsel %vm2341, %v6001, 0
      %v6033 = vsel %vm2341, %v6002, 0
      %v6036 = vsel %vm2341, %v6003, 0
      %v6039 = vsel %vm2341, %v6004, 0
      %v6042 = vsel %vm2341, %v6005, 0
      %v6045 = vsel %vm2341, %v6006, 0
      %v6048 = vsel %vm2341, %v6007, 0
      %v6051 = vsel %vm2341, %v6008, 0
      %v6054 = vsel %vm2341, %v6009, 0
      %v6057 = vsel %vm2341, %v6010, 0
      %6059 = vmatpush.bf16.xpose.msra.mxu0 %v6057
      %6060 = vmatpush.bf16.xpose.msra.mxu0 %v6054
      %6061 = vmatpush.bf16.xpose.msra.mxu0 %v6051
      %6062 = vmatpush.bf16.xpose.msra.mxu0 %v6048
      %6063 = vmatpush.bf16.xpose.msra.mxu0 %v6045
      %6064 = vmatpush.bf16.xpose.msra.mxu0 %v6042
      %6065 = vmatpush.bf16.xpose.msra.mxu0 %v6039
      %6066 = vmatpush.bf16.xpose.msra.mxu0 %v6036
      %6067 = vmatmul.bf16.gmra.mxu0 %v6012
      %v6068 = vpop.f32.mrf.mxu0
      %v6069 = vadd.f32 %v1619, %v6068
      %v6070 = vpop.f32.mrf.mxu0
      %v6071 = vadd.f32 %v1620, %v6070
      %6072 = vmatmul.bf16.gmra.mxu0 %v6015
      %v6073 = vpop.f32.mrf.mxu0
      %v6074 = vadd.f32 %v1621, %v6073
      %v6075 = vpop.f32.mrf.mxu0
      %v6076 = vadd.f32 %v1622, %v6075
      %6077 = vmatmul.bf16.gmra.mxu0 %v6018
      %v6078 = vpop.f32.mrf.mxu0
      %v6079 = vadd.f32 %v1623, %v6078
      %v6080 = vpop.f32.mrf.mxu0
      %v6081 = vadd.f32 %v1624, %v6080
      %6082 = vmatmul.bf16.gmra.mxu0 %v6021
      %v6083 = vpop.f32.mrf.mxu0
      %v6084 = vadd.f32 %v1625, %v6083
      %v6085 = vpop.f32.mrf.mxu0
      %v6086 = vadd.f32 %v1626, %v6085
      %6087 = vmatmul.bf16.gmra.mxu0 %v6024
      %v6088 = vpop.f32.mrf.mxu0
      %v6089 = vadd.f32 %v1627, %v6088
      %v6090 = vpop.f32.mrf.mxu0
      %v6091 = vadd.f32 %v1628, %v6090
      %6092 = vmatmul.bf16.gmra.mxu0 %v6027
      %v6093 = vpop.f32.mrf.mxu0
      %v6094 = vadd.f32 %v1629, %v6093
      %v6095 = vpop.f32.mrf.mxu0
      %v6096 = vadd.f32 %v1630, %v6095
      %6097 = vmatmul.bf16.gmra.mxu0 %v6030
      %v6098 = vpop.f32.mrf.mxu0
      %v6099 = vadd.f32 %v1631, %v6098
      %v6100 = vpop.f32.mrf.mxu0
      %v6101 = vadd.f32 %v1632, %v6100
      %6102 = vmatmul.bf16.gmra.mxu0 %v6033
      %v6103 = vpop.f32.mrf.mxu0
      %v6104 = vadd.f32 %v1633, %v6103
      %v6105 = vpop.f32.mrf.mxu0
      %v6106 = vadd.f32 %v1634, %v6105
      %6107 = vdwg.mxu0
      %6108 = vmax.xlane.f32.xlu0 %v6069
      %v6109 = vpop.xlane.xlu0 %6108
      %6110 = vmax.xlane.f32.xlu0 %v6071
      %v6111 = vpop.xlane.xlu0 %6110
      %6112 = vmax.xlane.f32.xlu0 %v6074
      %v6113 = vpop.xlane.xlu0 %6112
      %6114 = vmax.xlane.f32.xlu0 %v6076
      %v6115 = vpop.xlane.xlu0 %6114
      %6116 = vmax.xlane.f32.xlu0 %v6079
      %v6117 = vpop.xlane.xlu0 %6116
      %6118 = vmax.xlane.f32.xlu0 %v6081
      %v6119 = vpop.xlane.xlu0 %6118
      %6120 = vmax.xlane.f32.xlu0 %v6084
      %v6121 = vpop.xlane.xlu0 %6120
      %6122 = vmax.xlane.f32.xlu0 %v6086
      %v6123 = vpop.xlane.xlu0 %6122
      %6124 = vmax.xlane.f32.xlu0 %v6089
      %v6125 = vpop.xlane.xlu0 %6124
      %6126 = vmax.xlane.f32.xlu0 %v6091
      %v6127 = vpop.xlane.xlu0 %6126
      %6128 = vmax.xlane.f32.xlu0 %v6094
      %v6129 = vpop.xlane.xlu0 %6128
      %6130 = vmax.xlane.f32.xlu0 %v6096
      %v6131 = vpop.xlane.xlu0 %6130
      %6132 = vmax.xlane.f32.xlu0 %v6099
      %v6133 = vpop.xlane.xlu0 %6132
      %6134 = vmax.xlane.f32.xlu0 %v6101
      %v6135 = vpop.xlane.xlu0 %6134
      %6136 = vmax.xlane.f32.xlu0 %v6104
      %v6137 = vpop.xlane.xlu0 %6136
      %6138 = vmax.xlane.f32.xlu0 %v6106
      %v6139 = vpop.xlane.xlu0 %6138
      %v6140 = vsub.f32 %v6069, %v6109
      %v6141 = vsub.f32 %v6071, %v6111
      %v6142 = vsub.f32 %v6074, %v6113
      %v6143 = vsub.f32 %v6076, %v6115
      %v6144 = vsub.f32 %v6079, %v6117
      %v6145 = vsub.f32 %v6081, %v6119
      %v6146 = vsub.f32 %v6084, %v6121
      %v6147 = vsub.f32 %v6086, %v6123
      %v6148 = vsub.f32 %v6089, %v6125
      %v6149 = vsub.f32 %v6091, %v6127
      %v6150 = vsub.f32 %v6094, %v6129
      %v6151 = vsub.f32 %v6096, %v6131
      %v6152 = vsub.f32 %v6099, %v6133
      %v6153 = vsub.f32 %v6101, %v6135
      %v6154 = vsub.f32 %v6104, %v6137
      %v6155 = vsub.f32 %v6106, %v6139
      %v6156 = vmul.f32 %v6140, 1.442695
      %v6157 = vpow.pop %v6156
      %v6158 = vmul.f32 %v6141, 1.442695
      %v6159 = vpow.pop %v6158
      %v6160 = vmul.f32 %v6142, 1.442695
      %v6161 = vpow.pop %v6160
      %v6162 = vmul.f32 %v6143, 1.442695
      %v6163 = vpow.pop %v6162
      %v6164 = vmul.f32 %v6144, 1.442695
      %v6165 = vpow.pop %v6164
      %v6166 = vmul.f32 %v6145, 1.442695
      %v6167 = vpow.pop %v6166
      %v6168 = vmul.f32 %v6146, 1.442695
      %v6169 = vpow.pop %v6168
      %v6170 = vmul.f32 %v6147, 1.442695
      %v6171 = vpow.pop %v6170
      %v6172 = vmul.f32 %v6148, 1.442695
      %v6173 = vpow.pop %v6172
      %v6174 = vmul.f32 %v6149, 1.442695
      %v6175 = vpow.pop %v6174
      %v6176 = vmul.f32 %v6150, 1.442695
      %v6177 = vpow.pop %v6176
      %v6178 = vmul.f32 %v6151, 1.442695
      %v6179 = vpow.pop %v6178
      %v6180 = vmul.f32 %v6152, 1.442695
      %v6181 = vpow.pop %v6180
      %v6182 = vmul.f32 %v6153, 1.442695
      %v6183 = vpow.pop %v6182
      %v6184 = vmul.f32 %v6154, 1.442695
      %v6185 = vpow.pop %v6184
      %v6186 = vmul.f32 %v6155, 1.442695
      %v6187 = vpow.pop %v6186
      %6188 = vadd.xlane.f32.xlu0 %v6157
      %v6189 = vpop.xlane.xlu0 %6188
      %6190 = vadd.xlane.f32.xlu0 %v6159
      %v6191 = vpop.xlane.xlu0 %6190
      %6192 = vadd.xlane.f32.xlu0 %v6161
      %v6193 = vpop.xlane.xlu0 %6192
      %6194 = vadd.xlane.f32.xlu0 %v6163
      %v6195 = vpop.xlane.xlu0 %6194
      %6196 = vadd.xlane.f32.xlu0 %v6165
      %v6197 = vpop.xlane.xlu0 %6196
      %6198 = vadd.xlane.f32.xlu0 %v6167
      %v6199 = vpop.xlane.xlu0 %6198
      %6200 = vadd.xlane.f32.xlu0 %v6169
      %v6201 = vpop.xlane.xlu0 %6200
      %6202 = vadd.xlane.f32.xlu0 %v6171
      %v6203 = vpop.xlane.xlu0 %6202
      %6204 = vadd.xlane.f32.xlu0 %v6173
      %v6205 = vpop.xlane.xlu0 %6204
      %6206 = vadd.xlane.f32.xlu0 %v6175
      %v6207 = vpop.xlane.xlu0 %6206
      %6208 = vadd.xlane.f32.xlu0 %v6177
      %v6209 = vpop.xlane.xlu0 %6208
      %6210 = vadd.xlane.f32.xlu0 %v6179
      %v6211 = vpop.xlane.xlu0 %6210
      %6212 = vadd.xlane.f32.xlu0 %v6181
      %v6213 = vpop.xlane.xlu0 %6212
      %6214 = vadd.xlane.f32.xlu0 %v6183
      %v6215 = vpop.xlane.xlu0 %6214
      %6216 = vadd.xlane.f32.xlu0 %v6185
      %v6217 = vpop.xlane.xlu0 %6216
      %6218 = vadd.xlane.f32.xlu0 %v6187
      %v6219 = vpop.xlane.xlu0 %6218
      %v6220 = vrcp.pop %v6189
      %v6221 = vrcp.pop %v6191
      %v6222 = vrcp.pop %v6193
      %v6223 = vrcp.pop %v6195
      %v6224 = vrcp.pop %v6197
      %v6225 = vrcp.pop %v6199
      %v6226 = vrcp.pop %v6201
      %v6227 = vrcp.pop %v6203
      %v6228 = vrcp.pop %v6205
      %v6229 = vrcp.pop %v6207
      %v6230 = vrcp.pop %v6209
      %v6231 = vrcp.pop %v6211
      %v6232 = vrcp.pop %v6213
      %v6233 = vrcp.pop %v6215
      %v6234 = vrcp.pop %v6217
      %v6235 = vrcp.pop %v6219
      %v6236 = vmul.f32 %v6157, %v6220
      %v6237 = vmul.f32 %v6159, %v6221
      %v6238 = vmul.f32 %v6161, %v6222
      %v6239 = vmul.f32 %v6163, %v6223
      %v6240 = vmul.f32 %v6165, %v6224
      %v6241 = vmul.f32 %v6167, %v6225
      %v6242 = vmul.f32 %v6169, %v6226
      %v6243 = vmul.f32 %v6171, %v6227
      %v6244 = vmul.f32 %v6173, %v6228
      %v6245 = vmul.f32 %v6175, %v6229
      %v6246 = vmul.f32 %v6177, %v6230
      %v6247 = vmul.f32 %v6179, %v6231
      %v6248 = vmul.f32 %v6181, %v6232
      %v6249 = vmul.f32 %v6183, %v6233
      %v6250 = vmul.f32 %v6185, %v6234
      %v6251 = vmul.f32 %v6187, %v6235
      %v6252 = vpack.c.bf16 %v6237, %v6236
      %v6253 = vpack.c.bf16 %v6239, %v6238
      %v6254 = vpack.c.bf16 %v6241, %v6240
      %v6255 = vpack.c.bf16 %v6243, %v6242
      %v6256 = vpack.c.bf16 %v6245, %v6244
      %v6257 = vpack.c.bf16 %v6247, %v6246
      %v6258 = vpack.c.bf16 %v6249, %v6248
      %v6259 = vpack.c.bf16 %v6251, %v6250
      %v6260 = vpack.c.bf16 %v5958, %v5956
      %v6261 = vpack.c.bf16 %v5963, %v5961
      %v6262 = vpack.c.bf16 %v5968, %v5966
      %v6263 = vpack.c.bf16 %v5973, %v5971
      %v6264 = vpack.c.bf16 %v5978, %v5976
      %v6265 = vpack.c.bf16 %v5983, %v5981
      %v6266 = vpack.c.bf16 %v5988, %v5986
      %v6267 = vpack.c.bf16 %v5993, %v5991
      %6268 = vmatpush.bf16.msra.mxu0 %v6267
      %6269 = vmatpush.bf16.msra.mxu0 %v6266
      %6270 = vmatpush.bf16.msra.mxu0 %v6265
      %6271 = vmatpush.bf16.msra.mxu0 %v6264
      %6272 = vmatpush.bf16.msra.mxu0 %v6263
      %6273 = vmatpush.bf16.msra.mxu0 %v6262
      %6274 = vmatpush.bf16.msra.mxu0 %v6261
      %6275 = vmatpush.bf16.msra.mxu0 %v6260
      %6276 = vmatmul.bf16.gmra.mxu0 %v6252
      %v6277 = vpop.f32.mrf.mxu0
      %v6278 = vadd.f32 0.0, %v6277
      %v6279 = vpop.f32.mrf.mxu0
      %v6280 = vadd.f32 0.0, %v6279
      %6281 = vmatmul.bf16.gmra.mxu0 %v6253
      %v6282 = vpop.f32.mrf.mxu0
      %v6283 = vadd.f32 0.0, %v6282
      %v6284 = vpop.f32.mrf.mxu0
      %v6285 = vadd.f32 0.0, %v6284
      %6286 = vmatmul.bf16.gmra.mxu0 %v6254
      %v6287 = vpop.f32.mrf.mxu0
      %v6288 = vadd.f32 0.0, %v6287
      %v6289 = vpop.f32.mrf.mxu0
      %v6290 = vadd.f32 0.0, %v6289
      %6291 = vmatmul.bf16.gmra.mxu0 %v6255
      %v6292 = vpop.f32.mrf.mxu0
      %v6293 = vadd.f32 0.0, %v6292
      %v6294 = vpop.f32.mrf.mxu0
      %v6295 = vadd.f32 0.0, %v6294
      %6296 = vmatmul.bf16.gmra.mxu0 %v6256
      %v6297 = vpop.f32.mrf.mxu0
      %v6298 = vadd.f32 0.0, %v6297
      %v6299 = vpop.f32.mrf.mxu0
      %v6300 = vadd.f32 0.0, %v6299
      %6301 = vmatmul.bf16.gmra.mxu0 %v6257
      %v6302 = vpop.f32.mrf.mxu0
      %v6303 = vadd.f32 0.0, %v6302
      %v6304 = vpop.f32.mrf.mxu0
      %v6305 = vadd.f32 0.0, %v6304
      %6306 = vmatmul.bf16.gmra.mxu0 %v6258
      %v6307 = vpop.f32.mrf.mxu0
      %v6308 = vadd.f32 0.0, %v6307
      %v6309 = vpop.f32.mrf.mxu0
      %v6310 = vadd.f32 0.0, %v6309
      %6311 = vmatmul.bf16.gmra.mxu0 %v6259
      %v6312 = vpop.f32.mrf.mxu0
      %v6313 = vadd.f32 0.0, %v6312
      %v6314 = vpop.f32.mrf.mxu0
      %v6315 = vadd.f32 0.0, %v6314
      %6316 = vdwg.mxu0
      %s6317 = scalar_lea.vmem %s8, 64
      %v6318 = vld [vmem:[%s6317] sm:$0xf]
      %v6319 = vld [vmem:[%s6317 + $0x4] sm:$0xf]
      %v6320 = vld [vmem:[%s6317 + $0x8] sm:$0xf]
      %v6321 = vld [vmem:[%s6317 + $0xc] sm:$0xf]
      %v6322 = vpack.c.bf16 %v6280, %v6278
      %v6323 = vpack.c.bf16 %v6285, %v6283
      %v6324 = vpack.c.bf16 %v6290, %v6288
      %v6325 = vpack.c.bf16 %v6295, %v6293
      %v6326 = vpack.c.bf16 %v6300, %v6298
      %v6327 = vpack.c.bf16 %v6305, %v6303
      %v6328 = vpack.c.bf16 %v6310, %v6308
      %v6329 = vpack.c.bf16 %v6315, %v6313
      %6338 = vrot.lane.b32.xlu0 %v5995, 96
      %v6339 = vpop.permute.xlu0 %6338
      %6340 = vrot.lane.b32.xlu0 %v5996, 96
      %v6341 = vpop.permute.xlu0 %6340
      %6342 = vrot.lane.b32.xlu0 %v5997, 96
      %v6343 = vpop.permute.xlu0 %6342
      %6344 = vrot.lane.b32.xlu0 %v5998, 96
      %v6345 = vpop.permute.xlu0 %6344
      %6346 = vrot.lane.b32.xlu0 %v5999, 96
      %v6347 = vpop.permute.xlu0 %6346
      %6348 = vrot.lane.b32.xlu0 %v6000, 96
      %v6349 = vpop.permute.xlu0 %6348
      %6350 = vrot.lane.b32.xlu0 %v6001, 96
      %v6351 = vpop.permute.xlu0 %6350
      %6352 = vrot.lane.b32.xlu0 %v6002, 96
      %v6353 = vpop.permute.xlu0 %6352
      %6362 = vrot.lane.b32.xlu0 %v6003, 96
      %v6363 = vpop.permute.xlu0 %6362
      %6364 = vrot.lane.b32.xlu0 %v6004, 96
      %v6365 = vpop.permute.xlu0 %6364
      %6366 = vrot.lane.b32.xlu0 %v6005, 96
      %v6367 = vpop.permute.xlu0 %6366
      %6368 = vrot.lane.b32.xlu0 %v6006, 96
      %v6369 = vpop.permute.xlu0 %6368
      %6370 = vrot.lane.b32.xlu0 %v6007, 96
      %v6371 = vpop.permute.xlu0 %6370
      %6372 = vrot.lane.b32.xlu0 %v6008, 96
      %v6373 = vpop.permute.xlu0 %6372
      %6374 = vrot.lane.b32.xlu0 %v6009, 96
      %v6375 = vpop.permute.xlu0 %6374
      %6376 = vrot.lane.b32.xlu0 %v6010, 96
      %v6377 = vpop.permute.xlu0 %6376
      %v6379 = vsel %vm2341, %v6339, 0
      %v6382 = vsel %vm2341, %v6341, 0
      %v6385 = vsel %vm2341, %v6343, 0
      %v6388 = vsel %vm2341, %v6345, 0
      %v6391 = vsel %vm2341, %v6347, 0
      %v6394 = vsel %vm2341, %v6349, 0
      %v6397 = vsel %vm2341, %v6351, 0
      %v6400 = vsel %vm2341, %v6353, 0
      %v6403 = vsel %vm2341, %v6363, 0
      %v6406 = vsel %vm2341, %v6365, 0
      %v6409 = vsel %vm2341, %v6367, 0
      %v6412 = vsel %vm2341, %v6369, 0
      %v6415 = vsel %vm2341, %v6371, 0
      %v6418 = vsel %vm2341, %v6373, 0
      %v6421 = vsel %vm2341, %v6375, 0
      %v6424 = vsel %vm2341, %v6377, 0
      %6426 = vmatpush.bf16.xpose.msra.mxu0 %v6424
      %6427 = vmatpush.bf16.xpose.msra.mxu0 %v6421
      %6428 = vmatpush.bf16.xpose.msra.mxu0 %v6418
      %6429 = vmatpush.bf16.xpose.msra.mxu0 %v6415
      %6430 = vmatpush.bf16.xpose.msra.mxu0 %v6412
      %6431 = vmatpush.bf16.xpose.msra.mxu0 %v6409
      %6432 = vmatpush.bf16.xpose.msra.mxu0 %v6406
      %6433 = vmatpush.bf16.xpose.msra.mxu0 %v6403
      %6434 = vmatmul.bf16.gmra.mxu0 %v6379
      %v6435 = vpop.f32.mrf.mxu0
      %v6436 = vadd.f32 %v1619, %v6435
      %v6437 = vpop.f32.mrf.mxu0
      %v6438 = vadd.f32 %v1620, %v6437
      %6439 = vmatmul.bf16.gmra.mxu0 %v6382
      %v6440 = vpop.f32.mrf.mxu0
      %v6441 = vadd.f32 %v1621, %v6440
      %v6442 = vpop.f32.mrf.mxu0
      %v6443 = vadd.f32 %v1622, %v6442
      %6444 = vmatmul.bf16.gmra.mxu0 %v6385
      %v6445 = vpop.f32.mrf.mxu0
      %v6446 = vadd.f32 %v1623, %v6445
      %v6447 = vpop.f32.mrf.mxu0
      %v6448 = vadd.f32 %v1624, %v6447
      %6449 = vmatmul.bf16.gmra.mxu0 %v6388
      %v6450 = vpop.f32.mrf.mxu0
      %v6451 = vadd.f32 %v1625, %v6450
      %v6452 = vpop.f32.mrf.mxu0
      %v6453 = vadd.f32 %v1626, %v6452
      %6454 = vmatmul.bf16.gmra.mxu0 %v6391
      %v6455 = vpop.f32.mrf.mxu0
      %v6456 = vadd.f32 %v1627, %v6455
      %v6457 = vpop.f32.mrf.mxu0
      %v6458 = vadd.f32 %v1628, %v6457
      %6459 = vmatmul.bf16.gmra.mxu0 %v6394
      %v6460 = vpop.f32.mrf.mxu0
      %v6461 = vadd.f32 %v1629, %v6460
      %v6462 = vpop.f32.mrf.mxu0
      %v6463 = vadd.f32 %v1630, %v6462
      %6464 = vmatmul.bf16.gmra.mxu0 %v6397
      %v6465 = vpop.f32.mrf.mxu0
      %v6466 = vadd.f32 %v1631, %v6465
      %v6467 = vpop.f32.mrf.mxu0
      %v6468 = vadd.f32 %v1632, %v6467
      %6469 = vmatmul.bf16.gmra.mxu0 %v6400
      %v6470 = vpop.f32.mrf.mxu0
      %v6471 = vadd.f32 %v1633, %v6470
      %v6472 = vpop.f32.mrf.mxu0
      %v6473 = vadd.f32 %v1634, %v6472
      %6474 = vdwg.mxu0
      %6475 = vmax.xlane.f32.xlu0 %v6436
      %v6476 = vpop.xlane.xlu0 %6475
      %6477 = vmax.xlane.f32.xlu0 %v6438
      %v6478 = vpop.xlane.xlu0 %6477
      %6479 = vmax.xlane.f32.xlu0 %v6441
      %v6480 = vpop.xlane.xlu0 %6479
      %6481 = vmax.xlane.f32.xlu0 %v6443
      %v6482 = vpop.xlane.xlu0 %6481
      %6483 = vmax.xlane.f32.xlu0 %v6446
      %v6484 = vpop.xlane.xlu0 %6483
      %6485 = vmax.xlane.f32.xlu0 %v6448
      %v6486 = vpop.xlane.xlu0 %6485
      %6487 = vmax.xlane.f32.xlu0 %v6451
      %v6488 = vpop.xlane.xlu0 %6487
      %6489 = vmax.xlane.f32.xlu0 %v6453
      %v6490 = vpop.xlane.xlu0 %6489
      %6491 = vmax.xlane.f32.xlu0 %v6456
      %v6492 = vpop.xlane.xlu0 %6491
      %6493 = vmax.xlane.f32.xlu0 %v6458
      %v6494 = vpop.xlane.xlu0 %6493
      %6495 = vmax.xlane.f32.xlu0 %v6461
      %v6496 = vpop.xlane.xlu0 %6495
      %6497 = vmax.xlane.f32.xlu0 %v6463
      %v6498 = vpop.xlane.xlu0 %6497
      %6499 = vmax.xlane.f32.xlu0 %v6466
      %v6500 = vpop.xlane.xlu0 %6499
      %6501 = vmax.xlane.f32.xlu0 %v6468
      %v6502 = vpop.xlane.xlu0 %6501
      %6503 = vmax.xlane.f32.xlu0 %v6471
      %v6504 = vpop.xlane.xlu0 %6503
      %6505 = vmax.xlane.f32.xlu0 %v6473
      %v6506 = vpop.xlane.xlu0 %6505
      %v6507 = vsub.f32 %v6436, %v6476
      %v6508 = vsub.f32 %v6438, %v6478
      %v6509 = vsub.f32 %v6441, %v6480
      %v6510 = vsub.f32 %v6443, %v6482
      %v6511 = vsub.f32 %v6446, %v6484
      %v6512 = vsub.f32 %v6448, %v6486
      %v6513 = vsub.f32 %v6451, %v6488
      %v6514 = vsub.f32 %v6453, %v6490
      %v6515 = vsub.f32 %v6456, %v6492
      %v6516 = vsub.f32 %v6458, %v6494
      %v6517 = vsub.f32 %v6461, %v6496
      %v6518 = vsub.f32 %v6463, %v6498
      %v6519 = vsub.f32 %v6466, %v6500
      %v6520 = vsub.f32 %v6468, %v6502
      %v6521 = vsub.f32 %v6471, %v6504
      %v6522 = vsub.f32 %v6473, %v6506
      %v6523 = vmul.f32 %v6507, 1.442695
      %v6524 = vpow.pop %v6523
      %v6525 = vmul.f32 %v6508, 1.442695
      %v6526 = vpow.pop %v6525
      %v6527 = vmul.f32 %v6509, 1.442695
      %v6528 = vpow.pop %v6527
      %v6529 = vmul.f32 %v6510, 1.442695
      %v6530 = vpow.pop %v6529
      %v6531 = vmul.f32 %v6511, 1.442695
      %v6532 = vpow.pop %v6531
      %v6533 = vmul.f32 %v6512, 1.442695
      %v6534 = vpow.pop %v6533
      %v6535 = vmul.f32 %v6513, 1.442695
      %v6536 = vpow.pop %v6535
      %v6537 = vmul.f32 %v6514, 1.442695
      %v6538 = vpow.pop %v6537
      %v6539 = vmul.f32 %v6515, 1.442695
      %v6540 = vpow.pop %v6539
      %v6541 = vmul.f32 %v6516, 1.442695
      %v6542 = vpow.pop %v6541
      %v6543 = vmul.f32 %v6517, 1.442695
      %v6544 = vpow.pop %v6543
      %v6545 = vmul.f32 %v6518, 1.442695
      %v6546 = vpow.pop %v6545
      %v6547 = vmul.f32 %v6519, 1.442695
      %v6548 = vpow.pop %v6547
      %v6549 = vmul.f32 %v6520, 1.442695
      %v6550 = vpow.pop %v6549
      %v6551 = vmul.f32 %v6521, 1.442695
      %v6552 = vpow.pop %v6551
      %v6553 = vmul.f32 %v6522, 1.442695
      %v6554 = vpow.pop %v6553
      %6555 = vadd.xlane.f32.xlu0 %v6524
      %v6556 = vpop.xlane.xlu0 %6555
      %6557 = vadd.xlane.f32.xlu0 %v6526
      %v6558 = vpop.xlane.xlu0 %6557
      %6559 = vadd.xlane.f32.xlu0 %v6528
      %v6560 = vpop.xlane.xlu0 %6559
      %6561 = vadd.xlane.f32.xlu0 %v6530
      %v6562 = vpop.xlane.xlu0 %6561
      %6563 = vadd.xlane.f32.xlu0 %v6532
      %v6564 = vpop.xlane.xlu0 %6563
      %6565 = vadd.xlane.f32.xlu0 %v6534
      %v6566 = vpop.xlane.xlu0 %6565
      %6567 = vadd.xlane.f32.xlu0 %v6536
      %v6568 = vpop.xlane.xlu0 %6567
      %6569 = vadd.xlane.f32.xlu0 %v6538
      %v6570 = vpop.xlane.xlu0 %6569
      %6571 = vadd.xlane.f32.xlu0 %v6540
      %v6572 = vpop.xlane.xlu0 %6571
      %6573 = vadd.xlane.f32.xlu0 %v6542
      %v6574 = vpop.xlane.xlu0 %6573
      %6575 = vadd.xlane.f32.xlu0 %v6544
      %v6576 = vpop.xlane.xlu0 %6575
      %6577 = vadd.xlane.f32.xlu0 %v6546
      %v6578 = vpop.xlane.xlu0 %6577
      %6579 = vadd.xlane.f32.xlu0 %v6548
      %v6580 = vpop.xlane.xlu0 %6579
      %6581 = vadd.xlane.f32.xlu0 %v6550
      %v6582 = vpop.xlane.xlu0 %6581
      %6583 = vadd.xlane.f32.xlu0 %v6552
      %v6584 = vpop.xlane.xlu0 %6583
      %6585 = vadd.xlane.f32.xlu0 %v6554
      %v6586 = vpop.xlane.xlu0 %6585
      %v6587 = vrcp.pop %v6556
      %v6588 = vrcp.pop %v6558
      %v6589 = vrcp.pop %v6560
      %v6590 = vrcp.pop %v6562
      %v6591 = vrcp.pop %v6564
      %v6592 = vrcp.pop %v6566
      %v6593 = vrcp.pop %v6568
      %v6594 = vrcp.pop %v6570
      %v6595 = vrcp.pop %v6572
      %v6596 = vrcp.pop %v6574
      %v6597 = vrcp.pop %v6576
      %v6598 = vrcp.pop %v6578
      %v6599 = vrcp.pop %v6580
      %v6600 = vrcp.pop %v6582
      %v6601 = vrcp.pop %v6584
      %v6602 = vrcp.pop %v6586
      %v6603 = vmul.f32 %v6524, %v6587
      %v6604 = vmul.f32 %v6526, %v6588
      %v6605 = vmul.f32 %v6528, %v6589
      %v6606 = vmul.f32 %v6530, %v6590
      %v6607 = vmul.f32 %v6532, %v6591
      %v6608 = vmul.f32 %v6534, %v6592
      %v6609 = vmul.f32 %v6536, %v6593
      %v6610 = vmul.f32 %v6538, %v6594
      %v6611 = vmul.f32 %v6540, %v6595
      %v6612 = vmul.f32 %v6542, %v6596
      %v6613 = vmul.f32 %v6544, %v6597
      %v6614 = vmul.f32 %v6546, %v6598
      %v6615 = vmul.f32 %v6548, %v6599
      %v6616 = vmul.f32 %v6550, %v6600
      %v6617 = vmul.f32 %v6552, %v6601
      %v6618 = vmul.f32 %v6554, %v6602
      %v6619 = vpack.c.bf16 %v6604, %v6603
      %v6620 = vpack.c.bf16 %v6606, %v6605
      %v6621 = vpack.c.bf16 %v6608, %v6607
      %v6622 = vpack.c.bf16 %v6610, %v6609
      %v6623 = vpack.c.bf16 %v6612, %v6611
      %v6624 = vpack.c.bf16 %v6614, %v6613
      %v6625 = vpack.c.bf16 %v6616, %v6615
      %v6626 = vpack.c.bf16 %v6618, %v6617
      %6635 = vrot.lane.b32.xlu0 %v6260, 96
      %v6636 = vpop.permute.xlu0 %6635
      %6637 = vrot.lane.b32.xlu0 %v6261, 96
      %v6638 = vpop.permute.xlu0 %6637
      %6639 = vrot.lane.b32.xlu0 %v6262, 96
      %v6640 = vpop.permute.xlu0 %6639
      %6641 = vrot.lane.b32.xlu0 %v6263, 96
      %v6642 = vpop.permute.xlu0 %6641
      %6643 = vrot.lane.b32.xlu0 %v6264, 96
      %v6644 = vpop.permute.xlu0 %6643
      %6645 = vrot.lane.b32.xlu0 %v6265, 96
      %v6646 = vpop.permute.xlu0 %6645
      %6647 = vrot.lane.b32.xlu0 %v6266, 96
      %v6648 = vpop.permute.xlu0 %6647
      %6649 = vrot.lane.b32.xlu0 %v6267, 96
      %v6650 = vpop.permute.xlu0 %6649
      %6659 = vmatpush.bf16.msra.mxu0 %v6650
      %6660 = vmatpush.bf16.msra.mxu0 %v6648
      %6661 = vmatpush.bf16.msra.mxu0 %v6646
      %6662 = vmatpush.bf16.msra.mxu0 %v6644
      %6663 = vmatpush.bf16.msra.mxu0 %v6642
      %6664 = vmatpush.bf16.msra.mxu0 %v6640
      %6665 = vmatpush.bf16.msra.mxu0 %v6638
      %6666 = vmatpush.bf16.msra.mxu0 %v6636
      %6667 = vmatmul.bf16.gmra.mxu0 %v6619
      %v6668 = vpop.f32.mrf.mxu0
      %v6669 = vadd.f32 0.0, %v6668
      %v6670 = vpop.f32.mrf.mxu0
      %v6671 = vadd.f32 0.0, %v6670
      %6672 = vmatmul.bf16.gmra.mxu0 %v6620
      %v6673 = vpop.f32.mrf.mxu0
      %v6674 = vadd.f32 0.0, %v6673
      %v6675 = vpop.f32.mrf.mxu0
      %v6676 = vadd.f32 0.0, %v6675
      %6677 = vmatmul.bf16.gmra.mxu0 %v6621
      %v6678 = vpop.f32.mrf.mxu0
      %v6679 = vadd.f32 0.0, %v6678
      %v6680 = vpop.f32.mrf.mxu0
      %v6681 = vadd.f32 0.0, %v6680
      %6682 = vmatmul.bf16.gmra.mxu0 %v6622
      %v6683 = vpop.f32.mrf.mxu0
      %v6684 = vadd.f32 0.0, %v6683
      %v6685 = vpop.f32.mrf.mxu0
      %v6686 = vadd.f32 0.0, %v6685
      %6687 = vmatmul.bf16.gmra.mxu0 %v6623
      %v6688 = vpop.f32.mrf.mxu0
      %v6689 = vadd.f32 0.0, %v6688
      %v6690 = vpop.f32.mrf.mxu0
      %v6691 = vadd.f32 0.0, %v6690
      %6692 = vmatmul.bf16.gmra.mxu0 %v6624
      %v6693 = vpop.f32.mrf.mxu0
      %v6694 = vadd.f32 0.0, %v6693
      %v6695 = vpop.f32.mrf.mxu0
      %v6696 = vadd.f32 0.0, %v6695
      %6697 = vmatmul.bf16.gmra.mxu0 %v6625
      %v6698 = vpop.f32.mrf.mxu0
      %v6699 = vadd.f32 0.0, %v6698
      %v6700 = vpop.f32.mrf.mxu0
      %v6701 = vadd.f32 0.0, %v6700
      %6702 = vmatmul.bf16.gmra.mxu0 %v6626
      %v6703 = vpop.f32.mrf.mxu0
      %v6704 = vadd.f32 0.0, %v6703
      %v6705 = vpop.f32.mrf.mxu0
      %v6706 = vadd.f32 0.0, %v6705
      %6707 = vdwg.mxu0
      %v6708 = vld [vmem:[%s6317 + $0x10] sm:$0xf]
      %v6709 = vld [vmem:[%s6317 + $0x14] sm:$0xf]
      %v6710 = vld [vmem:[%s6317 + $0x18] sm:$0xf]
      %v6711 = vld [vmem:[%s6317 + $0x1c] sm:$0xf]
      %v6712 = vpack.c.bf16 %v6671, %v6669
      %v6713 = vpack.c.bf16 %v6676, %v6674
      %v6714 = vpack.c.bf16 %v6681, %v6679
      %v6715 = vpack.c.bf16 %v6686, %v6684
      %v6716 = vpack.c.bf16 %v6691, %v6689
      %v6717 = vpack.c.bf16 %v6696, %v6694
      %v6718 = vpack.c.bf16 %v6701, %v6699
      %v6719 = vpack.c.bf16 %v6706, %v6704
      %v6724 = vunpack.c.l.b16 %v6708
      %v6725 = vunpack.c.l.b16 %v6709
      %v6726 = vunpack.c.l.b16 %v6710
      %v6727 = vunpack.c.l.b16 %v6711
      %v6728 = vpack.c.b16 %v6725, %v6724
      %v6729 = vpack.c.b16 %v6727, %v6726
      %v6733 = vsel %vm2341, %v6712, 0
      %v6736 = vsel %vm2341, %v6713, 0
      %v6739 = vsel %vm2341, %v6714, 0
      %v6742 = vsel %vm2341, %v6715, 0
      %v6745 = vsel %vm2341, %v6716, 0
      %v6748 = vsel %vm2341, %v6717, 0
      %v6751 = vsel %vm2341, %v6718, 0
      %v6754 = vsel %vm2341, %v6719, 0
      %6756 = vmatpush.bf16.msra.mxu0 0
      %6757 = vmatpush.bf16.msra.mxu0 0
      %6758 = vmatpush.bf16.msra.mxu0 0
      %6759 = vmatpush.bf16.msra.mxu0 0
      %6760 = vmatpush.bf16.msra.mxu0 0
      %6761 = vmatpush.bf16.msra.mxu0 0
      %6762 = vmatpush.bf16.msra.mxu0 %v6729
      %6763 = vmatpush.bf16.msra.mxu0 %v6728
      %6764 = vmatmul.bf16.gmra.mxu0 %v6733
      %v6765 = vpop.f32.mrf.mxu0
      %v6766 = vadd.f32 0.0, %v6765
      %v6767 = vpop.f32.mrf.mxu0
      %v6768 = vadd.f32 0.0, %v6767
      %6769 = vmatmul.bf16.gmra.mxu0 %v6736
      %v6770 = vpop.f32.mrf.mxu0
      %v6771 = vadd.f32 0.0, %v6770
      %v6772 = vpop.f32.mrf.mxu0
      %v6773 = vadd.f32 0.0, %v6772
      %6774 = vmatmul.bf16.gmra.mxu0 %v6739
      %v6775 = vpop.f32.mrf.mxu0
      %v6776 = vadd.f32 0.0, %v6775
      %v6777 = vpop.f32.mrf.mxu0
      %v6778 = vadd.f32 0.0, %v6777
      %6779 = vmatmul.bf16.gmra.mxu0 %v6742
      %v6780 = vpop.f32.mrf.mxu0
      %v6781 = vadd.f32 0.0, %v6780
      %v6782 = vpop.f32.mrf.mxu0
      %v6783 = vadd.f32 0.0, %v6782
      %6784 = vmatmul.bf16.gmra.mxu0 %v6745
      %v6785 = vpop.f32.mrf.mxu0
      %v6786 = vadd.f32 0.0, %v6785
      %v6787 = vpop.f32.mrf.mxu0
      %v6788 = vadd.f32 0.0, %v6787
      %6789 = vmatmul.bf16.gmra.mxu0 %v6748
      %v6790 = vpop.f32.mrf.mxu0
      %v6791 = vadd.f32 0.0, %v6790
      %v6792 = vpop.f32.mrf.mxu0
      %v6793 = vadd.f32 0.0, %v6792
      %6794 = vmatmul.bf16.gmra.mxu0 %v6751
      %v6795 = vpop.f32.mrf.mxu0
      %v6796 = vadd.f32 0.0, %v6795
      %v6797 = vpop.f32.mrf.mxu0
      %v6798 = vadd.f32 0.0, %v6797
      %6799 = vmatmul.bf16.gmra.mxu0 %v6754
      %v6800 = vpop.f32.mrf.mxu0
      %v6801 = vadd.f32 0.0, %v6800
      %v6802 = vpop.f32.mrf.mxu0
      %v6803 = vadd.f32 0.0, %v6802
      %6804 = vdwg.mxu0
      %v6809 = vunpack.c.l.b16 %v6318
      %v6810 = vunpack.c.l.b16 %v6319
      %v6811 = vunpack.c.l.b16 %v6320
      %v6812 = vunpack.c.l.b16 %v6321
      %v6813 = vpack.c.b16 %v6810, %v6809
      %v6814 = vpack.c.b16 %v6812, %v6811
      %v6818 = vsel %vm2341, %v6322, 0
      %v6821 = vsel %vm2341, %v6323, 0
      %v6824 = vsel %vm2341, %v6324, 0
      %v6827 = vsel %vm2341, %v6325, 0
      %v6830 = vsel %vm2341, %v6326, 0
      %v6833 = vsel %vm2341, %v6327, 0
      %v6836 = vsel %vm2341, %v6328, 0
      %v6839 = vsel %vm2341, %v6329, 0
      %6841 = vmatpush.bf16.msra.mxu0 0
      %6842 = vmatpush.bf16.msra.mxu0 0
      %6843 = vmatpush.bf16.msra.mxu0 0
      %6844 = vmatpush.bf16.msra.mxu0 0
      %6845 = vmatpush.bf16.msra.mxu0 0
      %6846 = vmatpush.bf16.msra.mxu0 0
      %6847 = vmatpush.bf16.msra.mxu0 %v6814
      %6848 = vmatpush.bf16.msra.mxu0 %v6813
      %6849 = vmatmul.bf16.gmra.mxu0 %v6818
      %v6850 = vpop.f32.mrf.mxu0
      %v6851 = vadd.f32 %v6766, %v6850
      %v6852 = vpop.f32.mrf.mxu0
      %v6853 = vadd.f32 %v6768, %v6852
      %6854 = vmatmul.bf16.gmra.mxu0 %v6821
      %v6855 = vpop.f32.mrf.mxu0
      %v6856 = vadd.f32 %v6771, %v6855
      %v6857 = vpop.f32.mrf.mxu0
      %v6858 = vadd.f32 %v6773, %v6857
      %6859 = vmatmul.bf16.gmra.mxu0 %v6824
      %v6860 = vpop.f32.mrf.mxu0
      %v6861 = vadd.f32 %v6776, %v6860
      %v6862 = vpop.f32.mrf.mxu0
      %v6863 = vadd.f32 %v6778, %v6862
      %6864 = vmatmul.bf16.gmra.mxu0 %v6827
      %v6865 = vpop.f32.mrf.mxu0
      %v6866 = vadd.f32 %v6781, %v6865
      %v6867 = vpop.f32.mrf.mxu0
      %v6868 = vadd.f32 %v6783, %v6867
      %6869 = vmatmul.bf16.gmra.mxu0 %v6830
      %v6870 = vpop.f32.mrf.mxu0
      %v6871 = vadd.f32 %v6786, %v6870
      %v6872 = vpop.f32.mrf.mxu0
      %v6873 = vadd.f32 %v6788, %v6872
      %6874 = vmatmul.bf16.gmra.mxu0 %v6833
      %v6875 = vpop.f32.mrf.mxu0
      %v6876 = vadd.f32 %v6791, %v6875
      %v6877 = vpop.f32.mrf.mxu0
      %v6878 = vadd.f32 %v6793, %v6877
      %6879 = vmatmul.bf16.gmra.mxu0 %v6836
      %v6880 = vpop.f32.mrf.mxu0
      %v6881 = vadd.f32 %v6796, %v6880
      %v6882 = vpop.f32.mrf.mxu0
      %v6883 = vadd.f32 %v6798, %v6882
      %6884 = vmatmul.bf16.gmra.mxu0 %v6839
      %v6885 = vpop.f32.mrf.mxu0
      %v6886 = vadd.f32 %v6801, %v6885
      %v6887 = vpop.f32.mrf.mxu0
      %v6888 = vadd.f32 %v6803, %v6887
      %6889 = vdwg.mxu0
      %6890 = vrot.lane.b32.xlu0 %v5995, 64
      %v6891 = vpop.permute.xlu0 %6890
      %6892 = vrot.lane.b32.xlu0 %v5996, 64
      %v6893 = vpop.permute.xlu0 %6892
      %6894 = vrot.lane.b32.xlu0 %v5997, 64
      %v6895 = vpop.permute.xlu0 %6894
      %6896 = vrot.lane.b32.xlu0 %v5998, 64
      %v6897 = vpop.permute.xlu0 %6896
      %6898 = vrot.lane.b32.xlu0 %v5999, 64
      %v6899 = vpop.permute.xlu0 %6898
      %6900 = vrot.lane.b32.xlu0 %v6000, 64
      %v6901 = vpop.permute.xlu0 %6900
      %6902 = vrot.lane.b32.xlu0 %v6001, 64
      %v6903 = vpop.permute.xlu0 %6902
      %6904 = vrot.lane.b32.xlu0 %v6002, 64
      %v6905 = vpop.permute.xlu0 %6904
      %6906 = vrot.lane.b32.xlu0 %v6003, 64
      %v6907 = vpop.permute.xlu0 %6906
      %6908 = vrot.lane.b32.xlu0 %v6004, 64
      %v6909 = vpop.permute.xlu0 %6908
      %6910 = vrot.lane.b32.xlu0 %v6005, 64
      %v6911 = vpop.permute.xlu0 %6910
      %6912 = vrot.lane.b32.xlu0 %v6006, 64
      %v6913 = vpop.permute.xlu0 %6912
      %6914 = vrot.lane.b32.xlu0 %v6007, 64
      %v6915 = vpop.permute.xlu0 %6914
      %6916 = vrot.lane.b32.xlu0 %v6008, 64
      %v6917 = vpop.permute.xlu0 %6916
      %6918 = vrot.lane.b32.xlu0 %v6009, 64
      %v6919 = vpop.permute.xlu0 %6918
      %6920 = vrot.lane.b32.xlu0 %v6010, 64
      %v6921 = vpop.permute.xlu0 %6920
      %v6923 = vsel %vm2341, %v6891, 0
      %v6926 = vsel %vm2341, %v6893, 0
      %v6929 = vsel %vm2341, %v6895, 0
      %v6932 = vsel %vm2341, %v6897, 0
      %v6935 = vsel %vm2341, %v6899, 0
      %v6938 = vsel %vm2341, %v6901, 0
      %v6941 = vsel %vm2341, %v6903, 0
      %v6944 = vsel %vm2341, %v6905, 0
      %v6947 = vsel %vm2341, %v6907, 0
      %v6950 = vsel %vm2341, %v6909, 0
      %v6953 = vsel %vm2341, %v6911, 0
      %v6956 = vsel %vm2341, %v6913, 0
      %v6959 = vsel %vm2341, %v6915, 0
      %v6962 = vsel %vm2341, %v6917, 0
      %v6965 = vsel %vm2341, %v6919, 0
      %v6968 = vsel %vm2341, %v6921, 0
      %6970 = vmatpush.bf16.xpose.msra.mxu0 %v6968
      %6971 = vmatpush.bf16.xpose.msra.mxu0 %v6965
      %6972 = vmatpush.bf16.xpose.msra.mxu0 %v6962
      %6973 = vmatpush.bf16.xpose.msra.mxu0 %v6959
      %6974 = vmatpush.bf16.xpose.msra.mxu0 %v6956
      %6975 = vmatpush.bf16.xpose.msra.mxu0 %v6953
      %6976 = vmatpush.bf16.xpose.msra.mxu0 %v6950
      %6977 = vmatpush.bf16.xpose.msra.mxu0 %v6947
      %6978 = vmatmul.bf16.gmra.mxu0 %v6923
      %v6979 = vpop.f32.mrf.mxu0
      %v6980 = vadd.f32 %v1619, %v6979
      %v6981 = vpop.f32.mrf.mxu0
      %v6982 = vadd.f32 %v1620, %v6981
      %6983 = vmatmul.bf16.gmra.mxu0 %v6926
      %v6984 = vpop.f32.mrf.mxu0
      %v6985 = vadd.f32 %v1621, %v6984
      %v6986 = vpop.f32.mrf.mxu0
      %v6987 = vadd.f32 %v1622, %v6986
      %6988 = vmatmul.bf16.gmra.mxu0 %v6929
      %v6989 = vpop.f32.mrf.mxu0
      %v6990 = vadd.f32 %v1623, %v6989
      %v6991 = vpop.f32.mrf.mxu0
      %v6992 = vadd.f32 %v1624, %v6991
      %6993 = vmatmul.bf16.gmra.mxu0 %v6932
      %v6994 = vpop.f32.mrf.mxu0
      %v6995 = vadd.f32 %v1625, %v6994
      %v6996 = vpop.f32.mrf.mxu0
      %v6997 = vadd.f32 %v1626, %v6996
      %6998 = vmatmul.bf16.gmra.mxu0 %v6935
      %v6999 = vpop.f32.mrf.mxu0
      %v7000 = vadd.f32 %v1627, %v6999
      %v7001 = vpop.f32.mrf.mxu0
      %v7002 = vadd.f32 %v1628, %v7001
      %7003 = vmatmul.bf16.gmra.mxu0 %v6938
      %v7004 = vpop.f32.mrf.mxu0
      %v7005 = vadd.f32 %v1629, %v7004
      %v7006 = vpop.f32.mrf.mxu0
      %v7007 = vadd.f32 %v1630, %v7006
      %7008 = vmatmul.bf16.gmra.mxu0 %v6941
      %v7009 = vpop.f32.mrf.mxu0
      %v7010 = vadd.f32 %v1631, %v7009
      %v7011 = vpop.f32.mrf.mxu0
      %v7012 = vadd.f32 %v1632, %v7011
      %7013 = vmatmul.bf16.gmra.mxu0 %v6944
      %v7014 = vpop.f32.mrf.mxu0
      %v7015 = vadd.f32 %v1633, %v7014
      %v7016 = vpop.f32.mrf.mxu0
      %v7017 = vadd.f32 %v1634, %v7016
      %7018 = vdwg.mxu0
      %7019 = vmax.xlane.f32.xlu0 %v6980
      %v7020 = vpop.xlane.xlu0 %7019
      %7021 = vmax.xlane.f32.xlu0 %v6982
      %v7022 = vpop.xlane.xlu0 %7021
      %7023 = vmax.xlane.f32.xlu0 %v6985
      %v7024 = vpop.xlane.xlu0 %7023
      %7025 = vmax.xlane.f32.xlu0 %v6987
      %v7026 = vpop.xlane.xlu0 %7025
      %7027 = vmax.xlane.f32.xlu0 %v6990
      %v7028 = vpop.xlane.xlu0 %7027
      %7029 = vmax.xlane.f32.xlu0 %v6992
      %v7030 = vpop.xlane.xlu0 %7029
      %7031 = vmax.xlane.f32.xlu0 %v6995
      %v7032 = vpop.xlane.xlu0 %7031
      %7033 = vmax.xlane.f32.xlu0 %v6997
      %v7034 = vpop.xlane.xlu0 %7033
      %7035 = vmax.xlane.f32.xlu0 %v7000
      %v7036 = vpop.xlane.xlu0 %7035
      %7037 = vmax.xlane.f32.xlu0 %v7002
      %v7038 = vpop.xlane.xlu0 %7037
      %7039 = vmax.xlane.f32.xlu0 %v7005
      %v7040 = vpop.xlane.xlu0 %7039
      %7041 = vmax.xlane.f32.xlu0 %v7007
      %v7042 = vpop.xlane.xlu0 %7041
      %7043 = vmax.xlane.f32.xlu0 %v7010
      %v7044 = vpop.xlane.xlu0 %7043
      %7045 = vmax.xlane.f32.xlu0 %v7012
      %v7046 = vpop.xlane.xlu0 %7045
      %7047 = vmax.xlane.f32.xlu0 %v7015
      %v7048 = vpop.xlane.xlu0 %7047
      %7049 = vmax.xlane.f32.xlu0 %v7017
      %v7050 = vpop.xlane.xlu0 %7049
      %v7051 = vsub.f32 %v6980, %v7020
      %v7052 = vsub.f32 %v6982, %v7022
      %v7053 = vsub.f32 %v6985, %v7024
      %v7054 = vsub.f32 %v6987, %v7026
      %v7055 = vsub.f32 %v6990, %v7028
      %v7056 = vsub.f32 %v6992, %v7030
      %v7057 = vsub.f32 %v6995, %v7032
      %v7058 = vsub.f32 %v6997, %v7034
      %v7059 = vsub.f32 %v7000, %v7036
      %v7060 = vsub.f32 %v7002, %v7038
      %v7061 = vsub.f32 %v7005, %v7040
      %v7062 = vsub.f32 %v7007, %v7042
      %v7063 = vsub.f32 %v7010, %v7044
      %v7064 = vsub.f32 %v7012, %v7046
      %v7065 = vsub.f32 %v7015, %v7048
      %v7066 = vsub.f32 %v7017, %v7050
      %v7067 = vmul.f32 %v7051, 1.442695
      %v7068 = vpow.pop %v7067
      %v7069 = vmul.f32 %v7052, 1.442695
      %v7070 = vpow.pop %v7069
      %v7071 = vmul.f32 %v7053, 1.442695
      %v7072 = vpow.pop %v7071
      %v7073 = vmul.f32 %v7054, 1.442695
      %v7074 = vpow.pop %v7073
      %v7075 = vmul.f32 %v7055, 1.442695
      %v7076 = vpow.pop %v7075
      %v7077 = vmul.f32 %v7056, 1.442695
      %v7078 = vpow.pop %v7077
      %v7079 = vmul.f32 %v7057, 1.442695
      %v7080 = vpow.pop %v7079
      %v7081 = vmul.f32 %v7058, 1.442695
      %v7082 = vpow.pop %v7081
      %v7083 = vmul.f32 %v7059, 1.442695
      %v7084 = vpow.pop %v7083
      %v7085 = vmul.f32 %v7060, 1.442695
      %v7086 = vpow.pop %v7085
      %v7087 = vmul.f32 %v7061, 1.442695
      %v7088 = vpow.pop %v7087
      %v7089 = vmul.f32 %v7062, 1.442695
      %v7090 = vpow.pop %v7089
      %v7091 = vmul.f32 %v7063, 1.442695
      %v7092 = vpow.pop %v7091
      %v7093 = vmul.f32 %v7064, 1.442695
      %v7094 = vpow.pop %v7093
      %v7095 = vmul.f32 %v7065, 1.442695
      %v7096 = vpow.pop %v7095
      %v7097 = vmul.f32 %v7066, 1.442695
      %v7098 = vpow.pop %v7097
      %7099 = vadd.xlane.f32.xlu0 %v7068
      %v7100 = vpop.xlane.xlu0 %7099
      %7101 = vadd.xlane.f32.xlu0 %v7070
      %v7102 = vpop.xlane.xlu0 %7101
      %7103 = vadd.xlane.f32.xlu0 %v7072
      %v7104 = vpop.xlane.xlu0 %7103
      %7105 = vadd.xlane.f32.xlu0 %v7074
      %v7106 = vpop.xlane.xlu0 %7105
      %7107 = vadd.xlane.f32.xlu0 %v7076
      %v7108 = vpop.xlane.xlu0 %7107
      %7109 = vadd.xlane.f32.xlu0 %v7078
      %v7110 = vpop.xlane.xlu0 %7109
      %7111 = vadd.xlane.f32.xlu0 %v7080
      %v7112 = vpop.xlane.xlu0 %7111
      %7113 = vadd.xlane.f32.xlu0 %v7082
      %v7114 = vpop.xlane.xlu0 %7113
      %7115 = vadd.xlane.f32.xlu0 %v7084
      %v7116 = vpop.xlane.xlu0 %7115
      %7117 = vadd.xlane.f32.xlu0 %v7086
      %v7118 = vpop.xlane.xlu0 %7117
      %7119 = vadd.xlane.f32.xlu0 %v7088
      %v7120 = vpop.xlane.xlu0 %7119
      %7121 = vadd.xlane.f32.xlu0 %v7090
      %v7122 = vpop.xlane.xlu0 %7121
      %7123 = vadd.xlane.f32.xlu0 %v7092
      %v7124 = vpop.xlane.xlu0 %7123
      %7125 = vadd.xlane.f32.xlu0 %v7094
      %v7126 = vpop.xlane.xlu0 %7125
      %7127 = vadd.xlane.f32.xlu0 %v7096
      %v7128 = vpop.xlane.xlu0 %7127
      %7129 = vadd.xlane.f32.xlu0 %v7098
      %v7130 = vpop.xlane.xlu0 %7129
      %v7131 = vrcp.pop %v7100
      %v7132 = vrcp.pop %v7102
      %v7133 = vrcp.pop %v7104
      %v7134 = vrcp.pop %v7106
      %v7135 = vrcp.pop %v7108
      %v7136 = vrcp.pop %v7110
      %v7137 = vrcp.pop %v7112
      %v7138 = vrcp.pop %v7114
      %v7139 = vrcp.pop %v7116
      %v7140 = vrcp.pop %v7118
      %v7141 = vrcp.pop %v7120
      %v7142 = vrcp.pop %v7122
      %v7143 = vrcp.pop %v7124
      %v7144 = vrcp.pop %v7126
      %v7145 = vrcp.pop %v7128
      %v7146 = vrcp.pop %v7130
      %v7147 = vmul.f32 %v7068, %v7131
      %v7148 = vmul.f32 %v7070, %v7132
      %v7149 = vmul.f32 %v7072, %v7133
      %v7150 = vmul.f32 %v7074, %v7134
      %v7151 = vmul.f32 %v7076, %v7135
      %v7152 = vmul.f32 %v7078, %v7136
      %v7153 = vmul.f32 %v7080, %v7137
      %v7154 = vmul.f32 %v7082, %v7138
      %v7155 = vmul.f32 %v7084, %v7139
      %v7156 = vmul.f32 %v7086, %v7140
      %v7157 = vmul.f32 %v7088, %v7141
      %v7158 = vmul.f32 %v7090, %v7142
      %v7159 = vmul.f32 %v7092, %v7143
      %v7160 = vmul.f32 %v7094, %v7144
      %v7161 = vmul.f32 %v7096, %v7145
      %v7162 = vmul.f32 %v7098, %v7146
      %v7163 = vpack.c.bf16 %v7148, %v7147
      %v7164 = vpack.c.bf16 %v7150, %v7149
      %v7165 = vpack.c.bf16 %v7152, %v7151
      %v7166 = vpack.c.bf16 %v7154, %v7153
      %v7167 = vpack.c.bf16 %v7156, %v7155
      %v7168 = vpack.c.bf16 %v7158, %v7157
      %v7169 = vpack.c.bf16 %v7160, %v7159
      %v7170 = vpack.c.bf16 %v7162, %v7161
      %7171 = vrot.lane.b32.xlu0 %v6260, 64
      %v7172 = vpop.permute.xlu0 %7171
      %7173 = vrot.lane.b32.xlu0 %v6261, 64
      %v7174 = vpop.permute.xlu0 %7173
      %7175 = vrot.lane.b32.xlu0 %v6262, 64
      %v7176 = vpop.permute.xlu0 %7175
      %7177 = vrot.lane.b32.xlu0 %v6263, 64
      %v7178 = vpop.permute.xlu0 %7177
      %7179 = vrot.lane.b32.xlu0 %v6264, 64
      %v7180 = vpop.permute.xlu0 %7179
      %7181 = vrot.lane.b32.xlu0 %v6265, 64
      %v7182 = vpop.permute.xlu0 %7181
      %7183 = vrot.lane.b32.xlu0 %v6266, 64
      %v7184 = vpop.permute.xlu0 %7183
      %7185 = vrot.lane.b32.xlu0 %v6267, 64
      %v7186 = vpop.permute.xlu0 %7185
      %7195 = vmatpush.bf16.msra.mxu0 %v7186
      %7196 = vmatpush.bf16.msra.mxu0 %v7184
      %7197 = vmatpush.bf16.msra.mxu0 %v7182
      %7198 = vmatpush.bf16.msra.mxu0 %v7180
      %7199 = vmatpush.bf16.msra.mxu0 %v7178
      %7200 = vmatpush.bf16.msra.mxu0 %v7176
      %7201 = vmatpush.bf16.msra.mxu0 %v7174
      %7202 = vmatpush.bf16.msra.mxu0 %v7172
      %7203 = vmatmul.bf16.gmra.mxu0 %v7163
      %v7204 = vpop.f32.mrf.mxu0
      %v7205 = vadd.f32 0.0, %v7204
      %v7206 = vpop.f32.mrf.mxu0
      %v7207 = vadd.f32 0.0, %v7206
      %7208 = vmatmul.bf16.gmra.mxu0 %v7164
      %v7209 = vpop.f32.mrf.mxu0
      %v7210 = vadd.f32 0.0, %v7209
      %v7211 = vpop.f32.mrf.mxu0
      %v7212 = vadd.f32 0.0, %v7211
      %7213 = vmatmul.bf16.gmra.mxu0 %v7165
      %v7214 = vpop.f32.mrf.mxu0
      %v7215 = vadd.f32 0.0, %v7214
      %v7216 = vpop.f32.mrf.mxu0
      %v7217 = vadd.f32 0.0, %v7216
      %7218 = vmatmul.bf16.gmra.mxu0 %v7166
      %v7219 = vpop.f32.mrf.mxu0
      %v7220 = vadd.f32 0.0, %v7219
      %v7221 = vpop.f32.mrf.mxu0
      %v7222 = vadd.f32 0.0, %v7221
      %7223 = vmatmul.bf16.gmra.mxu0 %v7167
      %v7224 = vpop.f32.mrf.mxu0
      %v7225 = vadd.f32 0.0, %v7224
      %v7226 = vpop.f32.mrf.mxu0
      %v7227 = vadd.f32 0.0, %v7226
      %7228 = vmatmul.bf16.gmra.mxu0 %v7168
      %v7229 = vpop.f32.mrf.mxu0
      %v7230 = vadd.f32 0.0, %v7229
      %v7231 = vpop.f32.mrf.mxu0
      %v7232 = vadd.f32 0.0, %v7231
      %7233 = vmatmul.bf16.gmra.mxu0 %v7169
      %v7234 = vpop.f32.mrf.mxu0
      %v7235 = vadd.f32 0.0, %v7234
      %v7236 = vpop.f32.mrf.mxu0
      %v7237 = vadd.f32 0.0, %v7236
      %7238 = vmatmul.bf16.gmra.mxu0 %v7170
      %v7239 = vpop.f32.mrf.mxu0
      %v7240 = vadd.f32 0.0, %v7239
      %v7241 = vpop.f32.mrf.mxu0
      %v7242 = vadd.f32 0.0, %v7241
      %7243 = vdwg.mxu0
      %v7244 = vld [vmem:[%s6317 + $0x20] sm:$0xf]
      %v7245 = vld [vmem:[%s6317 + $0x24] sm:$0xf]
      %v7246 = vld [vmem:[%s6317 + $0x28] sm:$0xf]
      %v7247 = vld [vmem:[%s6317 + $0x2c] sm:$0xf]
      %v7248 = vpack.c.bf16 %v7207, %v7205
      %v7249 = vpack.c.bf16 %v7212, %v7210
      %v7250 = vpack.c.bf16 %v7217, %v7215
      %v7251 = vpack.c.bf16 %v7222, %v7220
      %v7252 = vpack.c.bf16 %v7227, %v7225
      %v7253 = vpack.c.bf16 %v7232, %v7230
      %v7254 = vpack.c.bf16 %v7237, %v7235
      %v7255 = vpack.c.bf16 %v7242, %v7240
      %v7260 = vunpack.c.l.b16 %v7244
      %v7261 = vunpack.c.l.b16 %v7245
      %v7262 = vunpack.c.l.b16 %v7246
      %v7263 = vunpack.c.l.b16 %v7247
      %v7264 = vpack.c.b16 %v7261, %v7260
      %v7265 = vpack.c.b16 %v7263, %v7262
      %v7269 = vsel %vm2341, %v7248, 0
      %v7272 = vsel %vm2341, %v7249, 0
      %v7275 = vsel %vm2341, %v7250, 0
      %v7278 = vsel %vm2341, %v7251, 0
      %v7281 = vsel %vm2341, %v7252, 0
      %v7284 = vsel %vm2341, %v7253, 0
      %v7287 = vsel %vm2341, %v7254, 0
      %v7290 = vsel %vm2341, %v7255, 0
      %7292 = vmatpush.bf16.msra.mxu0 0
      %7293 = vmatpush.bf16.msra.mxu0 0
      %7294 = vmatpush.bf16.msra.mxu0 0
      %7295 = vmatpush.bf16.msra.mxu0 0
      %7296 = vmatpush.bf16.msra.mxu0 0
      %7297 = vmatpush.bf16.msra.mxu0 0
      %7298 = vmatpush.bf16.msra.mxu0 %v7265
      %7299 = vmatpush.bf16.msra.mxu0 %v7264
      %7300 = vmatmul.bf16.gmra.mxu0 %v7269
      %v7301 = vpop.f32.mrf.mxu0
      %v7302 = vadd.f32 0.0, %v7301
      %v7303 = vpop.f32.mrf.mxu0
      %v7304 = vadd.f32 0.0, %v7303
      %7305 = vmatmul.bf16.gmra.mxu0 %v7272
      %v7306 = vpop.f32.mrf.mxu0
      %v7307 = vadd.f32 0.0, %v7306
      %v7308 = vpop.f32.mrf.mxu0
      %v7309 = vadd.f32 0.0, %v7308
      %7310 = vmatmul.bf16.gmra.mxu0 %v7275
      %v7311 = vpop.f32.mrf.mxu0
      %v7312 = vadd.f32 0.0, %v7311
      %v7313 = vpop.f32.mrf.mxu0
      %v7314 = vadd.f32 0.0, %v7313
      %7315 = vmatmul.bf16.gmra.mxu0 %v7278
      %v7316 = vpop.f32.mrf.mxu0
      %v7317 = vadd.f32 0.0, %v7316
      %v7318 = vpop.f32.mrf.mxu0
      %v7319 = vadd.f32 0.0, %v7318
      %7320 = vmatmul.bf16.gmra.mxu0 %v7281
      %v7321 = vpop.f32.mrf.mxu0
      %v7322 = vadd.f32 0.0, %v7321
      %v7323 = vpop.f32.mrf.mxu0
      %v7324 = vadd.f32 0.0, %v7323
      %7325 = vmatmul.bf16.gmra.mxu0 %v7284
      %v7326 = vpop.f32.mrf.mxu0
      %v7327 = vadd.f32 0.0, %v7326
      %v7328 = vpop.f32.mrf.mxu0
      %v7329 = vadd.f32 0.0, %v7328
      %7330 = vmatmul.bf16.gmra.mxu0 %v7287
      %v7331 = vpop.f32.mrf.mxu0
      %v7332 = vadd.f32 0.0, %v7331
      %v7333 = vpop.f32.mrf.mxu0
      %v7334 = vadd.f32 0.0, %v7333
      %7335 = vmatmul.bf16.gmra.mxu0 %v7290
      %v7336 = vpop.f32.mrf.mxu0
      %v7337 = vadd.f32 0.0, %v7336
      %v7338 = vpop.f32.mrf.mxu0
      %v7339 = vadd.f32 0.0, %v7338
      %7340 = vdwg.mxu0
      %v7341 = vadd.f32 %v6851, %v7302
      %v7342 = vadd.f32 %v6853, %v7304
      %v7343 = vadd.f32 %v6856, %v7307
      %v7344 = vadd.f32 %v6858, %v7309
      %v7345 = vadd.f32 %v6861, %v7312
      %v7346 = vadd.f32 %v6863, %v7314
      %v7347 = vadd.f32 %v6866, %v7317
      %v7348 = vadd.f32 %v6868, %v7319
      %v7349 = vadd.f32 %v6871, %v7322
      %v7350 = vadd.f32 %v6873, %v7324
      %v7351 = vadd.f32 %v6876, %v7327
      %v7352 = vadd.f32 %v6878, %v7329
      %v7353 = vadd.f32 %v6881, %v7332
      %v7354 = vadd.f32 %v6883, %v7334
      %v7355 = vadd.f32 %v6886, %v7337
      %v7356 = vadd.f32 %v6888, %v7339
      %7357 = vrot.lane.b32.xlu0 %v5995, 32
      %v7358 = vpop.permute.xlu0 %7357
      %7359 = vrot.lane.b32.xlu0 %v5996, 32
      %v7360 = vpop.permute.xlu0 %7359
      %7361 = vrot.lane.b32.xlu0 %v5997, 32
      %v7362 = vpop.permute.xlu0 %7361
      %7363 = vrot.lane.b32.xlu0 %v5998, 32
      %v7364 = vpop.permute.xlu0 %7363
      %7365 = vrot.lane.b32.xlu0 %v5999, 32
      %v7366 = vpop.permute.xlu0 %7365
      %7367 = vrot.lane.b32.xlu0 %v6000, 32
      %v7368 = vpop.permute.xlu0 %7367
      %7369 = vrot.lane.b32.xlu0 %v6001, 32
      %v7370 = vpop.permute.xlu0 %7369
      %7371 = vrot.lane.b32.xlu0 %v6002, 32
      %v7372 = vpop.permute.xlu0 %7371
      %7373 = vrot.lane.b32.xlu0 %v6003, 32
      %v7374 = vpop.permute.xlu0 %7373
      %7375 = vrot.lane.b32.xlu0 %v6004, 32
      %v7376 = vpop.permute.xlu0 %7375
      %7377 = vrot.lane.b32.xlu0 %v6005, 32
      %v7378 = vpop.permute.xlu0 %7377
      %7379 = vrot.lane.b32.xlu0 %v6006, 32
      %v7380 = vpop.permute.xlu0 %7379
      %7381 = vrot.lane.b32.xlu0 %v6007, 32
      %v7382 = vpop.permute.xlu0 %7381
      %7383 = vrot.lane.b32.xlu0 %v6008, 32
      %v7384 = vpop.permute.xlu0 %7383
      %7385 = vrot.lane.b32.xlu0 %v6009, 32
      %v7386 = vpop.permute.xlu0 %7385
      %7387 = vrot.lane.b32.xlu0 %v6010, 32
      %v7388 = vpop.permute.xlu0 %7387
      %v7390 = vsel %vm2341, %v7358, 0
      %v7393 = vsel %vm2341, %v7360, 0
      %v7396 = vsel %vm2341, %v7362, 0
      %v7399 = vsel %vm2341, %v7364, 0
      %v7402 = vsel %vm2341, %v7366, 0
      %v7405 = vsel %vm2341, %v7368, 0
      %v7408 = vsel %vm2341, %v7370, 0
      %v7411 = vsel %vm2341, %v7372, 0
      %v7414 = vsel %vm2341, %v7374, 0
      %v7417 = vsel %vm2341, %v7376, 0
      %v7420 = vsel %vm2341, %v7378, 0
      %v7423 = vsel %vm2341, %v7380, 0
      %v7426 = vsel %vm2341, %v7382, 0
      %v7429 = vsel %vm2341, %v7384, 0
      %v7432 = vsel %vm2341, %v7386, 0
      %v7435 = vsel %vm2341, %v7388, 0
      %7437 = vmatpush.bf16.xpose.msra.mxu0 %v7435
      %7438 = vmatpush.bf16.xpose.msra.mxu0 %v7432
      %7439 = vmatpush.bf16.xpose.msra.mxu0 %v7429
      %7440 = vmatpush.bf16.xpose.msra.mxu0 %v7426
      %7441 = vmatpush.bf16.xpose.msra.mxu0 %v7423
      %7442 = vmatpush.bf16.xpose.msra.mxu0 %v7420
      %7443 = vmatpush.bf16.xpose.msra.mxu0 %v7417
      %7444 = vmatpush.bf16.xpose.msra.mxu0 %v7414
      %7445 = vmatmul.bf16.gmra.mxu0 %v7390
      %v7446 = vpop.f32.mrf.mxu0
      %v7447 = vadd.f32 %v1619, %v7446
      %v7448 = vpop.f32.mrf.mxu0
      %v7449 = vadd.f32 %v1620, %v7448
      %7450 = vmatmul.bf16.gmra.mxu0 %v7393
      %v7451 = vpop.f32.mrf.mxu0
      %v7452 = vadd.f32 %v1621, %v7451
      %v7453 = vpop.f32.mrf.mxu0
      %v7454 = vadd.f32 %v1622, %v7453
      %7455 = vmatmul.bf16.gmra.mxu0 %v7396
      %v7456 = vpop.f32.mrf.mxu0
      %v7457 = vadd.f32 %v1623, %v7456
      %v7458 = vpop.f32.mrf.mxu0
      %v7459 = vadd.f32 %v1624, %v7458
      %7460 = vmatmul.bf16.gmra.mxu0 %v7399
      %v7461 = vpop.f32.mrf.mxu0
      %v7462 = vadd.f32 %v1625, %v7461
      %v7463 = vpop.f32.mrf.mxu0
      %v7464 = vadd.f32 %v1626, %v7463
      %7465 = vmatmul.bf16.gmra.mxu0 %v7402
      %v7466 = vpop.f32.mrf.mxu0
      %v7467 = vadd.f32 %v1627, %v7466
      %v7468 = vpop.f32.mrf.mxu0
      %v7469 = vadd.f32 %v1628, %v7468
      %7470 = vmatmul.bf16.gmra.mxu0 %v7405
      %v7471 = vpop.f32.mrf.mxu0
      %v7472 = vadd.f32 %v1629, %v7471
      %v7473 = vpop.f32.mrf.mxu0
      %v7474 = vadd.f32 %v1630, %v7473
      %7475 = vmatmul.bf16.gmra.mxu0 %v7408
      %v7476 = vpop.f32.mrf.mxu0
      %v7477 = vadd.f32 %v1631, %v7476
      %v7478 = vpop.f32.mrf.mxu0
      %v7479 = vadd.f32 %v1632, %v7478
      %7480 = vmatmul.bf16.gmra.mxu0 %v7411
      %v7481 = vpop.f32.mrf.mxu0
      %v7482 = vadd.f32 %v1633, %v7481
      %v7483 = vpop.f32.mrf.mxu0
      %v7484 = vadd.f32 %v1634, %v7483
      %7485 = vdwg.mxu0
      %7486 = vmax.xlane.f32.xlu0 %v7447
      %v7487 = vpop.xlane.xlu0 %7486
      %7488 = vmax.xlane.f32.xlu0 %v7449
      %v7489 = vpop.xlane.xlu0 %7488
      %7490 = vmax.xlane.f32.xlu0 %v7452
      %v7491 = vpop.xlane.xlu0 %7490
      %7492 = vmax.xlane.f32.xlu0 %v7454
      %v7493 = vpop.xlane.xlu0 %7492
      %7494 = vmax.xlane.f32.xlu0 %v7457
      %v7495 = vpop.xlane.xlu0 %7494
      %7496 = vmax.xlane.f32.xlu0 %v7459
      %v7497 = vpop.xlane.xlu0 %7496
      %7498 = vmax.xlane.f32.xlu0 %v7462
      %v7499 = vpop.xlane.xlu0 %7498
      %7500 = vmax.xlane.f32.xlu0 %v7464
      %v7501 = vpop.xlane.xlu0 %7500
      %7502 = vmax.xlane.f32.xlu0 %v7467
      %v7503 = vpop.xlane.xlu0 %7502
      %7504 = vmax.xlane.f32.xlu0 %v7469
      %v7505 = vpop.xlane.xlu0 %7504
      %7506 = vmax.xlane.f32.xlu0 %v7472
      %v7507 = vpop.xlane.xlu0 %7506
      %7508 = vmax.xlane.f32.xlu0 %v7474
      %v7509 = vpop.xlane.xlu0 %7508
      %7510 = vmax.xlane.f32.xlu0 %v7477
      %v7511 = vpop.xlane.xlu0 %7510
      %7512 = vmax.xlane.f32.xlu0 %v7479
      %v7513 = vpop.xlane.xlu0 %7512
      %7514 = vmax.xlane.f32.xlu0 %v7482
      %v7515 = vpop.xlane.xlu0 %7514
      %7516 = vmax.xlane.f32.xlu0 %v7484
      %v7517 = vpop.xlane.xlu0 %7516
      %v7518 = vsub.f32 %v7447, %v7487
      %v7519 = vsub.f32 %v7449, %v7489
      %v7520 = vsub.f32 %v7452, %v7491
      %v7521 = vsub.f32 %v7454, %v7493
      %v7522 = vsub.f32 %v7457, %v7495
      %v7523 = vsub.f32 %v7459, %v7497
      %v7524 = vsub.f32 %v7462, %v7499
      %v7525 = vsub.f32 %v7464, %v7501
      %v7526 = vsub.f32 %v7467, %v7503
      %v7527 = vsub.f32 %v7469, %v7505
      %v7528 = vsub.f32 %v7472, %v7507
      %v7529 = vsub.f32 %v7474, %v7509
      %v7530 = vsub.f32 %v7477, %v7511
      %v7531 = vsub.f32 %v7479, %v7513
      %v7532 = vsub.f32 %v7482, %v7515
      %v7533 = vsub.f32 %v7484, %v7517
      %v7534 = vmul.f32 %v7518, 1.442695
      %v7535 = vpow.pop %v7534
      %v7536 = vmul.f32 %v7519, 1.442695
      %v7537 = vpow.pop %v7536
      %v7538 = vmul.f32 %v7520, 1.442695
      %v7539 = vpow.pop %v7538
      %v7540 = vmul.f32 %v7521, 1.442695
      %v7541 = vpow.pop %v7540
      %v7542 = vmul.f32 %v7522, 1.442695
      %v7543 = vpow.pop %v7542
      %v7544 = vmul.f32 %v7523, 1.442695
      %v7545 = vpow.pop %v7544
      %v7546 = vmul.f32 %v7524, 1.442695
      %v7547 = vpow.pop %v7546
      %v7548 = vmul.f32 %v7525, 1.442695
      %v7549 = vpow.pop %v7548
      %v7550 = vmul.f32 %v7526, 1.442695
      %v7551 = vpow.pop %v7550
      %v7552 = vmul.f32 %v7527, 1.442695
      %v7553 = vpow.pop %v7552
      %v7554 = vmul.f32 %v7528, 1.442695
      %v7555 = vpow.pop %v7554
      %v7556 = vmul.f32 %v7529, 1.442695
      %v7557 = vpow.pop %v7556
      %v7558 = vmul.f32 %v7530, 1.442695
      %v7559 = vpow.pop %v7558
      %v7560 = vmul.f32 %v7531, 1.442695
      %v7561 = vpow.pop %v7560
      %v7562 = vmul.f32 %v7532, 1.442695
      %v7563 = vpow.pop %v7562
      %v7564 = vmul.f32 %v7533, 1.442695
      %v7565 = vpow.pop %v7564
      %7566 = vadd.xlane.f32.xlu0 %v7535
      %v7567 = vpop.xlane.xlu0 %7566
      %7568 = vadd.xlane.f32.xlu0 %v7537
      %v7569 = vpop.xlane.xlu0 %7568
      %7570 = vadd.xlane.f32.xlu0 %v7539
      %v7571 = vpop.xlane.xlu0 %7570
      %7572 = vadd.xlane.f32.xlu0 %v7541
      %v7573 = vpop.xlane.xlu0 %7572
      %7574 = vadd.xlane.f32.xlu0 %v7543
      %v7575 = vpop.xlane.xlu0 %7574
      %7576 = vadd.xlane.f32.xlu0 %v7545
      %v7577 = vpop.xlane.xlu0 %7576
      %7578 = vadd.xlane.f32.xlu0 %v7547
      %v7579 = vpop.xlane.xlu0 %7578
      %7580 = vadd.xlane.f32.xlu0 %v7549
      %v7581 = vpop.xlane.xlu0 %7580
      %7582 = vadd.xlane.f32.xlu0 %v7551
      %v7583 = vpop.xlane.xlu0 %7582
      %7584 = vadd.xlane.f32.xlu0 %v7553
      %v7585 = vpop.xlane.xlu0 %7584
      %7586 = vadd.xlane.f32.xlu0 %v7555
      %v7587 = vpop.xlane.xlu0 %7586
      %7588 = vadd.xlane.f32.xlu0 %v7557
      %v7589 = vpop.xlane.xlu0 %7588
      %7590 = vadd.xlane.f32.xlu0 %v7559
      %v7591 = vpop.xlane.xlu0 %7590
      %7592 = vadd.xlane.f32.xlu0 %v7561
      %v7593 = vpop.xlane.xlu0 %7592
      %7594 = vadd.xlane.f32.xlu0 %v7563
      %v7595 = vpop.xlane.xlu0 %7594
      %7596 = vadd.xlane.f32.xlu0 %v7565
      %v7597 = vpop.xlane.xlu0 %7596
      %v7598 = vrcp.pop %v7567
      %v7599 = vrcp.pop %v7569
      %v7600 = vrcp.pop %v7571
      %v7601 = vrcp.pop %v7573
      %v7602 = vrcp.pop %v7575
      %v7603 = vrcp.pop %v7577
      %v7604 = vrcp.pop %v7579
      %v7605 = vrcp.pop %v7581
      %v7606 = vrcp.pop %v7583
      %v7607 = vrcp.pop %v7585
      %v7608 = vrcp.pop %v7587
      %v7609 = vrcp.pop %v7589
      %v7610 = vrcp.pop %v7591
      %v7611 = vrcp.pop %v7593
      %v7612 = vrcp.pop %v7595
      %v7613 = vrcp.pop %v7597
      %v7614 = vmul.f32 %v7535, %v7598
      %v7615 = vmul.f32 %v7537, %v7599
      %v7616 = vmul.f32 %v7539, %v7600
      %v7617 = vmul.f32 %v7541, %v7601
      %v7618 = vmul.f32 %v7543, %v7602
      %v7619 = vmul.f32 %v7545, %v7603
      %v7620 = vmul.f32 %v7547, %v7604
      %v7621 = vmul.f32 %v7549, %v7605
      %v7622 = vmul.f32 %v7551, %v7606
      %v7623 = vmul.f32 %v7553, %v7607
      %v7624 = vmul.f32 %v7555, %v7608
      %v7625 = vmul.f32 %v7557, %v7609
      %v7626 = vmul.f32 %v7559, %v7610
      %v7627 = vmul.f32 %v7561, %v7611
      %v7628 = vmul.f32 %v7563, %v7612
      %v7629 = vmul.f32 %v7565, %v7613
      %v7630 = vpack.c.bf16 %v7615, %v7614
      %v7631 = vpack.c.bf16 %v7617, %v7616
      %v7632 = vpack.c.bf16 %v7619, %v7618
      %v7633 = vpack.c.bf16 %v7621, %v7620
      %v7634 = vpack.c.bf16 %v7623, %v7622
      %v7635 = vpack.c.bf16 %v7625, %v7624
      %v7636 = vpack.c.bf16 %v7627, %v7626
      %v7637 = vpack.c.bf16 %v7629, %v7628
      %7638 = vrot.lane.b32.xlu0 %v6260, 32
      %v7639 = vpop.permute.xlu0 %7638
      %7640 = vrot.lane.b32.xlu0 %v6261, 32
      %v7641 = vpop.permute.xlu0 %7640
      %7642 = vrot.lane.b32.xlu0 %v6262, 32
      %v7643 = vpop.permute.xlu0 %7642
      %7644 = vrot.lane.b32.xlu0 %v6263, 32
      %v7645 = vpop.permute.xlu0 %7644
      %7646 = vrot.lane.b32.xlu0 %v6264, 32
      %v7647 = vpop.permute.xlu0 %7646
      %7648 = vrot.lane.b32.xlu0 %v6265, 32
      %v7649 = vpop.permute.xlu0 %7648
      %7650 = vrot.lane.b32.xlu0 %v6266, 32
      %v7651 = vpop.permute.xlu0 %7650
      %7652 = vrot.lane.b32.xlu0 %v6267, 32
      %v7653 = vpop.permute.xlu0 %7652
      %7662 = vmatpush.bf16.msra.mxu0 %v7653
      %7663 = vmatpush.bf16.msra.mxu0 %v7651
      %7664 = vmatpush.bf16.msra.mxu0 %v7649
      %7665 = vmatpush.bf16.msra.mxu0 %v7647
      %7666 = vmatpush.bf16.msra.mxu0 %v7645
      %7667 = vmatpush.bf16.msra.mxu0 %v7643
      %7668 = vmatpush.bf16.msra.mxu0 %v7641
      %7669 = vmatpush.bf16.msra.mxu0 %v7639
      %7670 = vmatmul.bf16.gmra.mxu0 %v7630
      %v7671 = vpop.f32.mrf.mxu0
      %v7672 = vadd.f32 0.0, %v7671
      %v7673 = vpop.f32.mrf.mxu0
      %v7674 = vadd.f32 0.0, %v7673
      %7675 = vmatmul.bf16.gmra.mxu0 %v7631
      %v7676 = vpop.f32.mrf.mxu0
      %v7677 = vadd.f32 0.0, %v7676
      %v7678 = vpop.f32.mrf.mxu0
      %v7679 = vadd.f32 0.0, %v7678
      %7680 = vmatmul.bf16.gmra.mxu0 %v7632
      %v7681 = vpop.f32.mrf.mxu0
      %v7682 = vadd.f32 0.0, %v7681
      %v7683 = vpop.f32.mrf.mxu0
      %v7684 = vadd.f32 0.0, %v7683
      %7685 = vmatmul.bf16.gmra.mxu0 %v7633
      %v7686 = vpop.f32.mrf.mxu0
      %v7687 = vadd.f32 0.0, %v7686
      %v7688 = vpop.f32.mrf.mxu0
      %v7689 = vadd.f32 0.0, %v7688
      %7690 = vmatmul.bf16.gmra.mxu0 %v7634
      %v7691 = vpop.f32.mrf.mxu0
      %v7692 = vadd.f32 0.0, %v7691
      %v7693 = vpop.f32.mrf.mxu0
      %v7694 = vadd.f32 0.0, %v7693
      %7695 = vmatmul.bf16.gmra.mxu0 %v7635
      %v7696 = vpop.f32.mrf.mxu0
      %v7697 = vadd.f32 0.0, %v7696
      %v7698 = vpop.f32.mrf.mxu0
      %v7699 = vadd.f32 0.0, %v7698
      %7700 = vmatmul.bf16.gmra.mxu0 %v7636
      %v7701 = vpop.f32.mrf.mxu0
      %v7702 = vadd.f32 0.0, %v7701
      %v7703 = vpop.f32.mrf.mxu0
      %v7704 = vadd.f32 0.0, %v7703
      %7705 = vmatmul.bf16.gmra.mxu0 %v7637
      %v7706 = vpop.f32.mrf.mxu0
      %v7707 = vadd.f32 0.0, %v7706
      %v7708 = vpop.f32.mrf.mxu0
      %v7709 = vadd.f32 0.0, %v7708
      %7710 = vdwg.mxu0
      %v7711 = vld [vmem:[%s6317 + $0x30] sm:$0xf]
      %v7712 = vld [vmem:[%s6317 + $0x34] sm:$0xf]
      %v7713 = vld [vmem:[%s6317 + $0x38] sm:$0xf]
      %v7714 = vld [vmem:[%s6317 + $0x3c] sm:$0xf]
      %v7715 = vpack.c.bf16 %v7674, %v7672
      %v7716 = vpack.c.bf16 %v7679, %v7677
      %v7717 = vpack.c.bf16 %v7684, %v7682
      %v7718 = vpack.c.bf16 %v7689, %v7687
      %v7719 = vpack.c.bf16 %v7694, %v7692
      %v7720 = vpack.c.bf16 %v7699, %v7697
      %v7721 = vpack.c.bf16 %v7704, %v7702
      %v7722 = vpack.c.bf16 %v7709, %v7707
      %v7727 = vunpack.c.l.b16 %v7711
      %v7728 = vunpack.c.l.b16 %v7712
      %v7729 = vunpack.c.l.b16 %v7713
      %v7730 = vunpack.c.l.b16 %v7714
      %v7731 = vpack.c.b16 %v7728, %v7727
      %v7732 = vpack.c.b16 %v7730, %v7729
      %v7736 = vsel %vm2341, %v7715, 0
      %v7739 = vsel %vm2341, %v7716, 0
      %v7742 = vsel %vm2341, %v7717, 0
      %v7745 = vsel %vm2341, %v7718, 0
      %v7748 = vsel %vm2341, %v7719, 0
      %v7751 = vsel %vm2341, %v7720, 0
      %v7754 = vsel %vm2341, %v7721, 0
      %v7757 = vsel %vm2341, %v7722, 0
      %7759 = vmatpush.bf16.msra.mxu0 0
      %7760 = vmatpush.bf16.msra.mxu0 0
      %7761 = vmatpush.bf16.msra.mxu0 0
      %7762 = vmatpush.bf16.msra.mxu0 0
      %7763 = vmatpush.bf16.msra.mxu0 0
      %7764 = vmatpush.bf16.msra.mxu0 0
      %7765 = vmatpush.bf16.msra.mxu0 %v7732
      %7766 = vmatpush.bf16.msra.mxu0 %v7731
      %7767 = vmatmul.bf16.gmra.mxu0 %v7736
      %v7768 = vpop.f32.mrf.mxu0
      %v7769 = vadd.f32 0.0, %v7768
      %v7770 = vpop.f32.mrf.mxu0
      %v7771 = vadd.f32 0.0, %v7770
      %7772 = vmatmul.bf16.gmra.mxu0 %v7739
      %v7773 = vpop.f32.mrf.mxu0
      %v7774 = vadd.f32 0.0, %v7773
      %v7775 = vpop.f32.mrf.mxu0
      %v7776 = vadd.f32 0.0, %v7775
      %7777 = vmatmul.bf16.gmra.mxu0 %v7742
      %v7778 = vpop.f32.mrf.mxu0
      %v7779 = vadd.f32 0.0, %v7778
      %v7780 = vpop.f32.mrf.mxu0
      %v7781 = vadd.f32 0.0, %v7780
      %7782 = vmatmul.bf16.gmra.mxu0 %v7745
      %v7783 = vpop.f32.mrf.mxu0
      %v7784 = vadd.f32 0.0, %v7783
      %v7785 = vpop.f32.mrf.mxu0
      %v7786 = vadd.f32 0.0, %v7785
      %7787 = vmatmul.bf16.gmra.mxu0 %v7748
      %v7788 = vpop.f32.mrf.mxu0
      %v7789 = vadd.f32 0.0, %v7788
      %v7790 = vpop.f32.mrf.mxu0
      %v7791 = vadd.f32 0.0, %v7790
      %7792 = vmatmul.bf16.gmra.mxu0 %v7751
      %v7793 = vpop.f32.mrf.mxu0
      %v7794 = vadd.f32 0.0, %v7793
      %v7795 = vpop.f32.mrf.mxu0
      %v7796 = vadd.f32 0.0, %v7795
      %7797 = vmatmul.bf16.gmra.mxu0 %v7754
      %v7798 = vpop.f32.mrf.mxu0
      %v7799 = vadd.f32 0.0, %v7798
      %v7800 = vpop.f32.mrf.mxu0
      %v7801 = vadd.f32 0.0, %v7800
      %7802 = vmatmul.bf16.gmra.mxu0 %v7757
      %v7803 = vpop.f32.mrf.mxu0
      %v7804 = vadd.f32 0.0, %v7803
      %v7805 = vpop.f32.mrf.mxu0
      %v7806 = vadd.f32 0.0, %v7805
      %7807 = vdwg.mxu0
      %v7808 = vadd.f32 %v7341, %v7769
      %v7809 = vadd.f32 %v7342, %v7771
      %v7810 = vadd.f32 %v7343, %v7774
      %v7811 = vadd.f32 %v7344, %v7776
      %v7812 = vadd.f32 %v7345, %v7779
      %v7813 = vadd.f32 %v7346, %v7781
      %v7814 = vadd.f32 %v7347, %v7784
      %v7815 = vadd.f32 %v7348, %v7786
      %v7816 = vadd.f32 %v7349, %v7789
      %v7817 = vadd.f32 %v7350, %v7791
      %v7818 = vadd.f32 %v7351, %v7794
      %v7819 = vadd.f32 %v7352, %v7796
      %v7820 = vadd.f32 %v7353, %v7799
      %v7821 = vadd.f32 %v7354, %v7801
      %v7822 = vadd.f32 %v7355, %v7804
      %v7823 = vadd.f32 %v7356, %v7806
      %v7824 = vadd.f32 %v5292, %v7808
      %v7825 = vadd.f32 %v5293, %v7809
      %v7826 = vadd.f32 %v5294, %v7810
      %v7827 = vadd.f32 %v5295, %v7811
      %v7828 = vadd.f32 %v5296, %v7812
      %v7829 = vadd.f32 %v5297, %v7813
      %v7830 = vadd.f32 %v5298, %v7814
      %v7831 = vadd.f32 %v5299, %v7815
      %v7832 = vadd.f32 %v5300, %v7816
      %v7833 = vadd.f32 %v5301, %v7817
      %v7834 = vadd.f32 %v5302, %v7818
      %v7835 = vadd.f32 %v5303, %v7819
      %v7836 = vadd.f32 %v5304, %v7820
      %v7837 = vadd.f32 %v5305, %v7821
      %v7838 = vadd.f32 %v5306, %v7822
      %v7839 = vadd.f32 %v5307, %v7823
      %s7840 = scalar_lea.vmem %s9, 1
      %v7841 = vld [vmem:[%s7840] sm:$0x1]
      %v7843 = vperm.slane %v7841, 0
      %v7845 = vadd.f32 %v7824, %v7843
      %v7846 = vadd.f32 %v7825, %v7843
      %v7847 = vadd.f32 %v7826, %v7843
      %v7848 = vadd.f32 %v7827, %v7843
      %v7849 = vadd.f32 %v7828, %v7843
      %v7850 = vadd.f32 %v7829, %v7843
      %v7851 = vadd.f32 %v7830, %v7843
      %v7852 = vadd.f32 %v7831, %v7843
      %v7853 = vadd.f32 %v7832, %v7843
      %v7854 = vadd.f32 %v7833, %v7843
      %v7855 = vadd.f32 %v7834, %v7843
      %v7856 = vadd.f32 %v7835, %v7843
      %v7857 = vadd.f32 %v7836, %v7843
      %v7858 = vadd.f32 %v7837, %v7843
      %v7859 = vadd.f32 %v7838, %v7843
      %v7860 = vadd.f32 %v7839, %v7843
      %s7861 = scalar_lea.vmem %s10, 1
      %v7862 = vld [vmem:[%s7861] sm:$0x1]
      %s7863 = scalar_lea.vmem %s11, 1
      %v7864 = vld [vmem:[%s7863] sm:$0x1]
      %7865 = vadd.xlane.f32.xlu0 %v7845
      %v7866 = vpop.xlane.xlu0 %7865
      %7867 = vadd.xlane.f32.xlu0 %v7846
      %v7868 = vpop.xlane.xlu0 %7867
      %7869 = vadd.xlane.f32.xlu0 %v7847
      %v7870 = vpop.xlane.xlu0 %7869
      %7871 = vadd.xlane.f32.xlu0 %v7848
      %v7872 = vpop.xlane.xlu0 %7871
      %7873 = vadd.xlane.f32.xlu0 %v7849
      %v7874 = vpop.xlane.xlu0 %7873
      %7875 = vadd.xlane.f32.xlu0 %v7850
      %v7876 = vpop.xlane.xlu0 %7875
      %7877 = vadd.xlane.f32.xlu0 %v7851
      %v7878 = vpop.xlane.xlu0 %7877
      %7879 = vadd.xlane.f32.xlu0 %v7852
      %v7880 = vpop.xlane.xlu0 %7879
      %7881 = vadd.xlane.f32.xlu0 %v7853
      %v7882 = vpop.xlane.xlu0 %7881
      %7883 = vadd.xlane.f32.xlu0 %v7854
      %v7884 = vpop.xlane.xlu0 %7883
      %7885 = vadd.xlane.f32.xlu0 %v7855
      %v7886 = vpop.xlane.xlu0 %7885
      %7887 = vadd.xlane.f32.xlu0 %v7856
      %v7888 = vpop.xlane.xlu0 %7887
      %7889 = vadd.xlane.f32.xlu0 %v7857
      %v7890 = vpop.xlane.xlu0 %7889
      %7891 = vadd.xlane.f32.xlu0 %v7858
      %v7892 = vpop.xlane.xlu0 %7891
      %7893 = vadd.xlane.f32.xlu0 %v7859
      %v7894 = vpop.xlane.xlu0 %7893
      %7895 = vadd.xlane.f32.xlu0 %v7860
      %v7896 = vpop.xlane.xlu0 %7895
      %v7897 = vmul.f32 %v7866, %v1675
      %v7898 = vmul.f32 %v7868, %v1675
      %v7899 = vmul.f32 %v7870, %v1675
      %v7900 = vmul.f32 %v7872, %v1675
      %v7901 = vmul.f32 %v7874, %v1675
      %v7902 = vmul.f32 %v7876, %v1675
      %v7903 = vmul.f32 %v7878, %v1675
      %v7904 = vmul.f32 %v7880, %v1675
      %v7905 = vmul.f32 %v7882, %v1675
      %v7906 = vmul.f32 %v7884, %v1675
      %v7907 = vmul.f32 %v7886, %v1675
      %v7908 = vmul.f32 %v7888, %v1675
      %v7909 = vmul.f32 %v7890, %v1675
      %v7910 = vmul.f32 %v7892, %v1675
      %v7911 = vmul.f32 %v7894, %v1675
      %v7912 = vmul.f32 %v7896, %v1675
      %v7913 = vsub.f32 %v7845, %v7897
      %v7914 = vsub.f32 %v7846, %v7898
      %v7915 = vsub.f32 %v7847, %v7899
      %v7916 = vsub.f32 %v7848, %v7900
      %v7917 = vsub.f32 %v7849, %v7901
      %v7918 = vsub.f32 %v7850, %v7902
      %v7919 = vsub.f32 %v7851, %v7903
      %v7920 = vsub.f32 %v7852, %v7904
      %v7921 = vsub.f32 %v7853, %v7905
      %v7922 = vsub.f32 %v7854, %v7906
      %v7923 = vsub.f32 %v7855, %v7907
      %v7924 = vsub.f32 %v7856, %v7908
      %v7925 = vsub.f32 %v7857, %v7909
      %v7926 = vsub.f32 %v7858, %v7910
      %v7927 = vsub.f32 %v7859, %v7911
      %v7928 = vsub.f32 %v7860, %v7912
      %v7929 = vmul.f32 %v7913, %v7913
      %v7930 = vmul.f32 %v7914, %v7914
      %v7931 = vmul.f32 %v7915, %v7915
      %v7932 = vmul.f32 %v7916, %v7916
      %v7933 = vmul.f32 %v7917, %v7917
      %v7934 = vmul.f32 %v7918, %v7918
      %v7935 = vmul.f32 %v7919, %v7919
      %v7936 = vmul.f32 %v7920, %v7920
      %v7937 = vmul.f32 %v7921, %v7921
      %v7938 = vmul.f32 %v7922, %v7922
      %v7939 = vmul.f32 %v7923, %v7923
      %v7940 = vmul.f32 %v7924, %v7924
      %v7941 = vmul.f32 %v7925, %v7925
      %v7942 = vmul.f32 %v7926, %v7926
      %v7943 = vmul.f32 %v7927, %v7927
      %v7944 = vmul.f32 %v7928, %v7928
      %7945 = vadd.xlane.f32.xlu0 %v7929
      %v7946 = vpop.xlane.xlu0 %7945
      %7947 = vadd.xlane.f32.xlu0 %v7930
      %v7948 = vpop.xlane.xlu0 %7947
      %7949 = vadd.xlane.f32.xlu0 %v7931
      %v7950 = vpop.xlane.xlu0 %7949
      %7951 = vadd.xlane.f32.xlu0 %v7932
      %v7952 = vpop.xlane.xlu0 %7951
      %7953 = vadd.xlane.f32.xlu0 %v7933
      %v7954 = vpop.xlane.xlu0 %7953
      %7955 = vadd.xlane.f32.xlu0 %v7934
      %v7956 = vpop.xlane.xlu0 %7955
      %7957 = vadd.xlane.f32.xlu0 %v7935
      %v7958 = vpop.xlane.xlu0 %7957
      %7959 = vadd.xlane.f32.xlu0 %v7936
      %v7960 = vpop.xlane.xlu0 %7959
      %7961 = vadd.xlane.f32.xlu0 %v7937
      %v7962 = vpop.xlane.xlu0 %7961
      %7963 = vadd.xlane.f32.xlu0 %v7938
      %v7964 = vpop.xlane.xlu0 %7963
      %7965 = vadd.xlane.f32.xlu0 %v7939
      %v7966 = vpop.xlane.xlu0 %7965
      %7967 = vadd.xlane.f32.xlu0 %v7940
      %v7968 = vpop.xlane.xlu0 %7967
      %7969 = vadd.xlane.f32.xlu0 %v7941
      %v7970 = vpop.xlane.xlu0 %7969
      %7971 = vadd.xlane.f32.xlu0 %v7942
      %v7972 = vpop.xlane.xlu0 %7971
      %7973 = vadd.xlane.f32.xlu0 %v7943
      %v7974 = vpop.xlane.xlu0 %7973
      %7975 = vadd.xlane.f32.xlu0 %v7944
      %v7976 = vpop.xlane.xlu0 %7975
      %v7977 = vmul.f32 %v7946, %v1675
      %v7978 = vmul.f32 %v7948, %v1675
      %v7979 = vmul.f32 %v7950, %v1675
      %v7980 = vmul.f32 %v7952, %v1675
      %v7981 = vmul.f32 %v7954, %v1675
      %v7982 = vmul.f32 %v7956, %v1675
      %v7983 = vmul.f32 %v7958, %v1675
      %v7984 = vmul.f32 %v7960, %v1675
      %v7985 = vmul.f32 %v7962, %v1675
      %v7986 = vmul.f32 %v7964, %v1675
      %v7987 = vmul.f32 %v7966, %v1675
      %v7988 = vmul.f32 %v7968, %v1675
      %v7989 = vmul.f32 %v7970, %v1675
      %v7990 = vmul.f32 %v7972, %v1675
      %v7991 = vmul.f32 %v7974, %v1675
      %v7992 = vmul.f32 %v7976, %v1675
      %v7993 = vadd.f32 %v7977, 1e-06
      %v7994 = vadd.f32 %v7978, 1e-06
      %v7995 = vadd.f32 %v7979, 1e-06
      %v7996 = vadd.f32 %v7980, 1e-06
      %v7997 = vadd.f32 %v7981, 1e-06
      %v7998 = vadd.f32 %v7982, 1e-06
      %v7999 = vadd.f32 %v7983, 1e-06
      %v8000 = vadd.f32 %v7984, 1e-06
      %v8001 = vadd.f32 %v7985, 1e-06
      %v8002 = vadd.f32 %v7986, 1e-06
      %v8003 = vadd.f32 %v7987, 1e-06
      %v8004 = vadd.f32 %v7988, 1e-06
      %v8005 = vadd.f32 %v7989, 1e-06
      %v8006 = vadd.f32 %v7990, 1e-06
      %v8007 = vadd.f32 %v7991, 1e-06
      %v8008 = vadd.f32 %v7992, 1e-06
      %v8009 = vrsqrt.pop %v7993
      %v8010 = vmul.f32 %v8009, %v7993
      %v8011 = vmul.f32 %v8010, %v8009
      %v8012 = vmul.f32 0.5, %v8011
      %v8013 = vsub.f32 1.5, %v8012
      %v8014 = vmul.f32 %v8009, %v8013
      %vm8015 = vweird.f32 %v7993
      %vm8016 = vweird.f32 %v8009
      %vm8017 = vmor %vm8015, %vm8016
      %v8018 = vsel %vm8017, %v8009, %v8014
      %v8019 = vrsqrt.pop %v7994
      %v8020 = vmul.f32 %v8019, %v7994
      %v8021 = vmul.f32 %v8020, %v8019
      %v8022 = vmul.f32 0.5, %v8021
      %v8023 = vsub.f32 1.5, %v8022
      %v8024 = vmul.f32 %v8019, %v8023
      %vm8025 = vweird.f32 %v7994
      %vm8026 = vweird.f32 %v8019
      %vm8027 = vmor %vm8025, %vm8026
      %v8028 = vsel %vm8027, %v8019, %v8024
      %v8029 = vrsqrt.pop %v7995
      %v8030 = vmul.f32 %v8029, %v7995
      %v8031 = vmul.f32 %v8030, %v8029
      %v8032 = vmul.f32 0.5, %v8031
      %v8033 = vsub.f32 1.5, %v8032
      %v8034 = vmul.f32 %v8029, %v8033
      %vm8035 = vweird.f32 %v7995
      %vm8036 = vweird.f32 %v8029
      %vm8037 = vmor %vm8035, %vm8036
      %v8038 = vsel %vm8037, %v8029, %v8034
      %v8039 = vrsqrt.pop %v7996
      %v8040 = vmul.f32 %v8039, %v7996
      %v8041 = vmul.f32 %v8040, %v8039
      %v8042 = vmul.f32 0.5, %v8041
      %v8043 = vsub.f32 1.5, %v8042
      %v8044 = vmul.f32 %v8039, %v8043
      %vm8045 = vweird.f32 %v7996
      %vm8046 = vweird.f32 %v8039
      %vm8047 = vmor %vm8045, %vm8046
      %v8048 = vsel %vm8047, %v8039, %v8044
      %v8049 = vrsqrt.pop %v7997
      %v8050 = vmul.f32 %v8049, %v7997
      %v8051 = vmul.f32 %v8050, %v8049
      %v8052 = vmul.f32 0.5, %v8051
      %v8053 = vsub.f32 1.5, %v8052
      %v8054 = vmul.f32 %v8049, %v8053
      %vm8055 = vweird.f32 %v7997
      %vm8056 = vweird.f32 %v8049
      %vm8057 = vmor %vm8055, %vm8056
      %v8058 = vsel %vm8057, %v8049, %v8054
      %v8059 = vrsqrt.pop %v7998
      %v8060 = vmul.f32 %v8059, %v7998
      %v8061 = vmul.f32 %v8060, %v8059
      %v8062 = vmul.f32 0.5, %v8061
      %v8063 = vsub.f32 1.5, %v8062
      %v8064 = vmul.f32 %v8059, %v8063
      %vm8065 = vweird.f32 %v7998
      %vm8066 = vweird.f32 %v8059
      %vm8067 = vmor %vm8065, %vm8066
      %v8068 = vsel %vm8067, %v8059, %v8064
      %v8069 = vrsqrt.pop %v7999
      %v8070 = vmul.f32 %v8069, %v7999
      %v8071 = vmul.f32 %v8070, %v8069
      %v8072 = vmul.f32 0.5, %v8071
      %v8073 = vsub.f32 1.5, %v8072
      %v8074 = vmul.f32 %v8069, %v8073
      %vm8075 = vweird.f32 %v7999
      %vm8076 = vweird.f32 %v8069
      %vm8077 = vmor %vm8075, %vm8076
      %v8078 = vsel %vm8077, %v8069, %v8074
      %v8079 = vrsqrt.pop %v8000
      %v8080 = vmul.f32 %v8079, %v8000
      %v8081 = vmul.f32 %v8080, %v8079
      %v8082 = vmul.f32 0.5, %v8081
      %v8083 = vsub.f32 1.5, %v8082
      %v8084 = vmul.f32 %v8079, %v8083
      %vm8085 = vweird.f32 %v8000
      %vm8086 = vweird.f32 %v8079
      %vm8087 = vmor %vm8085, %vm8086
      %v8088 = vsel %vm8087, %v8079, %v8084
      %v8089 = vrsqrt.pop %v8001
      %v8090 = vmul.f32 %v8089, %v8001
      %v8091 = vmul.f32 %v8090, %v8089
      %v8092 = vmul.f32 0.5, %v8091
      %v8093 = vsub.f32 1.5, %v8092
      %v8094 = vmul.f32 %v8089, %v8093
      %vm8095 = vweird.f32 %v8001
      %vm8096 = vweird.f32 %v8089
      %vm8097 = vmor %vm8095, %vm8096
      %v8098 = vsel %vm8097, %v8089, %v8094
      %v8099 = vrsqrt.pop %v8002
      %v8100 = vmul.f32 %v8099, %v8002
      %v8101 = vmul.f32 %v8100, %v8099
      %v8102 = vmul.f32 0.5, %v8101
      %v8103 = vsub.f32 1.5, %v8102
      %v8104 = vmul.f32 %v8099, %v8103
      %vm8105 = vweird.f32 %v8002
      %vm8106 = vweird.f32 %v8099
      %vm8107 = vmor %vm8105, %vm8106
      %v8108 = vsel %vm8107, %v8099, %v8104
      %v8109 = vrsqrt.pop %v8003
      %v8110 = vmul.f32 %v8109, %v8003
      %v8111 = vmul.f32 %v8110, %v8109
      %v8112 = vmul.f32 0.5, %v8111
      %v8113 = vsub.f32 1.5, %v8112
      %v8114 = vmul.f32 %v8109, %v8113
      %vm8115 = vweird.f32 %v8003
      %vm8116 = vweird.f32 %v8109
      %vm8117 = vmor %vm8115, %vm8116
      %v8118 = vsel %vm8117, %v8109, %v8114
      %v8119 = vrsqrt.pop %v8004
      %v8120 = vmul.f32 %v8119, %v8004
      %v8121 = vmul.f32 %v8120, %v8119
      %v8122 = vmul.f32 0.5, %v8121
      %v8123 = vsub.f32 1.5, %v8122
      %v8124 = vmul.f32 %v8119, %v8123
      %vm8125 = vweird.f32 %v8004
      %vm8126 = vweird.f32 %v8119
      %vm8127 = vmor %vm8125, %vm8126
      %v8128 = vsel %vm8127, %v8119, %v8124
      %v8129 = vrsqrt.pop %v8005
      %v8130 = vmul.f32 %v8129, %v8005
      %v8131 = vmul.f32 %v8130, %v8129
      %v8132 = vmul.f32 0.5, %v8131
      %v8133 = vsub.f32 1.5, %v8132
      %v8134 = vmul.f32 %v8129, %v8133
      %vm8135 = vweird.f32 %v8005
      %vm8136 = vweird.f32 %v8129
      %vm8137 = vmor %vm8135, %vm8136
      %v8138 = vsel %vm8137, %v8129, %v8134
      %v8139 = vrsqrt.pop %v8006
      %v8140 = vmul.f32 %v8139, %v8006
      %v8141 = vmul.f32 %v8140, %v8139
      %v8142 = vmul.f32 0.5, %v8141
      %v8143 = vsub.f32 1.5, %v8142
      %v8144 = vmul.f32 %v8139, %v8143
      %vm8145 = vweird.f32 %v8006
      %vm8146 = vweird.f32 %v8139
      %vm8147 = vmor %vm8145, %vm8146
      %v8148 = vsel %vm8147, %v8139, %v8144
      %v8149 = vrsqrt.pop %v8007
      %v8150 = vmul.f32 %v8149, %v8007
      %v8151 = vmul.f32 %v8150, %v8149
      %v8152 = vmul.f32 0.5, %v8151
      %v8153 = vsub.f32 1.5, %v8152
      %v8154 = vmul.f32 %v8149, %v8153
      %vm8155 = vweird.f32 %v8007
      %vm8156 = vweird.f32 %v8149
      %vm8157 = vmor %vm8155, %vm8156
      %v8158 = vsel %vm8157, %v8149, %v8154
      %v8159 = vrsqrt.pop %v8008
      %v8160 = vmul.f32 %v8159, %v8008
      %v8161 = vmul.f32 %v8160, %v8159
      %v8162 = vmul.f32 0.5, %v8161
      %v8163 = vsub.f32 1.5, %v8162
      %v8164 = vmul.f32 %v8159, %v8163
      %vm8165 = vweird.f32 %v8008
      %vm8166 = vweird.f32 %v8159
      %vm8167 = vmor %vm8165, %vm8166
      %v8168 = vsel %vm8167, %v8159, %v8164
      %v8169 = vmul.f32 %v7913, %v8018
      %v8170 = vmul.f32 %v7914, %v8028
      %v8171 = vmul.f32 %v7915, %v8038
      %v8172 = vmul.f32 %v7916, %v8048
      %v8173 = vmul.f32 %v7917, %v8058
      %v8174 = vmul.f32 %v7918, %v8068
      %v8175 = vmul.f32 %v7919, %v8078
      %v8176 = vmul.f32 %v7920, %v8088
      %v8177 = vmul.f32 %v7921, %v8098
      %v8178 = vmul.f32 %v7922, %v8108
      %v8179 = vmul.f32 %v7923, %v8118
      %v8180 = vmul.f32 %v7924, %v8128
      %v8181 = vmul.f32 %v7925, %v8138
      %v8182 = vmul.f32 %v7926, %v8148
      %v8183 = vmul.f32 %v7927, %v8158
      %v8184 = vmul.f32 %v7928, %v8168
      %v8186 = vperm.slane %v7862, 0
      %v8188 = vmul.f32 %v8169, %v8186
      %v8189 = vmul.f32 %v8170, %v8186
      %v8190 = vmul.f32 %v8171, %v8186
      %v8191 = vmul.f32 %v8172, %v8186
      %v8192 = vmul.f32 %v8173, %v8186
      %v8193 = vmul.f32 %v8174, %v8186
      %v8194 = vmul.f32 %v8175, %v8186
      %v8195 = vmul.f32 %v8176, %v8186
      %v8196 = vmul.f32 %v8177, %v8186
      %v8197 = vmul.f32 %v8178, %v8186
      %v8198 = vmul.f32 %v8179, %v8186
      %v8199 = vmul.f32 %v8180, %v8186
      %v8200 = vmul.f32 %v8181, %v8186
      %v8201 = vmul.f32 %v8182, %v8186
      %v8202 = vmul.f32 %v8183, %v8186
      %v8203 = vmul.f32 %v8184, %v8186
      %v8205 = vperm.slane %v7864, 0
      %v8207 = vadd.f32 %v8188, %v8205
      %v8208 = vadd.f32 %v8189, %v8205
      %v8209 = vadd.f32 %v8190, %v8205
      %v8210 = vadd.f32 %v8191, %v8205
      %v8211 = vadd.f32 %v8192, %v8205
      %v8212 = vadd.f32 %v8193, %v8205
      %v8213 = vadd.f32 %v8194, %v8205
      %v8214 = vadd.f32 %v8195, %v8205
      %v8215 = vadd.f32 %v8196, %v8205
      %v8216 = vadd.f32 %v8197, %v8205
      %v8217 = vadd.f32 %v8198, %v8205
      %v8218 = vadd.f32 %v8199, %v8205
      %v8219 = vadd.f32 %v8200, %v8205
      %v8220 = vadd.f32 %v8201, %v8205
      %v8221 = vadd.f32 %v8202, %v8205
      %v8222 = vadd.f32 %v8203, %v8205
      %s8223 = scalar_lea.vmem %s12, 128
      %v8224 = vld [vmem:[%s8223] sm:$0xff]
      %v8225 = vld [vmem:[%s8223 + $0x8] sm:$0xff]
      %v8226 = vld [vmem:[%s8223 + $0x10] sm:$0xff]
      %v8227 = vld [vmem:[%s8223 + $0x18] sm:$0xff]
      %v8228 = vld [vmem:[%s8223 + $0x20] sm:$0xff]
      %v8229 = vld [vmem:[%s8223 + $0x28] sm:$0xff]
      %v8230 = vld [vmem:[%s8223 + $0x30] sm:$0xff]
      %v8231 = vld [vmem:[%s8223 + $0x38] sm:$0xff]
      %v8232 = vld [vmem:[%s8223 + $0x40] sm:$0xff]
      %v8233 = vld [vmem:[%s8223 + $0x48] sm:$0xff]
      %v8234 = vld [vmem:[%s8223 + $0x50] sm:$0xff]
      %v8235 = vld [vmem:[%s8223 + $0x58] sm:$0xff]
      %v8236 = vld [vmem:[%s8223 + $0x60] sm:$0xff]
      %v8237 = vld [vmem:[%s8223 + $0x68] sm:$0xff]
      %v8238 = vld [vmem:[%s8223 + $0x70] sm:$0xff]
      %v8239 = vld [vmem:[%s8223 + $0x78] sm:$0xff]
      %s8240 = scalar_lea.vmem %s13, 2
      %v8241 = vld [vmem:[%s8240] sm:$0x3]
      %v8242 = vpack.c.bf16 %v8208, %v8207
      %v8243 = vpack.c.bf16 %v8210, %v8209
      %v8244 = vpack.c.bf16 %v8212, %v8211
      %v8245 = vpack.c.bf16 %v8214, %v8213
      %v8246 = vpack.c.bf16 %v8216, %v8215
      %v8247 = vpack.c.bf16 %v8218, %v8217
      %v8248 = vpack.c.bf16 %v8220, %v8219
      %v8249 = vpack.c.bf16 %v8222, %v8221
      %v8251 = vperm.slane %v8241, 0
      %v8252 = vperm.slane %v8241, 1
      %v8271 = vunpack.c.l.b16 %v8224
      %v8272 = vunpack.c.h.b16 %v8224
      %v8273 = vunpack.c.l.b16 %v8225
      %v8274 = vunpack.c.h.b16 %v8225
      %v8275 = vunpack.c.l.b16 %v8226
      %v8276 = vunpack.c.h.b16 %v8226
      %v8277 = vunpack.c.l.b16 %v8227
      %v8278 = vunpack.c.h.b16 %v8227
      %v8279 = vunpack.c.l.b16 %v8228
      %v8280 = vunpack.c.h.b16 %v8228
      %v8281 = vunpack.c.l.b16 %v8229
      %v8282 = vunpack.c.h.b16 %v8229
      %v8283 = vunpack.c.l.b16 %v8230
      %v8284 = vunpack.c.h.b16 %v8230
      %v8285 = vunpack.c.l.b16 %v8231
      %v8286 = vunpack.c.h.b16 %v8231
      %v8287 = vunpack.c.l.b16 %v8232
      %v8288 = vunpack.c.h.b16 %v8232
      %v8289 = vunpack.c.l.b16 %v8233
      %v8290 = vunpack.c.h.b16 %v8233
      %v8291 = vunpack.c.l.b16 %v8234
      %v8292 = vunpack.c.h.b16 %v8234
      %v8293 = vunpack.c.l.b16 %v8235
      %v8294 = vunpack.c.h.b16 %v8235
      %v8295 = vunpack.c.l.b16 %v8236
      %v8296 = vunpack.c.h.b16 %v8236
      %v8297 = vunpack.c.l.b16 %v8237
      %v8298 = vunpack.c.h.b16 %v8237
      %v8299 = vunpack.c.l.b16 %v8238
      %v8300 = vunpack.c.h.b16 %v8238
      %v8301 = vunpack.c.l.b16 %v8239
      %v8302 = vunpack.c.h.b16 %v8239
      %v8303 = vpack.c.b16 %v8273, %v8271
      %v8304 = vpack.c.b16 %v8274, %v8272
      %v8305 = vpack.c.b16 %v8277, %v8275
      %v8306 = vpack.c.b16 %v8278, %v8276
      %v8307 = vpack.c.b16 %v8281, %v8279
      %v8308 = vpack.c.b16 %v8282, %v8280
      %v8309 = vpack.c.b16 %v8285, %v8283
      %v8310 = vpack.c.b16 %v8286, %v8284
      %v8311 = vpack.c.b16 %v8289, %v8287
      %v8312 = vpack.c.b16 %v8290, %v8288
      %v8313 = vpack.c.b16 %v8293, %v8291
      %v8314 = vpack.c.b16 %v8294, %v8292
      %v8315 = vpack.c.b16 %v8297, %v8295
      %v8316 = vpack.c.b16 %v8298, %v8296
      %v8317 = vpack.c.b16 %v8301, %v8299
      %v8318 = vpack.c.b16 %v8302, %v8300
      %8335 = vmatpush.bf16.msra.mxu0 %v8317
      %8336 = vmatpush.bf16.msra.mxu0 %v8315
      %8337 = vmatpush.bf16.msra.mxu0 %v8313
      %8338 = vmatpush.bf16.msra.mxu0 %v8311
      %8339 = vmatpush.bf16.msra.mxu0 %v8309
      %8340 = vmatpush.bf16.msra.mxu0 %v8307
      %8341 = vmatpush.bf16.msra.mxu0 %v8305
      %8342 = vmatpush.bf16.msra.mxu0 %v8303
      %8343 = vmatmul.bf16.gmra.mxu0 %v8242
      %v8344 = vpop.f32.mrf.mxu0
      %v8345 = vadd.f32 %v8251, %v8344
      %v8346 = vpop.f32.mrf.mxu0
      %v8347 = vadd.f32 %v8251, %v8346
      %8348 = vmatmul.bf16.gmra.mxu0 %v8243
      %v8349 = vpop.f32.mrf.mxu0
      %v8350 = vadd.f32 %v8251, %v8349
      %v8351 = vpop.f32.mrf.mxu0
      %v8352 = vadd.f32 %v8251, %v8351
      %8353 = vmatmul.bf16.gmra.mxu0 %v8244
      %v8354 = vpop.f32.mrf.mxu0
      %v8355 = vadd.f32 %v8251, %v8354
      %v8356 = vpop.f32.mrf.mxu0
      %v8357 = vadd.f32 %v8251, %v8356
      %8358 = vmatmul.bf16.gmra.mxu0 %v8245
      %v8359 = vpop.f32.mrf.mxu0
      %v8360 = vadd.f32 %v8251, %v8359
      %v8361 = vpop.f32.mrf.mxu0
      %v8362 = vadd.f32 %v8251, %v8361
      %8363 = vmatmul.bf16.gmra.mxu0 %v8246
      %v8364 = vpop.f32.mrf.mxu0
      %v8365 = vadd.f32 %v8251, %v8364
      %v8366 = vpop.f32.mrf.mxu0
      %v8367 = vadd.f32 %v8251, %v8366
      %8368 = vmatmul.bf16.gmra.mxu0 %v8247
      %v8369 = vpop.f32.mrf.mxu0
      %v8370 = vadd.f32 %v8251, %v8369
      %v8371 = vpop.f32.mrf.mxu0
      %v8372 = vadd.f32 %v8251, %v8371
      %8373 = vmatmul.bf16.gmra.mxu0 %v8248
      %v8374 = vpop.f32.mrf.mxu0
      %v8375 = vadd.f32 %v8251, %v8374
      %v8376 = vpop.f32.mrf.mxu0
      %v8377 = vadd.f32 %v8251, %v8376
      %8378 = vmatmul.bf16.gmra.mxu0 %v8249
      %v8379 = vpop.f32.mrf.mxu0
      %v8380 = vadd.f32 %v8251, %v8379
      %v8381 = vpop.f32.mrf.mxu0
      %v8382 = vadd.f32 %v8251, %v8381
      %8383 = vdwg.mxu0
      %8384 = vmatpush.bf16.msra.mxu0 %v8318
      %8385 = vmatpush.bf16.msra.mxu0 %v8316
      %8386 = vmatpush.bf16.msra.mxu0 %v8314
      %8387 = vmatpush.bf16.msra.mxu0 %v8312
      %8388 = vmatpush.bf16.msra.mxu0 %v8310
      %8389 = vmatpush.bf16.msra.mxu0 %v8308
      %8390 = vmatpush.bf16.msra.mxu0 %v8306
      %8391 = vmatpush.bf16.msra.mxu0 %v8304
      %8392 = vmatmul.bf16.gmra.mxu0 %v8242
      %v8393 = vpop.f32.mrf.mxu0
      %v8394 = vadd.f32 %v8252, %v8393
      %v8395 = vpop.f32.mrf.mxu0
      %v8396 = vadd.f32 %v8252, %v8395
      %8397 = vmatmul.bf16.gmra.mxu0 %v8243
      %v8398 = vpop.f32.mrf.mxu0
      %v8399 = vadd.f32 %v8252, %v8398
      %v8400 = vpop.f32.mrf.mxu0
      %v8401 = vadd.f32 %v8252, %v8400
      %8402 = vmatmul.bf16.gmra.mxu0 %v8244
      %v8403 = vpop.f32.mrf.mxu0
      %v8404 = vadd.f32 %v8252, %v8403
      %v8405 = vpop.f32.mrf.mxu0
      %v8406 = vadd.f32 %v8252, %v8405
      %8407 = vmatmul.bf16.gmra.mxu0 %v8245
      %v8408 = vpop.f32.mrf.mxu0
      %v8409 = vadd.f32 %v8252, %v8408
      %v8410 = vpop.f32.mrf.mxu0
      %v8411 = vadd.f32 %v8252, %v8410
      %8412 = vmatmul.bf16.gmra.mxu0 %v8246
      %v8413 = vpop.f32.mrf.mxu0
      %v8414 = vadd.f32 %v8252, %v8413
      %v8415 = vpop.f32.mrf.mxu0
      %v8416 = vadd.f32 %v8252, %v8415
      %8417 = vmatmul.bf16.gmra.mxu0 %v8247
      %v8418 = vpop.f32.mrf.mxu0
      %v8419 = vadd.f32 %v8252, %v8418
      %v8420 = vpop.f32.mrf.mxu0
      %v8421 = vadd.f32 %v8252, %v8420
      %8422 = vmatmul.bf16.gmra.mxu0 %v8248
      %v8423 = vpop.f32.mrf.mxu0
      %v8424 = vadd.f32 %v8252, %v8423
      %v8425 = vpop.f32.mrf.mxu0
      %v8426 = vadd.f32 %v8252, %v8425
      %8427 = vmatmul.bf16.gmra.mxu0 %v8249
      %v8428 = vpop.f32.mrf.mxu0
      %v8429 = vadd.f32 %v8252, %v8428
      %v8430 = vpop.f32.mrf.mxu0
      %v8431 = vadd.f32 %v8252, %v8430
      %8432 = vdwg.mxu0
      %v8433 = vmul.f32 %v8345, 0.5
      %v8434 = vmul.f32 %v8394, 0.5
      %v8435 = vmul.f32 %v8347, 0.5
      %v8436 = vmul.f32 %v8396, 0.5
      %v8437 = vmul.f32 %v8350, 0.5
      %v8438 = vmul.f32 %v8399, 0.5
      %v8439 = vmul.f32 %v8352, 0.5
      %v8440 = vmul.f32 %v8401, 0.5
      %v8441 = vmul.f32 %v8355, 0.5
      %v8442 = vmul.f32 %v8404, 0.5
      %v8443 = vmul.f32 %v8357, 0.5
      %v8444 = vmul.f32 %v8406, 0.5
      %v8445 = vmul.f32 %v8360, 0.5
      %v8446 = vmul.f32 %v8409, 0.5
      %v8447 = vmul.f32 %v8362, 0.5
      %v8448 = vmul.f32 %v8411, 0.5
      %v8449 = vmul.f32 %v8365, 0.5
      %v8450 = vmul.f32 %v8414, 0.5
      %v8451 = vmul.f32 %v8367, 0.5
      %v8452 = vmul.f32 %v8416, 0.5
      %v8453 = vmul.f32 %v8370, 0.5
      %v8454 = vmul.f32 %v8419, 0.5
      %v8455 = vmul.f32 %v8372, 0.5
      %v8456 = vmul.f32 %v8421, 0.5
      %v8457 = vmul.f32 %v8375, 0.5
      %v8458 = vmul.f32 %v8424, 0.5
      %v8459 = vmul.f32 %v8377, 0.5
      %v8460 = vmul.f32 %v8426, 0.5
      %v8461 = vmul.f32 %v8380, 0.5
      %v8462 = vmul.f32 %v8429, 0.5
      %v8463 = vmul.f32 %v8382, 0.5
      %v8464 = vmul.f32 %v8431, 0.5
      %v8465 = vmul.f32 %v8345, 0.044715
      %v8466 = vmul.f32 %v8394, 0.044715
      %v8467 = vmul.f32 %v8347, 0.044715
      %v8468 = vmul.f32 %v8396, 0.044715
      %v8469 = vmul.f32 %v8350, 0.044715
      %v8470 = vmul.f32 %v8399, 0.044715
      %v8471 = vmul.f32 %v8352, 0.044715
      %v8472 = vmul.f32 %v8401, 0.044715
      %v8473 = vmul.f32 %v8355, 0.044715
      %v8474 = vmul.f32 %v8404, 0.044715
      %v8475 = vmul.f32 %v8357, 0.044715
      %v8476 = vmul.f32 %v8406, 0.044715
      %v8477 = vmul.f32 %v8360, 0.044715
      %v8478 = vmul.f32 %v8409, 0.044715
      %v8479 = vmul.f32 %v8362, 0.044715
      %v8480 = vmul.f32 %v8411, 0.044715
      %v8481 = vmul.f32 %v8365, 0.044715
      %v8482 = vmul.f32 %v8414, 0.044715
      %v8483 = vmul.f32 %v8367, 0.044715
      %v8484 = vmul.f32 %v8416, 0.044715
      %v8485 = vmul.f32 %v8370, 0.044715
      %v8486 = vmul.f32 %v8419, 0.044715
      %v8487 = vmul.f32 %v8372, 0.044715
      %v8488 = vmul.f32 %v8421, 0.044715
      %v8489 = vmul.f32 %v8375, 0.044715
      %v8490 = vmul.f32 %v8424, 0.044715
      %v8491 = vmul.f32 %v8377, 0.044715
      %v8492 = vmul.f32 %v8426, 0.044715
      %v8493 = vmul.f32 %v8380, 0.044715
      %v8494 = vmul.f32 %v8429, 0.044715
      %v8495 = vmul.f32 %v8382, 0.044715
      %v8496 = vmul.f32 %v8431, 0.044715
      %v8497 = vmul.f32 %v8465, %v8345
      %v8498 = vmul.f32 %v8466, %v8394
      %v8499 = vmul.f32 %v8467, %v8347
      %v8500 = vmul.f32 %v8468, %v8396
      %v8501 = vmul.f32 %v8469, %v8350
      %v8502 = vmul.f32 %v8470, %v8399
      %v8503 = vmul.f32 %v8471, %v8352
      %v8504 = vmul.f32 %v8472, %v8401
      %v8505 = vmul.f32 %v8473, %v8355
      %v8506 = vmul.f32 %v8474, %v8404
      %v8507 = vmul.f32 %v8475, %v8357
      %v8508 = vmul.f32 %v8476, %v8406
      %v8509 = vmul.f32 %v8477, %v8360
      %v8510 = vmul.f32 %v8478, %v8409
      %v8511 = vmul.f32 %v8479, %v8362
      %v8512 = vmul.f32 %v8480, %v8411
      %v8513 = vmul.f32 %v8481, %v8365
      %v8514 = vmul.f32 %v8482, %v8414
      %v8515 = vmul.f32 %v8483, %v8367
      %v8516 = vmul.f32 %v8484, %v8416
      %v8517 = vmul.f32 %v8485, %v8370
      %v8518 = vmul.f32 %v8486, %v8419
      %v8519 = vmul.f32 %v8487, %v8372
      %v8520 = vmul.f32 %v8488, %v8421
      %v8521 = vmul.f32 %v8489, %v8375
      %v8522 = vmul.f32 %v8490, %v8424
      %v8523 = vmul.f32 %v8491, %v8377
      %v8524 = vmul.f32 %v8492, %v8426
      %v8525 = vmul.f32 %v8493, %v8380
      %v8526 = vmul.f32 %v8494, %v8429
      %v8527 = vmul.f32 %v8495, %v8382
      %v8528 = vmul.f32 %v8496, %v8431
      %v8529 = vmul.f32 %v8497, %v8345
      %v8530 = vmul.f32 %v8498, %v8394
      %v8531 = vmul.f32 %v8499, %v8347
      %v8532 = vmul.f32 %v8500, %v8396
      %v8533 = vmul.f32 %v8501, %v8350
      %v8534 = vmul.f32 %v8502, %v8399
      %v8535 = vmul.f32 %v8503, %v8352
      %v8536 = vmul.f32 %v8504, %v8401
      %v8537 = vmul.f32 %v8505, %v8355
      %v8538 = vmul.f32 %v8506, %v8404
      %v8539 = vmul.f32 %v8507, %v8357
      %v8540 = vmul.f32 %v8508, %v8406
      %v8541 = vmul.f32 %v8509, %v8360
      %v8542 = vmul.f32 %v8510, %v8409
      %v8543 = vmul.f32 %v8511, %v8362
      %v8544 = vmul.f32 %v8512, %v8411
      %v8545 = vmul.f32 %v8513, %v8365
      %v8546 = vmul.f32 %v8514, %v8414
      %v8547 = vmul.f32 %v8515, %v8367
      %v8548 = vmul.f32 %v8516, %v8416
      %v8549 = vmul.f32 %v8517, %v8370
      %v8550 = vmul.f32 %v8518, %v8419
      %v8551 = vmul.f32 %v8519, %v8372
      %v8552 = vmul.f32 %v8520, %v8421
      %v8553 = vmul.f32 %v8521, %v8375
      %v8554 = vmul.f32 %v8522, %v8424
      %v8555 = vmul.f32 %v8523, %v8377
      %v8556 = vmul.f32 %v8524, %v8426
      %v8557 = vmul.f32 %v8525, %v8380
      %v8558 = vmul.f32 %v8526, %v8429
      %v8559 = vmul.f32 %v8527, %v8382
      %v8560 = vmul.f32 %v8528, %v8431
      %v8561 = vadd.f32 %v8345, %v8529
      %v8562 = vadd.f32 %v8394, %v8530
      %v8563 = vadd.f32 %v8347, %v8531
      %v8564 = vadd.f32 %v8396, %v8532
      %v8565 = vadd.f32 %v8350, %v8533
      %v8566 = vadd.f32 %v8399, %v8534
      %v8567 = vadd.f32 %v8352, %v8535
      %v8568 = vadd.f32 %v8401, %v8536
      %v8569 = vadd.f32 %v8355, %v8537
      %v8570 = vadd.f32 %v8404, %v8538
      %v8571 = vadd.f32 %v8357, %v8539
      %v8572 = vadd.f32 %v8406, %v8540
      %v8573 = vadd.f32 %v8360, %v8541
      %v8574 = vadd.f32 %v8409, %v8542
      %v8575 = vadd.f32 %v8362, %v8543
      %v8576 = vadd.f32 %v8411, %v8544
      %v8577 = vadd.f32 %v8365, %v8545
      %v8578 = vadd.f32 %v8414, %v8546
      %v8579 = vadd.f32 %v8367, %v8547
      %v8580 = vadd.f32 %v8416, %v8548
      %v8581 = vadd.f32 %v8370, %v8549
      %v8582 = vadd.f32 %v8419, %v8550
      %v8583 = vadd.f32 %v8372, %v8551
      %v8584 = vadd.f32 %v8421, %v8552
      %v8585 = vadd.f32 %v8375, %v8553
      %v8586 = vadd.f32 %v8424, %v8554
      %v8587 = vadd.f32 %v8377, %v8555
      %v8588 = vadd.f32 %v8426, %v8556
      %v8589 = vadd.f32 %v8380, %v8557
      %v8590 = vadd.f32 %v8429, %v8558
      %v8591 = vadd.f32 %v8382, %v8559
      %v8592 = vadd.f32 %v8431, %v8560
      %v8593 = vmul.f32 %v8561, 0.7978846
      %v8594 = vmul.f32 %v8562, 0.7978846
      %v8595 = vmul.f32 %v8563, 0.7978846
      %v8596 = vmul.f32 %v8564, 0.7978846
      %v8597 = vmul.f32 %v8565, 0.7978846
      %v8598 = vmul.f32 %v8566, 0.7978846
      %v8599 = vmul.f32 %v8567, 0.7978846
      %v8600 = vmul.f32 %v8568, 0.7978846
      %v8601 = vmul.f32 %v8569, 0.7978846
      %v8602 = vmul.f32 %v8570, 0.7978846
      %v8603 = vmul.f32 %v8571, 0.7978846
      %v8604 = vmul.f32 %v8572, 0.7978846
      %v8605 = vmul.f32 %v8573, 0.7978846
      %v8606 = vmul.f32 %v8574, 0.7978846
      %v8607 = vmul.f32 %v8575, 0.7978846
      %v8608 = vmul.f32 %v8576, 0.7978846
      %v8609 = vmul.f32 %v8577, 0.7978846
      %v8610 = vmul.f32 %v8578, 0.7978846
      %v8611 = vmul.f32 %v8579, 0.7978846
      %v8612 = vmul.f32 %v8580, 0.7978846
      %v8613 = vmul.f32 %v8581, 0.7978846
      %v8614 = vmul.f32 %v8582, 0.7978846
      %v8615 = vmul.f32 %v8583, 0.7978846
      %v8616 = vmul.f32 %v8584, 0.7978846
      %v8617 = vmul.f32 %v8585, 0.7978846
      %v8618 = vmul.f32 %v8586, 0.7978846
      %v8619 = vmul.f32 %v8587, 0.7978846
      %v8620 = vmul.f32 %v8588, 0.7978846
      %v8621 = vmul.f32 %v8589, 0.7978846
      %v8622 = vmul.f32 %v8590, 0.7978846
      %v8623 = vmul.f32 %v8591, 0.7978846
      %v8624 = vmul.f32 %v8592, 0.7978846
      %v8625 = vtanh.pop %v8593
      %v8626 = vtanh.pop %v8594
      %v8627 = vtanh.pop %v8595
      %v8628 = vtanh.pop %v8596
      %v8629 = vtanh.pop %v8597
      %v8630 = vtanh.pop %v8598
      %v8631 = vtanh.pop %v8599
      %v8632 = vtanh.pop %v8600
      %v8633 = vtanh.pop %v8601
      %v8634 = vtanh.pop %v8602
      %v8635 = vtanh.pop %v8603
      %v8636 = vtanh.pop %v8604
      %v8637 = vtanh.pop %v8605
      %v8638 = vtanh.pop %v8606
      %v8639 = vtanh.pop %v8607
      %v8640 = vtanh.pop %v8608
      %v8641 = vtanh.pop %v8609
      %v8642 = vtanh.pop %v8610
      %v8643 = vtanh.pop %v8611
      %v8644 = vtanh.pop %v8612
      %v8645 = vtanh.pop %v8613
      %v8646 = vtanh.pop %v8614
      %v8647 = vtanh.pop %v8615
      %v8648 = vtanh.pop %v8616
      %v8649 = vtanh.pop %v8617
      %v8650 = vtanh.pop %v8618
      %v8651 = vtanh.pop %v8619
      %v8652 = vtanh.pop %v8620
      %v8653 = vtanh.pop %v8621
      %v8654 = vtanh.pop %v8622
      %v8655 = vtanh.pop %v8623
      %v8656 = vtanh.pop %v8624
      %v8657 = vadd.f32 %v8625, 1.0
      %v8658 = vadd.f32 %v8626, 1.0
      %v8659 = vadd.f32 %v8627, 1.0
      %v8660 = vadd.f32 %v8628, 1.0
      %v8661 = vadd.f32 %v8629, 1.0
      %v8662 = vadd.f32 %v8630, 1.0
      %v8663 = vadd.f32 %v8631, 1.0
      %v8664 = vadd.f32 %v8632, 1.0
      %v8665 = vadd.f32 %v8633, 1.0
      %v8666 = vadd.f32 %v8634, 1.0
      %v8667 = vadd.f32 %v8635, 1.0
      %v8668 = vadd.f32 %v8636, 1.0
      %v8669 = vadd.f32 %v8637, 1.0
      %v8670 = vadd.f32 %v8638, 1.0
      %v8671 = vadd.f32 %v8639, 1.0
      %v8672 = vadd.f32 %v8640, 1.0
      %v8673 = vadd.f32 %v8641, 1.0
      %v8674 = vadd.f32 %v8642, 1.0
      %v8675 = vadd.f32 %v8643, 1.0
      %v8676 = vadd.f32 %v8644, 1.0
      %v8677 = vadd.f32 %v8645, 1.0
      %v8678 = vadd.f32 %v8646, 1.0
      %v8679 = vadd.f32 %v8647, 1.0
      %v8680 = vadd.f32 %v8648, 1.0
      %v8681 = vadd.f32 %v8649, 1.0
      %v8682 = vadd.f32 %v8650, 1.0
      %v8683 = vadd.f32 %v8651, 1.0
      %v8684 = vadd.f32 %v8652, 1.0
      %v8685 = vadd.f32 %v8653, 1.0
      %v8686 = vadd.f32 %v8654, 1.0
      %v8687 = vadd.f32 %v8655, 1.0
      %v8688 = vadd.f32 %v8656, 1.0
      %v8689 = vmul.f32 %v8433, %v8657
      %v8690 = vmul.f32 %v8434, %v8658
      %v8691 = vmul.f32 %v8435, %v8659
      %v8692 = vmul.f32 %v8436, %v8660
      %v8693 = vmul.f32 %v8437, %v8661
      %v8694 = vmul.f32 %v8438, %v8662
      %v8695 = vmul.f32 %v8439, %v8663
      %v8696 = vmul.f32 %v8440, %v8664
      %v8697 = vmul.f32 %v8441, %v8665
      %v8698 = vmul.f32 %v8442, %v8666
      %v8699 = vmul.f32 %v8443, %v8667
      %v8700 = vmul.f32 %v8444, %v8668
      %v8701 = vmul.f32 %v8445, %v8669
      %v8702 = vmul.f32 %v8446, %v8670
      %v8703 = vmul.f32 %v8447, %v8671
      %v8704 = vmul.f32 %v8448, %v8672
      %v8705 = vmul.f32 %v8449, %v8673
      %v8706 = vmul.f32 %v8450, %v8674
      %v8707 = vmul.f32 %v8451, %v8675
      %v8708 = vmul.f32 %v8452, %v8676
      %v8709 = vmul.f32 %v8453, %v8677
      %v8710 = vmul.f32 %v8454, %v8678
      %v8711 = vmul.f32 %v8455, %v8679
      %v8712 = vmul.f32 %v8456, %v8680
      %v8713 = vmul.f32 %v8457, %v8681
      %v8714 = vmul.f32 %v8458, %v8682
      %v8715 = vmul.f32 %v8459, %v8683
      %v8716 = vmul.f32 %v8460, %v8684
      %v8717 = vmul.f32 %v8461, %v8685
      %v8718 = vmul.f32 %v8462, %v8686
      %v8719 = vmul.f32 %v8463, %v8687
      %v8720 = vmul.f32 %v8464, %v8688
      %s8721 = scalar_lea.vmem %s14, 128
      %v8722 = vld [vmem:[%s8721] sm:$0xf]
      %v8723 = vld [vmem:[%s8721 + $0x4] sm:$0xf]
      %v8724 = vld [vmem:[%s8721 + $0x8] sm:$0xf]
      %v8725 = vld [vmem:[%s8721 + $0xc] sm:$0xf]
      %v8726 = vld [vmem:[%s8721 + $0x10] sm:$0xf]
      %v8727 = vld [vmem:[%s8721 + $0x14] sm:$0xf]
      %v8728 = vld [vmem:[%s8721 + $0x18] sm:$0xf]
      %v8729 = vld [vmem:[%s8721 + $0x1c] sm:$0xf]
      %v8730 = vld [vmem:[%s8721 + $0x20] sm:$0xf]
      %v8731 = vld [vmem:[%s8721 + $0x24] sm:$0xf]
      %v8732 = vld [vmem:[%s8721 + $0x28] sm:$0xf]
      %v8733 = vld [vmem:[%s8721 + $0x2c] sm:$0xf]
      %v8734 = vld [vmem:[%s8721 + $0x30] sm:$0xf]
      %v8735 = vld [vmem:[%s8721 + $0x34] sm:$0xf]
      %v8736 = vld [vmem:[%s8721 + $0x38] sm:$0xf]
      %v8737 = vld [vmem:[%s8721 + $0x3c] sm:$0xf]
      %v8738 = vld [vmem:[%s8721 + $0x40] sm:$0xf]
      %v8739 = vld [vmem:[%s8721 + $0x44] sm:$0xf]
      %v8740 = vld [vmem:[%s8721 + $0x48] sm:$0xf]
      %v8741 = vld [vmem:[%s8721 + $0x4c] sm:$0xf]
      %v8742 = vld [vmem:[%s8721 + $0x50] sm:$0xf]
      %v8743 = vld [vmem:[%s8721 + $0x54] sm:$0xf]
      %v8744 = vld [vmem:[%s8721 + $0x58] sm:$0xf]
      %v8745 = vld [vmem:[%s8721 + $0x5c] sm:$0xf]
      %v8746 = vld [vmem:[%s8721 + $0x60] sm:$0xf]
      %v8747 = vld [vmem:[%s8721 + $0x64] sm:$0xf]
      %v8748 = vld [vmem:[%s8721 + $0x68] sm:$0xf]
      %v8749 = vld [vmem:[%s8721 + $0x6c] sm:$0xf]
      %v8750 = vld [vmem:[%s8721 + $0x70] sm:$0xf]
      %v8751 = vld [vmem:[%s8721 + $0x74] sm:$0xf]
      %v8752 = vld [vmem:[%s8721 + $0x78] sm:$0xf]
      %v8753 = vld [vmem:[%s8721 + $0x7c] sm:$0xf]
      %s8754 = scalar_lea.vmem %s15, 1
      %v8755 = vld [vmem:[%s8754] sm:$0x1]
      %v8756 = vpack.c.bf16 %v8691, %v8689
      %v8757 = vpack.c.bf16 %v8692, %v8690
      %v8758 = vpack.c.bf16 %v8695, %v8693
      %v8759 = vpack.c.bf16 %v8696, %v8694
      %v8760 = vpack.c.bf16 %v8699, %v8697
      %v8761 = vpack.c.bf16 %v8700, %v8698
      %v8762 = vpack.c.bf16 %v8703, %v8701
      %v8763 = vpack.c.bf16 %v8704, %v8702
      %v8764 = vpack.c.bf16 %v8707, %v8705
      %v8765 = vpack.c.bf16 %v8708, %v8706
      %v8766 = vpack.c.bf16 %v8711, %v8709
      %v8767 = vpack.c.bf16 %v8712, %v8710
      %v8768 = vpack.c.bf16 %v8715, %v8713
      %v8769 = vpack.c.bf16 %v8716, %v8714
      %v8770 = vpack.c.bf16 %v8719, %v8717
      %v8771 = vpack.c.bf16 %v8720, %v8718
      %v8773 = vperm.slane %v8755, 0
      %v8807 = vunpack.c.l.b16 %v8722
      %v8808 = vunpack.c.l.b16 %v8723
      %v8809 = vunpack.c.l.b16 %v8724
      %v8810 = vunpack.c.l.b16 %v8725
      %v8811 = vunpack.c.l.b16 %v8726
      %v8812 = vunpack.c.l.b16 %v8727
      %v8813 = vunpack.c.l.b16 %v8728
      %v8814 = vunpack.c.l.b16 %v8729
      %v8815 = vunpack.c.l.b16 %v8730
      %v8816 = vunpack.c.l.b16 %v8731
      %v8817 = vunpack.c.l.b16 %v8732
      %v8818 = vunpack.c.l.b16 %v8733
      %v8819 = vunpack.c.l.b16 %v8734
      %v8820 = vunpack.c.l.b16 %v8735
      %v8821 = vunpack.c.l.b16 %v8736
      %v8822 = vunpack.c.l.b16 %v8737
      %v8823 = vunpack.c.l.b16 %v8738
      %v8824 = vunpack.c.l.b16 %v8739
      %v8825 = vunpack.c.l.b16 %v8740
      %v8826 = vunpack.c.l.b16 %v8741
      %v8827 = vunpack.c.l.b16 %v8742
      %v8828 = vunpack.c.l.b16 %v8743
      %v8829 = vunpack.c.l.b16 %v8744
      %v8830 = vunpack.c.l.b16 %v8745
      %v8831 = vunpack.c.l.b16 %v8746
      %v8832 = vunpack.c.l.b16 %v8747
      %v8833 = vunpack.c.l.b16 %v8748
      %v8834 = vunpack.c.l.b16 %v8749
      %v8835 = vunpack.c.l.b16 %v8750
      %v8836 = vunpack.c.l.b16 %v8751
      %v8837 = vunpack.c.l.b16 %v8752
      %v8838 = vunpack.c.l.b16 %v8753
      %v8839 = vpack.c.b16 %v8808, %v8807
      %v8840 = vpack.c.b16 %v8810, %v8809
      %v8841 = vpack.c.b16 %v8812, %v8811
      %v8842 = vpack.c.b16 %v8814, %v8813
      %v8843 = vpack.c.b16 %v8816, %v8815
      %v8844 = vpack.c.b16 %v8818, %v8817
      %v8845 = vpack.c.b16 %v8820, %v8819
      %v8846 = vpack.c.b16 %v8822, %v8821
      %v8847 = vpack.c.b16 %v8824, %v8823
      %v8848 = vpack.c.b16 %v8826, %v8825
      %v8849 = vpack.c.b16 %v8828, %v8827
      %v8850 = vpack.c.b16 %v8830, %v8829
      %v8851 = vpack.c.b16 %v8832, %v8831
      %v8852 = vpack.c.b16 %v8834, %v8833
      %v8853 = vpack.c.b16 %v8836, %v8835
      %v8854 = vpack.c.b16 %v8838, %v8837
      %8871 = vmatpush.bf16.msra.mxu0 %v8846
      %8872 = vmatpush.bf16.msra.mxu0 %v8845
      %8873 = vmatpush.bf16.msra.mxu0 %v8844
      %8874 = vmatpush.bf16.msra.mxu0 %v8843
      %8875 = vmatpush.bf16.msra.mxu0 %v8842
      %8876 = vmatpush.bf16.msra.mxu0 %v8841
      %8877 = vmatpush.bf16.msra.mxu0 %v8840
      %8878 = vmatpush.bf16.msra.mxu0 %v8839
      %8879 = vmatmul.bf16.gmra.mxu0 %v8756
      %v8880 = vpop.f32.mrf.mxu0
      %v8881 = vadd.f32 %v8773, %v8880
      %v8882 = vpop.f32.mrf.mxu0
      %v8883 = vadd.f32 %v8773, %v8882
      %8884 = vmatmul.bf16.gmra.mxu0 %v8758
      %v8885 = vpop.f32.mrf.mxu0
      %v8886 = vadd.f32 %v8773, %v8885
      %v8887 = vpop.f32.mrf.mxu0
      %v8888 = vadd.f32 %v8773, %v8887
      %8889 = vmatmul.bf16.gmra.mxu0 %v8760
      %v8890 = vpop.f32.mrf.mxu0
      %v8891 = vadd.f32 %v8773, %v8890
      %v8892 = vpop.f32.mrf.mxu0
      %v8893 = vadd.f32 %v8773, %v8892
      %8894 = vmatmul.bf16.gmra.mxu0 %v8762
      %v8895 = vpop.f32.mrf.mxu0
      %v8896 = vadd.f32 %v8773, %v8895
      %v8897 = vpop.f32.mrf.mxu0
      %v8898 = vadd.f32 %v8773, %v8897
      %8899 = vmatmul.bf16.gmra.mxu0 %v8764
      %v8900 = vpop.f32.mrf.mxu0
      %v8901 = vadd.f32 %v8773, %v8900
      %v8902 = vpop.f32.mrf.mxu0
      %v8903 = vadd.f32 %v8773, %v8902
      %8904 = vmatmul.bf16.gmra.mxu0 %v8766
      %v8905 = vpop.f32.mrf.mxu0
      %v8906 = vadd.f32 %v8773, %v8905
      %v8907 = vpop.f32.mrf.mxu0
      %v8908 = vadd.f32 %v8773, %v8907
      %8909 = vmatmul.bf16.gmra.mxu0 %v8768
      %v8910 = vpop.f32.mrf.mxu0
      %v8911 = vadd.f32 %v8773, %v8910
      %v8912 = vpop.f32.mrf.mxu0
      %v8913 = vadd.f32 %v8773, %v8912
      %8914 = vmatmul.bf16.gmra.mxu0 %v8770
      %v8915 = vpop.f32.mrf.mxu0
      %v8916 = vadd.f32 %v8773, %v8915
      %v8917 = vpop.f32.mrf.mxu0
      %v8918 = vadd.f32 %v8773, %v8917
      %8919 = vdwg.mxu0
      %8920 = vmatpush.bf16.msra.mxu0 %v8854
      %8921 = vmatpush.bf16.msra.mxu0 %v8853
      %8922 = vmatpush.bf16.msra.mxu0 %v8852
      %8923 = vmatpush.bf16.msra.mxu0 %v8851
      %8924 = vmatpush.bf16.msra.mxu0 %v8850
      %8925 = vmatpush.bf16.msra.mxu0 %v8849
      %8926 = vmatpush.bf16.msra.mxu0 %v8848
      %8927 = vmatpush.bf16.msra.mxu0 %v8847
      %8928 = vmatmul.bf16.gmra.mxu0 %v8757
      %v8929 = vpop.f32.mrf.mxu0
      %v8930 = vadd.f32 %v8881, %v8929
      %v8931 = vpop.f32.mrf.mxu0
      %v8932 = vadd.f32 %v8883, %v8931
      %8933 = vmatmul.bf16.gmra.mxu0 %v8759
      %v8934 = vpop.f32.mrf.mxu0
      %v8935 = vadd.f32 %v8886, %v8934
      %v8936 = vpop.f32.mrf.mxu0
      %v8937 = vadd.f32 %v8888, %v8936
      %8938 = vmatmul.bf16.gmra.mxu0 %v8761
      %v8939 = vpop.f32.mrf.mxu0
      %v8940 = vadd.f32 %v8891, %v8939
      %v8941 = vpop.f32.mrf.mxu0
      %v8942 = vadd.f32 %v8893, %v8941
      %8943 = vmatmul.bf16.gmra.mxu0 %v8763
      %v8944 = vpop.f32.mrf.mxu0
      %v8945 = vadd.f32 %v8896, %v8944
      %v8946 = vpop.f32.mrf.mxu0
      %v8947 = vadd.f32 %v8898, %v8946
      %8948 = vmatmul.bf16.gmra.mxu0 %v8765
      %v8949 = vpop.f32.mrf.mxu0
      %v8950 = vadd.f32 %v8901, %v8949
      %v8951 = vpop.f32.mrf.mxu0
      %v8952 = vadd.f32 %v8903, %v8951
      %8953 = vmatmul.bf16.gmra.mxu0 %v8767
      %v8954 = vpop.f32.mrf.mxu0
      %v8955 = vadd.f32 %v8906, %v8954
      %v8956 = vpop.f32.mrf.mxu0
      %v8957 = vadd.f32 %v8908, %v8956
      %8958 = vmatmul.bf16.gmra.mxu0 %v8769
      %v8959 = vpop.f32.mrf.mxu0
      %v8960 = vadd.f32 %v8911, %v8959
      %v8961 = vpop.f32.mrf.mxu0
      %v8962 = vadd.f32 %v8913, %v8961
      %8963 = vmatmul.bf16.gmra.mxu0 %v8771
      %v8964 = vpop.f32.mrf.mxu0
      %v8965 = vadd.f32 %v8916, %v8964
      %v8966 = vpop.f32.mrf.mxu0
      %v8967 = vadd.f32 %v8918, %v8966
      %8968 = vdwg.mxu0
      %v8969 = vadd.f32 %v7845, %v8930
      %v8970 = vadd.f32 %v7846, %v8932
      %v8971 = vadd.f32 %v7847, %v8935
      %v8972 = vadd.f32 %v7848, %v8937
      %v8973 = vadd.f32 %v7849, %v8940
      %v8974 = vadd.f32 %v7850, %v8942
      %v8975 = vadd.f32 %v7851, %v8945
      %v8976 = vadd.f32 %v7852, %v8947
      %v8977 = vadd.f32 %v7853, %v8950
      %v8978 = vadd.f32 %v7854, %v8952
      %v8979 = vadd.f32 %v7855, %v8955
      %v8980 = vadd.f32 %v7856, %v8957
      %v8981 = vadd.f32 %v7857, %v8960
      %v8982 = vadd.f32 %v7858, %v8962
      %v8983 = vadd.f32 %v7859, %v8965
      %v8984 = vadd.f32 %v7860, %v8967
      %8985 = vst [vmem:[#allocation2] sm:$0xff] %v8969
      %8986 = vst [vmem:[#allocation2 + $0x8] sm:$0xff] %v8970
      %8987 = vst [vmem:[#allocation2 + $0x10] sm:$0xff] %v8971
      %8988 = vst [vmem:[#allocation2 + $0x18] sm:$0xff] %v8972
      %8989 = vst [vmem:[#allocation2 + $0x20] sm:$0xff] %v8973
      %8990 = vst [vmem:[#allocation2 + $0x28] sm:$0xff] %v8974
      %8991 = vst [vmem:[#allocation2 + $0x30] sm:$0xff] %v8975
      %8992 = vst [vmem:[#allocation2 + $0x38] sm:$0xff] %v8976
      %8993 = vst [vmem:[#allocation2 + $0x40] sm:$0xff] %v8977
      %8994 = vst [vmem:[#allocation2 + $0x48] sm:$0xff] %v8978
      %8995 = vst [vmem:[#allocation2 + $0x50] sm:$0xff] %v8979
      %8996 = vst [vmem:[#allocation2 + $0x58] sm:$0xff] %v8980
      %8997 = vst [vmem:[#allocation2 + $0x60] sm:$0xff] %v8981
      %8998 = vst [vmem:[#allocation2 + $0x68] sm:$0xff] %v8982
      %8999 = vst [vmem:[#allocation2 + $0x70] sm:$0xff] %v8983
      %9000 = vst [vmem:[#allocation2 + $0x78] sm:$0xff] %v8984
      %v9001 = vld [vmem:[#allocation2] ss:$8 sm:$0xf]
      %v9002 = vld [vmem:[#allocation2] ss:$8 sm:$0xf0]
      %v9003 = vor.u32 %v9001, %v9002
      %s9004 = scalar_lea.vmem [#allocation2], 64
      %v9005 = vld [vmem:[%s9004] ss:$8 sm:$0xf]
      %v9006 = vld [vmem:[%s9004] ss:$8 sm:$0xf0]
      %v9007 = vor.u32 %v9005, %v9006
      %v9008 = vld [vmem:[%s16] sm:$0x1]
      %v9009 = vld [vmem:[%s17] sm:$0x1]
      %9010 = vadd.xlane.f32.xlu0 %v9003
      %v9011 = vpop.xlane.xlu0 %9010
      %9012 = vadd.xlane.f32.xlu0 %v9007
      %v9013 = vpop.xlane.xlu0 %9012
      %v9014 = vmul.f32 %v9011, %v1675
      %v9015 = vmul.f32 %v9013, %v1675
      %v9016 = vsub.f32 %v9003, %v9014
      %v9017 = vsub.f32 %v9007, %v9015
      %v9018 = vmul.f32 %v9016, %v9016
      %v9019 = vmul.f32 %v9017, %v9017
      %9020 = vadd.xlane.f32.xlu0 %v9018
      %v9021 = vpop.xlane.xlu0 %9020
      %9022 = vadd.xlane.f32.xlu0 %v9019
      %v9023 = vpop.xlane.xlu0 %9022
      %v9024 = vmul.f32 %v9021, %v1675
      %v9025 = vmul.f32 %v9023, %v1675
      %v9026 = vadd.f32 %v9024, 1e-06
      %v9027 = vadd.f32 %v9025, 1e-06
      %v9028 = vrsqrt.pop %v9026
      %v9029 = vmul.f32 %v9028, %v9026
      %v9030 = vmul.f32 %v9029, %v9028
      %v9031 = vmul.f32 0.5, %v9030
      %v9032 = vsub.f32 1.5, %v9031
      %v9033 = vmul.f32 %v9028, %v9032
      %vm9034 = vweird.f32 %v9026
      %vm9035 = vweird.f32 %v9028
      %vm9036 = vmor %vm9034, %vm9035
      %v9037 = vsel %vm9036, %v9028, %v9033
      %v9038 = vrsqrt.pop %v9027
      %v9039 = vmul.f32 %v9038, %v9027
      %v9040 = vmul.f32 %v9039, %v9038
      %v9041 = vmul.f32 0.5, %v9040
      %v9042 = vsub.f32 1.5, %v9041
      %v9043 = vmul.f32 %v9038, %v9042
      %vm9044 = vweird.f32 %v9027
      %vm9045 = vweird.f32 %v9038
      %vm9046 = vmor %vm9044, %vm9045
      %v9047 = vsel %vm9046, %v9038, %v9043
      %v9048 = vmul.f32 %v9016, %v9037
      %v9049 = vmul.f32 %v9017, %v9047
      %v9051 = vperm.slane %v9008, 0
      %v9053 = vmul.f32 %v9048, %v9051
      %v9054 = vmul.f32 %v9049, %v9051
      %v9056 = vperm.slane %v9009, 0
      %v9058 = vadd.f32 %v9053, %v9056
      %v9059 = vadd.f32 %v9054, %v9056
      %v9060 = vld [vmem:[%s18] sm:$0xf]
      %v9061 = vld [vmem:[%s18 + $0x4] sm:$0xf]
      %v9062 = vld [vmem:[%s18 + $0x8] sm:$0xf]
      %v9063 = vld [vmem:[%s18 + $0xc] sm:$0xf]
      %v9064 = vld [vmem:[%s18 + $0x10] sm:$0xf]
      %v9065 = vld [vmem:[%s18 + $0x14] sm:$0xf]
      %v9066 = vld [vmem:[%s18 + $0x18] sm:$0xf]
      %v9067 = vld [vmem:[%s18 + $0x1c] sm:$0xf]
      %v9068 = vld [vmem:[%s18 + $0x20] sm:$0xf]
      %v9069 = vld [vmem:[%s18 + $0x24] sm:$0xf]
      %v9070 = vld [vmem:[%s18 + $0x28] sm:$0xf]
      %v9071 = vld [vmem:[%s18 + $0x2c] sm:$0xf]
      %v9072 = vld [vmem:[%s18 + $0x30] sm:$0xf]
      %v9073 = vld [vmem:[%s18 + $0x34] sm:$0xf]
      %v9074 = vld [vmem:[%s18 + $0x38] sm:$0xf]
      %v9075 = vld [vmem:[%s18 + $0x3c] sm:$0xf]
      %v9076 = vld [vmem:[%s19] sm:$0x1]
      %v9077 = vpack.c.bf16 %v9059, %v9058
      %v9079 = vperm.slane %v9076, 0
      %v9097 = vunpack.c.l.b16 %v9060
      %v9098 = vunpack.c.l.b16 %v9061
      %v9099 = vunpack.c.l.b16 %v9062
      %v9100 = vunpack.c.l.b16 %v9063
      %v9101 = vunpack.c.l.b16 %v9064
      %v9102 = vunpack.c.l.b16 %v9065
      %v9103 = vunpack.c.l.b16 %v9066
      %v9104 = vunpack.c.l.b16 %v9067
      %v9105 = vunpack.c.l.b16 %v9068
      %v9106 = vunpack.c.l.b16 %v9069
      %v9107 = vunpack.c.l.b16 %v9070
      %v9108 = vunpack.c.l.b16 %v9071
      %v9109 = vunpack.c.l.b16 %v9072
      %v9110 = vunpack.c.l.b16 %v9073
      %v9111 = vunpack.c.l.b16 %v9074
      %v9112 = vunpack.c.l.b16 %v9075
      %v9113 = vpack.c.b16 %v9098, %v9097
      %v9114 = vpack.c.b16 %v9100, %v9099
      %v9115 = vpack.c.b16 %v9102, %v9101
      %v9116 = vpack.c.b16 %v9104, %v9103
      %v9117 = vpack.c.b16 %v9106, %v9105
      %v9118 = vpack.c.b16 %v9108, %v9107
      %v9119 = vpack.c.b16 %v9110, %v9109
      %v9120 = vpack.c.b16 %v9112, %v9111
      %9129 = vmatpush.bf16.msra.mxu0 %v9120
      %9130 = vmatpush.bf16.msra.mxu0 %v9119
      %9131 = vmatpush.bf16.msra.mxu0 %v9118
      %9132 = vmatpush.bf16.msra.mxu0 %v9117
      %9133 = vmatpush.bf16.msra.mxu0 %v9116
      %9134 = vmatpush.bf16.msra.mxu0 %v9115
      %9135 = vmatpush.bf16.msra.mxu0 %v9114
      %9136 = vmatpush.bf16.msra.mxu0 %v9113
      %9137 = vmatmul.bf16.gmra.mxu0 %v9077
      %v9138 = vpop.f32.mrf.mxu0
      %v9139 = vadd.f32 %v9079, %v9138
      %v9140 = vpop.f32.mrf.mxu0
      %v9141 = vadd.f32 %v9079, %v9140
      %9142 = vdwg.mxu0
      %9143 = vst [vmem:[%s634] sm:$0xff] %v9139
      %9144 = vst [vmem:[%s634 + $0x8] sm:$0xff] %v9141
      %s9145 = smul.u32 2, %s31
      %p9146 = scmp.lt.s32.totalorder %s9145, 3
      %s9147 = scalar_select %p9146, %s9145, 3
      %s9148 = smul.addr %s9147, 8
      %s9149 = scalar_lea.vmem %s20, %s9148
      // Predicated region
      $region101: #{vit_forward.1} parent=99 // pred_check
        %p9150 = pneg %p474
      $region102: #{vit_forward.1} parent=99 // pred_check_branch
        %9152 = sbr.rel (%p9150) target = $region104
      $region103: #{vit_forward.1} parent=99 // pred_region
        %s9153 = smul.u32 2, %s31
      $region104: #{vit_forward.1} parent=99 // pred_fallthru
        _
    $region100: #{vit_forward.1} parent=5 // pred_fallthru
      _
    %p9154 = scmp.le.s32.totalorder 2, %s26
    // Predicated region
    $region105: #{vit_forward.1} parent=5 // pred_check
      %p9155 = pneg %p9154
    $region106: #{vit_forward.1} parent=5 // pred_check_branch
      %9157 = sbr.rel (%p9155) target = $region108
    $region107: #{vit_forward.1} parent=5 // pred_region
      %s9158 = ssub.s32 %s26, 2
      // Predicated region
      $region109: #{vit_forward.1} parent=107 // pred_check
        %p9159 = pneg %p480
      $region110: #{vit_forward.1} parent=107 // pred_check_branch
        %9161 = sbr.rel (%p9159) target = $region112
      $region111: #{vit_forward.1} parent=107 // pred_region
        %s9162 = smul.u32 2, %s32
        %p9163 = scmp.lt.s32.totalorder %s9162, 3
        %s9164 = scalar_select %p9163, %s9162, 3
        %s9165 = smul.addr %s9164, 8
        %s9166 = scalar_lea.vmem %s20, %s9165
      $region112: #{vit_forward.1} parent=107 // pred_fallthru
        _
    $region108: #{vit_forward.1} parent=5 // pred_fallthru
      _
  $region6: #{vit_forward.1} parent=0 // loop_footer
    %s30 = sadd.s32 1, %s26
  $region7: #{vit_forward.1} parent=0 // loop_footer_branch
    %25 = sbr.rel target = $region3
  $region8: #{vit_forward.1} parent=0 // loop_exit
    _

</llo_original>
